<compile_context>
chip_gen: v7x
topology: tpu7x:2x2x1
jax: 0.10.0
libtpu: 0.0.40
codegen_flags: <defaults>
</compile_context>

<pallas_src>
import functools

import jax
import jax.numpy as jnp
from jax.experimental import pallas as pl
from jax.experimental.pallas import tpu as pltpu


# -----------------------------------------------------------------------------
# Helpers
# -----------------------------------------------------------------------------
def _full_spec(shape):
    """Whole-array block for a grid=(1,) pallas_call."""
    zeros = (0,) * len(shape)
    return pl.BlockSpec(tuple(shape), lambda i, _z=zeros: _z)


_ARB = pltpu.CompilerParams(dimension_semantics=("arbitrary",))


def _lstm_cell(gates, c_prev, H):
    """PyTorch LSTM cell from pre-activation gates (B, 4H).

    The g-gate columns of the weights/bias were pre-scaled by 2 at init, so
    tanh(x) == 2*sigmoid(2x) - 1 costs only the single full-vreg sigmoid plus
    a cheap VPU fma (one fewer EUP push on the serial critical path).
    """
    sig = jax.nn.sigmoid(gates)                 # (B, 4H) on the EUP
    i_g = sig[:, 0 * H:1 * H]
    f_g = sig[:, 1 * H:2 * H]
    g_g = 2.0 * sig[:, 2 * H:3 * H] - 1.0       # == tanh(original g pre-act)
    o_g = sig[:, 3 * H:4 * H]
    c_new = f_g * c_prev + i_g * g_g
    h_new = o_g * jnp.tanh(c_new)
    return h_new, c_new


# -----------------------------------------------------------------------------
# Single fused LVGNet forward kernel
# -----------------------------------------------------------------------------
def _lvgnet_kernel(*refs, num_layers, seq_len, batch, hidden, latent, d_in):
    T, B, H, L = seq_len, batch, hidden, latent
    del d_in  # implied by ref shapes

    it = iter(refs)
    x_ref = next(it)                                        # (T*B, d_in)
    eps_ref = next(it)                                      # (B, L)
    enc = [(next(it), next(it), next(it)) for _ in range(num_layers)]
    w_ml_ref, b_ml_ref = next(it), next(it)                 # (H, 2L), (1, 2L)
    w_di_ref, b_di_ref = next(it), next(it)                 # (L, H), (1, H)
    dec0_whh_ref, dec0_b_ref = next(it), next(it)           # (H, 4H), (1, 4H)
    dec_up = [(next(it), next(it), next(it)) for _ in range(num_layers - 1)]
    w_out_ref, b_out_ref = next(it), next(it)               # (H, d_in), (1, d_in)
    disc = [(next(it), next(it), next(it)) for _ in range(num_layers)]
    w_d_ref, b_d_ref = next(it), next(it)                   # (H, 1), (1, 1)
    pred_ref = next(it)                                     # (B, d_in)
    ml_ref = next(it)                                       # (B, 2L)
    val_ref = next(it)                                      # (B, 1)
    seq_ref = next(it)                                      # VMEM (T*B, H)

    zB = jnp.zeros((B, H), jnp.float32)

    def run_stack(layers, first_src):
        """Stacked LSTM with zero initial state.  Each layer's input
        projection is hoisted into one (T*B, Din) x (Din, 4H) matmul; only
        h @ W_hh stays inside the serial time loop.  Intermediate hidden
        sequences live in the seq_ref VMEM scratch.  Returns top-layer h_T."""
        h = zB
        for li, (wih_ref, whh_ref, b_ref) in enumerate(layers):
            src = first_src if li == 0 else seq_ref[...]
            proj = jnp.dot(src, wih_ref[...],
                           preferred_element_type=jnp.float32) + b_ref[...]
            whh = whh_ref[...]
            last = li == len(layers) - 1
            h, c = zB, zB
            for t in range(T):
                gates = proj[t * B:(t + 1) * B, :] + jnp.dot(
                    h, whh, preferred_element_type=jnp.float32)
                h, c = _lstm_cell(gates, c, H)
                if not last:                        # last layer: only h_T used
                    seq_ref[t * B:(t + 1) * B, :] = h
        return h

    # ---------------- encoder ----------------
    h_n = run_stack(enc, x_ref[...])                         # (B, H)

    # ------ latent: [fc_mu | fc_logvar] as one matmul + reparameterize ------
    ml = jnp.dot(h_n, w_ml_ref[...],
                 preferred_element_type=jnp.float32) + b_ml_ref[...]   # (B, 2L)
    mu = ml[:, :L]
    logvar = ml[:, L:]
    z = mu + eps_ref[...] * jnp.exp(0.5 * logvar)            # stays in VMEM
    ml_ref[...] = ml                                         # one (B, 2L) store

    # ---------------- decoder ----------------
    # decoder_init: shared h0 across all layers, c0 = 0.
    h0 = jnp.dot(z, w_di_ref[...],
                 preferred_element_type=jnp.float32) + b_di_ref[...]   # (B, H)
    # Layer 0 input is all zeros -> gates = b0 + h @ W_hh0 (x @ W_ih skipped).
    whh0 = dec0_whh_ref[...]
    b0 = dec0_b_ref[...]
    h, c = h0, zB
    for t in range(T):
        gates = b0 + jnp.dot(h, whh0, preferred_element_type=jnp.float32)
        h, c = _lstm_cell(gates, c, H)
        seq_ref[t * B:(t + 1) * B, :] = h
    # Upper decoder layers (hoisted input projection each), h0 repeated.
    for (wih_ref, whh_ref, b_ref) in dec_up:
        proj = jnp.dot(seq_ref[...], wih_ref[...],
                       preferred_element_type=jnp.float32) + b_ref[...]
        whh = whh_ref[...]
        h, c = h0, zB
        for t in range(T):
            gates = proj[t * B:(t + 1) * B, :] + jnp.dot(
                h, whh, preferred_element_type=jnp.float32)
            h, c = _lstm_cell(gates, c, H)
            seq_ref[t * B:(t + 1) * B, :] = h

    # fc_out + tanh over the whole sequence in ONE matmul; recon never leaves
    # VMEM (only pred, its last timestep, is written to HBM).
    recon = jnp.tanh(jnp.dot(seq_ref[...], w_out_ref[...],
                             preferred_element_type=jnp.float32) + b_out_ref[...])
    pred_ref[...] = recon[(T - 1) * B:T * B, :]

    # -------------- discriminator --------------
    # recon.detach() in the reference is a no-op for this inference forward.
    h_d = run_stack(disc, recon)                             # (B, H)
    val_ref[...] = jax.nn.sigmoid(
        jnp.dot(h_d, w_d_ref[...], preferred_element_type=jnp.float32)
        + b_d_ref[...])


# -----------------------------------------------------------------------------
# Parameter construction (deterministic, PyTorch-like uniform init).
# -----------------------------------------------------------------------------
def _uniform(key, shape, bound):
    return jax.random.uniform(key, shape, jnp.float32, -bound, bound)


def init_lstm_params(key, input_size, hidden_size, num_layers):
    """Returns [(wih_t (Din,4H), whh_t (H,4H), b (1,4H))] per layer.

    PyTorch layout/init, but with the g-gate columns (2H:3H) pre-scaled by 2
    so the kernel can use tanh(x) == 2*sigmoid(2x) - 1.
    """
    H = hidden_size
    g_scale = jnp.concatenate(
        [jnp.ones((1, 2 * H)), jnp.full((1, H), 2.0), jnp.ones((1, H))],
        axis=1).astype(jnp.float32)
    bound = 1.0 / jnp.sqrt(hidden_size)
    params = []
    for layer in range(num_layers):
        din = input_size if layer == 0 else hidden_size
        key, k1, k2, k3, k4 = jax.random.split(key, 5)
        w_ih = _uniform(k1, (4 * H, din), bound)              # PyTorch (4H, Din)
        w_hh = _uniform(k2, (4 * H, H), bound)
        b_ih = _uniform(k3, (4 * H,), bound)
        b_hh = _uniform(k4, (4 * H,), bound)
        params.append((w_ih.T * g_scale, w_hh.T * g_scale,
                       (b_ih + b_hh)[None, :] * g_scale))
    return params, key


def init_linear_params(key, in_f, out_f):
    bound = 1.0 / jnp.sqrt(in_f)
    key, k1, k2 = jax.random.split(key, 3)
    w = _uniform(k1, (out_f, in_f), bound)                    # PyTorch (out, in)
    b = _uniform(k2, (out_f,), bound)
    return (w.T, b[None, :]), key


def init_lvgnet_params(key, input_size, hidden_size, latent_size, num_layers):
    p = {}
    p["encoder"], key = init_lstm_params(key, input_size, hidden_size, num_layers)
    fc_mu, key = init_linear_params(key, hidden_size, latent_size)
    fc_logvar, key = init_linear_params(key, hidden_size, latent_size)
    # Pre-concatenate [fc_mu | fc_logvar] once at init (free at forward time).
    p["fc_mulogvar"] = (jnp.concatenate([fc_mu[0], fc_logvar[0]], axis=1),
                        jnp.concatenate([fc_mu[1], fc_logvar[1]], axis=1))
    p["decoder_init"], key = init_linear_params(key, latent_size, hidden_size)
    p["decoder"], key = init_lstm_params(key, hidden_size, hidden_size, num_layers)
    p["fc_out"], key = init_linear_params(key, hidden_size, input_size)
    p["disc_lstm"], key = init_lstm_params(key, input_size, hidden_size, num_layers)
    p["disc_fc"], key = init_linear_params(key, hidden_size, 1)
    return p


# -----------------------------------------------------------------------------
# Full forward pass (single fused pallas_call).
# -----------------------------------------------------------------------------
def lvgnet_forward(params, x, eps, *, hidden_size, latent_size, seq_length):
    B, T, d_in = x.shape
    assert T == seq_length
    num_layers = len(params["encoder"])
    H, L = hidden_size, latent_size

    # Pad batch to the f32 sublane count (8) for full vreg/MXU-row occupancy.
    # Padded rows carry zero input / zero eps, stay bounded through the
    # tanh/sigmoid-gated network, and are sliced off below.
    b_pad = max(8, -(-B // 8) * 8)
    x_tm = jnp.transpose(x, (1, 0, 2)).astype(jnp.float32)    # (T, B, D)
    eps = eps.astype(jnp.float32)
    if b_pad != B:
        x_tm = jnp.pad(x_tm, ((0, 0), (0, b_pad - B), (0, 0)))
        eps = jnp.pad(eps, ((0, b_pad - B), (0, 0)))
    x_flat = x_tm.reshape(T * b_pad, d_in)                    # free reshape

    inputs = [x_flat, eps]
    for wih, whh, b in params["encoder"]:
        inputs += [wih, whh, b]
    inputs += list(params["fc_mulogvar"])
    inputs += list(params["decoder_init"])
    _wih0d, whh0d, b0d = params["decoder"][0]    # wih0d unused (zero input)
    inputs += [whh0d, b0d]
    for wih, whh, b in params["decoder"][1:]:
        inputs += [wih, whh, b]
    inputs += list(params["fc_out"])
    for wih, whh, b in params["disc_lstm"]:
        inputs += [wih, whh, b]
    inputs += list(params["disc_fc"])

    kernel = functools.partial(_lvgnet_kernel, num_layers=num_layers,
                               seq_len=T, batch=b_pad, hidden=H, latent=L,
                               d_in=d_in)
    pred_p, ml_p, val_p = pl.pallas_call(
        kernel,
        out_shape=(jax.ShapeDtypeStruct((b_pad, d_in), jnp.float32),
                   jax.ShapeDtypeStruct((b_pad, 2 * L), jnp.float32),
                   jax.ShapeDtypeStruct((b_pad, 1), jnp.float32)),
        grid=(1,),
        in_specs=[_full_spec(a.shape) for a in inputs],
        out_specs=[_full_spec((b_pad, d_in)),
                   _full_spec((b_pad, 2 * L)),
                   _full_spec((b_pad, 1))],
        scratch_shapes=[pltpu.VMEM((T * b_pad, H), jnp.float32)],
        compiler_params=_ARB,
    )(*inputs)

    pred = pred_p[:B]
    mu = ml_p[:B, :L]
    logvar = ml_p[:B, L:]
    validity = val_p[:B]
    return pred, mu, logvar, validity


# -----------------------------------------------------------------------------
if __name__ == "__main__":
    INPUT_SIZE = 4
    HIDDEN_SIZE = 32
    LATENT_SIZE = 16
    NUM_LAYERS = 2
    SEQ_LENGTH = 8
    BATCH = 2

    root = jax.random.PRNGKey(0)
    k_params, k_x, k_eps = jax.random.split(root, 3)

    params = init_lvgnet_params(k_params, INPUT_SIZE, HIDDEN_SIZE,
                                LATENT_SIZE, NUM_LAYERS)
    x = jax.random.normal(k_x, (BATCH, SEQ_LENGTH, INPUT_SIZE), jnp.float32)
    # Fresh reparameterization noise is a per-call traced input (not baked
    # into the jit), matching torch.randn_like semantics.
    eps = jax.random.normal(k_eps, (BATCH, LATENT_SIZE), jnp.float32)

    fwd = jax.jit(functools.partial(lvgnet_forward,
                                    hidden_size=HIDDEN_SIZE,
                                    latent_size=LATENT_SIZE,
                                    seq_length=SEQ_LENGTH))
    pred, mu, logvar, validity = fwd(params, x, eps)
    jax.block_until_ready((pred, mu, logvar, validity))

    assert pred.shape == (BATCH, INPUT_SIZE)
    assert mu.shape == (BATCH, LATENT_SIZE)
    assert logvar.shape == (BATCH, LATENT_SIZE)
    assert validity.shape == (BATCH, 1)
    assert bool(jnp.all(jnp.isfinite(pred)))
    assert bool(jnp.all(jnp.isfinite(mu)) and jnp.all(jnp.isfinite(logvar)))
    assert bool(jnp.all(validity >= 0) and jnp.all(validity <= 1))
    print("KERNEL_OK")
</pallas_src>

<mosaic_0001>
module attributes {stable_mosaic.version = 11 : i64} {
  func.func @_lvgnet_kernel(%arg0: i32, %arg1: memref<64x4xf32, #tpu.memory_space<vmem>>, %arg2: memref<8x16xf32, #tpu.memory_space<vmem>>, %arg3: memref<4x128xf32, #tpu.memory_space<vmem>>, %arg4: memref<32x128xf32, #tpu.memory_space<vmem>>, %arg5: memref<1x128xf32, #tpu.memory_space<vmem>>, %arg6: memref<32x128xf32, #tpu.memory_space<vmem>>, %arg7: memref<32x128xf32, #tpu.memory_space<vmem>>, %arg8: memref<1x128xf32, #tpu.memory_space<vmem>>, %arg9: memref<32x32xf32, #tpu.memory_space<vmem>>, %arg10: memref<1x32xf32, #tpu.memory_space<vmem>>, %arg11: memref<16x32xf32, #tpu.memory_space<vmem>>, %arg12: memref<1x32xf32, #tpu.memory_space<vmem>>, %arg13: memref<32x128xf32, #tpu.memory_space<vmem>>, %arg14: memref<1x128xf32, #tpu.memory_space<vmem>>, %arg15: memref<32x128xf32, #tpu.memory_space<vmem>>, %arg16: memref<32x128xf32, #tpu.memory_space<vmem>>, %arg17: memref<1x128xf32, #tpu.memory_space<vmem>>, %arg18: memref<32x4xf32, #tpu.memory_space<vmem>>, %arg19: memref<1x4xf32, #tpu.memory_space<vmem>>, %arg20: memref<4x128xf32, #tpu.memory_space<vmem>>, %arg21: memref<32x128xf32, #tpu.memory_space<vmem>>, %arg22: memref<1x128xf32, #tpu.memory_space<vmem>>, %arg23: memref<32x128xf32, #tpu.memory_space<vmem>>, %arg24: memref<32x128xf32, #tpu.memory_space<vmem>>, %arg25: memref<1x128xf32, #tpu.memory_space<vmem>>, %arg26: memref<32x1xf32, #tpu.memory_space<vmem>>, %arg27: memref<1x1xf32, #tpu.memory_space<vmem>>, %arg28: memref<8x4xf32, #tpu.memory_space<vmem>>, %arg29: memref<8x32xf32, #tpu.memory_space<vmem>>, %arg30: memref<8x1xf32, #tpu.memory_space<vmem>>, %arg31: memref<64x32xf32, #tpu.memory_space<vmem>>) attributes {dimension_semantics = [#tpu.dimension_semantics<arbitrary>], iteration_bounds = array<i64: 1>, scalar_prefetch = 0 : i64, scratch_operands = 1 : i64, tpu.core_type = #tpu.core_type<tc>, window_params = [{pipeline_mode = #tpu.pipeline_mode<synchronous>, transform_indices = @transform_0, window_bounds = array<i64: 64, 4>}, {pipeline_mode = #tpu.pipeline_mode<synchronous>, transform_indices = @transform_1, window_bounds = array<i64: 8, 16>}, {pipeline_mode = #tpu.pipeline_mode<synchronous>, transform_indices = @transform_2, window_bounds = array<i64: 4, 128>}, {pipeline_mode = #tpu.pipeline_mode<synchronous>, transform_indices = @transform_3, window_bounds = array<i64: 32, 128>}, {pipeline_mode = #tpu.pipeline_mode<synchronous>, transform_indices = @transform_4, window_bounds = array<i64: 1, 128>}, {pipeline_mode = #tpu.pipeline_mode<synchronous>, transform_indices = @transform_5, window_bounds = array<i64: 32, 128>}, {pipeline_mode = #tpu.pipeline_mode<synchronous>, transform_indices = @transform_6, window_bounds = array<i64: 32, 128>}, {pipeline_mode = #tpu.pipeline_mode<synchronous>, transform_indices = @transform_7, window_bounds = array<i64: 1, 128>}, {pipeline_mode = #tpu.pipeline_mode<synchronous>, transform_indices = @transform_8, window_bounds = array<i64: 32, 32>}, {pipeline_mode = #tpu.pipeline_mode<synchronous>, transform_indices = @transform_9, window_bounds = array<i64: 1, 32>}, {pipeline_mode = #tpu.pipeline_mode<synchronous>, transform_indices = @transform_10, window_bounds = array<i64: 16, 32>}, {pipeline_mode = #tpu.pipeline_mode<synchronous>, transform_indices = @transform_11, window_bounds = array<i64: 1, 32>}, {pipeline_mode = #tpu.pipeline_mode<synchronous>, transform_indices = @transform_12, window_bounds = array<i64: 32, 128>}, {pipeline_mode = #tpu.pipeline_mode<synchronous>, transform_indices = @transform_13, window_bounds = array<i64: 1, 128>}, {pipeline_mode = #tpu.pipeline_mode<synchronous>, transform_indices = @transform_14, window_bounds = array<i64: 32, 128>}, {pipeline_mode = #tpu.pipeline_mode<synchronous>, transform_indices = @transform_15, window_bounds = array<i64: 32, 128>}, {pipeline_mode = #tpu.pipeline_mode<synchronous>, transform_indices = @transform_16, window_bounds = array<i64: 1, 128>}, {pipeline_mode = #tpu.pipeline_mode<synchronous>, transform_indices = @transform_17, window_bounds = array<i64: 32, 4>}, {pipeline_mode = #tpu.pipeline_mode<synchronous>, transform_indices = @transform_18, window_bounds = array<i64: 1, 4>}, {pipeline_mode = #tpu.pipeline_mode<synchronous>, transform_indices = @transform_19, window_bounds = array<i64: 4, 128>}, {pipeline_mode = #tpu.pipeline_mode<synchronous>, transform_indices = @transform_20, window_bounds = array<i64: 32, 128>}, {pipeline_mode = #tpu.pipeline_mode<synchronous>, transform_indices = @transform_21, window_bounds = array<i64: 1, 128>}, {pipeline_mode = #tpu.pipeline_mode<synchronous>, transform_indices = @transform_22, window_bounds = array<i64: 32, 128>}, {pipeline_mode = #tpu.pipeline_mode<synchronous>, transform_indices = @transform_23, window_bounds = array<i64: 32, 128>}, {pipeline_mode = #tpu.pipeline_mode<synchronous>, transform_indices = @transform_24, window_bounds = array<i64: 1, 128>}, {pipeline_mode = #tpu.pipeline_mode<synchronous>, transform_indices = @transform_25, window_bounds = array<i64: 32, 1>}, {pipeline_mode = #tpu.pipeline_mode<synchronous>, transform_indices = @transform_26, window_bounds = array<i64: 1, 1>}, {pipeline_mode = #tpu.pipeline_mode<synchronous>, transform_indices = @transform_27, window_bounds = array<i64: 8, 4>}, {pipeline_mode = #tpu.pipeline_mode<synchronous>, transform_indices = @transform_28, window_bounds = array<i64: 8, 32>}, {pipeline_mode = #tpu.pipeline_mode<synchronous>, transform_indices = @transform_29, window_bounds = array<i64: 8, 1>}]} {
    %cst = arith.constant 0.000000e+00 : f32
    %0 = vector.broadcast %cst : f32 to vector<8x32xf32>
    %c0 = arith.constant 0 : index
    %c0_0 = arith.constant 0 : index
    %1 = vector.load %arg1[%c0, %c0_0] : memref<64x4xf32, #tpu.memory_space<vmem>>, vector<64x4xf32>
    %c0_1 = arith.constant 0 : index
    %c0_2 = arith.constant 0 : index
    %2 = vector.load %arg3[%c0_1, %c0_2] : memref<4x128xf32, #tpu.memory_space<vmem>>, vector<4x128xf32>
    %cst_3 = arith.constant dense<0.000000e+00> : vector<64x128xf32>
    %3 = tpu.matmul %1, %2, %cst_3 {dimension_numbers = #tpu.dot_dimension_numbers<[1], [0], [0], [1], [0, 0, 1, 1], [], []>} : vector<64x4xf32>, vector<4x128xf32>, vector<64x128xf32> -> vector<64x128xf32>
    %c0_4 = arith.constant 0 : index
    %c0_5 = arith.constant 0 : index
    %4 = vector.load %arg5[%c0_4, %c0_5] : memref<1x128xf32, #tpu.memory_space<vmem>>, vector<1x128xf32>
    %5 = vector.broadcast %4 : vector<1x128xf32> to vector<64x128xf32>
    %6 = arith.addf %3, %5 : vector<64x128xf32>
    %c0_6 = arith.constant 0 : index
    %c0_7 = arith.constant 0 : index
    %7 = vector.load %arg4[%c0_6, %c0_7] : memref<32x128xf32, #tpu.memory_space<vmem>>, vector<32x128xf32>
    %8 = vector.extract_strided_slice %6 {offsets = [0, 0], sizes = [8, 128], strides = [1, 1]} : vector<64x128xf32> to vector<8x128xf32>
    %cst_8 = arith.constant dense<0.000000e+00> : vector<8x128xf32>
    %9 = tpu.matmul %0, %7, %cst_8 {dimension_numbers = #tpu.dot_dimension_numbers<[1], [0], [0], [1], [0, 0, 1, 1], [], []>} : vector<8x32xf32>, vector<32x128xf32>, vector<8x128xf32> -> vector<8x128xf32>
    %10 = arith.addf %8, %9 : vector<8x128xf32>
    %11 = arith.negf %10 : vector<8x128xf32>
    %12 = math.exp %11 : vector<8x128xf32>
    %cst_9 = arith.constant 1.000000e+00 : f32
    %13 = vector.broadcast %cst_9 : f32 to vector<8x128xf32>
    %14 = arith.addf %13, %12 : vector<8x128xf32>
    %15 = arith.divf %13, %14 : vector<8x128xf32>
    %16 = vector.extract_strided_slice %15 {offsets = [0, 0], sizes = [8, 32], strides = [1, 1]} : vector<8x128xf32> to vector<8x32xf32>
    %17 = vector.extract_strided_slice %15 {offsets = [0, 32], sizes = [8, 32], strides = [1, 1]} : vector<8x128xf32> to vector<8x32xf32>
    %18 = vector.extract_strided_slice %15 {offsets = [0, 64], sizes = [8, 32], strides = [1, 1]} : vector<8x128xf32> to vector<8x32xf32>
    %cst_10 = arith.constant 2.000000e+00 : f32
    %19 = vector.broadcast %cst_10 : f32 to vector<8x32xf32>
    %20 = arith.mulf %19, %18 : vector<8x32xf32>
    %cst_11 = arith.constant 1.000000e+00 : f32
    %21 = vector.broadcast %cst_11 : f32 to vector<8x32xf32>
    %22 = arith.subf %20, %21 : vector<8x32xf32>
    %23 = vector.extract_strided_slice %15 {offsets = [0, 96], sizes = [8, 32], strides = [1, 1]} : vector<8x128xf32> to vector<8x32xf32>
    %24 = arith.mulf %17, %0 : vector<8x32xf32>
    %25 = arith.mulf %16, %22 : vector<8x32xf32>
    %26 = arith.addf %24, %25 : vector<8x32xf32>
    %27 = math.tanh %26 : vector<8x32xf32>
    %28 = arith.mulf %23, %27 : vector<8x32xf32>
    %c0_12 = arith.constant 0 : index
    %c0_13 = arith.constant 0 : index
    %29 = vector.load %arg31[%c0_12, %c0_13] : memref<64x32xf32, #tpu.memory_space<vmem>>, vector<8x32xf32>
    tpu.vector_store %arg31[%c0_12, %c0_13], %28 {strides = array<i32>} : memref<64x32xf32, #tpu.memory_space<vmem>>, vector<8x32xf32>,
    %30 = vector.extract_strided_slice %6 {offsets = [8, 0], sizes = [8, 128], strides = [1, 1]} : vector<64x128xf32> to vector<8x128xf32>
    %cst_14 = arith.constant dense<0.000000e+00> : vector<8x128xf32>
    %31 = tpu.matmul %28, %7, %cst_14 {dimension_numbers = #tpu.dot_dimension_numbers<[1], [0], [0], [1], [0, 0, 1, 1], [], []>} : vector<8x32xf32>, vector<32x128xf32>, vector<8x128xf32> -> vector<8x128xf32>
    %32 = arith.addf %30, %31 : vector<8x128xf32>
    %33 = arith.negf %32 : vector<8x128xf32>
    %34 = math.exp %33 : vector<8x128xf32>
    %cst_15 = arith.constant 1.000000e+00 : f32
    %35 = vector.broadcast %cst_15 : f32 to vector<8x128xf32>
    %36 = arith.addf %35, %34 : vector<8x128xf32>
    %37 = arith.divf %35, %36 : vector<8x128xf32>
    %38 = vector.extract_strided_slice %37 {offsets = [0, 0], sizes = [8, 32], strides = [1, 1]} : vector<8x128xf32> to vector<8x32xf32>
    %39 = vector.extract_strided_slice %37 {offsets = [0, 32], sizes = [8, 32], strides = [1, 1]} : vector<8x128xf32> to vector<8x32xf32>
    %40 = vector.extract_strided_slice %37 {offsets = [0, 64], sizes = [8, 32], strides = [1, 1]} : vector<8x128xf32> to vector<8x32xf32>
    %cst_16 = arith.constant 2.000000e+00 : f32
    %41 = vector.broadcast %cst_16 : f32 to vector<8x32xf32>
    %42 = arith.mulf %41, %40 : vector<8x32xf32>
    %cst_17 = arith.constant 1.000000e+00 : f32
    %43 = vector.broadcast %cst_17 : f32 to vector<8x32xf32>
    %44 = arith.subf %42, %43 : vector<8x32xf32>
    %45 = vector.extract_strided_slice %37 {offsets = [0, 96], sizes = [8, 32], strides = [1, 1]} : vector<8x128xf32> to vector<8x32xf32>
    %46 = arith.mulf %39, %26 : vector<8x32xf32>
    %47 = arith.mulf %38, %44 : vector<8x32xf32>
    %48 = arith.addf %46, %47 : vector<8x32xf32>
    %49 = math.tanh %48 : vector<8x32xf32>
    %50 = arith.mulf %45, %49 : vector<8x32xf32>
    %c8 = arith.constant 8 : index
    %c0_18 = arith.constant 0 : index
    %51 = vector.load %arg31[%c8, %c0_18] : memref<64x32xf32, #tpu.memory_space<vmem>>, vector<8x32xf32>
    tpu.vector_store %arg31[%c8, %c0_18], %50 {strides = array<i32>} : memref<64x32xf32, #tpu.memory_space<vmem>>, vector<8x32xf32>,
    %52 = vector.extract_strided_slice %6 {offsets = [16, 0], sizes = [8, 128], strides = [1, 1]} : vector<64x128xf32> to vector<8x128xf32>
    %cst_19 = arith.constant dense<0.000000e+00> : vector<8x128xf32>
    %53 = tpu.matmul %50, %7, %cst_19 {dimension_numbers = #tpu.dot_dimension_numbers<[1], [0], [0], [1], [0, 0, 1, 1], [], []>} : vector<8x32xf32>, vector<32x128xf32>, vector<8x128xf32> -> vector<8x128xf32>
    %54 = arith.addf %52, %53 : vector<8x128xf32>
    %55 = arith.negf %54 : vector<8x128xf32>
    %56 = math.exp %55 : vector<8x128xf32>
    %cst_20 = arith.constant 1.000000e+00 : f32
    %57 = vector.broadcast %cst_20 : f32 to vector<8x128xf32>
    %58 = arith.addf %57, %56 : vector<8x128xf32>
    %59 = arith.divf %57, %58 : vector<8x128xf32>
    %60 = vector.extract_strided_slice %59 {offsets = [0, 0], sizes = [8, 32], strides = [1, 1]} : vector<8x128xf32> to vector<8x32xf32>
    %61 = vector.extract_strided_slice %59 {offsets = [0, 32], sizes = [8, 32], strides = [1, 1]} : vector<8x128xf32> to vector<8x32xf32>
    %62 = vector.extract_strided_slice %59 {offsets = [0, 64], sizes = [8, 32], strides = [1, 1]} : vector<8x128xf32> to vector<8x32xf32>
    %cst_21 = arith.constant 2.000000e+00 : f32
    %63 = vector.broadcast %cst_21 : f32 to vector<8x32xf32>
    %64 = arith.mulf %63, %62 : vector<8x32xf32>
    %cst_22 = arith.constant 1.000000e+00 : f32
    %65 = vector.broadcast %cst_22 : f32 to vector<8x32xf32>
    %66 = arith.subf %64, %65 : vector<8x32xf32>
    %67 = vector.extract_strided_slice %59 {offsets = [0, 96], sizes = [8, 32], strides = [1, 1]} : vector<8x128xf32> to vector<8x32xf32>
    %68 = arith.mulf %61, %48 : vector<8x32xf32>
    %69 = arith.mulf %60, %66 : vector<8x32xf32>
    %70 = arith.addf %68, %69 : vector<8x32xf32>
    %71 = math.tanh %70 : vector<8x32xf32>
    %72 = arith.mulf %67, %71 : vector<8x32xf32>
    %c16 = arith.constant 16 : index
    %c0_23 = arith.constant 0 : index
    %73 = vector.load %arg31[%c16, %c0_23] : memref<64x32xf32, #tpu.memory_space<vmem>>, vector<8x32xf32>
    tpu.vector_store %arg31[%c16, %c0_23], %72 {strides = array<i32>} : memref<64x32xf32, #tpu.memory_space<vmem>>, vector<8x32xf32>,
    %74 = vector.extract_strided_slice %6 {offsets = [24, 0], sizes = [8, 128], strides = [1, 1]} : vector<64x128xf32> to vector<8x128xf32>
    %cst_24 = arith.constant dense<0.000000e+00> : vector<8x128xf32>
    %75 = tpu.matmul %72, %7, %cst_24 {dimension_numbers = #tpu.dot_dimension_numbers<[1], [0], [0], [1], [0, 0, 1, 1], [], []>} : vector<8x32xf32>, vector<32x128xf32>, vector<8x128xf32> -> vector<8x128xf32>
    %76 = arith.addf %74, %75 : vector<8x128xf32>
    %77 = arith.negf %76 : vector<8x128xf32>
    %78 = math.exp %77 : vector<8x128xf32>
    %cst_25 = arith.constant 1.000000e+00 : f32
    %79 = vector.broadcast %cst_25 : f32 to vector<8x128xf32>
    %80 = arith.addf %79, %78 : vector<8x128xf32>
    %81 = arith.divf %79, %80 : vector<8x128xf32>
    %82 = vector.extract_strided_slice %81 {offsets = [0, 0], sizes = [8, 32], strides = [1, 1]} : vector<8x128xf32> to vector<8x32xf32>
    %83 = vector.extract_strided_slice %81 {offsets = [0, 32], sizes = [8, 32], strides = [1, 1]} : vector<8x128xf32> to vector<8x32xf32>
    %84 = vector.extract_strided_slice %81 {offsets = [0, 64], sizes = [8, 32], strides = [1, 1]} : vector<8x128xf32> to vector<8x32xf32>
    %cst_26 = arith.constant 2.000000e+00 : f32
    %85 = vector.broadcast %cst_26 : f32 to vector<8x32xf32>
    %86 = arith.mulf %85, %84 : vector<8x32xf32>
    %cst_27 = arith.constant 1.000000e+00 : f32
    %87 = vector.broadcast %cst_27 : f32 to vector<8x32xf32>
    %88 = arith.subf %86, %87 : vector<8x32xf32>
    %89 = vector.extract_strided_slice %81 {offsets = [0, 96], sizes = [8, 32], strides = [1, 1]} : vector<8x128xf32> to vector<8x32xf32>
    %90 = arith.mulf %83, %70 : vector<8x32xf32>
    %91 = arith.mulf %82, %88 : vector<8x32xf32>
    %92 = arith.addf %90, %91 : vector<8x32xf32>
    %93 = math.tanh %92 : vector<8x32xf32>
    %94 = arith.mulf %89, %93 : vector<8x32xf32>
    %c24 = arith.constant 24 : index
    %c0_28 = arith.constant 0 : index
    %95 = vector.load %arg31[%c24, %c0_28] : memref<64x32xf32, #tpu.memory_space<vmem>>, vector<8x32xf32>
    tpu.vector_store %arg31[%c24, %c0_28], %94 {strides = array<i32>} : memref<64x32xf32, #tpu.memory_space<vmem>>, vector<8x32xf32>,
    %96 = vector.extract_strided_slice %6 {offsets = [32, 0], sizes = [8, 128], strides = [1, 1]} : vector<64x128xf32> to vector<8x128xf32>
    %cst_29 = arith.constant dense<0.000000e+00> : vector<8x128xf32>
    %97 = tpu.matmul %94, %7, %cst_29 {dimension_numbers = #tpu.dot_dimension_numbers<[1], [0], [0], [1], [0, 0, 1, 1], [], []>} : vector<8x32xf32>, vector<32x128xf32>, vector<8x128xf32> -> vector<8x128xf32>
    %98 = arith.addf %96, %97 : vector<8x128xf32>
    %99 = arith.negf %98 : vector<8x128xf32>
    %100 = math.exp %99 : vector<8x128xf32>
    %cst_30 = arith.constant 1.000000e+00 : f32
    %101 = vector.broadcast %cst_30 : f32 to vector<8x128xf32>
    %102 = arith.addf %101, %100 : vector<8x128xf32>
    %103 = arith.divf %101, %102 : vector<8x128xf32>
    %104 = vector.extract_strided_slice %103 {offsets = [0, 0], sizes = [8, 32], strides = [1, 1]} : vector<8x128xf32> to vector<8x32xf32>
    %105 = vector.extract_strided_slice %103 {offsets = [0, 32], sizes = [8, 32], strides = [1, 1]} : vector<8x128xf32> to vector<8x32xf32>
    %106 = vector.extract_strided_slice %103 {offsets = [0, 64], sizes = [8, 32], strides = [1, 1]} : vector<8x128xf32> to vector<8x32xf32>
    %cst_31 = arith.constant 2.000000e+00 : f32
    %107 = vector.broadcast %cst_31 : f32 to vector<8x32xf32>
    %108 = arith.mulf %107, %106 : vector<8x32xf32>
    %cst_32 = arith.constant 1.000000e+00 : f32
    %109 = vector.broadcast %cst_32 : f32 to vector<8x32xf32>
    %110 = arith.subf %108, %109 : vector<8x32xf32>
    %111 = vector.extract_strided_slice %103 {offsets = [0, 96], sizes = [8, 32], strides = [1, 1]} : vector<8x128xf32> to vector<8x32xf32>
    %112 = arith.mulf %105, %92 : vector<8x32xf32>
    %113 = arith.mulf %104, %110 : vector<8x32xf32>
    %114 = arith.addf %112, %113 : vector<8x32xf32>
    %115 = math.tanh %114 : vector<8x32xf32>
    %116 = arith.mulf %111, %115 : vector<8x32xf32>
    %c32 = arith.constant 32 : index
    %c0_33 = arith.constant 0 : index
    %117 = vector.load %arg31[%c32, %c0_33] : memref<64x32xf32, #tpu.memory_space<vmem>>, vector<8x32xf32>
    tpu.vector_store %arg31[%c32, %c0_33], %116 {strides = array<i32>} : memref<64x32xf32, #tpu.memory_space<vmem>>, vector<8x32xf32>,
    %118 = vector.extract_strided_slice %6 {offsets = [40, 0], sizes = [8, 128], strides = [1, 1]} : vector<64x128xf32> to vector<8x128xf32>
    %cst_34 = arith.constant dense<0.000000e+00> : vector<8x128xf32>
    %119 = tpu.matmul %116, %7, %cst_34 {dimension_numbers = #tpu.dot_dimension_numbers<[1], [0], [0], [1], [0, 0, 1, 1], [], []>} : vector<8x32xf32>, vector<32x128xf32>, vector<8x128xf32> -> vector<8x128xf32>
    %120 = arith.addf %118, %119 : vector<8x128xf32>
    %121 = arith.negf %120 : vector<8x128xf32>
    %122 = math.exp %121 : vector<8x128xf32>
    %cst_35 = arith.constant 1.000000e+00 : f32
    %123 = vector.broadcast %cst_35 : f32 to vector<8x128xf32>
    %124 = arith.addf %123, %122 : vector<8x128xf32>
    %125 = arith.divf %123, %124 : vector<8x128xf32>
    %126 = vector.extract_strided_slice %125 {offsets = [0, 0], sizes = [8, 32], strides = [1, 1]} : vector<8x128xf32> to vector<8x32xf32>
    %127 = vector.extract_strided_slice %125 {offsets = [0, 32], sizes = [8, 32], strides = [1, 1]} : vector<8x128xf32> to vector<8x32xf32>
    %128 = vector.extract_strided_slice %125 {offsets = [0, 64], sizes = [8, 32], strides = [1, 1]} : vector<8x128xf32> to vector<8x32xf32>
    %cst_36 = arith.constant 2.000000e+00 : f32
    %129 = vector.broadcast %cst_36 : f32 to vector<8x32xf32>
    %130 = arith.mulf %129, %128 : vector<8x32xf32>
    %cst_37 = arith.constant 1.000000e+00 : f32
    %131 = vector.broadcast %cst_37 : f32 to vector<8x32xf32>
    %132 = arith.subf %130, %131 : vector<8x32xf32>
    %133 = vector.extract_strided_slice %125 {offsets = [0, 96], sizes = [8, 32], strides = [1, 1]} : vector<8x128xf32> to vector<8x32xf32>
    %134 = arith.mulf %127, %114 : vector<8x32xf32>
    %135 = arith.mulf %126, %132 : vector<8x32xf32>
    %136 = arith.addf %134, %135 : vector<8x32xf32>
    %137 = math.tanh %136 : vector<8x32xf32>
    %138 = arith.mulf %133, %137 : vector<8x32xf32>
    %c40 = arith.constant 40 : index
    %c0_38 = arith.constant 0 : index
    %139 = vector.load %arg31[%c40, %c0_38] : memref<64x32xf32, #tpu.memory_space<vmem>>, vector<8x32xf32>
    tpu.vector_store %arg31[%c40, %c0_38], %138 {strides = array<i32>} : memref<64x32xf32, #tpu.memory_space<vmem>>, vector<8x32xf32>,
    %140 = vector.extract_strided_slice %6 {offsets = [48, 0], sizes = [8, 128], strides = [1, 1]} : vector<64x128xf32> to vector<8x128xf32>
    %cst_39 = arith.constant dense<0.000000e+00> : vector<8x128xf32>
    %141 = tpu.matmul %138, %7, %cst_39 {dimension_numbers = #tpu.dot_dimension_numbers<[1], [0], [0], [1], [0, 0, 1, 1], [], []>} : vector<8x32xf32>, vector<32x128xf32>, vector<8x128xf32> -> vector<8x128xf32>
    %142 = arith.addf %140, %141 : vector<8x128xf32>
    %143 = arith.negf %142 : vector<8x128xf32>
    %144 = math.exp %143 : vector<8x128xf32>
    %cst_40 = arith.constant 1.000000e+00 : f32
    %145 = vector.broadcast %cst_40 : f32 to vector<8x128xf32>
    %146 = arith.addf %145, %144 : vector<8x128xf32>
    %147 = arith.divf %145, %146 : vector<8x128xf32>
    %148 = vector.extract_strided_slice %147 {offsets = [0, 0], sizes = [8, 32], strides = [1, 1]} : vector<8x128xf32> to vector<8x32xf32>
    %149 = vector.extract_strided_slice %147 {offsets = [0, 32], sizes = [8, 32], strides = [1, 1]} : vector<8x128xf32> to vector<8x32xf32>
    %150 = vector.extract_strided_slice %147 {offsets = [0, 64], sizes = [8, 32], strides = [1, 1]} : vector<8x128xf32> to vector<8x32xf32>
    %cst_41 = arith.constant 2.000000e+00 : f32
    %151 = vector.broadcast %cst_41 : f32 to vector<8x32xf32>
    %152 = arith.mulf %151, %150 : vector<8x32xf32>
    %cst_42 = arith.constant 1.000000e+00 : f32
    %153 = vector.broadcast %cst_42 : f32 to vector<8x32xf32>
    %154 = arith.subf %152, %153 : vector<8x32xf32>
    %155 = vector.extract_strided_slice %147 {offsets = [0, 96], sizes = [8, 32], strides = [1, 1]} : vector<8x128xf32> to vector<8x32xf32>
    %156 = arith.mulf %149, %136 : vector<8x32xf32>
    %157 = arith.mulf %148, %154 : vector<8x32xf32>
    %158 = arith.addf %156, %157 : vector<8x32xf32>
    %159 = math.tanh %158 : vector<8x32xf32>
    %160 = arith.mulf %155, %159 : vector<8x32xf32>
    %c48 = arith.constant 48 : index
    %c0_43 = arith.constant 0 : index
    %161 = vector.load %arg31[%c48, %c0_43] : memref<64x32xf32, #tpu.memory_space<vmem>>, vector<8x32xf32>
    tpu.vector_store %arg31[%c48, %c0_43], %160 {strides = array<i32>} : memref<64x32xf32, #tpu.memory_space<vmem>>, vector<8x32xf32>,
    %162 = vector.extract_strided_slice %6 {offsets = [56, 0], sizes = [8, 128], strides = [1, 1]} : vector<64x128xf32> to vector<8x128xf32>
    %cst_44 = arith.constant dense<0.000000e+00> : vector<8x128xf32>
    %163 = tpu.matmul %160, %7, %cst_44 {dimension_numbers = #tpu.dot_dimension_numbers<[1], [0], [0], [1], [0, 0, 1, 1], [], []>} : vector<8x32xf32>, vector<32x128xf32>, vector<8x128xf32> -> vector<8x128xf32>
    %164 = arith.addf %162, %163 : vector<8x128xf32>
    %165 = arith.negf %164 : vector<8x128xf32>
    %166 = math.exp %165 : vector<8x128xf32>
    %cst_45 = arith.constant 1.000000e+00 : f32
    %167 = vector.broadcast %cst_45 : f32 to vector<8x128xf32>
    %168 = arith.addf %167, %166 : vector<8x128xf32>
    %169 = arith.divf %167, %168 : vector<8x128xf32>
    %170 = vector.extract_strided_slice %169 {offsets = [0, 0], sizes = [8, 32], strides = [1, 1]} : vector<8x128xf32> to vector<8x32xf32>
    %171 = vector.extract_strided_slice %169 {offsets = [0, 32], sizes = [8, 32], strides = [1, 1]} : vector<8x128xf32> to vector<8x32xf32>
    %172 = vector.extract_strided_slice %169 {offsets = [0, 64], sizes = [8, 32], strides = [1, 1]} : vector<8x128xf32> to vector<8x32xf32>
    %cst_46 = arith.constant 2.000000e+00 : f32
    %173 = vector.broadcast %cst_46 : f32 to vector<8x32xf32>
    %174 = arith.mulf %173, %172 : vector<8x32xf32>
    %cst_47 = arith.constant 1.000000e+00 : f32
    %175 = vector.broadcast %cst_47 : f32 to vector<8x32xf32>
    %176 = arith.subf %174, %175 : vector<8x32xf32>
    %177 = vector.extract_strided_slice %169 {offsets = [0, 96], sizes = [8, 32], strides = [1, 1]} : vector<8x128xf32> to vector<8x32xf32>
    %178 = arith.mulf %171, %158 : vector<8x32xf32>
    %179 = arith.mulf %170, %176 : vector<8x32xf32>
    %180 = arith.addf %178, %179 : vector<8x32xf32>
    %181 = math.tanh %180 : vector<8x32xf32>
    %182 = arith.mulf %177, %181 : vector<8x32xf32>
    %c56 = arith.constant 56 : index
    %c0_48 = arith.constant 0 : index
    %183 = vector.load %arg31[%c56, %c0_48] : memref<64x32xf32, #tpu.memory_space<vmem>>, vector<8x32xf32>
    tpu.vector_store %arg31[%c56, %c0_48], %182 {strides = array<i32>} : memref<64x32xf32, #tpu.memory_space<vmem>>, vector<8x32xf32>,
    %c0_49 = arith.constant 0 : index
    %c0_50 = arith.constant 0 : index
    %184 = vector.load %arg31[%c0_49, %c0_50] : memref<64x32xf32, #tpu.memory_space<vmem>>, vector<64x32xf32>
    %c0_51 = arith.constant 0 : index
    %c0_52 = arith.constant 0 : index
    %185 = vector.load %arg6[%c0_51, %c0_52] : memref<32x128xf32, #tpu.memory_space<vmem>>, vector<32x128xf32>
    %cst_53 = arith.constant dense<0.000000e+00> : vector<64x128xf32>
    %186 = tpu.matmul %184, %185, %cst_53 {dimension_numbers = #tpu.dot_dimension_numbers<[1], [0], [0], [1], [0, 0, 1, 1], [], []>} : vector<64x32xf32>, vector<32x128xf32>, vector<64x128xf32> -> vector<64x128xf32>
    %c0_54 = arith.constant 0 : index
    %c0_55 = arith.constant 0 : index
    %187 = vector.load %arg8[%c0_54, %c0_55] : memref<1x128xf32, #tpu.memory_space<vmem>>, vector<1x128xf32>
    %188 = vector.broadcast %187 : vector<1x128xf32> to vector<64x128xf32>
    %189 = arith.addf %186, %188 : vector<64x128xf32>
    %c0_56 = arith.constant 0 : index
    %c0_57 = arith.constant 0 : index
    %190 = vector.load %arg7[%c0_56, %c0_57] : memref<32x128xf32, #tpu.memory_space<vmem>>, vector<32x128xf32>
    %191 = vector.extract_strided_slice %189 {offsets = [0, 0], sizes = [8, 128], strides = [1, 1]} : vector<64x128xf32> to vector<8x128xf32>
    %cst_58 = arith.constant dense<0.000000e+00> : vector<8x128xf32>
    %192 = tpu.matmul %0, %190, %cst_58 {dimension_numbers = #tpu.dot_dimension_numbers<[1], [0], [0], [1], [0, 0, 1, 1], [], []>} : vector<8x32xf32>, vector<32x128xf32>, vector<8x128xf32> -> vector<8x128xf32>
    %193 = arith.addf %191, %192 : vector<8x128xf32>
    %194 = arith.negf %193 : vector<8x128xf32>
    %195 = math.exp %194 : vector<8x128xf32>
    %cst_59 = arith.constant 1.000000e+00 : f32
    %196 = vector.broadcast %cst_59 : f32 to vector<8x128xf32>
    %197 = arith.addf %196, %195 : vector<8x128xf32>
    %198 = arith.divf %196, %197 : vector<8x128xf32>
    %199 = vector.extract_strided_slice %198 {offsets = [0, 0], sizes = [8, 32], strides = [1, 1]} : vector<8x128xf32> to vector<8x32xf32>
    %200 = vector.extract_strided_slice %198 {offsets = [0, 32], sizes = [8, 32], strides = [1, 1]} : vector<8x128xf32> to vector<8x32xf32>
    %201 = vector.extract_strided_slice %198 {offsets = [0, 64], sizes = [8, 32], strides = [1, 1]} : vector<8x128xf32> to vector<8x32xf32>
    %cst_60 = arith.constant 2.000000e+00 : f32
    %202 = vector.broadcast %cst_60 : f32 to vector<8x32xf32>
    %203 = arith.mulf %202, %201 : vector<8x32xf32>
    %cst_61 = arith.constant 1.000000e+00 : f32
    %204 = vector.broadcast %cst_61 : f32 to vector<8x32xf32>
    %205 = arith.subf %203, %204 : vector<8x32xf32>
    %206 = vector.extract_strided_slice %198 {offsets = [0, 96], sizes = [8, 32], strides = [1, 1]} : vector<8x128xf32> to vector<8x32xf32>
    %207 = arith.mulf %200, %0 : vector<8x32xf32>
    %208 = arith.mulf %199, %205 : vector<8x32xf32>
    %209 = arith.addf %207, %208 : vector<8x32xf32>
    %210 = math.tanh %209 : vector<8x32xf32>
    %211 = arith.mulf %206, %210 : vector<8x32xf32>
    %212 = vector.extract_strided_slice %189 {offsets = [8, 0], sizes = [8, 128], strides = [1, 1]} : vector<64x128xf32> to vector<8x128xf32>
    %cst_62 = arith.constant dense<0.000000e+00> : vector<8x128xf32>
    %213 = tpu.matmul %211, %190, %cst_62 {dimension_numbers = #tpu.dot_dimension_numbers<[1], [0], [0], [1], [0, 0, 1, 1], [], []>} : vector<8x32xf32>, vector<32x128xf32>, vector<8x128xf32> -> vector<8x128xf32>
    %214 = arith.addf %212, %213 : vector<8x128xf32>
    %215 = arith.negf %214 : vector<8x128xf32>
    %216 = math.exp %215 : vector<8x128xf32>
    %cst_63 = arith.constant 1.000000e+00 : f32
    %217 = vector.broadcast %cst_63 : f32 to vector<8x128xf32>
    %218 = arith.addf %217, %216 : vector<8x128xf32>
    %219 = arith.divf %217, %218 : vector<8x128xf32>
    %220 = vector.extract_strided_slice %219 {offsets = [0, 0], sizes = [8, 32], strides = [1, 1]} : vector<8x128xf32> to vector<8x32xf32>
    %221 = vector.extract_strided_slice %219 {offsets = [0, 32], sizes = [8, 32], strides = [1, 1]} : vector<8x128xf32> to vector<8x32xf32>
    %222 = vector.extract_strided_slice %219 {offsets = [0, 64], sizes = [8, 32], strides = [1, 1]} : vector<8x128xf32> to vector<8x32xf32>
    %cst_64 = arith.constant 2.000000e+00 : f32
    %223 = vector.broadcast %cst_64 : f32 to vector<8x32xf32>
    %224 = arith.mulf %223, %222 : vector<8x32xf32>
    %cst_65 = arith.constant 1.000000e+00 : f32
    %225 = vector.broadcast %cst_65 : f32 to vector<8x32xf32>
    %226 = arith.subf %224, %225 : vector<8x32xf32>
    %227 = vector.extract_strided_slice %219 {offsets = [0, 96], sizes = [8, 32], strides = [1, 1]} : vector<8x128xf32> to vector<8x32xf32>
    %228 = arith.mulf %221, %209 : vector<8x32xf32>
    %229 = arith.mulf %220, %226 : vector<8x32xf32>
    %230 = arith.addf %228, %229 : vector<8x32xf32>
    %231 = math.tanh %230 : vector<8x32xf32>
    %232 = arith.mulf %227, %231 : vector<8x32xf32>
    %233 = vector.extract_strided_slice %189 {offsets = [16, 0], sizes = [8, 128], strides = [1, 1]} : vector<64x128xf32> to vector<8x128xf32>
    %cst_66 = arith.constant dense<0.000000e+00> : vector<8x128xf32>
    %234 = tpu.matmul %232, %190, %cst_66 {dimension_numbers = #tpu.dot_dimension_numbers<[1], [0], [0], [1], [0, 0, 1, 1], [], []>} : vector<8x32xf32>, vector<32x128xf32>, vector<8x128xf32> -> vector<8x128xf32>
    %235 = arith.addf %233, %234 : vector<8x128xf32>
    %236 = arith.negf %235 : vector<8x128xf32>
    %237 = math.exp %236 : vector<8x128xf32>
    %cst_67 = arith.constant 1.000000e+00 : f32
    %238 = vector.broadcast %cst_67 : f32 to vector<8x128xf32>
    %239 = arith.addf %238, %237 : vector<8x128xf32>
    %240 = arith.divf %238, %239 : vector<8x128xf32>
    %241 = vector.extract_strided_slice %240 {offsets = [0, 0], sizes = [8, 32], strides = [1, 1]} : vector<8x128xf32> to vector<8x32xf32>
    %242 = vector.extract_strided_slice %240 {offsets = [0, 32], sizes = [8, 32], strides = [1, 1]} : vector<8x128xf32> to vector<8x32xf32>
    %243 = vector.extract_strided_slice %240 {offsets = [0, 64], sizes = [8, 32], strides = [1, 1]} : vector<8x128xf32> to vector<8x32xf32>
    %cst_68 = arith.constant 2.000000e+00 : f32
    %244 = vector.broadcast %cst_68 : f32 to vector<8x32xf32>
    %245 = arith.mulf %244, %243 : vector<8x32xf32>
    %cst_69 = arith.constant 1.000000e+00 : f32
    %246 = vector.broadcast %cst_69 : f32 to vector<8x32xf32>
    %247 = arith.subf %245, %246 : vector<8x32xf32>
    %248 = vector.extract_strided_slice %240 {offsets = [0, 96], sizes = [8, 32], strides = [1, 1]} : vector<8x128xf32> to vector<8x32xf32>
    %249 = arith.mulf %242, %230 : vector<8x32xf32>
    %250 = arith.mulf %241, %247 : vector<8x32xf32>
    %251 = arith.addf %249, %250 : vector<8x32xf32>
    %252 = math.tanh %251 : vector<8x32xf32>
    %253 = arith.mulf %248, %252 : vector<8x32xf32>
    %254 = vector.extract_strided_slice %189 {offsets = [24, 0], sizes = [8, 128], strides = [1, 1]} : vector<64x128xf32> to vector<8x128xf32>
    %cst_70 = arith.constant dense<0.000000e+00> : vector<8x128xf32>
    %255 = tpu.matmul %253, %190, %cst_70 {dimension_numbers = #tpu.dot_dimension_numbers<[1], [0], [0], [1], [0, 0, 1, 1], [], []>} : vector<8x32xf32>, vector<32x128xf32>, vector<8x128xf32> -> vector<8x128xf32>
    %256 = arith.addf %254, %255 : vector<8x128xf32>
    %257 = arith.negf %256 : vector<8x128xf32>
    %258 = math.exp %257 : vector<8x128xf32>
    %cst_71 = arith.constant 1.000000e+00 : f32
    %259 = vector.broadcast %cst_71 : f32 to vector<8x128xf32>
    %260 = arith.addf %259, %258 : vector<8x128xf32>
    %261 = arith.divf %259, %260 : vector<8x128xf32>
    %262 = vector.extract_strided_slice %261 {offsets = [0, 0], sizes = [8, 32], strides = [1, 1]} : vector<8x128xf32> to vector<8x32xf32>
    %263 = vector.extract_strided_slice %261 {offsets = [0, 32], sizes = [8, 32], strides = [1, 1]} : vector<8x128xf32> to vector<8x32xf32>
    %264 = vector.extract_strided_slice %261 {offsets = [0, 64], sizes = [8, 32], strides = [1, 1]} : vector<8x128xf32> to vector<8x32xf32>
    %cst_72 = arith.constant 2.000000e+00 : f32
    %265 = vector.broadcast %cst_72 : f32 to vector<8x32xf32>
    %266 = arith.mulf %265, %264 : vector<8x32xf32>
    %cst_73 = arith.constant 1.000000e+00 : f32
    %267 = vector.broadcast %cst_73 : f32 to vector<8x32xf32>
    %268 = arith.subf %266, %267 : vector<8x32xf32>
    %269 = vector.extract_strided_slice %261 {offsets = [0, 96], sizes = [8, 32], strides = [1, 1]} : vector<8x128xf32> to vector<8x32xf32>
    %270 = arith.mulf %263, %251 : vector<8x32xf32>
    %271 = arith.mulf %262, %268 : vector<8x32xf32>
    %272 = arith.addf %270, %271 : vector<8x32xf32>
    %273 = math.tanh %272 : vector<8x32xf32>
    %274 = arith.mulf %269, %273 : vector<8x32xf32>
    %275 = vector.extract_strided_slice %189 {offsets = [32, 0], sizes = [8, 128], strides = [1, 1]} : vector<64x128xf32> to vector<8x128xf32>
    %cst_74 = arith.constant dense<0.000000e+00> : vector<8x128xf32>
    %276 = tpu.matmul %274, %190, %cst_74 {dimension_numbers = #tpu.dot_dimension_numbers<[1], [0], [0], [1], [0, 0, 1, 1], [], []>} : vector<8x32xf32>, vector<32x128xf32>, vector<8x128xf32> -> vector<8x128xf32>
    %277 = arith.addf %275, %276 : vector<8x128xf32>
    %278 = arith.negf %277 : vector<8x128xf32>
    %279 = math.exp %278 : vector<8x128xf32>
    %cst_75 = arith.constant 1.000000e+00 : f32
    %280 = vector.broadcast %cst_75 : f32 to vector<8x128xf32>
    %281 = arith.addf %280, %279 : vector<8x128xf32>
    %282 = arith.divf %280, %281 : vector<8x128xf32>
    %283 = vector.extract_strided_slice %282 {offsets = [0, 0], sizes = [8, 32], strides = [1, 1]} : vector<8x128xf32> to vector<8x32xf32>
    %284 = vector.extract_strided_slice %282 {offsets = [0, 32], sizes = [8, 32], strides = [1, 1]} : vector<8x128xf32> to vector<8x32xf32>
    %285 = vector.extract_strided_slice %282 {offsets = [0, 64], sizes = [8, 32], strides = [1, 1]} : vector<8x128xf32> to vector<8x32xf32>
    %cst_76 = arith.constant 2.000000e+00 : f32
    %286 = vector.broadcast %cst_76 : f32 to vector<8x32xf32>
    %287 = arith.mulf %286, %285 : vector<8x32xf32>
    %cst_77 = arith.constant 1.000000e+00 : f32
    %288 = vector.broadcast %cst_77 : f32 to vector<8x32xf32>
    %289 = arith.subf %287, %288 : vector<8x32xf32>
    %290 = vector.extract_strided_slice %282 {offsets = [0, 96], sizes = [8, 32], strides = [1, 1]} : vector<8x128xf32> to vector<8x32xf32>
    %291 = arith.mulf %284, %272 : vector<8x32xf32>
    %292 = arith.mulf %283, %289 : vector<8x32xf32>
    %293 = arith.addf %291, %292 : vector<8x32xf32>
    %294 = math.tanh %293 : vector<8x32xf32>
    %295 = arith.mulf %290, %294 : vector<8x32xf32>
    %296 = vector.extract_strided_slice %189 {offsets = [40, 0], sizes = [8, 128], strides = [1, 1]} : vector<64x128xf32> to vector<8x128xf32>
    %cst_78 = arith.constant dense<0.000000e+00> : vector<8x128xf32>
    %297 = tpu.matmul %295, %190, %cst_78 {dimension_numbers = #tpu.dot_dimension_numbers<[1], [0], [0], [1], [0, 0, 1, 1], [], []>} : vector<8x32xf32>, vector<32x128xf32>, vector<8x128xf32> -> vector<8x128xf32>
    %298 = arith.addf %296, %297 : vector<8x128xf32>
    %299 = arith.negf %298 : vector<8x128xf32>
    %300 = math.exp %299 : vector<8x128xf32>
    %cst_79 = arith.constant 1.000000e+00 : f32
    %301 = vector.broadcast %cst_79 : f32 to vector<8x128xf32>
    %302 = arith.addf %301, %300 : vector<8x128xf32>
    %303 = arith.divf %301, %302 : vector<8x128xf32>
    %304 = vector.extract_strided_slice %303 {offsets = [0, 0], sizes = [8, 32], strides = [1, 1]} : vector<8x128xf32> to vector<8x32xf32>
    %305 = vector.extract_strided_slice %303 {offsets = [0, 32], sizes = [8, 32], strides = [1, 1]} : vector<8x128xf32> to vector<8x32xf32>
    %306 = vector.extract_strided_slice %303 {offsets = [0, 64], sizes = [8, 32], strides = [1, 1]} : vector<8x128xf32> to vector<8x32xf32>
    %cst_80 = arith.constant 2.000000e+00 : f32
    %307 = vector.broadcast %cst_80 : f32 to vector<8x32xf32>
    %308 = arith.mulf %307, %306 : vector<8x32xf32>
    %cst_81 = arith.constant 1.000000e+00 : f32
    %309 = vector.broadcast %cst_81 : f32 to vector<8x32xf32>
    %310 = arith.subf %308, %309 : vector<8x32xf32>
    %311 = vector.extract_strided_slice %303 {offsets = [0, 96], sizes = [8, 32], strides = [1, 1]} : vector<8x128xf32> to vector<8x32xf32>
    %312 = arith.mulf %305, %293 : vector<8x32xf32>
    %313 = arith.mulf %304, %310 : vector<8x32xf32>
    %314 = arith.addf %312, %313 : vector<8x32xf32>
    %315 = math.tanh %314 : vector<8x32xf32>
    %316 = arith.mulf %311, %315 : vector<8x32xf32>
    %317 = vector.extract_strided_slice %189 {offsets = [48, 0], sizes = [8, 128], strides = [1, 1]} : vector<64x128xf32> to vector<8x128xf32>
    %cst_82 = arith.constant dense<0.000000e+00> : vector<8x128xf32>
    %318 = tpu.matmul %316, %190, %cst_82 {dimension_numbers = #tpu.dot_dimension_numbers<[1], [0], [0], [1], [0, 0, 1, 1], [], []>} : vector<8x32xf32>, vector<32x128xf32>, vector<8x128xf32> -> vector<8x128xf32>
    %319 = arith.addf %317, %318 : vector<8x128xf32>
    %320 = arith.negf %319 : vector<8x128xf32>
    %321 = math.exp %320 : vector<8x128xf32>
    %cst_83 = arith.constant 1.000000e+00 : f32
    %322 = vector.broadcast %cst_83 : f32 to vector<8x128xf32>
    %323 = arith.addf %322, %321 : vector<8x128xf32>
    %324 = arith.divf %322, %323 : vector<8x128xf32>
    %325 = vector.extract_strided_slice %324 {offsets = [0, 0], sizes = [8, 32], strides = [1, 1]} : vector<8x128xf32> to vector<8x32xf32>
    %326 = vector.extract_strided_slice %324 {offsets = [0, 32], sizes = [8, 32], strides = [1, 1]} : vector<8x128xf32> to vector<8x32xf32>
    %327 = vector.extract_strided_slice %324 {offsets = [0, 64], sizes = [8, 32], strides = [1, 1]} : vector<8x128xf32> to vector<8x32xf32>
    %cst_84 = arith.constant 2.000000e+00 : f32
    %328 = vector.broadcast %cst_84 : f32 to vector<8x32xf32>
    %329 = arith.mulf %328, %327 : vector<8x32xf32>
    %cst_85 = arith.constant 1.000000e+00 : f32
    %330 = vector.broadcast %cst_85 : f32 to vector<8x32xf32>
    %331 = arith.subf %329, %330 : vector<8x32xf32>
    %332 = vector.extract_strided_slice %324 {offsets = [0, 96], sizes = [8, 32], strides = [1, 1]} : vector<8x128xf32> to vector<8x32xf32>
    %333 = arith.mulf %326, %314 : vector<8x32xf32>
    %334 = arith.mulf %325, %331 : vector<8x32xf32>
    %335 = arith.addf %333, %334 : vector<8x32xf32>
    %336 = math.tanh %335 : vector<8x32xf32>
    %337 = arith.mulf %332, %336 : vector<8x32xf32>
    %338 = vector.extract_strided_slice %189 {offsets = [56, 0], sizes = [8, 128], strides = [1, 1]} : vector<64x128xf32> to vector<8x128xf32>
    %cst_86 = arith.constant dense<0.000000e+00> : vector<8x128xf32>
    %339 = tpu.matmul %337, %190, %cst_86 {dimension_numbers = #tpu.dot_dimension_numbers<[1], [0], [0], [1], [0, 0, 1, 1], [], []>} : vector<8x32xf32>, vector<32x128xf32>, vector<8x128xf32> -> vector<8x128xf32>
    %340 = arith.addf %338, %339 : vector<8x128xf32>
    %341 = arith.negf %340 : vector<8x128xf32>
    %342 = math.exp %341 : vector<8x128xf32>
    %cst_87 = arith.constant 1.000000e+00 : f32
    %343 = vector.broadcast %cst_87 : f32 to vector<8x128xf32>
    %344 = arith.addf %343, %342 : vector<8x128xf32>
    %345 = arith.divf %343, %344 : vector<8x128xf32>
    %346 = vector.extract_strided_slice %345 {offsets = [0, 0], sizes = [8, 32], strides = [1, 1]} : vector<8x128xf32> to vector<8x32xf32>
    %347 = vector.extract_strided_slice %345 {offsets = [0, 32], sizes = [8, 32], strides = [1, 1]} : vector<8x128xf32> to vector<8x32xf32>
    %348 = vector.extract_strided_slice %345 {offsets = [0, 64], sizes = [8, 32], strides = [1, 1]} : vector<8x128xf32> to vector<8x32xf32>
    %cst_88 = arith.constant 2.000000e+00 : f32
    %349 = vector.broadcast %cst_88 : f32 to vector<8x32xf32>
    %350 = arith.mulf %349, %348 : vector<8x32xf32>
    %cst_89 = arith.constant 1.000000e+00 : f32
    %351 = vector.broadcast %cst_89 : f32 to vector<8x32xf32>
    %352 = arith.subf %350, %351 : vector<8x32xf32>
    %353 = vector.extract_strided_slice %345 {offsets = [0, 96], sizes = [8, 32], strides = [1, 1]} : vector<8x128xf32> to vector<8x32xf32>
    %354 = arith.mulf %347, %335 : vector<8x32xf32>
    %355 = arith.mulf %346, %352 : vector<8x32xf32>
    %356 = arith.addf %354, %355 : vector<8x32xf32>
    %357 = math.tanh %356 : vector<8x32xf32>
    %358 = arith.mulf %353, %357 : vector<8x32xf32>
    %c0_90 = arith.constant 0 : index
    %c0_91 = arith.constant 0 : index
    %359 = vector.load %arg9[%c0_90, %c0_91] : memref<32x32xf32, #tpu.memory_space<vmem>>, vector<32x32xf32>
    %cst_92 = arith.constant dense<0.000000e+00> : vector<8x32xf32>
    %360 = tpu.matmul %358, %359, %cst_92 {dimension_numbers = #tpu.dot_dimension_numbers<[1], [0], [0], [1], [0, 0, 1, 1], [], []>} : vector<8x32xf32>, vector<32x32xf32>, vector<8x32xf32> -> vector<8x32xf32>
    %c0_93 = arith.constant 0 : index
    %c0_94 = arith.constant 0 : index
    %361 = vector.load %arg10[%c0_93, %c0_94] : memref<1x32xf32, #tpu.memory_space<vmem>>, vector<1x32xf32>
    %362 = vector.broadcast %361 : vector<1x32xf32> to vector<8x32xf32>
    %363 = arith.addf %360, %362 : vector<8x32xf32>
    %364 = vector.extract_strided_slice %363 {offsets = [0, 0], sizes = [8, 16], strides = [1, 1]} : vector<8x32xf32> to vector<8x16xf32>
    %365 = vector.extract_strided_slice %363 {offsets = [0, 16], sizes = [8, 16], strides = [1, 1]} : vector<8x32xf32> to vector<8x16xf32>
    %c0_95 = arith.constant 0 : index
    %c0_96 = arith.constant 0 : index
    %366 = vector.load %arg2[%c0_95, %c0_96] : memref<8x16xf32, #tpu.memory_space<vmem>>, vector<8x16xf32>
    %cst_97 = arith.constant 5.000000e-01 : f32
    %367 = vector.broadcast %cst_97 : f32 to vector<8x16xf32>
    %368 = arith.mulf %367, %365 : vector<8x16xf32>
    %369 = math.exp %368 : vector<8x16xf32>
    %370 = arith.mulf %366, %369 : vector<8x16xf32>
    %371 = arith.addf %364, %370 : vector<8x16xf32>
    %c0_98 = arith.constant 0 : index
    %c0_99 = arith.constant 0 : index
    %372 = vector.load %arg29[%c0_98, %c0_99] : memref<8x32xf32, #tpu.memory_space<vmem>>, vector<8x32xf32>
    tpu.vector_store %arg29[%c0_98, %c0_99], %363 {strides = array<i32>} : memref<8x32xf32, #tpu.memory_space<vmem>>, vector<8x32xf32>,
    %c0_100 = arith.constant 0 : index
    %c0_101 = arith.constant 0 : index
    %373 = vector.load %arg11[%c0_100, %c0_101] : memref<16x32xf32, #tpu.memory_space<vmem>>, vector<16x32xf32>
    %cst_102 = arith.constant dense<0.000000e+00> : vector<8x32xf32>
    %374 = tpu.matmul %371, %373, %cst_102 {dimension_numbers = #tpu.dot_dimension_numbers<[1], [0], [0], [1], [0, 0, 1, 1], [], []>} : vector<8x16xf32>, vector<16x32xf32>, vector<8x32xf32> -> vector<8x32xf32>
    %c0_103 = arith.constant 0 : index
    %c0_104 = arith.constant 0 : index
    %375 = vector.load %arg12[%c0_103, %c0_104] : memref<1x32xf32, #tpu.memory_space<vmem>>, vector<1x32xf32>
    %376 = vector.broadcast %375 : vector<1x32xf32> to vector<8x32xf32>
    %377 = arith.addf %374, %376 : vector<8x32xf32>
    %c0_105 = arith.constant 0 : index
    %c0_106 = arith.constant 0 : index
    %378 = vector.load %arg13[%c0_105, %c0_106] : memref<32x128xf32, #tpu.memory_space<vmem>>, vector<32x128xf32>
    %c0_107 = arith.constant 0 : index
    %c0_108 = arith.constant 0 : index
    %379 = vector.load %arg14[%c0_107, %c0_108] : memref<1x128xf32, #tpu.memory_space<vmem>>, vector<1x128xf32>
    %cst_109 = arith.constant dense<0.000000e+00> : vector<8x128xf32>
    %380 = tpu.matmul %377, %378, %cst_109 {dimension_numbers = #tpu.dot_dimension_numbers<[1], [0], [0], [1], [0, 0, 1, 1], [], []>} : vector<8x32xf32>, vector<32x128xf32>, vector<8x128xf32> -> vector<8x128xf32>
    %381 = vector.broadcast %379 : vector<1x128xf32> to vector<8x128xf32>
    %382 = arith.addf %381, %380 : vector<8x128xf32>
    %383 = arith.negf %382 : vector<8x128xf32>
    %384 = math.exp %383 : vector<8x128xf32>
    %cst_110 = arith.constant 1.000000e+00 : f32
    %385 = vector.broadcast %cst_110 : f32 to vector<8x128xf32>
    %386 = arith.addf %385, %384 : vector<8x128xf32>
    %387 = arith.divf %385, %386 : vector<8x128xf32>
    %388 = vector.extract_strided_slice %387 {offsets = [0, 0], sizes = [8, 32], strides = [1, 1]} : vector<8x128xf32> to vector<8x32xf32>
    %389 = vector.extract_strided_slice %387 {offsets = [0, 32], sizes = [8, 32], strides = [1, 1]} : vector<8x128xf32> to vector<8x32xf32>
    %390 = vector.extract_strided_slice %387 {offsets = [0, 64], sizes = [8, 32], strides = [1, 1]} : vector<8x128xf32> to vector<8x32xf32>
    %cst_111 = arith.constant 2.000000e+00 : f32
    %391 = vector.broadcast %cst_111 : f32 to vector<8x32xf32>
    %392 = arith.mulf %391, %390 : vector<8x32xf32>
    %cst_112 = arith.constant 1.000000e+00 : f32
    %393 = vector.broadcast %cst_112 : f32 to vector<8x32xf32>
    %394 = arith.subf %392, %393 : vector<8x32xf32>
    %395 = vector.extract_strided_slice %387 {offsets = [0, 96], sizes = [8, 32], strides = [1, 1]} : vector<8x128xf32> to vector<8x32xf32>
    %396 = arith.mulf %389, %0 : vector<8x32xf32>
    %397 = arith.mulf %388, %394 : vector<8x32xf32>
    %398 = arith.addf %396, %397 : vector<8x32xf32>
    %399 = math.tanh %398 : vector<8x32xf32>
    %400 = arith.mulf %395, %399 : vector<8x32xf32>
    %c0_113 = arith.constant 0 : index
    %c0_114 = arith.constant 0 : index
    %401 = vector.load %arg31[%c0_113, %c0_114] : memref<64x32xf32, #tpu.memory_space<vmem>>, vector<8x32xf32>
    tpu.vector_store %arg31[%c0_113, %c0_114], %400 {strides = array<i32>} : memref<64x32xf32, #tpu.memory_space<vmem>>, vector<8x32xf32>,
    %cst_115 = arith.constant dense<0.000000e+00> : vector<8x128xf32>
    %402 = tpu.matmul %400, %378, %cst_115 {dimension_numbers = #tpu.dot_dimension_numbers<[1], [0], [0], [1], [0, 0, 1, 1], [], []>} : vector<8x32xf32>, vector<32x128xf32>, vector<8x128xf32> -> vector<8x128xf32>
    %403 = vector.broadcast %379 : vector<1x128xf32> to vector<8x128xf32>
    %404 = arith.addf %403, %402 : vector<8x128xf32>
    %405 = arith.negf %404 : vector<8x128xf32>
    %406 = math.exp %405 : vector<8x128xf32>
    %cst_116 = arith.constant 1.000000e+00 : f32
    %407 = vector.broadcast %cst_116 : f32 to vector<8x128xf32>
    %408 = arith.addf %407, %406 : vector<8x128xf32>
    %409 = arith.divf %407, %408 : vector<8x128xf32>
    %410 = vector.extract_strided_slice %409 {offsets = [0, 0], sizes = [8, 32], strides = [1, 1]} : vector<8x128xf32> to vector<8x32xf32>
    %411 = vector.extract_strided_slice %409 {offsets = [0, 32], sizes = [8, 32], strides = [1, 1]} : vector<8x128xf32> to vector<8x32xf32>
    %412 = vector.extract_strided_slice %409 {offsets = [0, 64], sizes = [8, 32], strides = [1, 1]} : vector<8x128xf32> to vector<8x32xf32>
    %cst_117 = arith.constant 2.000000e+00 : f32
    %413 = vector.broadcast %cst_117 : f32 to vector<8x32xf32>
    %414 = arith.mulf %413, %412 : vector<8x32xf32>
    %cst_118 = arith.constant 1.000000e+00 : f32
    %415 = vector.broadcast %cst_118 : f32 to vector<8x32xf32>
    %416 = arith.subf %414, %415 : vector<8x32xf32>
    %417 = vector.extract_strided_slice %409 {offsets = [0, 96], sizes = [8, 32], strides = [1, 1]} : vector<8x128xf32> to vector<8x32xf32>
    %418 = arith.mulf %411, %398 : vector<8x32xf32>
    %419 = arith.mulf %410, %416 : vector<8x32xf32>
    %420 = arith.addf %418, %419 : vector<8x32xf32>
    %421 = math.tanh %420 : vector<8x32xf32>
    %422 = arith.mulf %417, %421 : vector<8x32xf32>
    %c8_119 = arith.constant 8 : index
    %c0_120 = arith.constant 0 : index
    %423 = vector.load %arg31[%c8_119, %c0_120] : memref<64x32xf32, #tpu.memory_space<vmem>>, vector<8x32xf32>
    tpu.vector_store %arg31[%c8_119, %c0_120], %422 {strides = array<i32>} : memref<64x32xf32, #tpu.memory_space<vmem>>, vector<8x32xf32>,
    %cst_121 = arith.constant dense<0.000000e+00> : vector<8x128xf32>
    %424 = tpu.matmul %422, %378, %cst_121 {dimension_numbers = #tpu.dot_dimension_numbers<[1], [0], [0], [1], [0, 0, 1, 1], [], []>} : vector<8x32xf32>, vector<32x128xf32>, vector<8x128xf32> -> vector<8x128xf32>
    %425 = vector.broadcast %379 : vector<1x128xf32> to vector<8x128xf32>
    %426 = arith.addf %425, %424 : vector<8x128xf32>
    %427 = arith.negf %426 : vector<8x128xf32>
    %428 = math.exp %427 : vector<8x128xf32>
    %cst_122 = arith.constant 1.000000e+00 : f32
    %429 = vector.broadcast %cst_122 : f32 to vector<8x128xf32>
    %430 = arith.addf %429, %428 : vector<8x128xf32>
    %431 = arith.divf %429, %430 : vector<8x128xf32>
    %432 = vector.extract_strided_slice %431 {offsets = [0, 0], sizes = [8, 32], strides = [1, 1]} : vector<8x128xf32> to vector<8x32xf32>
    %433 = vector.extract_strided_slice %431 {offsets = [0, 32], sizes = [8, 32], strides = [1, 1]} : vector<8x128xf32> to vector<8x32xf32>
    %434 = vector.extract_strided_slice %431 {offsets = [0, 64], sizes = [8, 32], strides = [1, 1]} : vector<8x128xf32> to vector<8x32xf32>
    %cst_123 = arith.constant 2.000000e+00 : f32
    %435 = vector.broadcast %cst_123 : f32 to vector<8x32xf32>
    %436 = arith.mulf %435, %434 : vector<8x32xf32>
    %cst_124 = arith.constant 1.000000e+00 : f32
    %437 = vector.broadcast %cst_124 : f32 to vector<8x32xf32>
    %438 = arith.subf %436, %437 : vector<8x32xf32>
    %439 = vector.extract_strided_slice %431 {offsets = [0, 96], sizes = [8, 32], strides = [1, 1]} : vector<8x128xf32> to vector<8x32xf32>
    %440 = arith.mulf %433, %420 : vector<8x32xf32>
    %441 = arith.mulf %432, %438 : vector<8x32xf32>
    %442 = arith.addf %440, %441 : vector<8x32xf32>
    %443 = math.tanh %442 : vector<8x32xf32>
    %444 = arith.mulf %439, %443 : vector<8x32xf32>
    %c16_125 = arith.constant 16 : index
    %c0_126 = arith.constant 0 : index
    %445 = vector.load %arg31[%c16_125, %c0_126] : memref<64x32xf32, #tpu.memory_space<vmem>>, vector<8x32xf32>
    tpu.vector_store %arg31[%c16_125, %c0_126], %444 {strides = array<i32>} : memref<64x32xf32, #tpu.memory_space<vmem>>, vector<8x32xf32>,
    %cst_127 = arith.constant dense<0.000000e+00> : vector<8x128xf32>
    %446 = tpu.matmul %444, %378, %cst_127 {dimension_numbers = #tpu.dot_dimension_numbers<[1], [0], [0], [1], [0, 0, 1, 1], [], []>} : vector<8x32xf32>, vector<32x128xf32>, vector<8x128xf32> -> vector<8x128xf32>
    %447 = vector.broadcast %379 : vector<1x128xf32> to vector<8x128xf32>
    %448 = arith.addf %447, %446 : vector<8x128xf32>
    %449 = arith.negf %448 : vector<8x128xf32>
    %450 = math.exp %449 : vector<8x128xf32>
    %cst_128 = arith.constant 1.000000e+00 : f32
    %451 = vector.broadcast %cst_128 : f32 to vector<8x128xf32>
    %452 = arith.addf %451, %450 : vector<8x128xf32>
    %453 = arith.divf %451, %452 : vector<8x128xf32>
    %454 = vector.extract_strided_slice %453 {offsets = [0, 0], sizes = [8, 32], strides = [1, 1]} : vector<8x128xf32> to vector<8x32xf32>
    %455 = vector.extract_strided_slice %453 {offsets = [0, 32], sizes = [8, 32], strides = [1, 1]} : vector<8x128xf32> to vector<8x32xf32>
    %456 = vector.extract_strided_slice %453 {offsets = [0, 64], sizes = [8, 32], strides = [1, 1]} : vector<8x128xf32> to vector<8x32xf32>
    %cst_129 = arith.constant 2.000000e+00 : f32
    %457 = vector.broadcast %cst_129 : f32 to vector<8x32xf32>
    %458 = arith.mulf %457, %456 : vector<8x32xf32>
    %cst_130 = arith.constant 1.000000e+00 : f32
    %459 = vector.broadcast %cst_130 : f32 to vector<8x32xf32>
    %460 = arith.subf %458, %459 : vector<8x32xf32>
    %461 = vector.extract_strided_slice %453 {offsets = [0, 96], sizes = [8, 32], strides = [1, 1]} : vector<8x128xf32> to vector<8x32xf32>
    %462 = arith.mulf %455, %442 : vector<8x32xf32>
    %463 = arith.mulf %454, %460 : vector<8x32xf32>
    %464 = arith.addf %462, %463 : vector<8x32xf32>
    %465 = math.tanh %464 : vector<8x32xf32>
    %466 = arith.mulf %461, %465 : vector<8x32xf32>
    %c24_131 = arith.constant 24 : index
    %c0_132 = arith.constant 0 : index
    %467 = vector.load %arg31[%c24_131, %c0_132] : memref<64x32xf32, #tpu.memory_space<vmem>>, vector<8x32xf32>
    tpu.vector_store %arg31[%c24_131, %c0_132], %466 {strides = array<i32>} : memref<64x32xf32, #tpu.memory_space<vmem>>, vector<8x32xf32>,
    %cst_133 = arith.constant dense<0.000000e+00> : vector<8x128xf32>
    %468 = tpu.matmul %466, %378, %cst_133 {dimension_numbers = #tpu.dot_dimension_numbers<[1], [0], [0], [1], [0, 0, 1, 1], [], []>} : vector<8x32xf32>, vector<32x128xf32>, vector<8x128xf32> -> vector<8x128xf32>
    %469 = vector.broadcast %379 : vector<1x128xf32> to vector<8x128xf32>
    %470 = arith.addf %469, %468 : vector<8x128xf32>
    %471 = arith.negf %470 : vector<8x128xf32>
    %472 = math.exp %471 : vector<8x128xf32>
    %cst_134 = arith.constant 1.000000e+00 : f32
    %473 = vector.broadcast %cst_134 : f32 to vector<8x128xf32>
    %474 = arith.addf %473, %472 : vector<8x128xf32>
    %475 = arith.divf %473, %474 : vector<8x128xf32>
    %476 = vector.extract_strided_slice %475 {offsets = [0, 0], sizes = [8, 32], strides = [1, 1]} : vector<8x128xf32> to vector<8x32xf32>
    %477 = vector.extract_strided_slice %475 {offsets = [0, 32], sizes = [8, 32], strides = [1, 1]} : vector<8x128xf32> to vector<8x32xf32>
    %478 = vector.extract_strided_slice %475 {offsets = [0, 64], sizes = [8, 32], strides = [1, 1]} : vector<8x128xf32> to vector<8x32xf32>
    %cst_135 = arith.constant 2.000000e+00 : f32
    %479 = vector.broadcast %cst_135 : f32 to vector<8x32xf32>
    %480 = arith.mulf %479, %478 : vector<8x32xf32>
    %cst_136 = arith.constant 1.000000e+00 : f32
    %481 = vector.broadcast %cst_136 : f32 to vector<8x32xf32>
    %482 = arith.subf %480, %481 : vector<8x32xf32>
    %483 = vector.extract_strided_slice %475 {offsets = [0, 96], sizes = [8, 32], strides = [1, 1]} : vector<8x128xf32> to vector<8x32xf32>
    %484 = arith.mulf %477, %464 : vector<8x32xf32>
    %485 = arith.mulf %476, %482 : vector<8x32xf32>
    %486 = arith.addf %484, %485 : vector<8x32xf32>
    %487 = math.tanh %486 : vector<8x32xf32>
    %488 = arith.mulf %483, %487 : vector<8x32xf32>
    %c32_137 = arith.constant 32 : index
    %c0_138 = arith.constant 0 : index
    %489 = vector.load %arg31[%c32_137, %c0_138] : memref<64x32xf32, #tpu.memory_space<vmem>>, vector<8x32xf32>
    tpu.vector_store %arg31[%c32_137, %c0_138], %488 {strides = array<i32>} : memref<64x32xf32, #tpu.memory_space<vmem>>, vector<8x32xf32>,
    %cst_139 = arith.constant dense<0.000000e+00> : vector<8x128xf32>
    %490 = tpu.matmul %488, %378, %cst_139 {dimension_numbers = #tpu.dot_dimension_numbers<[1], [0], [0], [1], [0, 0, 1, 1], [], []>} : vector<8x32xf32>, vector<32x128xf32>, vector<8x128xf32> -> vector<8x128xf32>
    %491 = vector.broadcast %379 : vector<1x128xf32> to vector<8x128xf32>
    %492 = arith.addf %491, %490 : vector<8x128xf32>
    %493 = arith.negf %492 : vector<8x128xf32>
    %494 = math.exp %493 : vector<8x128xf32>
    %cst_140 = arith.constant 1.000000e+00 : f32
    %495 = vector.broadcast %cst_140 : f32 to vector<8x128xf32>
    %496 = arith.addf %495, %494 : vector<8x128xf32>
    %497 = arith.divf %495, %496 : vector<8x128xf32>
    %498 = vector.extract_strided_slice %497 {offsets = [0, 0], sizes = [8, 32], strides = [1, 1]} : vector<8x128xf32> to vector<8x32xf32>
    %499 = vector.extract_strided_slice %497 {offsets = [0, 32], sizes = [8, 32], strides = [1, 1]} : vector<8x128xf32> to vector<8x32xf32>
    %500 = vector.extract_strided_slice %497 {offsets = [0, 64], sizes = [8, 32], strides = [1, 1]} : vector<8x128xf32> to vector<8x32xf32>
    %cst_141 = arith.constant 2.000000e+00 : f32
    %501 = vector.broadcast %cst_141 : f32 to vector<8x32xf32>
    %502 = arith.mulf %501, %500 : vector<8x32xf32>
    %cst_142 = arith.constant 1.000000e+00 : f32
    %503 = vector.broadcast %cst_142 : f32 to vector<8x32xf32>
    %504 = arith.subf %502, %503 : vector<8x32xf32>
    %505 = vector.extract_strided_slice %497 {offsets = [0, 96], sizes = [8, 32], strides = [1, 1]} : vector<8x128xf32> to vector<8x32xf32>
    %506 = arith.mulf %499, %486 : vector<8x32xf32>
    %507 = arith.mulf %498, %504 : vector<8x32xf32>
    %508 = arith.addf %506, %507 : vector<8x32xf32>
    %509 = math.tanh %508 : vector<8x32xf32>
    %510 = arith.mulf %505, %509 : vector<8x32xf32>
    %c40_143 = arith.constant 40 : index
    %c0_144 = arith.constant 0 : index
    %511 = vector.load %arg31[%c40_143, %c0_144] : memref<64x32xf32, #tpu.memory_space<vmem>>, vector<8x32xf32>
    tpu.vector_store %arg31[%c40_143, %c0_144], %510 {strides = array<i32>} : memref<64x32xf32, #tpu.memory_space<vmem>>, vector<8x32xf32>,
    %cst_145 = arith.constant dense<0.000000e+00> : vector<8x128xf32>
    %512 = tpu.matmul %510, %378, %cst_145 {dimension_numbers = #tpu.dot_dimension_numbers<[1], [0], [0], [1], [0, 0, 1, 1], [], []>} : vector<8x32xf32>, vector<32x128xf32>, vector<8x128xf32> -> vector<8x128xf32>
    %513 = vector.broadcast %379 : vector<1x128xf32> to vector<8x128xf32>
    %514 = arith.addf %513, %512 : vector<8x128xf32>
    %515 = arith.negf %514 : vector<8x128xf32>
    %516 = math.exp %515 : vector<8x128xf32>
    %cst_146 = arith.constant 1.000000e+00 : f32
    %517 = vector.broadcast %cst_146 : f32 to vector<8x128xf32>
    %518 = arith.addf %517, %516 : vector<8x128xf32>
    %519 = arith.divf %517, %518 : vector<8x128xf32>
    %520 = vector.extract_strided_slice %519 {offsets = [0, 0], sizes = [8, 32], strides = [1, 1]} : vector<8x128xf32> to vector<8x32xf32>
    %521 = vector.extract_strided_slice %519 {offsets = [0, 32], sizes = [8, 32], strides = [1, 1]} : vector<8x128xf32> to vector<8x32xf32>
    %522 = vector.extract_strided_slice %519 {offsets = [0, 64], sizes = [8, 32], strides = [1, 1]} : vector<8x128xf32> to vector<8x32xf32>
    %cst_147 = arith.constant 2.000000e+00 : f32
    %523 = vector.broadcast %cst_147 : f32 to vector<8x32xf32>
    %524 = arith.mulf %523, %522 : vector<8x32xf32>
    %cst_148 = arith.constant 1.000000e+00 : f32
    %525 = vector.broadcast %cst_148 : f32 to vector<8x32xf32>
    %526 = arith.subf %524, %525 : vector<8x32xf32>
    %527 = vector.extract_strided_slice %519 {offsets = [0, 96], sizes = [8, 32], strides = [1, 1]} : vector<8x128xf32> to vector<8x32xf32>
    %528 = arith.mulf %521, %508 : vector<8x32xf32>
    %529 = arith.mulf %520, %526 : vector<8x32xf32>
    %530 = arith.addf %528, %529 : vector<8x32xf32>
    %531 = math.tanh %530 : vector<8x32xf32>
    %532 = arith.mulf %527, %531 : vector<8x32xf32>
    %c48_149 = arith.constant 48 : index
    %c0_150 = arith.constant 0 : index
    %533 = vector.load %arg31[%c48_149, %c0_150] : memref<64x32xf32, #tpu.memory_space<vmem>>, vector<8x32xf32>
    tpu.vector_store %arg31[%c48_149, %c0_150], %532 {strides = array<i32>} : memref<64x32xf32, #tpu.memory_space<vmem>>, vector<8x32xf32>,
    %cst_151 = arith.constant dense<0.000000e+00> : vector<8x128xf32>
    %534 = tpu.matmul %532, %378, %cst_151 {dimension_numbers = #tpu.dot_dimension_numbers<[1], [0], [0], [1], [0, 0, 1, 1], [], []>} : vector<8x32xf32>, vector<32x128xf32>, vector<8x128xf32> -> vector<8x128xf32>
    %535 = vector.broadcast %379 : vector<1x128xf32> to vector<8x128xf32>
    %536 = arith.addf %535, %534 : vector<8x128xf32>
    %537 = arith.negf %536 : vector<8x128xf32>
    %538 = math.exp %537 : vector<8x128xf32>
    %cst_152 = arith.constant 1.000000e+00 : f32
    %539 = vector.broadcast %cst_152 : f32 to vector<8x128xf32>
    %540 = arith.addf %539, %538 : vector<8x128xf32>
    %541 = arith.divf %539, %540 : vector<8x128xf32>
    %542 = vector.extract_strided_slice %541 {offsets = [0, 0], sizes = [8, 32], strides = [1, 1]} : vector<8x128xf32> to vector<8x32xf32>
    %543 = vector.extract_strided_slice %541 {offsets = [0, 32], sizes = [8, 32], strides = [1, 1]} : vector<8x128xf32> to vector<8x32xf32>
    %544 = vector.extract_strided_slice %541 {offsets = [0, 64], sizes = [8, 32], strides = [1, 1]} : vector<8x128xf32> to vector<8x32xf32>
    %cst_153 = arith.constant 2.000000e+00 : f32
    %545 = vector.broadcast %cst_153 : f32 to vector<8x32xf32>
    %546 = arith.mulf %545, %544 : vector<8x32xf32>
    %cst_154 = arith.constant 1.000000e+00 : f32
    %547 = vector.broadcast %cst_154 : f32 to vector<8x32xf32>
    %548 = arith.subf %546, %547 : vector<8x32xf32>
    %549 = vector.extract_strided_slice %541 {offsets = [0, 96], sizes = [8, 32], strides = [1, 1]} : vector<8x128xf32> to vector<8x32xf32>
    %550 = arith.mulf %543, %530 : vector<8x32xf32>
    %551 = arith.mulf %542, %548 : vector<8x32xf32>
    %552 = arith.addf %550, %551 : vector<8x32xf32>
    %553 = math.tanh %552 : vector<8x32xf32>
    %554 = arith.mulf %549, %553 : vector<8x32xf32>
    %c56_155 = arith.constant 56 : index
    %c0_156 = arith.constant 0 : index
    %555 = vector.load %arg31[%c56_155, %c0_156] : memref<64x32xf32, #tpu.memory_space<vmem>>, vector<8x32xf32>
    tpu.vector_store %arg31[%c56_155, %c0_156], %554 {strides = array<i32>} : memref<64x32xf32, #tpu.memory_space<vmem>>, vector<8x32xf32>,
    %c0_157 = arith.constant 0 : index
    %c0_158 = arith.constant 0 : index
    %556 = vector.load %arg31[%c0_157, %c0_158] : memref<64x32xf32, #tpu.memory_space<vmem>>, vector<64x32xf32>
    %c0_159 = arith.constant 0 : index
    %c0_160 = arith.constant 0 : index
    %557 = vector.load %arg15[%c0_159, %c0_160] : memref<32x128xf32, #tpu.memory_space<vmem>>, vector<32x128xf32>
    %cst_161 = arith.constant dense<0.000000e+00> : vector<64x128xf32>
    %558 = tpu.matmul %556, %557, %cst_161 {dimension_numbers = #tpu.dot_dimension_numbers<[1], [0], [0], [1], [0, 0, 1, 1], [], []>} : vector<64x32xf32>, vector<32x128xf32>, vector<64x128xf32> -> vector<64x128xf32>
    %c0_162 = arith.constant 0 : index
    %c0_163 = arith.constant 0 : index
    %559 = vector.load %arg17[%c0_162, %c0_163] : memref<1x128xf32, #tpu.memory_space<vmem>>, vector<1x128xf32>
    %560 = vector.broadcast %559 : vector<1x128xf32> to vector<64x128xf32>
    %561 = arith.addf %558, %560 : vector<64x128xf32>
    %c0_164 = arith.constant 0 : index
    %c0_165 = arith.constant 0 : index
    %562 = vector.load %arg16[%c0_164, %c0_165] : memref<32x128xf32, #tpu.memory_space<vmem>>, vector<32x128xf32>
    %563 = vector.extract_strided_slice %561 {offsets = [0, 0], sizes = [8, 128], strides = [1, 1]} : vector<64x128xf32> to vector<8x128xf32>
    %cst_166 = arith.constant dense<0.000000e+00> : vector<8x128xf32>
    %564 = tpu.matmul %377, %562, %cst_166 {dimension_numbers = #tpu.dot_dimension_numbers<[1], [0], [0], [1], [0, 0, 1, 1], [], []>} : vector<8x32xf32>, vector<32x128xf32>, vector<8x128xf32> -> vector<8x128xf32>
    %565 = arith.addf %563, %564 : vector<8x128xf32>
    %566 = arith.negf %565 : vector<8x128xf32>
    %567 = math.exp %566 : vector<8x128xf32>
    %cst_167 = arith.constant 1.000000e+00 : f32
    %568 = vector.broadcast %cst_167 : f32 to vector<8x128xf32>
    %569 = arith.addf %568, %567 : vector<8x128xf32>
    %570 = arith.divf %568, %569 : vector<8x128xf32>
    %571 = vector.extract_strided_slice %570 {offsets = [0, 0], sizes = [8, 32], strides = [1, 1]} : vector<8x128xf32> to vector<8x32xf32>
    %572 = vector.extract_strided_slice %570 {offsets = [0, 32], sizes = [8, 32], strides = [1, 1]} : vector<8x128xf32> to vector<8x32xf32>
    %573 = vector.extract_strided_slice %570 {offsets = [0, 64], sizes = [8, 32], strides = [1, 1]} : vector<8x128xf32> to vector<8x32xf32>
    %cst_168 = arith.constant 2.000000e+00 : f32
    %574 = vector.broadcast %cst_168 : f32 to vector<8x32xf32>
    %575 = arith.mulf %574, %573 : vector<8x32xf32>
    %cst_169 = arith.constant 1.000000e+00 : f32
    %576 = vector.broadcast %cst_169 : f32 to vector<8x32xf32>
    %577 = arith.subf %575, %576 : vector<8x32xf32>
    %578 = vector.extract_strided_slice %570 {offsets = [0, 96], sizes = [8, 32], strides = [1, 1]} : vector<8x128xf32> to vector<8x32xf32>
    %579 = arith.mulf %572, %0 : vector<8x32xf32>
    %580 = arith.mulf %571, %577 : vector<8x32xf32>
    %581 = arith.addf %579, %580 : vector<8x32xf32>
    %582 = math.tanh %581 : vector<8x32xf32>
    %583 = arith.mulf %578, %582 : vector<8x32xf32>
    %c0_170 = arith.constant 0 : index
    %c0_171 = arith.constant 0 : index
    %584 = vector.load %arg31[%c0_170, %c0_171] : memref<64x32xf32, #tpu.memory_space<vmem>>, vector<8x32xf32>
    tpu.vector_store %arg31[%c0_170, %c0_171], %583 {strides = array<i32>} : memref<64x32xf32, #tpu.memory_space<vmem>>, vector<8x32xf32>,
    %585 = vector.extract_strided_slice %561 {offsets = [8, 0], sizes = [8, 128], strides = [1, 1]} : vector<64x128xf32> to vector<8x128xf32>
    %cst_172 = arith.constant dense<0.000000e+00> : vector<8x128xf32>
    %586 = tpu.matmul %583, %562, %cst_172 {dimension_numbers = #tpu.dot_dimension_numbers<[1], [0], [0], [1], [0, 0, 1, 1], [], []>} : vector<8x32xf32>, vector<32x128xf32>, vector<8x128xf32> -> vector<8x128xf32>
    %587 = arith.addf %585, %586 : vector<8x128xf32>
    %588 = arith.negf %587 : vector<8x128xf32>
    %589 = math.exp %588 : vector<8x128xf32>
    %cst_173 = arith.constant 1.000000e+00 : f32
    %590 = vector.broadcast %cst_173 : f32 to vector<8x128xf32>
    %591 = arith.addf %590, %589 : vector<8x128xf32>
    %592 = arith.divf %590, %591 : vector<8x128xf32>
    %593 = vector.extract_strided_slice %592 {offsets = [0, 0], sizes = [8, 32], strides = [1, 1]} : vector<8x128xf32> to vector<8x32xf32>
    %594 = vector.extract_strided_slice %592 {offsets = [0, 32], sizes = [8, 32], strides = [1, 1]} : vector<8x128xf32> to vector<8x32xf32>
    %595 = vector.extract_strided_slice %592 {offsets = [0, 64], sizes = [8, 32], strides = [1, 1]} : vector<8x128xf32> to vector<8x32xf32>
    %cst_174 = arith.constant 2.000000e+00 : f32
    %596 = vector.broadcast %cst_174 : f32 to vector<8x32xf32>
    %597 = arith.mulf %596, %595 : vector<8x32xf32>
    %cst_175 = arith.constant 1.000000e+00 : f32
    %598 = vector.broadcast %cst_175 : f32 to vector<8x32xf32>
    %599 = arith.subf %597, %598 : vector<8x32xf32>
    %600 = vector.extract_strided_slice %592 {offsets = [0, 96], sizes = [8, 32], strides = [1, 1]} : vector<8x128xf32> to vector<8x32xf32>
    %601 = arith.mulf %594, %581 : vector<8x32xf32>
    %602 = arith.mulf %593, %599 : vector<8x32xf32>
    %603 = arith.addf %601, %602 : vector<8x32xf32>
    %604 = math.tanh %603 : vector<8x32xf32>
    %605 = arith.mulf %600, %604 : vector<8x32xf32>
    %c8_176 = arith.constant 8 : index
    %c0_177 = arith.constant 0 : index
    %606 = vector.load %arg31[%c8_176, %c0_177] : memref<64x32xf32, #tpu.memory_space<vmem>>, vector<8x32xf32>
    tpu.vector_store %arg31[%c8_176, %c0_177], %605 {strides = array<i32>} : memref<64x32xf32, #tpu.memory_space<vmem>>, vector<8x32xf32>,
    %607 = vector.extract_strided_slice %561 {offsets = [16, 0], sizes = [8, 128], strides = [1, 1]} : vector<64x128xf32> to vector<8x128xf32>
    %cst_178 = arith.constant dense<0.000000e+00> : vector<8x128xf32>
    %608 = tpu.matmul %605, %562, %cst_178 {dimension_numbers = #tpu.dot_dimension_numbers<[1], [0], [0], [1], [0, 0, 1, 1], [], []>} : vector<8x32xf32>, vector<32x128xf32>, vector<8x128xf32> -> vector<8x128xf32>
    %609 = arith.addf %607, %608 : vector<8x128xf32>
    %610 = arith.negf %609 : vector<8x128xf32>
    %611 = math.exp %610 : vector<8x128xf32>
    %cst_179 = arith.constant 1.000000e+00 : f32
    %612 = vector.broadcast %cst_179 : f32 to vector<8x128xf32>
    %613 = arith.addf %612, %611 : vector<8x128xf32>
    %614 = arith.divf %612, %613 : vector<8x128xf32>
    %615 = vector.extract_strided_slice %614 {offsets = [0, 0], sizes = [8, 32], strides = [1, 1]} : vector<8x128xf32> to vector<8x32xf32>
    %616 = vector.extract_strided_slice %614 {offsets = [0, 32], sizes = [8, 32], strides = [1, 1]} : vector<8x128xf32> to vector<8x32xf32>
    %617 = vector.extract_strided_slice %614 {offsets = [0, 64], sizes = [8, 32], strides = [1, 1]} : vector<8x128xf32> to vector<8x32xf32>
    %cst_180 = arith.constant 2.000000e+00 : f32
    %618 = vector.broadcast %cst_180 : f32 to vector<8x32xf32>
    %619 = arith.mulf %618, %617 : vector<8x32xf32>
    %cst_181 = arith.constant 1.000000e+00 : f32
    %620 = vector.broadcast %cst_181 : f32 to vector<8x32xf32>
    %621 = arith.subf %619, %620 : vector<8x32xf32>
    %622 = vector.extract_strided_slice %614 {offsets = [0, 96], sizes = [8, 32], strides = [1, 1]} : vector<8x128xf32> to vector<8x32xf32>
    %623 = arith.mulf %616, %603 : vector<8x32xf32>
    %624 = arith.mulf %615, %621 : vector<8x32xf32>
    %625 = arith.addf %623, %624 : vector<8x32xf32>
    %626 = math.tanh %625 : vector<8x32xf32>
    %627 = arith.mulf %622, %626 : vector<8x32xf32>
    %c16_182 = arith.constant 16 : index
    %c0_183 = arith.constant 0 : index
    %628 = vector.load %arg31[%c16_182, %c0_183] : memref<64x32xf32, #tpu.memory_space<vmem>>, vector<8x32xf32>
    tpu.vector_store %arg31[%c16_182, %c0_183], %627 {strides = array<i32>} : memref<64x32xf32, #tpu.memory_space<vmem>>, vector<8x32xf32>,
    %629 = vector.extract_strided_slice %561 {offsets = [24, 0], sizes = [8, 128], strides = [1, 1]} : vector<64x128xf32> to vector<8x128xf32>
    %cst_184 = arith.constant dense<0.000000e+00> : vector<8x128xf32>
    %630 = tpu.matmul %627, %562, %cst_184 {dimension_numbers = #tpu.dot_dimension_numbers<[1], [0], [0], [1], [0, 0, 1, 1], [], []>} : vector<8x32xf32>, vector<32x128xf32>, vector<8x128xf32> -> vector<8x128xf32>
    %631 = arith.addf %629, %630 : vector<8x128xf32>
    %632 = arith.negf %631 : vector<8x128xf32>
    %633 = math.exp %632 : vector<8x128xf32>
    %cst_185 = arith.constant 1.000000e+00 : f32
    %634 = vector.broadcast %cst_185 : f32 to vector<8x128xf32>
    %635 = arith.addf %634, %633 : vector<8x128xf32>
    %636 = arith.divf %634, %635 : vector<8x128xf32>
    %637 = vector.extract_strided_slice %636 {offsets = [0, 0], sizes = [8, 32], strides = [1, 1]} : vector<8x128xf32> to vector<8x32xf32>
    %638 = vector.extract_strided_slice %636 {offsets = [0, 32], sizes = [8, 32], strides = [1, 1]} : vector<8x128xf32> to vector<8x32xf32>
    %639 = vector.extract_strided_slice %636 {offsets = [0, 64], sizes = [8, 32], strides = [1, 1]} : vector<8x128xf32> to vector<8x32xf32>
    %cst_186 = arith.constant 2.000000e+00 : f32
    %640 = vector.broadcast %cst_186 : f32 to vector<8x32xf32>
    %641 = arith.mulf %640, %639 : vector<8x32xf32>
    %cst_187 = arith.constant 1.000000e+00 : f32
    %642 = vector.broadcast %cst_187 : f32 to vector<8x32xf32>
    %643 = arith.subf %641, %642 : vector<8x32xf32>
    %644 = vector.extract_strided_slice %636 {offsets = [0, 96], sizes = [8, 32], strides = [1, 1]} : vector<8x128xf32> to vector<8x32xf32>
    %645 = arith.mulf %638, %625 : vector<8x32xf32>
    %646 = arith.mulf %637, %643 : vector<8x32xf32>
    %647 = arith.addf %645, %646 : vector<8x32xf32>
    %648 = math.tanh %647 : vector<8x32xf32>
    %649 = arith.mulf %644, %648 : vector<8x32xf32>
    %c24_188 = arith.constant 24 : index
    %c0_189 = arith.constant 0 : index
    %650 = vector.load %arg31[%c24_188, %c0_189] : memref<64x32xf32, #tpu.memory_space<vmem>>, vector<8x32xf32>
    tpu.vector_store %arg31[%c24_188, %c0_189], %649 {strides = array<i32>} : memref<64x32xf32, #tpu.memory_space<vmem>>, vector<8x32xf32>,
    %651 = vector.extract_strided_slice %561 {offsets = [32, 0], sizes = [8, 128], strides = [1, 1]} : vector<64x128xf32> to vector<8x128xf32>
    %cst_190 = arith.constant dense<0.000000e+00> : vector<8x128xf32>
    %652 = tpu.matmul %649, %562, %cst_190 {dimension_numbers = #tpu.dot_dimension_numbers<[1], [0], [0], [1], [0, 0, 1, 1], [], []>} : vector<8x32xf32>, vector<32x128xf32>, vector<8x128xf32> -> vector<8x128xf32>
    %653 = arith.addf %651, %652 : vector<8x128xf32>
    %654 = arith.negf %653 : vector<8x128xf32>
    %655 = math.exp %654 : vector<8x128xf32>
    %cst_191 = arith.constant 1.000000e+00 : f32
    %656 = vector.broadcast %cst_191 : f32 to vector<8x128xf32>
    %657 = arith.addf %656, %655 : vector<8x128xf32>
    %658 = arith.divf %656, %657 : vector<8x128xf32>
    %659 = vector.extract_strided_slice %658 {offsets = [0, 0], sizes = [8, 32], strides = [1, 1]} : vector<8x128xf32> to vector<8x32xf32>
    %660 = vector.extract_strided_slice %658 {offsets = [0, 32], sizes = [8, 32], strides = [1, 1]} : vector<8x128xf32> to vector<8x32xf32>
    %661 = vector.extract_strided_slice %658 {offsets = [0, 64], sizes = [8, 32], strides = [1, 1]} : vector<8x128xf32> to vector<8x32xf32>
    %cst_192 = arith.constant 2.000000e+00 : f32
    %662 = vector.broadcast %cst_192 : f32 to vector<8x32xf32>
    %663 = arith.mulf %662, %661 : vector<8x32xf32>
    %cst_193 = arith.constant 1.000000e+00 : f32
    %664 = vector.broadcast %cst_193 : f32 to vector<8x32xf32>
    %665 = arith.subf %663, %664 : vector<8x32xf32>
    %666 = vector.extract_strided_slice %658 {offsets = [0, 96], sizes = [8, 32], strides = [1, 1]} : vector<8x128xf32> to vector<8x32xf32>
    %667 = arith.mulf %660, %647 : vector<8x32xf32>
    %668 = arith.mulf %659, %665 : vector<8x32xf32>
    %669 = arith.addf %667, %668 : vector<8x32xf32>
    %670 = math.tanh %669 : vector<8x32xf32>
    %671 = arith.mulf %666, %670 : vector<8x32xf32>
    %c32_194 = arith.constant 32 : index
    %c0_195 = arith.constant 0 : index
    %672 = vector.load %arg31[%c32_194, %c0_195] : memref<64x32xf32, #tpu.memory_space<vmem>>, vector<8x32xf32>
    tpu.vector_store %arg31[%c32_194, %c0_195], %671 {strides = array<i32>} : memref<64x32xf32, #tpu.memory_space<vmem>>, vector<8x32xf32>,
    %673 = vector.extract_strided_slice %561 {offsets = [40, 0], sizes = [8, 128], strides = [1, 1]} : vector<64x128xf32> to vector<8x128xf32>
    %cst_196 = arith.constant dense<0.000000e+00> : vector<8x128xf32>
    %674 = tpu.matmul %671, %562, %cst_196 {dimension_numbers = #tpu.dot_dimension_numbers<[1], [0], [0], [1], [0, 0, 1, 1], [], []>} : vector<8x32xf32>, vector<32x128xf32>, vector<8x128xf32> -> vector<8x128xf32>
    %675 = arith.addf %673, %674 : vector<8x128xf32>
    %676 = arith.negf %675 : vector<8x128xf32>
    %677 = math.exp %676 : vector<8x128xf32>
    %cst_197 = arith.constant 1.000000e+00 : f32
    %678 = vector.broadcast %cst_197 : f32 to vector<8x128xf32>
    %679 = arith.addf %678, %677 : vector<8x128xf32>
    %680 = arith.divf %678, %679 : vector<8x128xf32>
    %681 = vector.extract_strided_slice %680 {offsets = [0, 0], sizes = [8, 32], strides = [1, 1]} : vector<8x128xf32> to vector<8x32xf32>
    %682 = vector.extract_strided_slice %680 {offsets = [0, 32], sizes = [8, 32], strides = [1, 1]} : vector<8x128xf32> to vector<8x32xf32>
    %683 = vector.extract_strided_slice %680 {offsets = [0, 64], sizes = [8, 32], strides = [1, 1]} : vector<8x128xf32> to vector<8x32xf32>
    %cst_198 = arith.constant 2.000000e+00 : f32
    %684 = vector.broadcast %cst_198 : f32 to vector<8x32xf32>
    %685 = arith.mulf %684, %683 : vector<8x32xf32>
    %cst_199 = arith.constant 1.000000e+00 : f32
    %686 = vector.broadcast %cst_199 : f32 to vector<8x32xf32>
    %687 = arith.subf %685, %686 : vector<8x32xf32>
    %688 = vector.extract_strided_slice %680 {offsets = [0, 96], sizes = [8, 32], strides = [1, 1]} : vector<8x128xf32> to vector<8x32xf32>
    %689 = arith.mulf %682, %669 : vector<8x32xf32>
    %690 = arith.mulf %681, %687 : vector<8x32xf32>
    %691 = arith.addf %689, %690 : vector<8x32xf32>
    %692 = math.tanh %691 : vector<8x32xf32>
    %693 = arith.mulf %688, %692 : vector<8x32xf32>
    %c40_200 = arith.constant 40 : index
    %c0_201 = arith.constant 0 : index
    %694 = vector.load %arg31[%c40_200, %c0_201] : memref<64x32xf32, #tpu.memory_space<vmem>>, vector<8x32xf32>
    tpu.vector_store %arg31[%c40_200, %c0_201], %693 {strides = array<i32>} : memref<64x32xf32, #tpu.memory_space<vmem>>, vector<8x32xf32>,
    %695 = vector.extract_strided_slice %561 {offsets = [48, 0], sizes = [8, 128], strides = [1, 1]} : vector<64x128xf32> to vector<8x128xf32>
    %cst_202 = arith.constant dense<0.000000e+00> : vector<8x128xf32>
    %696 = tpu.matmul %693, %562, %cst_202 {dimension_numbers = #tpu.dot_dimension_numbers<[1], [0], [0], [1], [0, 0, 1, 1], [], []>} : vector<8x32xf32>, vector<32x128xf32>, vector<8x128xf32> -> vector<8x128xf32>
    %697 = arith.addf %695, %696 : vector<8x128xf32>
    %698 = arith.negf %697 : vector<8x128xf32>
    %699 = math.exp %698 : vector<8x128xf32>
    %cst_203 = arith.constant 1.000000e+00 : f32
    %700 = vector.broadcast %cst_203 : f32 to vector<8x128xf32>
    %701 = arith.addf %700, %699 : vector<8x128xf32>
    %702 = arith.divf %700, %701 : vector<8x128xf32>
    %703 = vector.extract_strided_slice %702 {offsets = [0, 0], sizes = [8, 32], strides = [1, 1]} : vector<8x128xf32> to vector<8x32xf32>
    %704 = vector.extract_strided_slice %702 {offsets = [0, 32], sizes = [8, 32], strides = [1, 1]} : vector<8x128xf32> to vector<8x32xf32>
    %705 = vector.extract_strided_slice %702 {offsets = [0, 64], sizes = [8, 32], strides = [1, 1]} : vector<8x128xf32> to vector<8x32xf32>
    %cst_204 = arith.constant 2.000000e+00 : f32
    %706 = vector.broadcast %cst_204 : f32 to vector<8x32xf32>
    %707 = arith.mulf %706, %705 : vector<8x32xf32>
    %cst_205 = arith.constant 1.000000e+00 : f32
    %708 = vector.broadcast %cst_205 : f32 to vector<8x32xf32>
    %709 = arith.subf %707, %708 : vector<8x32xf32>
    %710 = vector.extract_strided_slice %702 {offsets = [0, 96], sizes = [8, 32], strides = [1, 1]} : vector<8x128xf32> to vector<8x32xf32>
    %711 = arith.mulf %704, %691 : vector<8x32xf32>
    %712 = arith.mulf %703, %709 : vector<8x32xf32>
    %713 = arith.addf %711, %712 : vector<8x32xf32>
    %714 = math.tanh %713 : vector<8x32xf32>
    %715 = arith.mulf %710, %714 : vector<8x32xf32>
    %c48_206 = arith.constant 48 : index
    %c0_207 = arith.constant 0 : index
    %716 = vector.load %arg31[%c48_206, %c0_207] : memref<64x32xf32, #tpu.memory_space<vmem>>, vector<8x32xf32>
    tpu.vector_store %arg31[%c48_206, %c0_207], %715 {strides = array<i32>} : memref<64x32xf32, #tpu.memory_space<vmem>>, vector<8x32xf32>,
    %717 = vector.extract_strided_slice %561 {offsets = [56, 0], sizes = [8, 128], strides = [1, 1]} : vector<64x128xf32> to vector<8x128xf32>
    %cst_208 = arith.constant dense<0.000000e+00> : vector<8x128xf32>
    %718 = tpu.matmul %715, %562, %cst_208 {dimension_numbers = #tpu.dot_dimension_numbers<[1], [0], [0], [1], [0, 0, 1, 1], [], []>} : vector<8x32xf32>, vector<32x128xf32>, vector<8x128xf32> -> vector<8x128xf32>
    %719 = arith.addf %717, %718 : vector<8x128xf32>
    %720 = arith.negf %719 : vector<8x128xf32>
    %721 = math.exp %720 : vector<8x128xf32>
    %cst_209 = arith.constant 1.000000e+00 : f32
    %722 = vector.broadcast %cst_209 : f32 to vector<8x128xf32>
    %723 = arith.addf %722, %721 : vector<8x128xf32>
    %724 = arith.divf %722, %723 : vector<8x128xf32>
    %725 = vector.extract_strided_slice %724 {offsets = [0, 0], sizes = [8, 32], strides = [1, 1]} : vector<8x128xf32> to vector<8x32xf32>
    %726 = vector.extract_strided_slice %724 {offsets = [0, 32], sizes = [8, 32], strides = [1, 1]} : vector<8x128xf32> to vector<8x32xf32>
    %727 = vector.extract_strided_slice %724 {offsets = [0, 64], sizes = [8, 32], strides = [1, 1]} : vector<8x128xf32> to vector<8x32xf32>
    %cst_210 = arith.constant 2.000000e+00 : f32
    %728 = vector.broadcast %cst_210 : f32 to vector<8x32xf32>
    %729 = arith.mulf %728, %727 : vector<8x32xf32>
    %cst_211 = arith.constant 1.000000e+00 : f32
    %730 = vector.broadcast %cst_211 : f32 to vector<8x32xf32>
    %731 = arith.subf %729, %730 : vector<8x32xf32>
    %732 = vector.extract_strided_slice %724 {offsets = [0, 96], sizes = [8, 32], strides = [1, 1]} : vector<8x128xf32> to vector<8x32xf32>
    %733 = arith.mulf %726, %713 : vector<8x32xf32>
    %734 = arith.mulf %725, %731 : vector<8x32xf32>
    %735 = arith.addf %733, %734 : vector<8x32xf32>
    %736 = math.tanh %735 : vector<8x32xf32>
    %737 = arith.mulf %732, %736 : vector<8x32xf32>
    %c56_212 = arith.constant 56 : index
    %c0_213 = arith.constant 0 : index
    %738 = vector.load %arg31[%c56_212, %c0_213] : memref<64x32xf32, #tpu.memory_space<vmem>>, vector<8x32xf32>
    tpu.vector_store %arg31[%c56_212, %c0_213], %737 {strides = array<i32>} : memref<64x32xf32, #tpu.memory_space<vmem>>, vector<8x32xf32>,
    %c0_214 = arith.constant 0 : index
    %c0_215 = arith.constant 0 : index
    %739 = vector.load %arg31[%c0_214, %c0_215] : memref<64x32xf32, #tpu.memory_space<vmem>>, vector<64x32xf32>
    %c0_216 = arith.constant 0 : index
    %c0_217 = arith.constant 0 : index
    %740 = vector.load %arg18[%c0_216, %c0_217] : memref<32x4xf32, #tpu.memory_space<vmem>>, vector<32x4xf32>
    %cst_218 = arith.constant dense<0.000000e+00> : vector<64x4xf32>
    %741 = tpu.matmul %739, %740, %cst_218 {dimension_numbers = #tpu.dot_dimension_numbers<[1], [0], [0], [1], [0, 0, 1, 1], [], []>} : vector<64x32xf32>, vector<32x4xf32>, vector<64x4xf32> -> vector<64x4xf32>
    %c0_219 = arith.constant 0 : index
    %c0_220 = arith.constant 0 : index
    %742 = vector.load %arg19[%c0_219, %c0_220] : memref<1x4xf32, #tpu.memory_space<vmem>>, vector<1x4xf32>
    %743 = vector.broadcast %742 : vector<1x4xf32> to vector<64x4xf32>
    %744 = arith.addf %741, %743 : vector<64x4xf32>
    %745 = math.tanh %744 : vector<64x4xf32>
    %746 = vector.extract_strided_slice %745 {offsets = [56, 0], sizes = [8, 4], strides = [1, 1]} : vector<64x4xf32> to vector<8x4xf32>
    %c0_221 = arith.constant 0 : index
    %c0_222 = arith.constant 0 : index
    %747 = vector.load %arg28[%c0_221, %c0_222] : memref<8x4xf32, #tpu.memory_space<vmem>>, vector<8x4xf32>
    tpu.vector_store %arg28[%c0_221, %c0_222], %746 {strides = array<i32>} : memref<8x4xf32, #tpu.memory_space<vmem>>, vector<8x4xf32>,
    %c0_223 = arith.constant 0 : index
    %c0_224 = arith.constant 0 : index
    %748 = vector.load %arg20[%c0_223, %c0_224] : memref<4x128xf32, #tpu.memory_space<vmem>>, vector<4x128xf32>
    %cst_225 = arith.constant dense<0.000000e+00> : vector<64x128xf32>
    %749 = tpu.matmul %745, %748, %cst_225 {dimension_numbers = #tpu.dot_dimension_numbers<[1], [0], [0], [1], [0, 0, 1, 1], [], []>} : vector<64x4xf32>, vector<4x128xf32>, vector<64x128xf32> -> vector<64x128xf32>
    %c0_226 = arith.constant 0 : index
    %c0_227 = arith.constant 0 : index
    %750 = vector.load %arg22[%c0_226, %c0_227] : memref<1x128xf32, #tpu.memory_space<vmem>>, vector<1x128xf32>
    %751 = vector.broadcast %750 : vector<1x128xf32> to vector<64x128xf32>
    %752 = arith.addf %749, %751 : vector<64x128xf32>
    %c0_228 = arith.constant 0 : index
    %c0_229 = arith.constant 0 : index
    %753 = vector.load %arg21[%c0_228, %c0_229] : memref<32x128xf32, #tpu.memory_space<vmem>>, vector<32x128xf32>
    %754 = vector.extract_strided_slice %752 {offsets = [0, 0], sizes = [8, 128], strides = [1, 1]} : vector<64x128xf32> to vector<8x128xf32>
    %cst_230 = arith.constant dense<0.000000e+00> : vector<8x128xf32>
    %755 = tpu.matmul %0, %753, %cst_230 {dimension_numbers = #tpu.dot_dimension_numbers<[1], [0], [0], [1], [0, 0, 1, 1], [], []>} : vector<8x32xf32>, vector<32x128xf32>, vector<8x128xf32> -> vector<8x128xf32>
    %756 = arith.addf %754, %755 : vector<8x128xf32>
    %757 = arith.negf %756 : vector<8x128xf32>
    %758 = math.exp %757 : vector<8x128xf32>
    %cst_231 = arith.constant 1.000000e+00 : f32
    %759 = vector.broadcast %cst_231 : f32 to vector<8x128xf32>
    %760 = arith.addf %759, %758 : vector<8x128xf32>
    %761 = arith.divf %759, %760 : vector<8x128xf32>
    %762 = vector.extract_strided_slice %761 {offsets = [0, 0], sizes = [8, 32], strides = [1, 1]} : vector<8x128xf32> to vector<8x32xf32>
    %763 = vector.extract_strided_slice %761 {offsets = [0, 32], sizes = [8, 32], strides = [1, 1]} : vector<8x128xf32> to vector<8x32xf32>
    %764 = vector.extract_strided_slice %761 {offsets = [0, 64], sizes = [8, 32], strides = [1, 1]} : vector<8x128xf32> to vector<8x32xf32>
    %cst_232 = arith.constant 2.000000e+00 : f32
    %765 = vector.broadcast %cst_232 : f32 to vector<8x32xf32>
    %766 = arith.mulf %765, %764 : vector<8x32xf32>
    %cst_233 = arith.constant 1.000000e+00 : f32
    %767 = vector.broadcast %cst_233 : f32 to vector<8x32xf32>
    %768 = arith.subf %766, %767 : vector<8x32xf32>
    %769 = vector.extract_strided_slice %761 {offsets = [0, 96], sizes = [8, 32], strides = [1, 1]} : vector<8x128xf32> to vector<8x32xf32>
    %770 = arith.mulf %763, %0 : vector<8x32xf32>
    %771 = arith.mulf %762, %768 : vector<8x32xf32>
    %772 = arith.addf %770, %771 : vector<8x32xf32>
    %773 = math.tanh %772 : vector<8x32xf32>
    %774 = arith.mulf %769, %773 : vector<8x32xf32>
    %c0_234 = arith.constant 0 : index
    %c0_235 = arith.constant 0 : index
    %775 = vector.load %arg31[%c0_234, %c0_235] : memref<64x32xf32, #tpu.memory_space<vmem>>, vector<8x32xf32>
    tpu.vector_store %arg31[%c0_234, %c0_235], %774 {strides = array<i32>} : memref<64x32xf32, #tpu.memory_space<vmem>>, vector<8x32xf32>,
    %776 = vector.extract_strided_slice %752 {offsets = [8, 0], sizes = [8, 128], strides = [1, 1]} : vector<64x128xf32> to vector<8x128xf32>
    %cst_236 = arith.constant dense<0.000000e+00> : vector<8x128xf32>
    %777 = tpu.matmul %774, %753, %cst_236 {dimension_numbers = #tpu.dot_dimension_numbers<[1], [0], [0], [1], [0, 0, 1, 1], [], []>} : vector<8x32xf32>, vector<32x128xf32>, vector<8x128xf32> -> vector<8x128xf32>
    %778 = arith.addf %776, %777 : vector<8x128xf32>
    %779 = arith.negf %778 : vector<8x128xf32>
    %780 = math.exp %779 : vector<8x128xf32>
    %cst_237 = arith.constant 1.000000e+00 : f32
    %781 = vector.broadcast %cst_237 : f32 to vector<8x128xf32>
    %782 = arith.addf %781, %780 : vector<8x128xf32>
    %783 = arith.divf %781, %782 : vector<8x128xf32>
    %784 = vector.extract_strided_slice %783 {offsets = [0, 0], sizes = [8, 32], strides = [1, 1]} : vector<8x128xf32> to vector<8x32xf32>
    %785 = vector.extract_strided_slice %783 {offsets = [0, 32], sizes = [8, 32], strides = [1, 1]} : vector<8x128xf32> to vector<8x32xf32>
    %786 = vector.extract_strided_slice %783 {offsets = [0, 64], sizes = [8, 32], strides = [1, 1]} : vector<8x128xf32> to vector<8x32xf32>
    %cst_238 = arith.constant 2.000000e+00 : f32
    %787 = vector.broadcast %cst_238 : f32 to vector<8x32xf32>
    %788 = arith.mulf %787, %786 : vector<8x32xf32>
    %cst_239 = arith.constant 1.000000e+00 : f32
    %789 = vector.broadcast %cst_239 : f32 to vector<8x32xf32>
    %790 = arith.subf %788, %789 : vector<8x32xf32>
    %791 = vector.extract_strided_slice %783 {offsets = [0, 96], sizes = [8, 32], strides = [1, 1]} : vector<8x128xf32> to vector<8x32xf32>
    %792 = arith.mulf %785, %772 : vector<8x32xf32>
    %793 = arith.mulf %784, %790 : vector<8x32xf32>
    %794 = arith.addf %792, %793 : vector<8x32xf32>
    %795 = math.tanh %794 : vector<8x32xf32>
    %796 = arith.mulf %791, %795 : vector<8x32xf32>
    %c8_240 = arith.constant 8 : index
    %c0_241 = arith.constant 0 : index
    %797 = vector.load %arg31[%c8_240, %c0_241] : memref<64x32xf32, #tpu.memory_space<vmem>>, vector<8x32xf32>
    tpu.vector_store %arg31[%c8_240, %c0_241], %796 {strides = array<i32>} : memref<64x32xf32, #tpu.memory_space<vmem>>, vector<8x32xf32>,
    %798 = vector.extract_strided_slice %752 {offsets = [16, 0], sizes = [8, 128], strides = [1, 1]} : vector<64x128xf32> to vector<8x128xf32>
    %cst_242 = arith.constant dense<0.000000e+00> : vector<8x128xf32>
    %799 = tpu.matmul %796, %753, %cst_242 {dimension_numbers = #tpu.dot_dimension_numbers<[1], [0], [0], [1], [0, 0, 1, 1], [], []>} : vector<8x32xf32>, vector<32x128xf32>, vector<8x128xf32> -> vector<8x128xf32>
    %800 = arith.addf %798, %799 : vector<8x128xf32>
    %801 = arith.negf %800 : vector<8x128xf32>
    %802 = math.exp %801 : vector<8x128xf32>
    %cst_243 = arith.constant 1.000000e+00 : f32
    %803 = vector.broadcast %cst_243 : f32 to vector<8x128xf32>
    %804 = arith.addf %803, %802 : vector<8x128xf32>
    %805 = arith.divf %803, %804 : vector<8x128xf32>
    %806 = vector.extract_strided_slice %805 {offsets = [0, 0], sizes = [8, 32], strides = [1, 1]} : vector<8x128xf32> to vector<8x32xf32>
    %807 = vector.extract_strided_slice %805 {offsets = [0, 32], sizes = [8, 32], strides = [1, 1]} : vector<8x128xf32> to vector<8x32xf32>
    %808 = vector.extract_strided_slice %805 {offsets = [0, 64], sizes = [8, 32], strides = [1, 1]} : vector<8x128xf32> to vector<8x32xf32>
    %cst_244 = arith.constant 2.000000e+00 : f32
    %809 = vector.broadcast %cst_244 : f32 to vector<8x32xf32>
    %810 = arith.mulf %809, %808 : vector<8x32xf32>
    %cst_245 = arith.constant 1.000000e+00 : f32
    %811 = vector.broadcast %cst_245 : f32 to vector<8x32xf32>
    %812 = arith.subf %810, %811 : vector<8x32xf32>
    %813 = vector.extract_strided_slice %805 {offsets = [0, 96], sizes = [8, 32], strides = [1, 1]} : vector<8x128xf32> to vector<8x32xf32>
    %814 = arith.mulf %807, %794 : vector<8x32xf32>
    %815 = arith.mulf %806, %812 : vector<8x32xf32>
    %816 = arith.addf %814, %815 : vector<8x32xf32>
    %817 = math.tanh %816 : vector<8x32xf32>
    %818 = arith.mulf %813, %817 : vector<8x32xf32>
    %c16_246 = arith.constant 16 : index
    %c0_247 = arith.constant 0 : index
    %819 = vector.load %arg31[%c16_246, %c0_247] : memref<64x32xf32, #tpu.memory_space<vmem>>, vector<8x32xf32>
    tpu.vector_store %arg31[%c16_246, %c0_247], %818 {strides = array<i32>} : memref<64x32xf32, #tpu.memory_space<vmem>>, vector<8x32xf32>,
    %820 = vector.extract_strided_slice %752 {offsets = [24, 0], sizes = [8, 128], strides = [1, 1]} : vector<64x128xf32> to vector<8x128xf32>
    %cst_248 = arith.constant dense<0.000000e+00> : vector<8x128xf32>
    %821 = tpu.matmul %818, %753, %cst_248 {dimension_numbers = #tpu.dot_dimension_numbers<[1], [0], [0], [1], [0, 0, 1, 1], [], []>} : vector<8x32xf32>, vector<32x128xf32>, vector<8x128xf32> -> vector<8x128xf32>
    %822 = arith.addf %820, %821 : vector<8x128xf32>
    %823 = arith.negf %822 : vector<8x128xf32>
    %824 = math.exp %823 : vector<8x128xf32>
    %cst_249 = arith.constant 1.000000e+00 : f32
    %825 = vector.broadcast %cst_249 : f32 to vector<8x128xf32>
    %826 = arith.addf %825, %824 : vector<8x128xf32>
    %827 = arith.divf %825, %826 : vector<8x128xf32>
    %828 = vector.extract_strided_slice %827 {offsets = [0, 0], sizes = [8, 32], strides = [1, 1]} : vector<8x128xf32> to vector<8x32xf32>
    %829 = vector.extract_strided_slice %827 {offsets = [0, 32], sizes = [8, 32], strides = [1, 1]} : vector<8x128xf32> to vector<8x32xf32>
    %830 = vector.extract_strided_slice %827 {offsets = [0, 64], sizes = [8, 32], strides = [1, 1]} : vector<8x128xf32> to vector<8x32xf32>
    %cst_250 = arith.constant 2.000000e+00 : f32
    %831 = vector.broadcast %cst_250 : f32 to vector<8x32xf32>
    %832 = arith.mulf %831, %830 : vector<8x32xf32>
    %cst_251 = arith.constant 1.000000e+00 : f32
    %833 = vector.broadcast %cst_251 : f32 to vector<8x32xf32>
    %834 = arith.subf %832, %833 : vector<8x32xf32>
    %835 = vector.extract_strided_slice %827 {offsets = [0, 96], sizes = [8, 32], strides = [1, 1]} : vector<8x128xf32> to vector<8x32xf32>
    %836 = arith.mulf %829, %816 : vector<8x32xf32>
    %837 = arith.mulf %828, %834 : vector<8x32xf32>
    %838 = arith.addf %836, %837 : vector<8x32xf32>
    %839 = math.tanh %838 : vector<8x32xf32>
    %840 = arith.mulf %835, %839 : vector<8x32xf32>
    %c24_252 = arith.constant 24 : index
    %c0_253 = arith.constant 0 : index
    %841 = vector.load %arg31[%c24_252, %c0_253] : memref<64x32xf32, #tpu.memory_space<vmem>>, vector<8x32xf32>
    tpu.vector_store %arg31[%c24_252, %c0_253], %840 {strides = array<i32>} : memref<64x32xf32, #tpu.memory_space<vmem>>, vector<8x32xf32>,
    %842 = vector.extract_strided_slice %752 {offsets = [32, 0], sizes = [8, 128], strides = [1, 1]} : vector<64x128xf32> to vector<8x128xf32>
    %cst_254 = arith.constant dense<0.000000e+00> : vector<8x128xf32>
    %843 = tpu.matmul %840, %753, %cst_254 {dimension_numbers = #tpu.dot_dimension_numbers<[1], [0], [0], [1], [0, 0, 1, 1], [], []>} : vector<8x32xf32>, vector<32x128xf32>, vector<8x128xf32> -> vector<8x128xf32>
    %844 = arith.addf %842, %843 : vector<8x128xf32>
    %845 = arith.negf %844 : vector<8x128xf32>
    %846 = math.exp %845 : vector<8x128xf32>
    %cst_255 = arith.constant 1.000000e+00 : f32
    %847 = vector.broadcast %cst_255 : f32 to vector<8x128xf32>
    %848 = arith.addf %847, %846 : vector<8x128xf32>
    %849 = arith.divf %847, %848 : vector<8x128xf32>
    %850 = vector.extract_strided_slice %849 {offsets = [0, 0], sizes = [8, 32], strides = [1, 1]} : vector<8x128xf32> to vector<8x32xf32>
    %851 = vector.extract_strided_slice %849 {offsets = [0, 32], sizes = [8, 32], strides = [1, 1]} : vector<8x128xf32> to vector<8x32xf32>
    %852 = vector.extract_strided_slice %849 {offsets = [0, 64], sizes = [8, 32], strides = [1, 1]} : vector<8x128xf32> to vector<8x32xf32>
    %cst_256 = arith.constant 2.000000e+00 : f32
    %853 = vector.broadcast %cst_256 : f32 to vector<8x32xf32>
    %854 = arith.mulf %853, %852 : vector<8x32xf32>
    %cst_257 = arith.constant 1.000000e+00 : f32
    %855 = vector.broadcast %cst_257 : f32 to vector<8x32xf32>
    %856 = arith.subf %854, %855 : vector<8x32xf32>
    %857 = vector.extract_strided_slice %849 {offsets = [0, 96], sizes = [8, 32], strides = [1, 1]} : vector<8x128xf32> to vector<8x32xf32>
    %858 = arith.mulf %851, %838 : vector<8x32xf32>
    %859 = arith.mulf %850, %856 : vector<8x32xf32>
    %860 = arith.addf %858, %859 : vector<8x32xf32>
    %861 = math.tanh %860 : vector<8x32xf32>
    %862 = arith.mulf %857, %861 : vector<8x32xf32>
    %c32_258 = arith.constant 32 : index
    %c0_259 = arith.constant 0 : index
    %863 = vector.load %arg31[%c32_258, %c0_259] : memref<64x32xf32, #tpu.memory_space<vmem>>, vector<8x32xf32>
    tpu.vector_store %arg31[%c32_258, %c0_259], %862 {strides = array<i32>} : memref<64x32xf32, #tpu.memory_space<vmem>>, vector<8x32xf32>,
    %864 = vector.extract_strided_slice %752 {offsets = [40, 0], sizes = [8, 128], strides = [1, 1]} : vector<64x128xf32> to vector<8x128xf32>
    %cst_260 = arith.constant dense<0.000000e+00> : vector<8x128xf32>
    %865 = tpu.matmul %862, %753, %cst_260 {dimension_numbers = #tpu.dot_dimension_numbers<[1], [0], [0], [1], [0, 0, 1, 1], [], []>} : vector<8x32xf32>, vector<32x128xf32>, vector<8x128xf32> -> vector<8x128xf32>
    %866 = arith.addf %864, %865 : vector<8x128xf32>
    %867 = arith.negf %866 : vector<8x128xf32>
    %868 = math.exp %867 : vector<8x128xf32>
    %cst_261 = arith.constant 1.000000e+00 : f32
    %869 = vector.broadcast %cst_261 : f32 to vector<8x128xf32>
    %870 = arith.addf %869, %868 : vector<8x128xf32>
    %871 = arith.divf %869, %870 : vector<8x128xf32>
    %872 = vector.extract_strided_slice %871 {offsets = [0, 0], sizes = [8, 32], strides = [1, 1]} : vector<8x128xf32> to vector<8x32xf32>
    %873 = vector.extract_strided_slice %871 {offsets = [0, 32], sizes = [8, 32], strides = [1, 1]} : vector<8x128xf32> to vector<8x32xf32>
    %874 = vector.extract_strided_slice %871 {offsets = [0, 64], sizes = [8, 32], strides = [1, 1]} : vector<8x128xf32> to vector<8x32xf32>
    %cst_262 = arith.constant 2.000000e+00 : f32
    %875 = vector.broadcast %cst_262 : f32 to vector<8x32xf32>
    %876 = arith.mulf %875, %874 : vector<8x32xf32>
    %cst_263 = arith.constant 1.000000e+00 : f32
    %877 = vector.broadcast %cst_263 : f32 to vector<8x32xf32>
    %878 = arith.subf %876, %877 : vector<8x32xf32>
    %879 = vector.extract_strided_slice %871 {offsets = [0, 96], sizes = [8, 32], strides = [1, 1]} : vector<8x128xf32> to vector<8x32xf32>
    %880 = arith.mulf %873, %860 : vector<8x32xf32>
    %881 = arith.mulf %872, %878 : vector<8x32xf32>
    %882 = arith.addf %880, %881 : vector<8x32xf32>
    %883 = math.tanh %882 : vector<8x32xf32>
    %884 = arith.mulf %879, %883 : vector<8x32xf32>
    %c40_264 = arith.constant 40 : index
    %c0_265 = arith.constant 0 : index
    %885 = vector.load %arg31[%c40_264, %c0_265] : memref<64x32xf32, #tpu.memory_space<vmem>>, vector<8x32xf32>
    tpu.vector_store %arg31[%c40_264, %c0_265], %884 {strides = array<i32>} : memref<64x32xf32, #tpu.memory_space<vmem>>, vector<8x32xf32>,
    %886 = vector.extract_strided_slice %752 {offsets = [48, 0], sizes = [8, 128], strides = [1, 1]} : vector<64x128xf32> to vector<8x128xf32>
    %cst_266 = arith.constant dense<0.000000e+00> : vector<8x128xf32>
    %887 = tpu.matmul %884, %753, %cst_266 {dimension_numbers = #tpu.dot_dimension_numbers<[1], [0], [0], [1], [0, 0, 1, 1], [], []>} : vector<8x32xf32>, vector<32x128xf32>, vector<8x128xf32> -> vector<8x128xf32>
    %888 = arith.addf %886, %887 : vector<8x128xf32>
    %889 = arith.negf %888 : vector<8x128xf32>
    %890 = math.exp %889 : vector<8x128xf32>
    %cst_267 = arith.constant 1.000000e+00 : f32
    %891 = vector.broadcast %cst_267 : f32 to vector<8x128xf32>
    %892 = arith.addf %891, %890 : vector<8x128xf32>
    %893 = arith.divf %891, %892 : vector<8x128xf32>
    %894 = vector.extract_strided_slice %893 {offsets = [0, 0], sizes = [8, 32], strides = [1, 1]} : vector<8x128xf32> to vector<8x32xf32>
    %895 = vector.extract_strided_slice %893 {offsets = [0, 32], sizes = [8, 32], strides = [1, 1]} : vector<8x128xf32> to vector<8x32xf32>
    %896 = vector.extract_strided_slice %893 {offsets = [0, 64], sizes = [8, 32], strides = [1, 1]} : vector<8x128xf32> to vector<8x32xf32>
    %cst_268 = arith.constant 2.000000e+00 : f32
    %897 = vector.broadcast %cst_268 : f32 to vector<8x32xf32>
    %898 = arith.mulf %897, %896 : vector<8x32xf32>
    %cst_269 = arith.constant 1.000000e+00 : f32
    %899 = vector.broadcast %cst_269 : f32 to vector<8x32xf32>
    %900 = arith.subf %898, %899 : vector<8x32xf32>
    %901 = vector.extract_strided_slice %893 {offsets = [0, 96], sizes = [8, 32], strides = [1, 1]} : vector<8x128xf32> to vector<8x32xf32>
    %902 = arith.mulf %895, %882 : vector<8x32xf32>
    %903 = arith.mulf %894, %900 : vector<8x32xf32>
    %904 = arith.addf %902, %903 : vector<8x32xf32>
    %905 = math.tanh %904 : vector<8x32xf32>
    %906 = arith.mulf %901, %905 : vector<8x32xf32>
    %c48_270 = arith.constant 48 : index
    %c0_271 = arith.constant 0 : index
    %907 = vector.load %arg31[%c48_270, %c0_271] : memref<64x32xf32, #tpu.memory_space<vmem>>, vector<8x32xf32>
    tpu.vector_store %arg31[%c48_270, %c0_271], %906 {strides = array<i32>} : memref<64x32xf32, #tpu.memory_space<vmem>>, vector<8x32xf32>,
    %908 = vector.extract_strided_slice %752 {offsets = [56, 0], sizes = [8, 128], strides = [1, 1]} : vector<64x128xf32> to vector<8x128xf32>
    %cst_272 = arith.constant dense<0.000000e+00> : vector<8x128xf32>
    %909 = tpu.matmul %906, %753, %cst_272 {dimension_numbers = #tpu.dot_dimension_numbers<[1], [0], [0], [1], [0, 0, 1, 1], [], []>} : vector<8x32xf32>, vector<32x128xf32>, vector<8x128xf32> -> vector<8x128xf32>
    %910 = arith.addf %908, %909 : vector<8x128xf32>
    %911 = arith.negf %910 : vector<8x128xf32>
    %912 = math.exp %911 : vector<8x128xf32>
    %cst_273 = arith.constant 1.000000e+00 : f32
    %913 = vector.broadcast %cst_273 : f32 to vector<8x128xf32>
    %914 = arith.addf %913, %912 : vector<8x128xf32>
    %915 = arith.divf %913, %914 : vector<8x128xf32>
    %916 = vector.extract_strided_slice %915 {offsets = [0, 0], sizes = [8, 32], strides = [1, 1]} : vector<8x128xf32> to vector<8x32xf32>
    %917 = vector.extract_strided_slice %915 {offsets = [0, 32], sizes = [8, 32], strides = [1, 1]} : vector<8x128xf32> to vector<8x32xf32>
    %918 = vector.extract_strided_slice %915 {offsets = [0, 64], sizes = [8, 32], strides = [1, 1]} : vector<8x128xf32> to vector<8x32xf32>
    %cst_274 = arith.constant 2.000000e+00 : f32
    %919 = vector.broadcast %cst_274 : f32 to vector<8x32xf32>
    %920 = arith.mulf %919, %918 : vector<8x32xf32>
    %cst_275 = arith.constant 1.000000e+00 : f32
    %921 = vector.broadcast %cst_275 : f32 to vector<8x32xf32>
    %922 = arith.subf %920, %921 : vector<8x32xf32>
    %923 = vector.extract_strided_slice %915 {offsets = [0, 96], sizes = [8, 32], strides = [1, 1]} : vector<8x128xf32> to vector<8x32xf32>
    %924 = arith.mulf %917, %904 : vector<8x32xf32>
    %925 = arith.mulf %916, %922 : vector<8x32xf32>
    %926 = arith.addf %924, %925 : vector<8x32xf32>
    %927 = math.tanh %926 : vector<8x32xf32>
    %928 = arith.mulf %923, %927 : vector<8x32xf32>
    %c56_276 = arith.constant 56 : index
    %c0_277 = arith.constant 0 : index
    %929 = vector.load %arg31[%c56_276, %c0_277] : memref<64x32xf32, #tpu.memory_space<vmem>>, vector<8x32xf32>
    tpu.vector_store %arg31[%c56_276, %c0_277], %928 {strides = array<i32>} : memref<64x32xf32, #tpu.memory_space<vmem>>, vector<8x32xf32>,
    %c0_278 = arith.constant 0 : index
    %c0_279 = arith.constant 0 : index
    %930 = vector.load %arg31[%c0_278, %c0_279] : memref<64x32xf32, #tpu.memory_space<vmem>>, vector<64x32xf32>
    %c0_280 = arith.constant 0 : index
    %c0_281 = arith.constant 0 : index
    %931 = vector.load %arg23[%c0_280, %c0_281] : memref<32x128xf32, #tpu.memory_space<vmem>>, vector<32x128xf32>
    %cst_282 = arith.constant dense<0.000000e+00> : vector<64x128xf32>
    %932 = tpu.matmul %930, %931, %cst_282 {dimension_numbers = #tpu.dot_dimension_numbers<[1], [0], [0], [1], [0, 0, 1, 1], [], []>} : vector<64x32xf32>, vector<32x128xf32>, vector<64x128xf32> -> vector<64x128xf32>
    %c0_283 = arith.constant 0 : index
    %c0_284 = arith.constant 0 : index
    %933 = vector.load %arg25[%c0_283, %c0_284] : memref<1x128xf32, #tpu.memory_space<vmem>>, vector<1x128xf32>
    %934 = vector.broadcast %933 : vector<1x128xf32> to vector<64x128xf32>
    %935 = arith.addf %932, %934 : vector<64x128xf32>
    %c0_285 = arith.constant 0 : index
    %c0_286 = arith.constant 0 : index
    %936 = vector.load %arg24[%c0_285, %c0_286] : memref<32x128xf32, #tpu.memory_space<vmem>>, vector<32x128xf32>
    %937 = vector.extract_strided_slice %935 {offsets = [0, 0], sizes = [8, 128], strides = [1, 1]} : vector<64x128xf32> to vector<8x128xf32>
    %cst_287 = arith.constant dense<0.000000e+00> : vector<8x128xf32>
    %938 = tpu.matmul %0, %936, %cst_287 {dimension_numbers = #tpu.dot_dimension_numbers<[1], [0], [0], [1], [0, 0, 1, 1], [], []>} : vector<8x32xf32>, vector<32x128xf32>, vector<8x128xf32> -> vector<8x128xf32>
    %939 = arith.addf %937, %938 : vector<8x128xf32>
    %940 = arith.negf %939 : vector<8x128xf32>
    %941 = math.exp %940 : vector<8x128xf32>
    %cst_288 = arith.constant 1.000000e+00 : f32
    %942 = vector.broadcast %cst_288 : f32 to vector<8x128xf32>
    %943 = arith.addf %942, %941 : vector<8x128xf32>
    %944 = arith.divf %942, %943 : vector<8x128xf32>
    %945 = vector.extract_strided_slice %944 {offsets = [0, 0], sizes = [8, 32], strides = [1, 1]} : vector<8x128xf32> to vector<8x32xf32>
    %946 = vector.extract_strided_slice %944 {offsets = [0, 32], sizes = [8, 32], strides = [1, 1]} : vector<8x128xf32> to vector<8x32xf32>
    %947 = vector.extract_strided_slice %944 {offsets = [0, 64], sizes = [8, 32], strides = [1, 1]} : vector<8x128xf32> to vector<8x32xf32>
    %cst_289 = arith.constant 2.000000e+00 : f32
    %948 = vector.broadcast %cst_289 : f32 to vector<8x32xf32>
    %949 = arith.mulf %948, %947 : vector<8x32xf32>
    %cst_290 = arith.constant 1.000000e+00 : f32
    %950 = vector.broadcast %cst_290 : f32 to vector<8x32xf32>
    %951 = arith.subf %949, %950 : vector<8x32xf32>
    %952 = vector.extract_strided_slice %944 {offsets = [0, 96], sizes = [8, 32], strides = [1, 1]} : vector<8x128xf32> to vector<8x32xf32>
    %953 = arith.mulf %946, %0 : vector<8x32xf32>
    %954 = arith.mulf %945, %951 : vector<8x32xf32>
    %955 = arith.addf %953, %954 : vector<8x32xf32>
    %956 = math.tanh %955 : vector<8x32xf32>
    %957 = arith.mulf %952, %956 : vector<8x32xf32>
    %958 = vector.extract_strided_slice %935 {offsets = [8, 0], sizes = [8, 128], strides = [1, 1]} : vector<64x128xf32> to vector<8x128xf32>
    %cst_291 = arith.constant dense<0.000000e+00> : vector<8x128xf32>
    %959 = tpu.matmul %957, %936, %cst_291 {dimension_numbers = #tpu.dot_dimension_numbers<[1], [0], [0], [1], [0, 0, 1, 1], [], []>} : vector<8x32xf32>, vector<32x128xf32>, vector<8x128xf32> -> vector<8x128xf32>
    %960 = arith.addf %958, %959 : vector<8x128xf32>
    %961 = arith.negf %960 : vector<8x128xf32>
    %962 = math.exp %961 : vector<8x128xf32>
    %cst_292 = arith.constant 1.000000e+00 : f32
    %963 = vector.broadcast %cst_292 : f32 to vector<8x128xf32>
    %964 = arith.addf %963, %962 : vector<8x128xf32>
    %965 = arith.divf %963, %964 : vector<8x128xf32>
    %966 = vector.extract_strided_slice %965 {offsets = [0, 0], sizes = [8, 32], strides = [1, 1]} : vector<8x128xf32> to vector<8x32xf32>
    %967 = vector.extract_strided_slice %965 {offsets = [0, 32], sizes = [8, 32], strides = [1, 1]} : vector<8x128xf32> to vector<8x32xf32>
    %968 = vector.extract_strided_slice %965 {offsets = [0, 64], sizes = [8, 32], strides = [1, 1]} : vector<8x128xf32> to vector<8x32xf32>
    %cst_293 = arith.constant 2.000000e+00 : f32
    %969 = vector.broadcast %cst_293 : f32 to vector<8x32xf32>
    %970 = arith.mulf %969, %968 : vector<8x32xf32>
    %cst_294 = arith.constant 1.000000e+00 : f32
    %971 = vector.broadcast %cst_294 : f32 to vector<8x32xf32>
    %972 = arith.subf %970, %971 : vector<8x32xf32>
    %973 = vector.extract_strided_slice %965 {offsets = [0, 96], sizes = [8, 32], strides = [1, 1]} : vector<8x128xf32> to vector<8x32xf32>
    %974 = arith.mulf %967, %955 : vector<8x32xf32>
    %975 = arith.mulf %966, %972 : vector<8x32xf32>
    %976 = arith.addf %974, %975 : vector<8x32xf32>
    %977 = math.tanh %976 : vector<8x32xf32>
    %978 = arith.mulf %973, %977 : vector<8x32xf32>
    %979 = vector.extract_strided_slice %935 {offsets = [16, 0], sizes = [8, 128], strides = [1, 1]} : vector<64x128xf32> to vector<8x128xf32>
    %cst_295 = arith.constant dense<0.000000e+00> : vector<8x128xf32>
    %980 = tpu.matmul %978, %936, %cst_295 {dimension_numbers = #tpu.dot_dimension_numbers<[1], [0], [0], [1], [0, 0, 1, 1], [], []>} : vector<8x32xf32>, vector<32x128xf32>, vector<8x128xf32> -> vector<8x128xf32>
    %981 = arith.addf %979, %980 : vector<8x128xf32>
    %982 = arith.negf %981 : vector<8x128xf32>
    %983 = math.exp %982 : vector<8x128xf32>
    %cst_296 = arith.constant 1.000000e+00 : f32
    %984 = vector.broadcast %cst_296 : f32 to vector<8x128xf32>
    %985 = arith.addf %984, %983 : vector<8x128xf32>
    %986 = arith.divf %984, %985 : vector<8x128xf32>
    %987 = vector.extract_strided_slice %986 {offsets = [0, 0], sizes = [8, 32], strides = [1, 1]} : vector<8x128xf32> to vector<8x32xf32>
    %988 = vector.extract_strided_slice %986 {offsets = [0, 32], sizes = [8, 32], strides = [1, 1]} : vector<8x128xf32> to vector<8x32xf32>
    %989 = vector.extract_strided_slice %986 {offsets = [0, 64], sizes = [8, 32], strides = [1, 1]} : vector<8x128xf32> to vector<8x32xf32>
    %cst_297 = arith.constant 2.000000e+00 : f32
    %990 = vector.broadcast %cst_297 : f32 to vector<8x32xf32>
    %991 = arith.mulf %990, %989 : vector<8x32xf32>
    %cst_298 = arith.constant 1.000000e+00 : f32
    %992 = vector.broadcast %cst_298 : f32 to vector<8x32xf32>
    %993 = arith.subf %991, %992 : vector<8x32xf32>
    %994 = vector.extract_strided_slice %986 {offsets = [0, 96], sizes = [8, 32], strides = [1, 1]} : vector<8x128xf32> to vector<8x32xf32>
    %995 = arith.mulf %988, %976 : vector<8x32xf32>
    %996 = arith.mulf %987, %993 : vector<8x32xf32>
    %997 = arith.addf %995, %996 : vector<8x32xf32>
    %998 = math.tanh %997 : vector<8x32xf32>
    %999 = arith.mulf %994, %998 : vector<8x32xf32>
    %1000 = vector.extract_strided_slice %935 {offsets = [24, 0], sizes = [8, 128], strides = [1, 1]} : vector<64x128xf32> to vector<8x128xf32>
    %cst_299 = arith.constant dense<0.000000e+00> : vector<8x128xf32>
    %1001 = tpu.matmul %999, %936, %cst_299 {dimension_numbers = #tpu.dot_dimension_numbers<[1], [0], [0], [1], [0, 0, 1, 1], [], []>} : vector<8x32xf32>, vector<32x128xf32>, vector<8x128xf32> -> vector<8x128xf32>
    %1002 = arith.addf %1000, %1001 : vector<8x128xf32>
    %1003 = arith.negf %1002 : vector<8x128xf32>
    %1004 = math.exp %1003 : vector<8x128xf32>
    %cst_300 = arith.constant 1.000000e+00 : f32
    %1005 = vector.broadcast %cst_300 : f32 to vector<8x128xf32>
    %1006 = arith.addf %1005, %1004 : vector<8x128xf32>
    %1007 = arith.divf %1005, %1006 : vector<8x128xf32>
    %1008 = vector.extract_strided_slice %1007 {offsets = [0, 0], sizes = [8, 32], strides = [1, 1]} : vector<8x128xf32> to vector<8x32xf32>
    %1009 = vector.extract_strided_slice %1007 {offsets = [0, 32], sizes = [8, 32], strides = [1, 1]} : vector<8x128xf32> to vector<8x32xf32>
    %1010 = vector.extract_strided_slice %1007 {offsets = [0, 64], sizes = [8, 32], strides = [1, 1]} : vector<8x128xf32> to vector<8x32xf32>
    %cst_301 = arith.constant 2.000000e+00 : f32
    %1011 = vector.broadcast %cst_301 : f32 to vector<8x32xf32>
    %1012 = arith.mulf %1011, %1010 : vector<8x32xf32>
    %cst_302 = arith.constant 1.000000e+00 : f32
    %1013 = vector.broadcast %cst_302 : f32 to vector<8x32xf32>
    %1014 = arith.subf %1012, %1013 : vector<8x32xf32>
    %1015 = vector.extract_strided_slice %1007 {offsets = [0, 96], sizes = [8, 32], strides = [1, 1]} : vector<8x128xf32> to vector<8x32xf32>
    %1016 = arith.mulf %1009, %997 : vector<8x32xf32>
    %1017 = arith.mulf %1008, %1014 : vector<8x32xf32>
    %1018 = arith.addf %1016, %1017 : vector<8x32xf32>
    %1019 = math.tanh %1018 : vector<8x32xf32>
    %1020 = arith.mulf %1015, %1019 : vector<8x32xf32>
    %1021 = vector.extract_strided_slice %935 {offsets = [32, 0], sizes = [8, 128], strides = [1, 1]} : vector<64x128xf32> to vector<8x128xf32>
    %cst_303 = arith.constant dense<0.000000e+00> : vector<8x128xf32>
    %1022 = tpu.matmul %1020, %936, %cst_303 {dimension_numbers = #tpu.dot_dimension_numbers<[1], [0], [0], [1], [0, 0, 1, 1], [], []>} : vector<8x32xf32>, vector<32x128xf32>, vector<8x128xf32> -> vector<8x128xf32>
    %1023 = arith.addf %1021, %1022 : vector<8x128xf32>
    %1024 = arith.negf %1023 : vector<8x128xf32>
    %1025 = math.exp %1024 : vector<8x128xf32>
    %cst_304 = arith.constant 1.000000e+00 : f32
    %1026 = vector.broadcast %cst_304 : f32 to vector<8x128xf32>
    %1027 = arith.addf %1026, %1025 : vector<8x128xf32>
    %1028 = arith.divf %1026, %1027 : vector<8x128xf32>
    %1029 = vector.extract_strided_slice %1028 {offsets = [0, 0], sizes = [8, 32], strides = [1, 1]} : vector<8x128xf32> to vector<8x32xf32>
    %1030 = vector.extract_strided_slice %1028 {offsets = [0, 32], sizes = [8, 32], strides = [1, 1]} : vector<8x128xf32> to vector<8x32xf32>
    %1031 = vector.extract_strided_slice %1028 {offsets = [0, 64], sizes = [8, 32], strides = [1, 1]} : vector<8x128xf32> to vector<8x32xf32>
    %cst_305 = arith.constant 2.000000e+00 : f32
    %1032 = vector.broadcast %cst_305 : f32 to vector<8x32xf32>
    %1033 = arith.mulf %1032, %1031 : vector<8x32xf32>
    %cst_306 = arith.constant 1.000000e+00 : f32
    %1034 = vector.broadcast %cst_306 : f32 to vector<8x32xf32>
    %1035 = arith.subf %1033, %1034 : vector<8x32xf32>
    %1036 = vector.extract_strided_slice %1028 {offsets = [0, 96], sizes = [8, 32], strides = [1, 1]} : vector<8x128xf32> to vector<8x32xf32>
    %1037 = arith.mulf %1030, %1018 : vector<8x32xf32>
    %1038 = arith.mulf %1029, %1035 : vector<8x32xf32>
    %1039 = arith.addf %1037, %1038 : vector<8x32xf32>
    %1040 = math.tanh %1039 : vector<8x32xf32>
    %1041 = arith.mulf %1036, %1040 : vector<8x32xf32>
    %1042 = vector.extract_strided_slice %935 {offsets = [40, 0], sizes = [8, 128], strides = [1, 1]} : vector<64x128xf32> to vector<8x128xf32>
    %cst_307 = arith.constant dense<0.000000e+00> : vector<8x128xf32>
    %1043 = tpu.matmul %1041, %936, %cst_307 {dimension_numbers = #tpu.dot_dimension_numbers<[1], [0], [0], [1], [0, 0, 1, 1], [], []>} : vector<8x32xf32>, vector<32x128xf32>, vector<8x128xf32> -> vector<8x128xf32>
    %1044 = arith.addf %1042, %1043 : vector<8x128xf32>
    %1045 = arith.negf %1044 : vector<8x128xf32>
    %1046 = math.exp %1045 : vector<8x128xf32>
    %cst_308 = arith.constant 1.000000e+00 : f32
    %1047 = vector.broadcast %cst_308 : f32 to vector<8x128xf32>
    %1048 = arith.addf %1047, %1046 : vector<8x128xf32>
    %1049 = arith.divf %1047, %1048 : vector<8x128xf32>
    %1050 = vector.extract_strided_slice %1049 {offsets = [0, 0], sizes = [8, 32], strides = [1, 1]} : vector<8x128xf32> to vector<8x32xf32>
    %1051 = vector.extract_strided_slice %1049 {offsets = [0, 32], sizes = [8, 32], strides = [1, 1]} : vector<8x128xf32> to vector<8x32xf32>
    %1052 = vector.extract_strided_slice %1049 {offsets = [0, 64], sizes = [8, 32], strides = [1, 1]} : vector<8x128xf32> to vector<8x32xf32>
    %cst_309 = arith.constant 2.000000e+00 : f32
    %1053 = vector.broadcast %cst_309 : f32 to vector<8x32xf32>
    %1054 = arith.mulf %1053, %1052 : vector<8x32xf32>
    %cst_310 = arith.constant 1.000000e+00 : f32
    %1055 = vector.broadcast %cst_310 : f32 to vector<8x32xf32>
    %1056 = arith.subf %1054, %1055 : vector<8x32xf32>
    %1057 = vector.extract_strided_slice %1049 {offsets = [0, 96], sizes = [8, 32], strides = [1, 1]} : vector<8x128xf32> to vector<8x32xf32>
    %1058 = arith.mulf %1051, %1039 : vector<8x32xf32>
    %1059 = arith.mulf %1050, %1056 : vector<8x32xf32>
    %1060 = arith.addf %1058, %1059 : vector<8x32xf32>
    %1061 = math.tanh %1060 : vector<8x32xf32>
    %1062 = arith.mulf %1057, %1061 : vector<8x32xf32>
    %1063 = vector.extract_strided_slice %935 {offsets = [48, 0], sizes = [8, 128], strides = [1, 1]} : vector<64x128xf32> to vector<8x128xf32>
    %cst_311 = arith.constant dense<0.000000e+00> : vector<8x128xf32>
    %1064 = tpu.matmul %1062, %936, %cst_311 {dimension_numbers = #tpu.dot_dimension_numbers<[1], [0], [0], [1], [0, 0, 1, 1], [], []>} : vector<8x32xf32>, vector<32x128xf32>, vector<8x128xf32> -> vector<8x128xf32>
    %1065 = arith.addf %1063, %1064 : vector<8x128xf32>
    %1066 = arith.negf %1065 : vector<8x128xf32>
    %1067 = math.exp %1066 : vector<8x128xf32>
    %cst_312 = arith.constant 1.000000e+00 : f32
    %1068 = vector.broadcast %cst_312 : f32 to vector<8x128xf32>
    %1069 = arith.addf %1068, %1067 : vector<8x128xf32>
    %1070 = arith.divf %1068, %1069 : vector<8x128xf32>
    %1071 = vector.extract_strided_slice %1070 {offsets = [0, 0], sizes = [8, 32], strides = [1, 1]} : vector<8x128xf32> to vector<8x32xf32>
    %1072 = vector.extract_strided_slice %1070 {offsets = [0, 32], sizes = [8, 32], strides = [1, 1]} : vector<8x128xf32> to vector<8x32xf32>
    %1073 = vector.extract_strided_slice %1070 {offsets = [0, 64], sizes = [8, 32], strides = [1, 1]} : vector<8x128xf32> to vector<8x32xf32>
    %cst_313 = arith.constant 2.000000e+00 : f32
    %1074 = vector.broadcast %cst_313 : f32 to vector<8x32xf32>
    %1075 = arith.mulf %1074, %1073 : vector<8x32xf32>
    %cst_314 = arith.constant 1.000000e+00 : f32
    %1076 = vector.broadcast %cst_314 : f32 to vector<8x32xf32>
    %1077 = arith.subf %1075, %1076 : vector<8x32xf32>
    %1078 = vector.extract_strided_slice %1070 {offsets = [0, 96], sizes = [8, 32], strides = [1, 1]} : vector<8x128xf32> to vector<8x32xf32>
    %1079 = arith.mulf %1072, %1060 : vector<8x32xf32>
    %1080 = arith.mulf %1071, %1077 : vector<8x32xf32>
    %1081 = arith.addf %1079, %1080 : vector<8x32xf32>
    %1082 = math.tanh %1081 : vector<8x32xf32>
    %1083 = arith.mulf %1078, %1082 : vector<8x32xf32>
    %1084 = vector.extract_strided_slice %935 {offsets = [56, 0], sizes = [8, 128], strides = [1, 1]} : vector<64x128xf32> to vector<8x128xf32>
    %cst_315 = arith.constant dense<0.000000e+00> : vector<8x128xf32>
    %1085 = tpu.matmul %1083, %936, %cst_315 {dimension_numbers = #tpu.dot_dimension_numbers<[1], [0], [0], [1], [0, 0, 1, 1], [], []>} : vector<8x32xf32>, vector<32x128xf32>, vector<8x128xf32> -> vector<8x128xf32>
    %1086 = arith.addf %1084, %1085 : vector<8x128xf32>
    %1087 = arith.negf %1086 : vector<8x128xf32>
    %1088 = math.exp %1087 : vector<8x128xf32>
    %cst_316 = arith.constant 1.000000e+00 : f32
    %1089 = vector.broadcast %cst_316 : f32 to vector<8x128xf32>
    %1090 = arith.addf %1089, %1088 : vector<8x128xf32>
    %1091 = arith.divf %1089, %1090 : vector<8x128xf32>
    %1092 = vector.extract_strided_slice %1091 {offsets = [0, 0], sizes = [8, 32], strides = [1, 1]} : vector<8x128xf32> to vector<8x32xf32>
    %1093 = vector.extract_strided_slice %1091 {offsets = [0, 32], sizes = [8, 32], strides = [1, 1]} : vector<8x128xf32> to vector<8x32xf32>
    %1094 = vector.extract_strided_slice %1091 {offsets = [0, 64], sizes = [8, 32], strides = [1, 1]} : vector<8x128xf32> to vector<8x32xf32>
    %cst_317 = arith.constant 2.000000e+00 : f32
    %1095 = vector.broadcast %cst_317 : f32 to vector<8x32xf32>
    %1096 = arith.mulf %1095, %1094 : vector<8x32xf32>
    %cst_318 = arith.constant 1.000000e+00 : f32
    %1097 = vector.broadcast %cst_318 : f32 to vector<8x32xf32>
    %1098 = arith.subf %1096, %1097 : vector<8x32xf32>
    %1099 = vector.extract_strided_slice %1091 {offsets = [0, 96], sizes = [8, 32], strides = [1, 1]} : vector<8x128xf32> to vector<8x32xf32>
    %1100 = arith.mulf %1093, %1081 : vector<8x32xf32>
    %1101 = arith.mulf %1092, %1098 : vector<8x32xf32>
    %1102 = arith.addf %1100, %1101 : vector<8x32xf32>
    %1103 = math.tanh %1102 : vector<8x32xf32>
    %1104 = arith.mulf %1099, %1103 : vector<8x32xf32>
    %c0_319 = arith.constant 0 : index
    %c0_320 = arith.constant 0 : index
    %1105 = vector.load %arg26[%c0_319, %c0_320] : memref<32x1xf32, #tpu.memory_space<vmem>>, vector<32x1xf32>
    %cst_321 = arith.constant dense<0.000000e+00> : vector<8x1xf32>
    %1106 = tpu.matmul %1104, %1105, %cst_321 {dimension_numbers = #tpu.dot_dimension_numbers<[1], [0], [0], [1], [0, 0, 1, 1], [], []>} : vector<8x32xf32>, vector<32x1xf32>, vector<8x1xf32> -> vector<8x1xf32>
    %c0_322 = arith.constant 0 : index
    %c0_323 = arith.constant 0 : index
    %1107 = vector.load %arg27[%c0_322, %c0_323] : memref<1x1xf32, #tpu.memory_space<vmem>>, vector<1x1xf32>
    %1108 = vector.broadcast %1107 : vector<1x1xf32> to vector<8x1xf32>
    %1109 = arith.addf %1106, %1108 : vector<8x1xf32>
    %1110 = arith.negf %1109 : vector<8x1xf32>
    %1111 = math.exp %1110 : vector<8x1xf32>
    %cst_324 = arith.constant 1.000000e+00 : f32
    %1112 = vector.broadcast %cst_324 : f32 to vector<8x1xf32>
    %1113 = arith.addf %1112, %1111 : vector<8x1xf32>
    %1114 = arith.divf %1112, %1113 : vector<8x1xf32>
    %c0_325 = arith.constant 0 : index
    %c0_326 = arith.constant 0 : index
    %1115 = vector.load %arg30[%c0_325, %c0_326] : memref<8x1xf32, #tpu.memory_space<vmem>>, vector<8x1xf32>
    tpu.vector_store %arg30[%c0_325, %c0_326], %1114 {strides = array<i32>} : memref<8x1xf32, #tpu.memory_space<vmem>>, vector<8x1xf32>,
    return
  }
  func.func @transform_0(%arg0: i32) -> (i32, i32) {
    %c0_i32 = arith.constant 0 : i32
    %c0_i32_0 = arith.constant 0 : i32
    %c0_i32_1 = arith.constant 0 : i32
    return %c0_i32, %c0_i32_0 : i32, i32
  }
  func.func @transform_1(%arg0: i32) -> (i32, i32) {
    %c0_i32 = arith.constant 0 : i32
    %c0_i32_0 = arith.constant 0 : i32
    %c0_i32_1 = arith.constant 0 : i32
    return %c0_i32, %c0_i32_0 : i32, i32
  }
  func.func @transform_2(%arg0: i32) -> (i32, i32) {
    %c0_i32 = arith.constant 0 : i32
    %c0_i32_0 = arith.constant 0 : i32
    %c0_i32_1 = arith.constant 0 : i32
    return %c0_i32, %c0_i32_0 : i32, i32
  }
  func.func @transform_3(%arg0: i32) -> (i32, i32) {
    %c0_i32 = arith.constant 0 : i32
    %c0_i32_0 = arith.constant 0 : i32
    %c0_i32_1 = arith.constant 0 : i32
    return %c0_i32, %c0_i32_0 : i32, i32
  }
  func.func @transform_4(%arg0: i32) -> (i32, i32) {
    %c0_i32 = arith.constant 0 : i32
    %c0_i32_0 = arith.constant 0 : i32
    %c0_i32_1 = arith.constant 0 : i32
    return %c0_i32, %c0_i32_0 : i32, i32
  }
  func.func @transform_5(%arg0: i32) -> (i32, i32) {
    %c0_i32 = arith.constant 0 : i32
    %c0_i32_0 = arith.constant 0 : i32
    %c0_i32_1 = arith.constant 0 : i32
    return %c0_i32, %c0_i32_0 : i32, i32
  }
  func.func @transform_6(%arg0: i32) -> (i32, i32) {
    %c0_i32 = arith.constant 0 : i32
    %c0_i32_0 = arith.constant 0 : i32
    %c0_i32_1 = arith.constant 0 : i32
    return %c0_i32, %c0_i32_0 : i32, i32
  }
  func.func @transform_7(%arg0: i32) -> (i32, i32) {
    %c0_i32 = arith.constant 0 : i32
    %c0_i32_0 = arith.constant 0 : i32
    %c0_i32_1 = arith.constant 0 : i32
    return %c0_i32, %c0_i32_0 : i32, i32
  }
  func.func @transform_8(%arg0: i32) -> (i32, i32) {
    %c0_i32 = arith.constant 0 : i32
    %c0_i32_0 = arith.constant 0 : i32
    %c0_i32_1 = arith.constant 0 : i32
    return %c0_i32, %c0_i32_0 : i32, i32
  }
  func.func @transform_9(%arg0: i32) -> (i32, i32) {
    %c0_i32 = arith.constant 0 : i32
    %c0_i32_0 = arith.constant 0 : i32
    %c0_i32_1 = arith.constant 0 : i32
    return %c0_i32, %c0_i32_0 : i32, i32
  }
  func.func @transform_10(%arg0: i32) -> (i32, i32) {
    %c0_i32 = arith.constant 0 : i32
    %c0_i32_0 = arith.constant 0 : i32
    %c0_i32_1 = arith.constant 0 : i32
    return %c0_i32, %c0_i32_0 : i32, i32
  }
  func.func @transform_11(%arg0: i32) -> (i32, i32) {
    %c0_i32 = arith.constant 0 : i32
    %c0_i32_0 = arith.constant 0 : i32
    %c0_i32_1 = arith.constant 0 : i32
    return %c0_i32, %c0_i32_0 : i32, i32
  }
  func.func @transform_12(%arg0: i32) -> (i32, i32) {
    %c0_i32 = arith.constant 0 : i32
    %c0_i32_0 = arith.constant 0 : i32
    %c0_i32_1 = arith.constant 0 : i32
    return %c0_i32, %c0_i32_0 : i32, i32
  }
  func.func @transform_13(%arg0: i32) -> (i32, i32) {
    %c0_i32 = arith.constant 0 : i32
    %c0_i32_0 = arith.constant 0 : i32
    %c0_i32_1 = arith.constant 0 : i32
    return %c0_i32, %c0_i32_0 : i32, i32
  }
  func.func @transform_14(%arg0: i32) -> (i32, i32) {
    %c0_i32 = arith.constant 0 : i32
    %c0_i32_0 = arith.constant 0 : i32
    %c0_i32_1 = arith.constant 0 : i32
    return %c0_i32, %c0_i32_0 : i32, i32
  }
  func.func @transform_15(%arg0: i32) -> (i32, i32) {
    %c0_i32 = arith.constant 0 : i32
    %c0_i32_0 = arith.constant 0 : i32
    %c0_i32_1 = arith.constant 0 : i32
    return %c0_i32, %c0_i32_0 : i32, i32
  }
  func.func @transform_16(%arg0: i32) -> (i32, i32) {
    %c0_i32 = arith.constant 0 : i32
    %c0_i32_0 = arith.constant 0 : i32
    %c0_i32_1 = arith.constant 0 : i32
    return %c0_i32, %c0_i32_0 : i32, i32
  }
  func.func @transform_17(%arg0: i32) -> (i32, i32) {
    %c0_i32 = arith.constant 0 : i32
    %c0_i32_0 = arith.constant 0 : i32
    %c0_i32_1 = arith.constant 0 : i32
    return %c0_i32, %c0_i32_0 : i32, i32
  }
  func.func @transform_18(%arg0: i32) -> (i32, i32) {
    %c0_i32 = arith.constant 0 : i32
    %c0_i32_0 = arith.constant 0 : i32
    %c0_i32_1 = arith.constant 0 : i32
    return %c0_i32, %c0_i32_0 : i32, i32
  }
  func.func @transform_19(%arg0: i32) -> (i32, i32) {
    %c0_i32 = arith.constant 0 : i32
    %c0_i32_0 = arith.constant 0 : i32
    %c0_i32_1 = arith.constant 0 : i32
    return %c0_i32, %c0_i32_0 : i32, i32
  }
  func.func @transform_20(%arg0: i32) -> (i32, i32) {
    %c0_i32 = arith.constant 0 : i32
    %c0_i32_0 = arith.constant 0 : i32
    %c0_i32_1 = arith.constant 0 : i32
    return %c0_i32, %c0_i32_0 : i32, i32
  }
  func.func @transform_21(%arg0: i32) -> (i32, i32) {
    %c0_i32 = arith.constant 0 : i32
    %c0_i32_0 = arith.constant 0 : i32
    %c0_i32_1 = arith.constant 0 : i32
    return %c0_i32, %c0_i32_0 : i32, i32
  }
  func.func @transform_22(%arg0: i32) -> (i32, i32) {
    %c0_i32 = arith.constant 0 : i32
    %c0_i32_0 = arith.constant 0 : i32
    %c0_i32_1 = arith.constant 0 : i32
    return %c0_i32, %c0_i32_0 : i32, i32
  }
  func.func @transform_23(%arg0: i32) -> (i32, i32) {
    %c0_i32 = arith.constant 0 : i32
    %c0_i32_0 = arith.constant 0 : i32
    %c0_i32_1 = arith.constant 0 : i32
    return %c0_i32, %c0_i32_0 : i32, i32
  }
  func.func @transform_24(%arg0: i32) -> (i32, i32) {
    %c0_i32 = arith.constant 0 : i32
    %c0_i32_0 = arith.constant 0 : i32
    %c0_i32_1 = arith.constant 0 : i32
    return %c0_i32, %c0_i32_0 : i32, i32
  }
  func.func @transform_25(%arg0: i32) -> (i32, i32) {
    %c0_i32 = arith.constant 0 : i32
    %c0_i32_0 = arith.constant 0 : i32
    %c0_i32_1 = arith.constant 0 : i32
    return %c0_i32, %c0_i32_0 : i32, i32
  }
  func.func @transform_26(%arg0: i32) -> (i32, i32) {
    %c0_i32 = arith.constant 0 : i32
    %c0_i32_0 = arith.constant 0 : i32
    %c0_i32_1 = arith.constant 0 : i32
    return %c0_i32, %c0_i32_0 : i32, i32
  }
  func.func @transform_27(%arg0: i32) -> (i32, i32) {
    %c0_i32 = arith.constant 0 : i32
    %c0_i32_0 = arith.constant 0 : i32
    %c0_i32_1 = arith.constant 0 : i32
    return %c0_i32, %c0_i32_0 : i32, i32
  }
  func.func @transform_28(%arg0: i32) -> (i32, i32) {
    %c0_i32 = arith.constant 0 : i32
    %c0_i32_0 = arith.constant 0 : i32
    %c0_i32_1 = arith.constant 0 : i32
    return %c0_i32, %c0_i32_0 : i32, i32
  }
  func.func @transform_29(%arg0: i32) -> (i32, i32) {
    %c0_i32 = arith.constant 0 : i32
    %c0_i32_0 = arith.constant 0 : i32
    %c0_i32_1 = arith.constant 0 : i32
    return %c0_i32, %c0_i32_0 : i32, i32
  }
}

</mosaic_0001>

<llo_original>
// kernel: lvgnet_forward.1
$region0: #{lvgnet_forward.1}
  #allocation0 [shape = 'u32[]', space=smem, size = 0x4, offset = 0x4, fixed_abs, tag = 'smem constant byte address 0x4 - core index']
  #allocation1 [shape = 'u32[144,128]{1,0:T(1,128)}', space=vmem, size = 0x12000, scoped, tag = 'internal scratch']
  #allocation2 [shape = 'f32[64,32]{1,0:T(8,128)}', space=vmem, size = 0x8000, scoped, tag = 'scratch operand']
  #allocation3 [shape = 'f32[1,1]{1,0:T(1,128)S(1)}', space=vmem, size = 0x200, scoped, tag = 'scoped memory for lvgnet_forward.1']
  %s0 = inlined_call_operand.smem [shape: u32[30], index: -1, kind: input, shape index: {}]
  %s1 = sld [smem:[%s0]]
  %s2 = scalar_lea.smem %s0, 1
  %s3 = sld [smem:[%s2]]
  %s4 = scalar_lea.smem %s0, 2
  %s5 = sld [smem:[%s4]]
  %s6 = scalar_lea.smem %s0, 3
  %s7 = sld [smem:[%s6]]
  %s8 = scalar_lea.smem %s0, 4
  %s9 = sld [smem:[%s8]]
  %s10 = scalar_lea.smem %s0, 5
  %s11 = sld [smem:[%s10]]
  %s12 = scalar_lea.smem %s0, 6
  %s13 = sld [smem:[%s12]]
  %s14 = scalar_lea.smem %s0, 7
  %s15 = sld [smem:[%s14]]
  %s16 = scalar_lea.smem %s0, 8
  %s17 = sld [smem:[%s16]]
  %s18 = scalar_lea.smem %s0, 9
  %s19 = sld [smem:[%s18]]
  %s20 = scalar_lea.smem %s0, 10
  %s21 = sld [smem:[%s20]]
  %s22 = scalar_lea.smem %s0, 11
  %s23 = sld [smem:[%s22]]
  %s24 = scalar_lea.smem %s0, 12
  %s25 = sld [smem:[%s24]]
  %s26 = scalar_lea.smem %s0, 13
  %s27 = sld [smem:[%s26]]
  %s28 = scalar_lea.smem %s0, 14
  %s29 = sld [smem:[%s28]]
  %s30 = scalar_lea.smem %s0, 15
  %s31 = sld [smem:[%s30]]
  %s32 = scalar_lea.smem %s0, 16
  %s33 = sld [smem:[%s32]]
  %s34 = scalar_lea.smem %s0, 17
  %s35 = sld [smem:[%s34]]
  %s36 = scalar_lea.smem %s0, 18
  %s37 = sld [smem:[%s36]]
  %s38 = scalar_lea.smem %s0, 19
  %s39 = sld [smem:[%s38]]
  %s40 = scalar_lea.smem %s0, 20
  %s41 = sld [smem:[%s40]]
  %s42 = scalar_lea.smem %s0, 21
  %s43 = sld [smem:[%s42]]
  %s44 = scalar_lea.smem %s0, 22
  %s45 = sld [smem:[%s44]]
  %s46 = scalar_lea.smem %s0, 23
  %s47 = sld [smem:[%s46]]
  %s48 = scalar_lea.smem %s0, 24
  %s49 = sld [smem:[%s48]]
  %s50 = scalar_lea.smem %s0, 25
  %s51 = sld [smem:[%s50]]
  %s52 = scalar_lea.smem %s0, 26
  %s53 = sld [smem:[%s52]]
  %s54 = scalar_lea.smem %s0, 27
  %s55 = sld [smem:[%s54]]
  %s56 = scalar_lea.smem %s0, 28
  %s57 = sld [smem:[%s56]]
  %s58 = scalar_lea.smem %s0, 29
  %s59 = sld [smem:[%s58]]
  %60 = xla_tuple %s55, %s57, %s59
  %s61 = sld [smem:[#allocation0]]
  $region174: #{lvgnet_forward.1} parent=0
    _
  %s63 = ssub.s32 1, %s61
  %s64 = scalar_select 0, %s63, %s61
  %v65 = vstv %s53
  %66 = vst [vmem:[#allocation3] sm:$0x1] %v65
  $region1: #{lvgnet_forward.1} parent=0
    #allocation4 [shape = 'u8[8192]{0}', space=vmem, size = 0x2000, scoped, tag = 'input window, operand 10, single buffered']
    #allocation5 [shape = 's32[1]{0}', space=sflag, size = 0x4, scoped, tag = 'scoped memory for lvgnet_forward.1']
    #allocation6 [shape = 'u8[512]{0}', space=vmem, size = 0x400, scoped, tag = 'input window, operand 11, single buffered']
    #allocation7 [shape = 's32[1]{0}', space=sflag, size = 0x4, scoped, tag = 'scoped memory for lvgnet_forward.1']
    #allocation8 [shape = 'u8[512]{0}', space=vmem, size = 0x400, scoped, tag = 'input window, operand 13, single buffered']
    #allocation9 [shape = 'u8[16384]{0}', space=vmem, size = 0x4000, scoped, tag = 'input window, operand 15, single buffered']
    #allocation10 [shape = 's32[1]{0}', space=sflag, size = 0x4, scoped, tag = 'scoped memory for lvgnet_forward.1']
    #allocation11 [shape = 'u8[512]{0}', space=vmem, size = 0x400, scoped, tag = 'input window, operand 16, single buffered']
    #allocation12 [shape = 'u8[2048]{0}', space=vmem, size = 0x800, scoped, tag = 'input window, operand 19, single buffered']
    #allocation13 [shape = 's32[1]{0}', space=sflag, size = 0x4, scoped, tag = 'scoped memory for lvgnet_forward.1']
    #allocation14 [shape = 'u8[512]{0}', space=vmem, size = 0x400, scoped, tag = 'input window, operand 21, single buffered']
    #allocation15 [shape = 'u8[16384]{0}', space=vmem, size = 0x4000, scoped, tag = 'input window, operand 22, single buffered']
    #allocation16 [shape = 's32[1]{0}', space=sflag, size = 0x4, scoped, tag = 'scoped memory for lvgnet_forward.1']
    #allocation17 [shape = 'u8[16384]{0}', space=vmem, size = 0x4000, scoped, tag = 'input window, operand 23, single buffered']
    #allocation18 [shape = 'u8[512]{0}', space=vmem, size = 0x400, scoped, tag = 'input window, operand 24, single buffered']
    #allocation19 [shape = 's32[1]{0}', space=sflag, size = 0x4, scoped, tag = 'scoped memory for lvgnet_forward.1']
    %67 = vsyncpa [#allocation5], 0
    %68 = vsyncpa [#allocation7], 0
    %69 = vsyncpa [#allocation10], 0
    %70 = vsyncpa [#allocation13], 0
    %71 = vsyncpa [#allocation16], 0
    %72 = vsyncpa [#allocation19], 0
    // Predicated region
    $region2: #{lvgnet_forward.1} parent=1 // pred_check
      _
    $region3: #{lvgnet_forward.1} parent=1 // pred_check_branch
      %74 = sbr.rel (0) target = $region5
    $region4: #{lvgnet_forward.1} parent=1 // pred_region
      _
    $region5: #{lvgnet_forward.1} parent=1 // pred_fallthru
      _
    // Predicated region
    $region6: #{lvgnet_forward.1} parent=1 // pred_check
      _
    $region7: #{lvgnet_forward.1} parent=1 // pred_check_branch
      %76 = sbr.rel (0) target = $region9
    $region8: #{lvgnet_forward.1} parent=1 // pred_region
      _
    $region9: #{lvgnet_forward.1} parent=1 // pred_fallthru
      _
    // Predicated region
    $region10: #{lvgnet_forward.1} parent=1 // pred_check
      _
    $region11: #{lvgnet_forward.1} parent=1 // pred_check_branch
      %78 = sbr.rel (0) target = $region13
    $region12: #{lvgnet_forward.1} parent=1 // pred_region
      _
    $region13: #{lvgnet_forward.1} parent=1 // pred_fallthru
      _
    // Predicated region
    $region14: #{lvgnet_forward.1} parent=1 // pred_check
      _
    $region15: #{lvgnet_forward.1} parent=1 // pred_check_branch
      %80 = sbr.rel (0) target = $region17
    $region16: #{lvgnet_forward.1} parent=1 // pred_region
      _
    $region17: #{lvgnet_forward.1} parent=1 // pred_fallthru
      _
    // Predicated region
    $region18: #{lvgnet_forward.1} parent=1 // pred_check
      _
    $region19: #{lvgnet_forward.1} parent=1 // pred_check_branch
      %82 = sbr.rel (0) target = $region21
    $region20: #{lvgnet_forward.1} parent=1 // pred_region
      _
    $region21: #{lvgnet_forward.1} parent=1 // pred_fallthru
      _
    // Predicated region
    $region22: #{lvgnet_forward.1} parent=1 // pred_check
      _
    $region23: #{lvgnet_forward.1} parent=1 // pred_check_branch
      %84 = sbr.rel (0) target = $region25
    $region24: #{lvgnet_forward.1} parent=1 // pred_region
      _
    $region25: #{lvgnet_forward.1} parent=1 // pred_fallthru
      _
    // Predicated region
    $region26: #{lvgnet_forward.1} parent=1 // pred_check
      _
    $region27: #{lvgnet_forward.1} parent=1 // pred_check_branch
      %86 = sbr.rel (0) target = $region29
    $region28: #{lvgnet_forward.1} parent=1 // pred_region
      _
    $region29: #{lvgnet_forward.1} parent=1 // pred_fallthru
      _
    // Predicated region
    $region30: #{lvgnet_forward.1} parent=1 // pred_check
      _
    $region31: #{lvgnet_forward.1} parent=1 // pred_check_branch
      %88 = sbr.rel (0) target = $region33
    $region32: #{lvgnet_forward.1} parent=1 // pred_region
      _
    $region33: #{lvgnet_forward.1} parent=1 // pred_fallthru
      _
    // Predicated region
    $region34: #{lvgnet_forward.1} parent=1 // pred_check
      _
    $region35: #{lvgnet_forward.1} parent=1 // pred_check_branch
      %90 = sbr.rel (0) target = $region37
    $region36: #{lvgnet_forward.1} parent=1 // pred_region
      _
    $region37: #{lvgnet_forward.1} parent=1 // pred_fallthru
      _
    // Predicated region
    $region38: #{lvgnet_forward.1} parent=1 // pred_check
      _
    $region39: #{lvgnet_forward.1} parent=1 // pred_check_branch
      %92 = sbr.rel (0) target = $region41
    $region40: #{lvgnet_forward.1} parent=1 // pred_region
      _
    $region41: #{lvgnet_forward.1} parent=1 // pred_fallthru
      _
    // Predicated region
    $region42: #{lvgnet_forward.1} parent=1 // pred_check
      _
    $region43: #{lvgnet_forward.1} parent=1 // pred_check_branch
      %94 = sbr.rel (0) target = $region45
    $region44: #{lvgnet_forward.1} parent=1 // pred_region
      %s96 = ssub.s32 256, 256
      %97 = vsyncadd [#allocation5], %s96
      %s98 = sshll.u32 [#allocation4], 4
      %s99 = int_to_ptr.vmem [resolvable:$true] %s98
      %104 = dma.hbm_to_vmem [thread:$0]  %s21, 256, %s99, [#allocation5], 128, 128, 8
    $region45: #{lvgnet_forward.1} parent=1 // pred_fallthru
      _
    // Predicated region
    $region46: #{lvgnet_forward.1} parent=1 // pred_check
      _
    $region47: #{lvgnet_forward.1} parent=1 // pred_check_branch
      %106 = sbr.rel (0) target = $region49
    $region48: #{lvgnet_forward.1} parent=1 // pred_region
      %s108 = ssub.s32 16, 16
      %109 = vsyncadd [#allocation7], %s108
      %s111 = sshll.u32 [#allocation6], 4
      %s112 = int_to_ptr.vmem [resolvable:$true] %s111
      %114 = dma.hbm_to_vmem [thread:$0]  %s23, 16, %s112, [#allocation7]
    $region49: #{lvgnet_forward.1} parent=1 // pred_fallthru
      _
    // Predicated region
    $region50: #{lvgnet_forward.1} parent=1 // pred_check
      _
    $region51: #{lvgnet_forward.1} parent=1 // pred_check_branch
      %116 = sbr.rel (0) target = $region53
    $region52: #{lvgnet_forward.1} parent=1 // pred_region
      _
    $region53: #{lvgnet_forward.1} parent=1 // pred_fallthru
      _
    // Predicated region
    $region54: #{lvgnet_forward.1} parent=1 // pred_check
      _
    $region55: #{lvgnet_forward.1} parent=1 // pred_check_branch
      %118 = sbr.rel (0) target = $region57
    $region56: #{lvgnet_forward.1} parent=1 // pred_region
      %s120 = ssub.s32 16, 16
      %121 = vsyncadd [#allocation7], %s120
      %s123 = sshll.u32 [#allocation8], 4
      %s124 = int_to_ptr.vmem [resolvable:$true] %s123
      %126 = dma.hbm_to_vmem [thread:$0]  %s27, 16, %s124, [#allocation7]
    $region57: #{lvgnet_forward.1} parent=1 // pred_fallthru
      _
    // Predicated region
    $region58: #{lvgnet_forward.1} parent=1 // pred_check
      _
    $region59: #{lvgnet_forward.1} parent=1 // pred_check_branch
      %128 = sbr.rel (0) target = $region61
    $region60: #{lvgnet_forward.1} parent=1 // pred_region
      _
    $region61: #{lvgnet_forward.1} parent=1 // pred_fallthru
      _
    // Predicated region
    $region62: #{lvgnet_forward.1} parent=1 // pred_check
      _
    $region63: #{lvgnet_forward.1} parent=1 // pred_check_branch
      %130 = sbr.rel (0) target = $region65
    $region64: #{lvgnet_forward.1} parent=1 // pred_region
      %s132 = ssub.s32 512, 512
      %133 = vsyncadd [#allocation10], %s132
      %s134 = sshll.u32 [#allocation9], 4
      %s135 = int_to_ptr.vmem [resolvable:$true] %s134
      %140 = dma.hbm_to_vmem [thread:$0]  %s31, 512, %s135, [#allocation10], 128, 128, 8
    $region65: #{lvgnet_forward.1} parent=1 // pred_fallthru
      _
    // Predicated region
    $region66: #{lvgnet_forward.1} parent=1 // pred_check
      _
    $region67: #{lvgnet_forward.1} parent=1 // pred_check_branch
      %142 = sbr.rel (0) target = $region69
    $region68: #{lvgnet_forward.1} parent=1 // pred_region
      %s144 = ssub.s32 16, 16
      %145 = vsyncadd [#allocation10], %s144
      %s147 = sshll.u32 [#allocation11], 4
      %s148 = int_to_ptr.vmem [resolvable:$true] %s147
      %150 = dma.hbm_to_vmem [thread:$0]  %s33, 16, %s148, [#allocation10]
    $region69: #{lvgnet_forward.1} parent=1 // pred_fallthru
      _
    // Predicated region
    $region70: #{lvgnet_forward.1} parent=1 // pred_check
      _
    $region71: #{lvgnet_forward.1} parent=1 // pred_check_branch
      %152 = sbr.rel (0) target = $region73
    $region72: #{lvgnet_forward.1} parent=1 // pred_region
      _
    $region73: #{lvgnet_forward.1} parent=1 // pred_fallthru
      _
    // Predicated region
    $region74: #{lvgnet_forward.1} parent=1 // pred_check
      _
    $region75: #{lvgnet_forward.1} parent=1 // pred_check_branch
      %154 = sbr.rel (0) target = $region77
    $region76: #{lvgnet_forward.1} parent=1 // pred_region
      _
    $region77: #{lvgnet_forward.1} parent=1 // pred_fallthru
      _
    // Predicated region
    $region78: #{lvgnet_forward.1} parent=1 // pred_check
      _
    $region79: #{lvgnet_forward.1} parent=1 // pred_check_branch
      %156 = sbr.rel (0) target = $region81
    $region80: #{lvgnet_forward.1} parent=1 // pred_region
      %s158 = ssub.s32 64, 64
      %159 = vsyncadd [#allocation13], %s158
      %s161 = sshll.u32 [#allocation12], 4
      %s162 = int_to_ptr.vmem [resolvable:$true] %s161
      %164 = dma.hbm_to_vmem [thread:$0]  %s39, 64, %s162, [#allocation13]
    $region81: #{lvgnet_forward.1} parent=1 // pred_fallthru
      _
    // Predicated region
    $region82: #{lvgnet_forward.1} parent=1 // pred_check
      _
    $region83: #{lvgnet_forward.1} parent=1 // pred_check_branch
      %166 = sbr.rel (0) target = $region85
    $region84: #{lvgnet_forward.1} parent=1 // pred_region
      _
    $region85: #{lvgnet_forward.1} parent=1 // pred_fallthru
      _
    // Predicated region
    $region86: #{lvgnet_forward.1} parent=1 // pred_check
      _
    $region87: #{lvgnet_forward.1} parent=1 // pred_check_branch
      %168 = sbr.rel (0) target = $region89
    $region88: #{lvgnet_forward.1} parent=1 // pred_region
      %s170 = ssub.s32 16, 16
      %171 = vsyncadd [#allocation13], %s170
      %s173 = sshll.u32 [#allocation14], 4
      %s174 = int_to_ptr.vmem [resolvable:$true] %s173
      %176 = dma.hbm_to_vmem [thread:$0]  %s43, 16, %s174, [#allocation13]
    $region89: #{lvgnet_forward.1} parent=1 // pred_fallthru
      _
    // Predicated region
    $region90: #{lvgnet_forward.1} parent=1 // pred_check
      _
    $region91: #{lvgnet_forward.1} parent=1 // pred_check_branch
      %178 = sbr.rel (0) target = $region93
    $region92: #{lvgnet_forward.1} parent=1 // pred_region
      %s180 = ssub.s32 512, 512
      %181 = vsyncadd [#allocation16], %s180
      %s182 = sshll.u32 [#allocation15], 4
      %s183 = int_to_ptr.vmem [resolvable:$true] %s182
      %188 = dma.hbm_to_vmem [thread:$0]  %s45, 512, %s183, [#allocation16], 128, 128, 8
    $region93: #{lvgnet_forward.1} parent=1 // pred_fallthru
      _
    // Predicated region
    $region94: #{lvgnet_forward.1} parent=1 // pred_check
      _
    $region95: #{lvgnet_forward.1} parent=1 // pred_check_branch
      %190 = sbr.rel (0) target = $region97
    $region96: #{lvgnet_forward.1} parent=1 // pred_region
      %s192 = ssub.s32 512, 512
      %193 = vsyncadd [#allocation16], %s192
      %s194 = sshll.u32 [#allocation17], 4
      %s195 = int_to_ptr.vmem [resolvable:$true] %s194
      %200 = dma.hbm_to_vmem [thread:$0]  %s47, 512, %s195, [#allocation16], 128, 128, 8
    $region97: #{lvgnet_forward.1} parent=1 // pred_fallthru
      _
    // Predicated region
    $region98: #{lvgnet_forward.1} parent=1 // pred_check
      _
    $region99: #{lvgnet_forward.1} parent=1 // pred_check_branch
      %202 = sbr.rel (0) target = $region101
    $region100: #{lvgnet_forward.1} parent=1 // pred_region
      %s204 = ssub.s32 16, 16
      %205 = vsyncadd [#allocation19], %s204
      %s207 = sshll.u32 [#allocation18], 4
      %s208 = int_to_ptr.vmem [resolvable:$true] %s207
      %210 = dma.hbm_to_vmem [thread:$0]  %s49, 16, %s208, [#allocation19]
    $region101: #{lvgnet_forward.1} parent=1 // pred_fallthru
      _
    // Predicated region
    $region102: #{lvgnet_forward.1} parent=1 // pred_check
      _
    $region103: #{lvgnet_forward.1} parent=1 // pred_check_branch
      %212 = sbr.rel (0) target = $region105
    $region104: #{lvgnet_forward.1} parent=1 // pred_region
      _
    $region105: #{lvgnet_forward.1} parent=1 // pred_fallthru
      _
    // Predicated region
    $region106: #{lvgnet_forward.1} parent=1 // pred_check
      _
    $region107: #{lvgnet_forward.1} parent=1 // pred_check_branch
      %214 = sbr.rel (0) target = $region109
    $region108: #{lvgnet_forward.1} parent=1 // pred_region
      _
    $region109: #{lvgnet_forward.1} parent=1 // pred_fallthru
      _
    // Predicated region
    $region110: #{lvgnet_forward.1} parent=1 // pred_check
      _
    $region111: #{lvgnet_forward.1} parent=1 // pred_check_branch
      %216 = sbr.rel (0) target = $region113
    $region112: #{lvgnet_forward.1} parent=1 // pred_region
      %217 = dma.done [#allocation5], 256
    $region113: #{lvgnet_forward.1} parent=1 // pred_fallthru
      _
    // Predicated region
    $region114: #{lvgnet_forward.1} parent=1 // pred_check
      _
    $region115: #{lvgnet_forward.1} parent=1 // pred_check_branch
      %219 = sbr.rel (0) target = $region117
    $region116: #{lvgnet_forward.1} parent=1 // pred_region
      %220 = dma.done [#allocation7], 16
    $region117: #{lvgnet_forward.1} parent=1 // pred_fallthru
      _
    // Predicated region
    $region118: #{lvgnet_forward.1} parent=1 // pred_check
      _
    $region119: #{lvgnet_forward.1} parent=1 // pred_check_branch
      %222 = sbr.rel (0) target = $region121
    $region120: #{lvgnet_forward.1} parent=1 // pred_region
      %223 = dma.done [#allocation7], 16
    $region121: #{lvgnet_forward.1} parent=1 // pred_fallthru
      _
    // Predicated region
    $region122: #{lvgnet_forward.1} parent=1 // pred_check
      _
    $region123: #{lvgnet_forward.1} parent=1 // pred_check_branch
      %225 = sbr.rel (0) target = $region125
    $region124: #{lvgnet_forward.1} parent=1 // pred_region
      %226 = dma.done [#allocation10], 512
    $region125: #{lvgnet_forward.1} parent=1 // pred_fallthru
      _
    // Predicated region
    $region126: #{lvgnet_forward.1} parent=1 // pred_check
      _
    $region127: #{lvgnet_forward.1} parent=1 // pred_check_branch
      %228 = sbr.rel (0) target = $region129
    $region128: #{lvgnet_forward.1} parent=1 // pred_region
      %229 = dma.done [#allocation10], 16
    $region129: #{lvgnet_forward.1} parent=1 // pred_fallthru
      _
    // Predicated region
    $region130: #{lvgnet_forward.1} parent=1 // pred_check
      _
    $region131: #{lvgnet_forward.1} parent=1 // pred_check_branch
      %231 = sbr.rel (0) target = $region133
    $region132: #{lvgnet_forward.1} parent=1 // pred_region
      %232 = dma.done [#allocation13], 64
    $region133: #{lvgnet_forward.1} parent=1 // pred_fallthru
      _
    // Predicated region
    $region134: #{lvgnet_forward.1} parent=1 // pred_check
      _
    $region135: #{lvgnet_forward.1} parent=1 // pred_check_branch
      %234 = sbr.rel (0) target = $region137
    $region136: #{lvgnet_forward.1} parent=1 // pred_region
      %235 = dma.done [#allocation13], 16
    $region137: #{lvgnet_forward.1} parent=1 // pred_fallthru
      _
    // Predicated region
    $region138: #{lvgnet_forward.1} parent=1 // pred_check
      _
    $region139: #{lvgnet_forward.1} parent=1 // pred_check_branch
      %237 = sbr.rel (0) target = $region141
    $region140: #{lvgnet_forward.1} parent=1 // pred_region
      %238 = dma.done [#allocation16], 512
    $region141: #{lvgnet_forward.1} parent=1 // pred_fallthru
      _
    // Predicated region
    $region142: #{lvgnet_forward.1} parent=1 // pred_check
      _
    $region143: #{lvgnet_forward.1} parent=1 // pred_check_branch
      %240 = sbr.rel (0) target = $region145
    $region144: #{lvgnet_forward.1} parent=1 // pred_region
      %241 = dma.done [#allocation16], 512
    $region145: #{lvgnet_forward.1} parent=1 // pred_fallthru
      _
    // Predicated region
    $region146: #{lvgnet_forward.1} parent=1 // pred_check
      _
    $region147: #{lvgnet_forward.1} parent=1 // pred_check_branch
      %243 = sbr.rel (0) target = $region149
    $region148: #{lvgnet_forward.1} parent=1 // pred_region
      %244 = dma.done [#allocation19], 16
    $region149: #{lvgnet_forward.1} parent=1 // pred_fallthru
      _
    %v245 = vld [vmem:[%s1] sm:$0xff]
    %v246 = vld [vmem:[%s1 + $0x8] sm:$0xff]
    %v247 = vld [vmem:[%s1 + $0x10] sm:$0xff]
    %v248 = vld [vmem:[%s1 + $0x18] sm:$0xff]
    %v249 = vld [vmem:[%s1 + $0x20] sm:$0xff]
    %v250 = vld [vmem:[%s1 + $0x28] sm:$0xff]
    %v251 = vld [vmem:[%s1 + $0x30] sm:$0xff]
    %v252 = vld [vmem:[%s1 + $0x38] sm:$0xff]
    %v253 = vld [vmem:[%s5] sm:$0xf]
    %v254 = vld [vmem:[%s9] sm:$0x1]
    %v256 = vlaneseq
    %v257 = vshrl.u32 %v256, 7
    %v258 = vsub.s32 0, %v257
    %v259 = vrot.slane %v254, %v258
    %vm261 = vcmask 31744
    %v263 = vsel %vm261, %v245, 0
    %v266 = vsel %vm261, %v246, 0
    %v269 = vsel %vm261, %v247, 0
    %v272 = vsel %vm261, %v248, 0
    %v275 = vsel %vm261, %v249, 0
    %v278 = vsel %vm261, %v250, 0
    %v281 = vsel %vm261, %v251, 0
    %v284 = vsel %vm261, %v252, 0
    %vm286 = vcmask 1043456
    %v288 = vsel %vm286, %v253, 0
    %290 = vmatprep.subr.mxu0 0.0
    %291 = vmatpush1.msra.mxu0 %v288
    %292 = vmatprep.subr.mxu0 0.0
    %293 = vmatpush1.msra.mxu0 0.0
    %294 = vmatprep.subr.mxu0 0.0
    %295 = vmatpush1.msra.mxu0 0.0
    %296 = vmatprep.subr.mxu0 0.0
    %297 = vmatpush1.msra.mxu0 0.0
    %298 = vmatprep.subr.mxu0 0.0
    %299 = vmatpush1.msra.mxu0 0.0
    %300 = vmatprep.subr.mxu0 0.0
    %301 = vmatpush1.msra.mxu0 0.0
    %302 = vmatprep.subr.mxu0 0.0
    %303 = vmatpush1.msra.mxu0 0.0
    %304 = vmatprep.subr.mxu0 0.0
    %305 = vmatpush1.msra.mxu0 0.0
    %306 = vmatprep.subr.mxu0 0.0
    %307 = vmatpush1.msra.mxu0 0.0
    %308 = vmatprep.subr.mxu0 0.0
    %309 = vmatpush1.msra.mxu0 0.0
    %310 = vmatprep.subr.mxu0 0.0
    %311 = vmatpush1.msra.mxu0 0.0
    %312 = vmatprep.subr.mxu0 0.0
    %313 = vmatpush1.msra.mxu0 0.0
    %314 = vmatprep.subr.mxu0 0.0
    %315 = vmatpush1.msra.mxu0 0.0
    %316 = vmatprep.subr.mxu0 0.0
    %317 = vmatpush1.msra.mxu0 0.0
    %318 = vmatprep.subr.mxu0 0.0
    %319 = vmatpush1.msra.mxu0 0.0
    %320 = vmatprep.subr.mxu0 0.0
    %321 = vmatpush1.msra.mxu0 0.0
    %322 = vmatprep.subr.mxu0 0.0
    %323 = vmatpush1.msra.mxu0 0.0
    %324 = vmatprep.subr.mxu0 0.0
    %325 = vmatpush1.msra.mxu0 0.0
    %326 = vmatprep.subr.mxu0 0.0
    %327 = vmatpush1.msra.mxu0 0.0
    %328 = vmatprep.subr.mxu0 0.0
    %329 = vmatpush1.msra.mxu0 0.0
    %330 = vmatprep.subr.mxu0 0.0
    %331 = vmatpush1.msra.mxu0 0.0
    %332 = vmatprep.subr.mxu0 0.0
    %333 = vmatpush1.msra.mxu0 0.0
    %334 = vmatprep.subr.mxu0 0.0
    %335 = vmatpush1.msra.mxu0 0.0
    %336 = vmatprep.subr.mxu0 0.0
    %337 = vmatpush1.msra.mxu0 0.0
    %338 = vmatprep.subr.mxu0 0.0
    %339 = vmatpush1.msra.mxu0 0.0
    %340 = vmatprep.subr.mxu0 0.0
    %341 = vmatpush1.msra.mxu0 0.0
    %342 = vmatprep.subr.mxu0 0.0
    %343 = vmatpush1.msra.mxu0 0.0
    %344 = vmatprep.subr.mxu0 0.0
    %345 = vmatpush1.msra.mxu0 0.0
    %346 = vmatprep.subr.mxu0 0.0
    %347 = vmatpush1.msra.mxu0 0.0
    %348 = vmatprep.subr.mxu0 0.0
    %349 = vmatpush1.msra.mxu0 0.0
    %350 = vmatprep.subr.mxu0 0.0
    %351 = vmatpush1.msra.mxu0 0.0
    %352 = vmatprep.subr.mxu0 0.0
    %353 = vmatpush1.msra.mxu0 0.0
    %354 = vmatprep.mubr.f32.mxu0 0.0
    %355 = vmatmul.mubr.f32.gmra.mrb[0].mxu0 %v263
    %v356 = vpop.f32.mrb[0].mxu0
    %v357 = vadd.f32 %v259, %v356
    %v358 = vpop.f32.mrb[0].mxu0
    %359 = vmatprep.mubr.f32.mxu0 0.0
    %360 = vmatmul.mubr.f32.gmra.mrb[0].mxu0 %v266
    %v361 = vpop.f32.mrb[0].mxu0
    %v362 = vadd.f32 %v259, %v361
    %v363 = vpop.f32.mrb[0].mxu0
    %364 = vmatprep.mubr.f32.mxu0 0.0
    %365 = vmatmul.mubr.f32.gmra.mrb[0].mxu0 %v269
    %v366 = vpop.f32.mrb[0].mxu0
    %v367 = vadd.f32 %v259, %v366
    %v368 = vpop.f32.mrb[0].mxu0
    %369 = vmatprep.mubr.f32.mxu0 0.0
    %370 = vmatmul.mubr.f32.gmra.mrb[0].mxu0 %v272
    %v371 = vpop.f32.mrb[0].mxu0
    %v372 = vadd.f32 %v259, %v371
    %v373 = vpop.f32.mrb[0].mxu0
    %374 = vmatprep.mubr.f32.mxu0 0.0
    %375 = vmatmul.mubr.f32.gmra.mrb[0].mxu0 %v275
    %v376 = vpop.f32.mrb[0].mxu0
    %v377 = vadd.f32 %v259, %v376
    %v378 = vpop.f32.mrb[0].mxu0
    %379 = vmatprep.mubr.f32.mxu0 0.0
    %380 = vmatmul.mubr.f32.gmra.mrb[0].mxu0 %v278
    %v381 = vpop.f32.mrb[0].mxu0
    %v382 = vadd.f32 %v259, %v381
    %v383 = vpop.f32.mrb[0].mxu0
    %384 = vmatprep.mubr.f32.mxu0 0.0
    %385 = vmatmul.mubr.f32.gmra.mrb[0].mxu0 %v281
    %v386 = vpop.f32.mrb[0].mxu0
    %v387 = vadd.f32 %v259, %v386
    %v388 = vpop.f32.mrb[0].mxu0
    %389 = vmatprep.mubr.f32.mxu0 0.0
    %390 = vmatmul.mubr.f32.gmra.mrb[0].mxu0 %v284
    %v391 = vpop.f32.mrb[0].mxu0
    %v392 = vadd.f32 %v259, %v391
    %v393 = vpop.f32.mrb[0].mxu0
    %394 = vdwg.mxu0
    %v395 = vld [vmem:[%s7] sm:$0xff]
    %v396 = vld [vmem:[%s7 + $0x8] sm:$0xff]
    %v397 = vld [vmem:[%s7 + $0x10] sm:$0xff]
    %v398 = vld [vmem:[%s7 + $0x18] sm:$0xff]
    %vm399 = vcmask 261120
    %v401 = vsel %vm399, 0.0, 0
    %403 = vmatprep.subr.mxu0 0.0
    %404 = vmatpush1.msra.mxu0 %v395
    %405 = vmatprep.subr.mxu0 0.0
    %406 = vmatpush1.msra.mxu0 %v396
    %407 = vmatprep.subr.mxu0 0.0
    %408 = vmatpush1.msra.mxu0 %v397
    %409 = vmatprep.subr.mxu0 0.0
    %410 = vmatpush1.msra.mxu0 %v398
    %411 = vmatprep.subr.mxu0 0.0
    %412 = vmatpush1.msra.mxu0 0.0
    %413 = vmatprep.subr.mxu0 0.0
    %414 = vmatpush1.msra.mxu0 0.0
    %415 = vmatprep.subr.mxu0 0.0
    %416 = vmatpush1.msra.mxu0 0.0
    %417 = vmatprep.subr.mxu0 0.0
    %418 = vmatpush1.msra.mxu0 0.0
    %419 = vmatprep.subr.mxu0 0.0
    %420 = vmatpush1.msra.mxu0 0.0
    %421 = vmatprep.subr.mxu0 0.0
    %422 = vmatpush1.msra.mxu0 0.0
    %423 = vmatprep.subr.mxu0 0.0
    %424 = vmatpush1.msra.mxu0 0.0
    %425 = vmatprep.subr.mxu0 0.0
    %426 = vmatpush1.msra.mxu0 0.0
    %427 = vmatprep.subr.mxu0 0.0
    %428 = vmatpush1.msra.mxu0 0.0
    %429 = vmatprep.subr.mxu0 0.0
    %430 = vmatpush1.msra.mxu0 0.0
    %431 = vmatprep.subr.mxu0 0.0
    %432 = vmatpush1.msra.mxu0 0.0
    %433 = vmatprep.subr.mxu0 0.0
    %434 = vmatpush1.msra.mxu0 0.0
    %435 = vmatprep.subr.mxu0 0.0
    %436 = vmatpush1.msra.mxu0 0.0
    %437 = vmatprep.subr.mxu0 0.0
    %438 = vmatpush1.msra.mxu0 0.0
    %439 = vmatprep.subr.mxu0 0.0
    %440 = vmatpush1.msra.mxu0 0.0
    %441 = vmatprep.subr.mxu0 0.0
    %442 = vmatpush1.msra.mxu0 0.0
    %443 = vmatprep.subr.mxu0 0.0
    %444 = vmatpush1.msra.mxu0 0.0
    %445 = vmatprep.subr.mxu0 0.0
    %446 = vmatpush1.msra.mxu0 0.0
    %447 = vmatprep.subr.mxu0 0.0
    %448 = vmatpush1.msra.mxu0 0.0
    %449 = vmatprep.subr.mxu0 0.0
    %450 = vmatpush1.msra.mxu0 0.0
    %451 = vmatprep.subr.mxu0 0.0
    %452 = vmatpush1.msra.mxu0 0.0
    %453 = vmatprep.subr.mxu0 0.0
    %454 = vmatpush1.msra.mxu0 0.0
    %455 = vmatprep.subr.mxu0 0.0
    %456 = vmatpush1.msra.mxu0 0.0
    %457 = vmatprep.subr.mxu0 0.0
    %458 = vmatpush1.msra.mxu0 0.0
    %459 = vmatprep.subr.mxu0 0.0
    %460 = vmatpush1.msra.mxu0 0.0
    %461 = vmatprep.subr.mxu0 0.0
    %462 = vmatpush1.msra.mxu0 0.0
    %463 = vmatprep.subr.mxu0 0.0
    %464 = vmatpush1.msra.mxu0 0.0
    %465 = vmatprep.subr.mxu0 0.0
    %466 = vmatpush1.msra.mxu0 0.0
    %467 = vmatprep.mubr.f32.mxu0 0.0
    %468 = vmatmul.mubr.f32.gmra.mrb[0].mxu0 %v401
    %v469 = vpop.f32.mrb[0].mxu0
    %v470 = vadd.f32 0.0, %v469
    %v471 = vpop.f32.mrb[0].mxu0
    %472 = vdwg.mxu0
    %v473 = vadd.f32 %v357, %v470
    %v474 = vxor.u32 %v473, 2147483648
    %v475 = vmul.f32 %v474, 1.442695
    %v476 = vpow.pop %v475
    %v477 = vadd.f32 %v476, 1.0
    %v478 = vrcp.pop %v477
    %v479 = vmul.f32 1.0, %v478
    %v480 = vmul.f32 %v479, 2.0
    %v481 = vsub.f32 %v480, 1.0
    %v482 = vmul.f32 %v479, 0.0
    %484 = vrot.lane.b32.xlu0 %v481, 64
    %v485 = vpop.permute.xlu0 %484
    %v487 = vmul.f32 %v479, %v485
    %489 = vrot.lane.b32.xlu0 %v487, 32
    %v490 = vpop.permute.xlu0 %489
    %v492 = vadd.f32 %v482, %v490
    %v493 = vtanh.pop %v492
    %495 = vrot.lane.b32.xlu0 %v493, 64
    %v496 = vpop.permute.xlu0 %495
    %v498 = vmul.f32 %v479, %v496
    %500 = vrot.lane.b32.xlu0 %v498, 32
    %v501 = vpop.permute.xlu0 %500
    %503 = vst.msk [vmem:[#allocation2] sm:$0xff] %vm399, %v501
    %v504 = vsel %vm399, %v501, 0
    %506 = vmatprep.subr.mxu0 0.0
    %507 = vmatpush1.msra.mxu0 %v395
    %508 = vmatprep.subr.mxu0 0.0
    %509 = vmatpush1.msra.mxu0 %v396
    %510 = vmatprep.subr.mxu0 0.0
    %511 = vmatpush1.msra.mxu0 %v397
    %512 = vmatprep.subr.mxu0 0.0
    %513 = vmatpush1.msra.mxu0 %v398
    %514 = vmatprep.subr.mxu0 0.0
    %515 = vmatpush1.msra.mxu0 0.0
    %516 = vmatprep.subr.mxu0 0.0
    %517 = vmatpush1.msra.mxu0 0.0
    %518 = vmatprep.subr.mxu0 0.0
    %519 = vmatpush1.msra.mxu0 0.0
    %520 = vmatprep.subr.mxu0 0.0
    %521 = vmatpush1.msra.mxu0 0.0
    %522 = vmatprep.subr.mxu0 0.0
    %523 = vmatpush1.msra.mxu0 0.0
    %524 = vmatprep.subr.mxu0 0.0
    %525 = vmatpush1.msra.mxu0 0.0
    %526 = vmatprep.subr.mxu0 0.0
    %527 = vmatpush1.msra.mxu0 0.0
    %528 = vmatprep.subr.mxu0 0.0
    %529 = vmatpush1.msra.mxu0 0.0
    %530 = vmatprep.subr.mxu0 0.0
    %531 = vmatpush1.msra.mxu0 0.0
    %532 = vmatprep.subr.mxu0 0.0
    %533 = vmatpush1.msra.mxu0 0.0
    %534 = vmatprep.subr.mxu0 0.0
    %535 = vmatpush1.msra.mxu0 0.0
    %536 = vmatprep.subr.mxu0 0.0
    %537 = vmatpush1.msra.mxu0 0.0
    %538 = vmatprep.subr.mxu0 0.0
    %539 = vmatpush1.msra.mxu0 0.0
    %540 = vmatprep.subr.mxu0 0.0
    %541 = vmatpush1.msra.mxu0 0.0
    %542 = vmatprep.subr.mxu0 0.0
    %543 = vmatpush1.msra.mxu0 0.0
    %544 = vmatprep.subr.mxu0 0.0
    %545 = vmatpush1.msra.mxu0 0.0
    %546 = vmatprep.subr.mxu0 0.0
    %547 = vmatpush1.msra.mxu0 0.0
    %548 = vmatprep.subr.mxu0 0.0
    %549 = vmatpush1.msra.mxu0 0.0
    %550 = vmatprep.subr.mxu0 0.0
    %551 = vmatpush1.msra.mxu0 0.0
    %552 = vmatprep.subr.mxu0 0.0
    %553 = vmatpush1.msra.mxu0 0.0
    %554 = vmatprep.subr.mxu0 0.0
    %555 = vmatpush1.msra.mxu0 0.0
    %556 = vmatprep.subr.mxu0 0.0
    %557 = vmatpush1.msra.mxu0 0.0
    %558 = vmatprep.subr.mxu0 0.0
    %559 = vmatpush1.msra.mxu0 0.0
    %560 = vmatprep.subr.mxu0 0.0
    %561 = vmatpush1.msra.mxu0 0.0
    %562 = vmatprep.subr.mxu0 0.0
    %563 = vmatpush1.msra.mxu0 0.0
    %564 = vmatprep.subr.mxu0 0.0
    %565 = vmatpush1.msra.mxu0 0.0
    %566 = vmatprep.subr.mxu0 0.0
    %567 = vmatpush1.msra.mxu0 0.0
    %568 = vmatprep.subr.mxu0 0.0
    %569 = vmatpush1.msra.mxu0 0.0
    %570 = vmatprep.mubr.f32.mxu0 0.0
    %571 = vmatmul.mubr.f32.gmra.mrb[0].mxu0 %v504
    %v572 = vpop.f32.mrb[0].mxu0
    %v573 = vadd.f32 0.0, %v572
    %v574 = vpop.f32.mrb[0].mxu0
    %575 = vdwg.mxu0
    %v576 = vadd.f32 %v362, %v573
    %v577 = vxor.u32 %v576, 2147483648
    %v578 = vmul.f32 %v577, 1.442695
    %v579 = vpow.pop %v578
    %v580 = vadd.f32 %v579, 1.0
    %v581 = vrcp.pop %v580
    %v582 = vmul.f32 1.0, %v581
    %v583 = vmul.f32 %v582, 2.0
    %v584 = vsub.f32 %v583, 1.0
    %v585 = vmul.f32 %v582, %v492
    %587 = vrot.lane.b32.xlu0 %v584, 64
    %v588 = vpop.permute.xlu0 %587
    %v590 = vmul.f32 %v582, %v588
    %592 = vrot.lane.b32.xlu0 %v590, 32
    %v593 = vpop.permute.xlu0 %592
    %v595 = vadd.f32 %v585, %v593
    %v596 = vtanh.pop %v595
    %598 = vrot.lane.b32.xlu0 %v596, 64
    %v599 = vpop.permute.xlu0 %598
    %v601 = vmul.f32 %v582, %v599
    %603 = vrot.lane.b32.xlu0 %v601, 32
    %v604 = vpop.permute.xlu0 %603
    %606 = vst.msk [vmem:[#allocation2 + $0x8] sm:$0xff] %vm399, %v604
    %v607 = vsel %vm399, %v604, 0
    %609 = vmatprep.subr.mxu0 0.0
    %610 = vmatpush1.msra.mxu0 %v395
    %611 = vmatprep.subr.mxu0 0.0
    %612 = vmatpush1.msra.mxu0 %v396
    %613 = vmatprep.subr.mxu0 0.0
    %614 = vmatpush1.msra.mxu0 %v397
    %615 = vmatprep.subr.mxu0 0.0
    %616 = vmatpush1.msra.mxu0 %v398
    %617 = vmatprep.subr.mxu0 0.0
    %618 = vmatpush1.msra.mxu0 0.0
    %619 = vmatprep.subr.mxu0 0.0
    %620 = vmatpush1.msra.mxu0 0.0
    %621 = vmatprep.subr.mxu0 0.0
    %622 = vmatpush1.msra.mxu0 0.0
    %623 = vmatprep.subr.mxu0 0.0
    %624 = vmatpush1.msra.mxu0 0.0
    %625 = vmatprep.subr.mxu0 0.0
    %626 = vmatpush1.msra.mxu0 0.0
    %627 = vmatprep.subr.mxu0 0.0
    %628 = vmatpush1.msra.mxu0 0.0
    %629 = vmatprep.subr.mxu0 0.0
    %630 = vmatpush1.msra.mxu0 0.0
    %631 = vmatprep.subr.mxu0 0.0
    %632 = vmatpush1.msra.mxu0 0.0
    %633 = vmatprep.subr.mxu0 0.0
    %634 = vmatpush1.msra.mxu0 0.0
    %635 = vmatprep.subr.mxu0 0.0
    %636 = vmatpush1.msra.mxu0 0.0
    %637 = vmatprep.subr.mxu0 0.0
    %638 = vmatpush1.msra.mxu0 0.0
    %639 = vmatprep.subr.mxu0 0.0
    %640 = vmatpush1.msra.mxu0 0.0
    %641 = vmatprep.subr.mxu0 0.0
    %642 = vmatpush1.msra.mxu0 0.0
    %643 = vmatprep.subr.mxu0 0.0
    %644 = vmatpush1.msra.mxu0 0.0
    %645 = vmatprep.subr.mxu0 0.0
    %646 = vmatpush1.msra.mxu0 0.0
    %647 = vmatprep.subr.mxu0 0.0
    %648 = vmatpush1.msra.mxu0 0.0
    %649 = vmatprep.subr.mxu0 0.0
    %650 = vmatpush1.msra.mxu0 0.0
    %651 = vmatprep.subr.mxu0 0.0
    %652 = vmatpush1.msra.mxu0 0.0
    %653 = vmatprep.subr.mxu0 0.0
    %654 = vmatpush1.msra.mxu0 0.0
    %655 = vmatprep.subr.mxu0 0.0
    %656 = vmatpush1.msra.mxu0 0.0
    %657 = vmatprep.subr.mxu0 0.0
    %658 = vmatpush1.msra.mxu0 0.0
    %659 = vmatprep.subr.mxu0 0.0
    %660 = vmatpush1.msra.mxu0 0.0
    %661 = vmatprep.subr.mxu0 0.0
    %662 = vmatpush1.msra.mxu0 0.0
    %663 = vmatprep.subr.mxu0 0.0
    %664 = vmatpush1.msra.mxu0 0.0
    %665 = vmatprep.subr.mxu0 0.0
    %666 = vmatpush1.msra.mxu0 0.0
    %667 = vmatprep.subr.mxu0 0.0
    %668 = vmatpush1.msra.mxu0 0.0
    %669 = vmatprep.subr.mxu0 0.0
    %670 = vmatpush1.msra.mxu0 0.0
    %671 = vmatprep.subr.mxu0 0.0
    %672 = vmatpush1.msra.mxu0 0.0
    %673 = vmatprep.mubr.f32.mxu0 0.0
    %674 = vmatmul.mubr.f32.gmra.mrb[0].mxu0 %v607
    %v675 = vpop.f32.mrb[0].mxu0
    %v676 = vadd.f32 0.0, %v675
    %v677 = vpop.f32.mrb[0].mxu0
    %678 = vdwg.mxu0
    %v679 = vadd.f32 %v367, %v676
    %v680 = vxor.u32 %v679, 2147483648
    %v681 = vmul.f32 %v680, 1.442695
    %v682 = vpow.pop %v681
    %v683 = vadd.f32 %v682, 1.0
    %v684 = vrcp.pop %v683
    %v685 = vmul.f32 1.0, %v684
    %v686 = vmul.f32 %v685, 2.0
    %v687 = vsub.f32 %v686, 1.0
    %v688 = vmul.f32 %v685, %v595
    %690 = vrot.lane.b32.xlu0 %v687, 64
    %v691 = vpop.permute.xlu0 %690
    %v693 = vmul.f32 %v685, %v691
    %695 = vrot.lane.b32.xlu0 %v693, 32
    %v696 = vpop.permute.xlu0 %695
    %v698 = vadd.f32 %v688, %v696
    %v699 = vtanh.pop %v698
    %701 = vrot.lane.b32.xlu0 %v699, 64
    %v702 = vpop.permute.xlu0 %701
    %v704 = vmul.f32 %v685, %v702
    %706 = vrot.lane.b32.xlu0 %v704, 32
    %v707 = vpop.permute.xlu0 %706
    %709 = vst.msk [vmem:[#allocation2 + $0x10] sm:$0xff] %vm399, %v707
    %v710 = vsel %vm399, %v707, 0
    %712 = vmatprep.subr.mxu0 0.0
    %713 = vmatpush1.msra.mxu0 %v395
    %714 = vmatprep.subr.mxu0 0.0
    %715 = vmatpush1.msra.mxu0 %v396
    %716 = vmatprep.subr.mxu0 0.0
    %717 = vmatpush1.msra.mxu0 %v397
    %718 = vmatprep.subr.mxu0 0.0
    %719 = vmatpush1.msra.mxu0 %v398
    %720 = vmatprep.subr.mxu0 0.0
    %721 = vmatpush1.msra.mxu0 0.0
    %722 = vmatprep.subr.mxu0 0.0
    %723 = vmatpush1.msra.mxu0 0.0
    %724 = vmatprep.subr.mxu0 0.0
    %725 = vmatpush1.msra.mxu0 0.0
    %726 = vmatprep.subr.mxu0 0.0
    %727 = vmatpush1.msra.mxu0 0.0
    %728 = vmatprep.subr.mxu0 0.0
    %729 = vmatpush1.msra.mxu0 0.0
    %730 = vmatprep.subr.mxu0 0.0
    %731 = vmatpush1.msra.mxu0 0.0
    %732 = vmatprep.subr.mxu0 0.0
    %733 = vmatpush1.msra.mxu0 0.0
    %734 = vmatprep.subr.mxu0 0.0
    %735 = vmatpush1.msra.mxu0 0.0
    %736 = vmatprep.subr.mxu0 0.0
    %737 = vmatpush1.msra.mxu0 0.0
    %738 = vmatprep.subr.mxu0 0.0
    %739 = vmatpush1.msra.mxu0 0.0
    %740 = vmatprep.subr.mxu0 0.0
    %741 = vmatpush1.msra.mxu0 0.0
    %742 = vmatprep.subr.mxu0 0.0
    %743 = vmatpush1.msra.mxu0 0.0
    %744 = vmatprep.subr.mxu0 0.0
    %745 = vmatpush1.msra.mxu0 0.0
    %746 = vmatprep.subr.mxu0 0.0
    %747 = vmatpush1.msra.mxu0 0.0
    %748 = vmatprep.subr.mxu0 0.0
    %749 = vmatpush1.msra.mxu0 0.0
    %750 = vmatprep.subr.mxu0 0.0
    %751 = vmatpush1.msra.mxu0 0.0
    %752 = vmatprep.subr.mxu0 0.0
    %753 = vmatpush1.msra.mxu0 0.0
    %754 = vmatprep.subr.mxu0 0.0
    %755 = vmatpush1.msra.mxu0 0.0
    %756 = vmatprep.subr.mxu0 0.0
    %757 = vmatpush1.msra.mxu0 0.0
    %758 = vmatprep.subr.mxu0 0.0
    %759 = vmatpush1.msra.mxu0 0.0
    %760 = vmatprep.subr.mxu0 0.0
    %761 = vmatpush1.msra.mxu0 0.0
    %762 = vmatprep.subr.mxu0 0.0
    %763 = vmatpush1.msra.mxu0 0.0
    %764 = vmatprep.subr.mxu0 0.0
    %765 = vmatpush1.msra.mxu0 0.0
    %766 = vmatprep.subr.mxu0 0.0
    %767 = vmatpush1.msra.mxu0 0.0
    %768 = vmatprep.subr.mxu0 0.0
    %769 = vmatpush1.msra.mxu0 0.0
    %770 = vmatprep.subr.mxu0 0.0
    %771 = vmatpush1.msra.mxu0 0.0
    %772 = vmatprep.subr.mxu0 0.0
    %773 = vmatpush1.msra.mxu0 0.0
    %774 = vmatprep.subr.mxu0 0.0
    %775 = vmatpush1.msra.mxu0 0.0
    %776 = vmatprep.mubr.f32.mxu0 0.0
    %777 = vmatmul.mubr.f32.gmra.mrb[0].mxu0 %v710
    %v778 = vpop.f32.mrb[0].mxu0
    %v779 = vadd.f32 0.0, %v778
    %v780 = vpop.f32.mrb[0].mxu0
    %781 = vdwg.mxu0
    %v782 = vadd.f32 %v372, %v779
    %v783 = vxor.u32 %v782, 2147483648
    %v784 = vmul.f32 %v783, 1.442695
    %v785 = vpow.pop %v784
    %v786 = vadd.f32 %v785, 1.0
    %v787 = vrcp.pop %v786
    %v788 = vmul.f32 1.0, %v787
    %v789 = vmul.f32 %v788, 2.0
    %v790 = vsub.f32 %v789, 1.0
    %v791 = vmul.f32 %v788, %v698
    %793 = vrot.lane.b32.xlu0 %v790, 64
    %v794 = vpop.permute.xlu0 %793
    %v796 = vmul.f32 %v788, %v794
    %798 = vrot.lane.b32.xlu0 %v796, 32
    %v799 = vpop.permute.xlu0 %798
    %v801 = vadd.f32 %v791, %v799
    %v802 = vtanh.pop %v801
    %804 = vrot.lane.b32.xlu0 %v802, 64
    %v805 = vpop.permute.xlu0 %804
    %v807 = vmul.f32 %v788, %v805
    %809 = vrot.lane.b32.xlu0 %v807, 32
    %v810 = vpop.permute.xlu0 %809
    %812 = vst.msk [vmem:[#allocation2 + $0x18] sm:$0xff] %vm399, %v810
    %v813 = vsel %vm399, %v810, 0
    %815 = vmatprep.subr.mxu0 0.0
    %816 = vmatpush1.msra.mxu0 %v395
    %817 = vmatprep.subr.mxu0 0.0
    %818 = vmatpush1.msra.mxu0 %v396
    %819 = vmatprep.subr.mxu0 0.0
    %820 = vmatpush1.msra.mxu0 %v397
    %821 = vmatprep.subr.mxu0 0.0
    %822 = vmatpush1.msra.mxu0 %v398
    %823 = vmatprep.subr.mxu0 0.0
    %824 = vmatpush1.msra.mxu0 0.0
    %825 = vmatprep.subr.mxu0 0.0
    %826 = vmatpush1.msra.mxu0 0.0
    %827 = vmatprep.subr.mxu0 0.0
    %828 = vmatpush1.msra.mxu0 0.0
    %829 = vmatprep.subr.mxu0 0.0
    %830 = vmatpush1.msra.mxu0 0.0
    %831 = vmatprep.subr.mxu0 0.0
    %832 = vmatpush1.msra.mxu0 0.0
    %833 = vmatprep.subr.mxu0 0.0
    %834 = vmatpush1.msra.mxu0 0.0
    %835 = vmatprep.subr.mxu0 0.0
    %836 = vmatpush1.msra.mxu0 0.0
    %837 = vmatprep.subr.mxu0 0.0
    %838 = vmatpush1.msra.mxu0 0.0
    %839 = vmatprep.subr.mxu0 0.0
    %840 = vmatpush1.msra.mxu0 0.0
    %841 = vmatprep.subr.mxu0 0.0
    %842 = vmatpush1.msra.mxu0 0.0
    %843 = vmatprep.subr.mxu0 0.0
    %844 = vmatpush1.msra.mxu0 0.0
    %845 = vmatprep.subr.mxu0 0.0
    %846 = vmatpush1.msra.mxu0 0.0
    %847 = vmatprep.subr.mxu0 0.0
    %848 = vmatpush1.msra.mxu0 0.0
    %849 = vmatprep.subr.mxu0 0.0
    %850 = vmatpush1.msra.mxu0 0.0
    %851 = vmatprep.subr.mxu0 0.0
    %852 = vmatpush1.msra.mxu0 0.0
    %853 = vmatprep.subr.mxu0 0.0
    %854 = vmatpush1.msra.mxu0 0.0
    %855 = vmatprep.subr.mxu0 0.0
    %856 = vmatpush1.msra.mxu0 0.0
    %857 = vmatprep.subr.mxu0 0.0
    %858 = vmatpush1.msra.mxu0 0.0
    %859 = vmatprep.subr.mxu0 0.0
    %860 = vmatpush1.msra.mxu0 0.0
    %861 = vmatprep.subr.mxu0 0.0
    %862 = vmatpush1.msra.mxu0 0.0
    %863 = vmatprep.subr.mxu0 0.0
    %864 = vmatpush1.msra.mxu0 0.0
    %865 = vmatprep.subr.mxu0 0.0
    %866 = vmatpush1.msra.mxu0 0.0
    %867 = vmatprep.subr.mxu0 0.0
    %868 = vmatpush1.msra.mxu0 0.0
    %869 = vmatprep.subr.mxu0 0.0
    %870 = vmatpush1.msra.mxu0 0.0
    %871 = vmatprep.subr.mxu0 0.0
    %872 = vmatpush1.msra.mxu0 0.0
    %873 = vmatprep.subr.mxu0 0.0
    %874 = vmatpush1.msra.mxu0 0.0
    %875 = vmatprep.subr.mxu0 0.0
    %876 = vmatpush1.msra.mxu0 0.0
    %877 = vmatprep.subr.mxu0 0.0
    %878 = vmatpush1.msra.mxu0 0.0
    %879 = vmatprep.mubr.f32.mxu0 0.0
    %880 = vmatmul.mubr.f32.gmra.mrb[0].mxu0 %v813
    %v881 = vpop.f32.mrb[0].mxu0
    %v882 = vadd.f32 0.0, %v881
    %v883 = vpop.f32.mrb[0].mxu0
    %884 = vdwg.mxu0
    %v885 = vadd.f32 %v377, %v882
    %v886 = vxor.u32 %v885, 2147483648
    %v887 = vmul.f32 %v886, 1.442695
    %v888 = vpow.pop %v887
    %v889 = vadd.f32 %v888, 1.0
    %v890 = vrcp.pop %v889
    %v891 = vmul.f32 1.0, %v890
    %v892 = vmul.f32 %v891, 2.0
    %v893 = vsub.f32 %v892, 1.0
    %v894 = vmul.f32 %v891, %v801
    %896 = vrot.lane.b32.xlu0 %v893, 64
    %v897 = vpop.permute.xlu0 %896
    %v899 = vmul.f32 %v891, %v897
    %901 = vrot.lane.b32.xlu0 %v899, 32
    %v902 = vpop.permute.xlu0 %901
    %v904 = vadd.f32 %v894, %v902
    %v905 = vtanh.pop %v904
    %907 = vrot.lane.b32.xlu0 %v905, 64
    %v908 = vpop.permute.xlu0 %907
    %v910 = vmul.f32 %v891, %v908
    %912 = vrot.lane.b32.xlu0 %v910, 32
    %v913 = vpop.permute.xlu0 %912
    %915 = vst.msk [vmem:[#allocation2 + $0x20] sm:$0xff] %vm399, %v913
    %v916 = vsel %vm399, %v913, 0
    %918 = vmatprep.subr.mxu0 0.0
    %919 = vmatpush1.msra.mxu0 %v395
    %920 = vmatprep.subr.mxu0 0.0
    %921 = vmatpush1.msra.mxu0 %v396
    %922 = vmatprep.subr.mxu0 0.0
    %923 = vmatpush1.msra.mxu0 %v397
    %924 = vmatprep.subr.mxu0 0.0
    %925 = vmatpush1.msra.mxu0 %v398
    %926 = vmatprep.subr.mxu0 0.0
    %927 = vmatpush1.msra.mxu0 0.0
    %928 = vmatprep.subr.mxu0 0.0
    %929 = vmatpush1.msra.mxu0 0.0
    %930 = vmatprep.subr.mxu0 0.0
    %931 = vmatpush1.msra.mxu0 0.0
    %932 = vmatprep.subr.mxu0 0.0
    %933 = vmatpush1.msra.mxu0 0.0
    %934 = vmatprep.subr.mxu0 0.0
    %935 = vmatpush1.msra.mxu0 0.0
    %936 = vmatprep.subr.mxu0 0.0
    %937 = vmatpush1.msra.mxu0 0.0
    %938 = vmatprep.subr.mxu0 0.0
    %939 = vmatpush1.msra.mxu0 0.0
    %940 = vmatprep.subr.mxu0 0.0
    %941 = vmatpush1.msra.mxu0 0.0
    %942 = vmatprep.subr.mxu0 0.0
    %943 = vmatpush1.msra.mxu0 0.0
    %944 = vmatprep.subr.mxu0 0.0
    %945 = vmatpush1.msra.mxu0 0.0
    %946 = vmatprep.subr.mxu0 0.0
    %947 = vmatpush1.msra.mxu0 0.0
    %948 = vmatprep.subr.mxu0 0.0
    %949 = vmatpush1.msra.mxu0 0.0
    %950 = vmatprep.subr.mxu0 0.0
    %951 = vmatpush1.msra.mxu0 0.0
    %952 = vmatprep.subr.mxu0 0.0
    %953 = vmatpush1.msra.mxu0 0.0
    %954 = vmatprep.subr.mxu0 0.0
    %955 = vmatpush1.msra.mxu0 0.0
    %956 = vmatprep.subr.mxu0 0.0
    %957 = vmatpush1.msra.mxu0 0.0
    %958 = vmatprep.subr.mxu0 0.0
    %959 = vmatpush1.msra.mxu0 0.0
    %960 = vmatprep.subr.mxu0 0.0
    %961 = vmatpush1.msra.mxu0 0.0
    %962 = vmatprep.subr.mxu0 0.0
    %963 = vmatpush1.msra.mxu0 0.0
    %964 = vmatprep.subr.mxu0 0.0
    %965 = vmatpush1.msra.mxu0 0.0
    %966 = vmatprep.subr.mxu0 0.0
    %967 = vmatpush1.msra.mxu0 0.0
    %968 = vmatprep.subr.mxu0 0.0
    %969 = vmatpush1.msra.mxu0 0.0
    %970 = vmatprep.subr.mxu0 0.0
    %971 = vmatpush1.msra.mxu0 0.0
    %972 = vmatprep.subr.mxu0 0.0
    %973 = vmatpush1.msra.mxu0 0.0
    %974 = vmatprep.subr.mxu0 0.0
    %975 = vmatpush1.msra.mxu0 0.0
    %976 = vmatprep.subr.mxu0 0.0
    %977 = vmatpush1.msra.mxu0 0.0
    %978 = vmatprep.subr.mxu0 0.0
    %979 = vmatpush1.msra.mxu0 0.0
    %980 = vmatprep.subr.mxu0 0.0
    %981 = vmatpush1.msra.mxu0 0.0
    %982 = vmatprep.mubr.f32.mxu0 0.0
    %983 = vmatmul.mubr.f32.gmra.mrb[0].mxu0 %v916
    %v984 = vpop.f32.mrb[0].mxu0
    %v985 = vadd.f32 0.0, %v984
    %v986 = vpop.f32.mrb[0].mxu0
    %987 = vdwg.mxu0
    %v988 = vadd.f32 %v382, %v985
    %v989 = vxor.u32 %v988, 2147483648
    %v990 = vmul.f32 %v989, 1.442695
    %v991 = vpow.pop %v990
    %v992 = vadd.f32 %v991, 1.0
    %v993 = vrcp.pop %v992
    %v994 = vmul.f32 1.0, %v993
    %v995 = vmul.f32 %v994, 2.0
    %v996 = vsub.f32 %v995, 1.0
    %v997 = vmul.f32 %v994, %v904
    %999 = vrot.lane.b32.xlu0 %v996, 64
    %v1000 = vpop.permute.xlu0 %999
    %v1002 = vmul.f32 %v994, %v1000
    %1004 = vrot.lane.b32.xlu0 %v1002, 32
    %v1005 = vpop.permute.xlu0 %1004
    %v1007 = vadd.f32 %v997, %v1005
    %v1008 = vtanh.pop %v1007
    %1010 = vrot.lane.b32.xlu0 %v1008, 64
    %v1011 = vpop.permute.xlu0 %1010
    %v1013 = vmul.f32 %v994, %v1011
    %1015 = vrot.lane.b32.xlu0 %v1013, 32
    %v1016 = vpop.permute.xlu0 %1015
    %1018 = vst.msk [vmem:[#allocation2 + $0x28] sm:$0xff] %vm399, %v1016
    %v1019 = vsel %vm399, %v1016, 0
    %1021 = vmatprep.subr.mxu0 0.0
    %1022 = vmatpush1.msra.mxu0 %v395
    %1023 = vmatprep.subr.mxu0 0.0
    %1024 = vmatpush1.msra.mxu0 %v396
    %1025 = vmatprep.subr.mxu0 0.0
    %1026 = vmatpush1.msra.mxu0 %v397
    %1027 = vmatprep.subr.mxu0 0.0
    %1028 = vmatpush1.msra.mxu0 %v398
    %1029 = vmatprep.subr.mxu0 0.0
    %1030 = vmatpush1.msra.mxu0 0.0
    %1031 = vmatprep.subr.mxu0 0.0
    %1032 = vmatpush1.msra.mxu0 0.0
    %1033 = vmatprep.subr.mxu0 0.0
    %1034 = vmatpush1.msra.mxu0 0.0
    %1035 = vmatprep.subr.mxu0 0.0
    %1036 = vmatpush1.msra.mxu0 0.0
    %1037 = vmatprep.subr.mxu0 0.0
    %1038 = vmatpush1.msra.mxu0 0.0
    %1039 = vmatprep.subr.mxu0 0.0
    %1040 = vmatpush1.msra.mxu0 0.0
    %1041 = vmatprep.subr.mxu0 0.0
    %1042 = vmatpush1.msra.mxu0 0.0
    %1043 = vmatprep.subr.mxu0 0.0
    %1044 = vmatpush1.msra.mxu0 0.0
    %1045 = vmatprep.subr.mxu0 0.0
    %1046 = vmatpush1.msra.mxu0 0.0
    %1047 = vmatprep.subr.mxu0 0.0
    %1048 = vmatpush1.msra.mxu0 0.0
    %1049 = vmatprep.subr.mxu0 0.0
    %1050 = vmatpush1.msra.mxu0 0.0
    %1051 = vmatprep.subr.mxu0 0.0
    %1052 = vmatpush1.msra.mxu0 0.0
    %1053 = vmatprep.subr.mxu0 0.0
    %1054 = vmatpush1.msra.mxu0 0.0
    %1055 = vmatprep.subr.mxu0 0.0
    %1056 = vmatpush1.msra.mxu0 0.0
    %1057 = vmatprep.subr.mxu0 0.0
    %1058 = vmatpush1.msra.mxu0 0.0
    %1059 = vmatprep.subr.mxu0 0.0
    %1060 = vmatpush1.msra.mxu0 0.0
    %1061 = vmatprep.subr.mxu0 0.0
    %1062 = vmatpush1.msra.mxu0 0.0
    %1063 = vmatprep.subr.mxu0 0.0
    %1064 = vmatpush1.msra.mxu0 0.0
    %1065 = vmatprep.subr.mxu0 0.0
    %1066 = vmatpush1.msra.mxu0 0.0
    %1067 = vmatprep.subr.mxu0 0.0
    %1068 = vmatpush1.msra.mxu0 0.0
    %1069 = vmatprep.subr.mxu0 0.0
    %1070 = vmatpush1.msra.mxu0 0.0
    %1071 = vmatprep.subr.mxu0 0.0
    %1072 = vmatpush1.msra.mxu0 0.0
    %1073 = vmatprep.subr.mxu0 0.0
    %1074 = vmatpush1.msra.mxu0 0.0
    %1075 = vmatprep.subr.mxu0 0.0
    %1076 = vmatpush1.msra.mxu0 0.0
    %1077 = vmatprep.subr.mxu0 0.0
    %1078 = vmatpush1.msra.mxu0 0.0
    %1079 = vmatprep.subr.mxu0 0.0
    %1080 = vmatpush1.msra.mxu0 0.0
    %1081 = vmatprep.subr.mxu0 0.0
    %1082 = vmatpush1.msra.mxu0 0.0
    %1083 = vmatprep.subr.mxu0 0.0
    %1084 = vmatpush1.msra.mxu0 0.0
    %1085 = vmatprep.mubr.f32.mxu0 0.0
    %1086 = vmatmul.mubr.f32.gmra.mrb[0].mxu0 %v1019
    %v1087 = vpop.f32.mrb[0].mxu0
    %v1088 = vadd.f32 0.0, %v1087
    %v1089 = vpop.f32.mrb[0].mxu0
    %1090 = vdwg.mxu0
    %v1091 = vadd.f32 %v387, %v1088
    %v1092 = vxor.u32 %v1091, 2147483648
    %v1093 = vmul.f32 %v1092, 1.442695
    %v1094 = vpow.pop %v1093
    %v1095 = vadd.f32 %v1094, 1.0
    %v1096 = vrcp.pop %v1095
    %v1097 = vmul.f32 1.0, %v1096
    %v1098 = vmul.f32 %v1097, 2.0
    %v1099 = vsub.f32 %v1098, 1.0
    %v1100 = vmul.f32 %v1097, %v1007
    %1102 = vrot.lane.b32.xlu0 %v1099, 64
    %v1103 = vpop.permute.xlu0 %1102
    %v1105 = vmul.f32 %v1097, %v1103
    %1107 = vrot.lane.b32.xlu0 %v1105, 32
    %v1108 = vpop.permute.xlu0 %1107
    %v1110 = vadd.f32 %v1100, %v1108
    %v1111 = vtanh.pop %v1110
    %1113 = vrot.lane.b32.xlu0 %v1111, 64
    %v1114 = vpop.permute.xlu0 %1113
    %v1116 = vmul.f32 %v1097, %v1114
    %1118 = vrot.lane.b32.xlu0 %v1116, 32
    %v1119 = vpop.permute.xlu0 %1118
    %1121 = vst.msk [vmem:[#allocation2 + $0x30] sm:$0xff] %vm399, %v1119
    %v1122 = vsel %vm399, %v1119, 0
    %1124 = vmatprep.subr.mxu0 0.0
    %1125 = vmatpush1.msra.mxu0 %v395
    %1126 = vmatprep.subr.mxu0 0.0
    %1127 = vmatpush1.msra.mxu0 %v396
    %1128 = vmatprep.subr.mxu0 0.0
    %1129 = vmatpush1.msra.mxu0 %v397
    %1130 = vmatprep.subr.mxu0 0.0
    %1131 = vmatpush1.msra.mxu0 %v398
    %1132 = vmatprep.subr.mxu0 0.0
    %1133 = vmatpush1.msra.mxu0 0.0
    %1134 = vmatprep.subr.mxu0 0.0
    %1135 = vmatpush1.msra.mxu0 0.0
    %1136 = vmatprep.subr.mxu0 0.0
    %1137 = vmatpush1.msra.mxu0 0.0
    %1138 = vmatprep.subr.mxu0 0.0
    %1139 = vmatpush1.msra.mxu0 0.0
    %1140 = vmatprep.subr.mxu0 0.0
    %1141 = vmatpush1.msra.mxu0 0.0
    %1142 = vmatprep.subr.mxu0 0.0
    %1143 = vmatpush1.msra.mxu0 0.0
    %1144 = vmatprep.subr.mxu0 0.0
    %1145 = vmatpush1.msra.mxu0 0.0
    %1146 = vmatprep.subr.mxu0 0.0
    %1147 = vmatpush1.msra.mxu0 0.0
    %1148 = vmatprep.subr.mxu0 0.0
    %1149 = vmatpush1.msra.mxu0 0.0
    %1150 = vmatprep.subr.mxu0 0.0
    %1151 = vmatpush1.msra.mxu0 0.0
    %1152 = vmatprep.subr.mxu0 0.0
    %1153 = vmatpush1.msra.mxu0 0.0
    %1154 = vmatprep.subr.mxu0 0.0
    %1155 = vmatpush1.msra.mxu0 0.0
    %1156 = vmatprep.subr.mxu0 0.0
    %1157 = vmatpush1.msra.mxu0 0.0
    %1158 = vmatprep.subr.mxu0 0.0
    %1159 = vmatpush1.msra.mxu0 0.0
    %1160 = vmatprep.subr.mxu0 0.0
    %1161 = vmatpush1.msra.mxu0 0.0
    %1162 = vmatprep.subr.mxu0 0.0
    %1163 = vmatpush1.msra.mxu0 0.0
    %1164 = vmatprep.subr.mxu0 0.0
    %1165 = vmatpush1.msra.mxu0 0.0
    %1166 = vmatprep.subr.mxu0 0.0
    %1167 = vmatpush1.msra.mxu0 0.0
    %1168 = vmatprep.subr.mxu0 0.0
    %1169 = vmatpush1.msra.mxu0 0.0
    %1170 = vmatprep.subr.mxu0 0.0
    %1171 = vmatpush1.msra.mxu0 0.0
    %1172 = vmatprep.subr.mxu0 0.0
    %1173 = vmatpush1.msra.mxu0 0.0
    %1174 = vmatprep.subr.mxu0 0.0
    %1175 = vmatpush1.msra.mxu0 0.0
    %1176 = vmatprep.subr.mxu0 0.0
    %1177 = vmatpush1.msra.mxu0 0.0
    %1178 = vmatprep.subr.mxu0 0.0
    %1179 = vmatpush1.msra.mxu0 0.0
    %1180 = vmatprep.subr.mxu0 0.0
    %1181 = vmatpush1.msra.mxu0 0.0
    %1182 = vmatprep.subr.mxu0 0.0
    %1183 = vmatpush1.msra.mxu0 0.0
    %1184 = vmatprep.subr.mxu0 0.0
    %1185 = vmatpush1.msra.mxu0 0.0
    %1186 = vmatprep.subr.mxu0 0.0
    %1187 = vmatpush1.msra.mxu0 0.0
    %1188 = vmatprep.mubr.f32.mxu0 0.0
    %1189 = vmatmul.mubr.f32.gmra.mrb[0].mxu0 %v1122
    %v1190 = vpop.f32.mrb[0].mxu0
    %v1191 = vadd.f32 0.0, %v1190
    %v1192 = vpop.f32.mrb[0].mxu0
    %1193 = vdwg.mxu0
    %v1194 = vadd.f32 %v392, %v1191
    %v1195 = vxor.u32 %v1194, 2147483648
    %v1196 = vmul.f32 %v1195, 1.442695
    %v1197 = vpow.pop %v1196
    %v1198 = vadd.f32 %v1197, 1.0
    %v1199 = vrcp.pop %v1198
    %v1200 = vmul.f32 1.0, %v1199
    %v1201 = vmul.f32 %v1200, 2.0
    %v1202 = vsub.f32 %v1201, 1.0
    %v1203 = vmul.f32 %v1200, %v1110
    %1205 = vrot.lane.b32.xlu0 %v1202, 64
    %v1206 = vpop.permute.xlu0 %1205
    %v1208 = vmul.f32 %v1200, %v1206
    %1210 = vrot.lane.b32.xlu0 %v1208, 32
    %v1211 = vpop.permute.xlu0 %1210
    %v1213 = vadd.f32 %v1203, %v1211
    %v1214 = vtanh.pop %v1213
    %1216 = vrot.lane.b32.xlu0 %v1214, 64
    %v1217 = vpop.permute.xlu0 %1216
    %v1219 = vmul.f32 %v1200, %v1217
    %1221 = vrot.lane.b32.xlu0 %v1219, 32
    %v1222 = vpop.permute.xlu0 %1221
    %1224 = vst.msk [vmem:[#allocation2 + $0x38] sm:$0xff] %vm399, %v1222
    %v1225 = vld [vmem:[#allocation2] sm:$0xff]
    %v1226 = vld [vmem:[#allocation2 + $0x8] sm:$0xff]
    %v1227 = vld [vmem:[#allocation2 + $0x10] sm:$0xff]
    %v1228 = vld [vmem:[#allocation2 + $0x18] sm:$0xff]
    %v1229 = vld [vmem:[#allocation2 + $0x20] sm:$0xff]
    %v1230 = vld [vmem:[#allocation2 + $0x28] sm:$0xff]
    %v1231 = vld [vmem:[#allocation2 + $0x30] sm:$0xff]
    %v1232 = vld [vmem:[#allocation2 + $0x38] sm:$0xff]
    %v1233 = vld [vmem:[%s11] sm:$0xff]
    %v1234 = vld [vmem:[%s11 + $0x8] sm:$0xff]
    %v1235 = vld [vmem:[%s11 + $0x10] sm:$0xff]
    %v1236 = vld [vmem:[%s11 + $0x18] sm:$0xff]
    %v1237 = vld [vmem:[%s15] sm:$0x1]
    %v1239 = vlaneseq
    %v1240 = vshrl.u32 %v1239, 7
    %v1241 = vsub.s32 0, %v1240
    %v1242 = vrot.slane %v1237, %v1241
    %v1245 = vsel %vm399, %v1225, 0
    %v1248 = vsel %vm399, %v1226, 0
    %v1251 = vsel %vm399, %v1227, 0
    %v1254 = vsel %vm399, %v1228, 0
    %v1257 = vsel %vm399, %v1229, 0
    %v1260 = vsel %vm399, %v1230, 0
    %v1263 = vsel %vm399, %v1231, 0
    %v1266 = vsel %vm399, %v1232, 0
    %1268 = vmatprep.subr.mxu0 0.0
    %1269 = vmatpush1.msra.mxu0 %v1233
    %1270 = vmatprep.subr.mxu0 0.0
    %1271 = vmatpush1.msra.mxu0 %v1234
    %1272 = vmatprep.subr.mxu0 0.0
    %1273 = vmatpush1.msra.mxu0 %v1235
    %1274 = vmatprep.subr.mxu0 0.0
    %1275 = vmatpush1.msra.mxu0 %v1236
    %1276 = vmatprep.subr.mxu0 0.0
    %1277 = vmatpush1.msra.mxu0 0.0
    %1278 = vmatprep.subr.mxu0 0.0
    %1279 = vmatpush1.msra.mxu0 0.0
    %1280 = vmatprep.subr.mxu0 0.0
    %1281 = vmatpush1.msra.mxu0 0.0
    %1282 = vmatprep.subr.mxu0 0.0
    %1283 = vmatpush1.msra.mxu0 0.0
    %1284 = vmatprep.subr.mxu0 0.0
    %1285 = vmatpush1.msra.mxu0 0.0
    %1286 = vmatprep.subr.mxu0 0.0
    %1287 = vmatpush1.msra.mxu0 0.0
    %1288 = vmatprep.subr.mxu0 0.0
    %1289 = vmatpush1.msra.mxu0 0.0
    %1290 = vmatprep.subr.mxu0 0.0
    %1291 = vmatpush1.msra.mxu0 0.0
    %1292 = vmatprep.subr.mxu0 0.0
    %1293 = vmatpush1.msra.mxu0 0.0
    %1294 = vmatprep.subr.mxu0 0.0
    %1295 = vmatpush1.msra.mxu0 0.0
    %1296 = vmatprep.subr.mxu0 0.0
    %1297 = vmatpush1.msra.mxu0 0.0
    %1298 = vmatprep.subr.mxu0 0.0
    %1299 = vmatpush1.msra.mxu0 0.0
    %1300 = vmatprep.subr.mxu0 0.0
    %1301 = vmatpush1.msra.mxu0 0.0
    %1302 = vmatprep.subr.mxu0 0.0
    %1303 = vmatpush1.msra.mxu0 0.0
    %1304 = vmatprep.subr.mxu0 0.0
    %1305 = vmatpush1.msra.mxu0 0.0
    %1306 = vmatprep.subr.mxu0 0.0
    %1307 = vmatpush1.msra.mxu0 0.0
    %1308 = vmatprep.subr.mxu0 0.0
    %1309 = vmatpush1.msra.mxu0 0.0
    %1310 = vmatprep.subr.mxu0 0.0
    %1311 = vmatpush1.msra.mxu0 0.0
    %1312 = vmatprep.subr.mxu0 0.0
    %1313 = vmatpush1.msra.mxu0 0.0
    %1314 = vmatprep.subr.mxu0 0.0
    %1315 = vmatpush1.msra.mxu0 0.0
    %1316 = vmatprep.subr.mxu0 0.0
    %1317 = vmatpush1.msra.mxu0 0.0
    %1318 = vmatprep.subr.mxu0 0.0
    %1319 = vmatpush1.msra.mxu0 0.0
    %1320 = vmatprep.subr.mxu0 0.0
    %1321 = vmatpush1.msra.mxu0 0.0
    %1322 = vmatprep.subr.mxu0 0.0
    %1323 = vmatpush1.msra.mxu0 0.0
    %1324 = vmatprep.subr.mxu0 0.0
    %1325 = vmatpush1.msra.mxu0 0.0
    %1326 = vmatprep.subr.mxu0 0.0
    %1327 = vmatpush1.msra.mxu0 0.0
    %1328 = vmatprep.subr.mxu0 0.0
    %1329 = vmatpush1.msra.mxu0 0.0
    %1330 = vmatprep.subr.mxu0 0.0
    %1331 = vmatpush1.msra.mxu0 0.0
    %1332 = vmatprep.mubr.f32.mxu0 0.0
    %1333 = vmatmul.mubr.f32.gmra.mrb[0].mxu0 %v1245
    %v1334 = vpop.f32.mrb[0].mxu0
    %v1335 = vadd.f32 %v1242, %v1334
    %v1336 = vpop.f32.mrb[0].mxu0
    %1337 = vmatprep.mubr.f32.mxu0 0.0
    %1338 = vmatmul.mubr.f32.gmra.mrb[0].mxu0 %v1248
    %v1339 = vpop.f32.mrb[0].mxu0
    %v1340 = vadd.f32 %v1242, %v1339
    %v1341 = vpop.f32.mrb[0].mxu0
    %1342 = vmatprep.mubr.f32.mxu0 0.0
    %1343 = vmatmul.mubr.f32.gmra.mrb[0].mxu0 %v1251
    %v1344 = vpop.f32.mrb[0].mxu0
    %v1345 = vadd.f32 %v1242, %v1344
    %v1346 = vpop.f32.mrb[0].mxu0
    %1347 = vmatprep.mubr.f32.mxu0 0.0
    %1348 = vmatmul.mubr.f32.gmra.mrb[0].mxu0 %v1254
    %v1349 = vpop.f32.mrb[0].mxu0
    %v1350 = vadd.f32 %v1242, %v1349
    %v1351 = vpop.f32.mrb[0].mxu0
    %1352 = vmatprep.mubr.f32.mxu0 0.0
    %1353 = vmatmul.mubr.f32.gmra.mrb[0].mxu0 %v1257
    %v1354 = vpop.f32.mrb[0].mxu0
    %v1355 = vadd.f32 %v1242, %v1354
    %v1356 = vpop.f32.mrb[0].mxu0
    %1357 = vmatprep.mubr.f32.mxu0 0.0
    %1358 = vmatmul.mubr.f32.gmra.mrb[0].mxu0 %v1260
    %v1359 = vpop.f32.mrb[0].mxu0
    %v1360 = vadd.f32 %v1242, %v1359
    %v1361 = vpop.f32.mrb[0].mxu0
    %1362 = vmatprep.mubr.f32.mxu0 0.0
    %1363 = vmatmul.mubr.f32.gmra.mrb[0].mxu0 %v1263
    %v1364 = vpop.f32.mrb[0].mxu0
    %v1365 = vadd.f32 %v1242, %v1364
    %v1366 = vpop.f32.mrb[0].mxu0
    %1367 = vmatprep.mubr.f32.mxu0 0.0
    %1368 = vmatmul.mubr.f32.gmra.mrb[0].mxu0 %v1266
    %v1369 = vpop.f32.mrb[0].mxu0
    %v1370 = vadd.f32 %v1242, %v1369
    %v1371 = vpop.f32.mrb[0].mxu0
    %1372 = vdwg.mxu0
    %v1373 = vld [vmem:[%s13] sm:$0xff]
    %v1374 = vld [vmem:[%s13 + $0x8] sm:$0xff]
    %v1375 = vld [vmem:[%s13 + $0x10] sm:$0xff]
    %v1376 = vld [vmem:[%s13 + $0x18] sm:$0xff]
    %1377 = vmatprep.subr.mxu0 0.0
    %1378 = vmatpush1.msra.mxu0 %v1373
    %1379 = vmatprep.subr.mxu0 0.0
    %1380 = vmatpush1.msra.mxu0 %v1374
    %1381 = vmatprep.subr.mxu0 0.0
    %1382 = vmatpush1.msra.mxu0 %v1375
    %1383 = vmatprep.subr.mxu0 0.0
    %1384 = vmatpush1.msra.mxu0 %v1376
    %1385 = vmatprep.subr.mxu0 0.0
    %1386 = vmatpush1.msra.mxu0 0.0
    %1387 = vmatprep.subr.mxu0 0.0
    %1388 = vmatpush1.msra.mxu0 0.0
    %1389 = vmatprep.subr.mxu0 0.0
    %1390 = vmatpush1.msra.mxu0 0.0
    %1391 = vmatprep.subr.mxu0 0.0
    %1392 = vmatpush1.msra.mxu0 0.0
    %1393 = vmatprep.subr.mxu0 0.0
    %1394 = vmatpush1.msra.mxu0 0.0
    %1395 = vmatprep.subr.mxu0 0.0
    %1396 = vmatpush1.msra.mxu0 0.0
    %1397 = vmatprep.subr.mxu0 0.0
    %1398 = vmatpush1.msra.mxu0 0.0
    %1399 = vmatprep.subr.mxu0 0.0
    %1400 = vmatpush1.msra.mxu0 0.0
    %1401 = vmatprep.subr.mxu0 0.0
    %1402 = vmatpush1.msra.mxu0 0.0
    %1403 = vmatprep.subr.mxu0 0.0
    %1404 = vmatpush1.msra.mxu0 0.0
    %1405 = vmatprep.subr.mxu0 0.0
    %1406 = vmatpush1.msra.mxu0 0.0
    %1407 = vmatprep.subr.mxu0 0.0
    %1408 = vmatpush1.msra.mxu0 0.0
    %1409 = vmatprep.subr.mxu0 0.0
    %1410 = vmatpush1.msra.mxu0 0.0
    %1411 = vmatprep.subr.mxu0 0.0
    %1412 = vmatpush1.msra.mxu0 0.0
    %1413 = vmatprep.subr.mxu0 0.0
    %1414 = vmatpush1.msra.mxu0 0.0
    %1415 = vmatprep.subr.mxu0 0.0
    %1416 = vmatpush1.msra.mxu0 0.0
    %1417 = vmatprep.subr.mxu0 0.0
    %1418 = vmatpush1.msra.mxu0 0.0
    %1419 = vmatprep.subr.mxu0 0.0
    %1420 = vmatpush1.msra.mxu0 0.0
    %1421 = vmatprep.subr.mxu0 0.0
    %1422 = vmatpush1.msra.mxu0 0.0
    %1423 = vmatprep.subr.mxu0 0.0
    %1424 = vmatpush1.msra.mxu0 0.0
    %1425 = vmatprep.subr.mxu0 0.0
    %1426 = vmatpush1.msra.mxu0 0.0
    %1427 = vmatprep.subr.mxu0 0.0
    %1428 = vmatpush1.msra.mxu0 0.0
    %1429 = vmatprep.subr.mxu0 0.0
    %1430 = vmatpush1.msra.mxu0 0.0
    %1431 = vmatprep.subr.mxu0 0.0
    %1432 = vmatpush1.msra.mxu0 0.0
    %1433 = vmatprep.subr.mxu0 0.0
    %1434 = vmatpush1.msra.mxu0 0.0
    %1435 = vmatprep.subr.mxu0 0.0
    %1436 = vmatpush1.msra.mxu0 0.0
    %1437 = vmatprep.subr.mxu0 0.0
    %1438 = vmatpush1.msra.mxu0 0.0
    %1439 = vmatprep.subr.mxu0 0.0
    %1440 = vmatpush1.msra.mxu0 0.0
    %1441 = vmatprep.mubr.f32.mxu0 0.0
    %1442 = vmatmul.mubr.f32.gmra.mrb[0].mxu0 %v401
    %v1443 = vpop.f32.mrb[0].mxu0
    %v1444 = vadd.f32 0.0, %v1443
    %v1445 = vpop.f32.mrb[0].mxu0
    %1446 = vdwg.mxu0
    %v1447 = vadd.f32 %v1335, %v1444
    %v1448 = vxor.u32 %v1447, 2147483648
    %v1449 = vmul.f32 %v1448, 1.442695
    %v1450 = vpow.pop %v1449
    %v1451 = vadd.f32 %v1450, 1.0
    %v1452 = vrcp.pop %v1451
    %v1453 = vmul.f32 1.0, %v1452
    %v1454 = vmul.f32 %v1453, 2.0
    %v1455 = vsub.f32 %v1454, 1.0
    %v1456 = vmul.f32 %v1453, 0.0
    %1458 = vrot.lane.b32.xlu0 %v1455, 64
    %v1459 = vpop.permute.xlu0 %1458
    %v1461 = vmul.f32 %v1453, %v1459
    %1463 = vrot.lane.b32.xlu0 %v1461, 32
    %v1464 = vpop.permute.xlu0 %1463
    %v1466 = vadd.f32 %v1456, %v1464
    %v1467 = vtanh.pop %v1466
    %1469 = vrot.lane.b32.xlu0 %v1467, 64
    %v1470 = vpop.permute.xlu0 %1469
    %v1472 = vmul.f32 %v1453, %v1470
    %1474 = vrot.lane.b32.xlu0 %v1472, 32
    %v1475 = vpop.permute.xlu0 %1474
    %v1476 = vsel %vm399, %v1475, 0
    %1478 = vmatprep.subr.mxu0 0.0
    %1479 = vmatpush1.msra.mxu0 %v1373
    %1480 = vmatprep.subr.mxu0 0.0
    %1481 = vmatpush1.msra.mxu0 %v1374
    %1482 = vmatprep.subr.mxu0 0.0
    %1483 = vmatpush1.msra.mxu0 %v1375
    %1484 = vmatprep.subr.mxu0 0.0
    %1485 = vmatpush1.msra.mxu0 %v1376
    %1486 = vmatprep.subr.mxu0 0.0
    %1487 = vmatpush1.msra.mxu0 0.0
    %1488 = vmatprep.subr.mxu0 0.0
    %1489 = vmatpush1.msra.mxu0 0.0
    %1490 = vmatprep.subr.mxu0 0.0
    %1491 = vmatpush1.msra.mxu0 0.0
    %1492 = vmatprep.subr.mxu0 0.0
    %1493 = vmatpush1.msra.mxu0 0.0
    %1494 = vmatprep.subr.mxu0 0.0
    %1495 = vmatpush1.msra.mxu0 0.0
    %1496 = vmatprep.subr.mxu0 0.0
    %1497 = vmatpush1.msra.mxu0 0.0
    %1498 = vmatprep.subr.mxu0 0.0
    %1499 = vmatpush1.msra.mxu0 0.0
    %1500 = vmatprep.subr.mxu0 0.0
    %1501 = vmatpush1.msra.mxu0 0.0
    %1502 = vmatprep.subr.mxu0 0.0
    %1503 = vmatpush1.msra.mxu0 0.0
    %1504 = vmatprep.subr.mxu0 0.0
    %1505 = vmatpush1.msra.mxu0 0.0
    %1506 = vmatprep.subr.mxu0 0.0
    %1507 = vmatpush1.msra.mxu0 0.0
    %1508 = vmatprep.subr.mxu0 0.0
    %1509 = vmatpush1.msra.mxu0 0.0
    %1510 = vmatprep.subr.mxu0 0.0
    %1511 = vmatpush1.msra.mxu0 0.0
    %1512 = vmatprep.subr.mxu0 0.0
    %1513 = vmatpush1.msra.mxu0 0.0
    %1514 = vmatprep.subr.mxu0 0.0
    %1515 = vmatpush1.msra.mxu0 0.0
    %1516 = vmatprep.subr.mxu0 0.0
    %1517 = vmatpush1.msra.mxu0 0.0
    %1518 = vmatprep.subr.mxu0 0.0
    %1519 = vmatpush1.msra.mxu0 0.0
    %1520 = vmatprep.subr.mxu0 0.0
    %1521 = vmatpush1.msra.mxu0 0.0
    %1522 = vmatprep.subr.mxu0 0.0
    %1523 = vmatpush1.msra.mxu0 0.0
    %1524 = vmatprep.subr.mxu0 0.0
    %1525 = vmatpush1.msra.mxu0 0.0
    %1526 = vmatprep.subr.mxu0 0.0
    %1527 = vmatpush1.msra.mxu0 0.0
    %1528 = vmatprep.subr.mxu0 0.0
    %1529 = vmatpush1.msra.mxu0 0.0
    %1530 = vmatprep.subr.mxu0 0.0
    %1531 = vmatpush1.msra.mxu0 0.0
    %1532 = vmatprep.subr.mxu0 0.0
    %1533 = vmatpush1.msra.mxu0 0.0
    %1534 = vmatprep.subr.mxu0 0.0
    %1535 = vmatpush1.msra.mxu0 0.0
    %1536 = vmatprep.subr.mxu0 0.0
    %1537 = vmatpush1.msra.mxu0 0.0
    %1538 = vmatprep.subr.mxu0 0.0
    %1539 = vmatpush1.msra.mxu0 0.0
    %1540 = vmatprep.subr.mxu0 0.0
    %1541 = vmatpush1.msra.mxu0 0.0
    %1542 = vmatprep.mubr.f32.mxu0 0.0
    %1543 = vmatmul.mubr.f32.gmra.mrb[0].mxu0 %v1476
    %v1544 = vpop.f32.mrb[0].mxu0
    %v1545 = vadd.f32 0.0, %v1544
    %v1546 = vpop.f32.mrb[0].mxu0
    %1547 = vdwg.mxu0
    %v1548 = vadd.f32 %v1340, %v1545
    %v1549 = vxor.u32 %v1548, 2147483648
    %v1550 = vmul.f32 %v1549, 1.442695
    %v1551 = vpow.pop %v1550
    %v1552 = vadd.f32 %v1551, 1.0
    %v1553 = vrcp.pop %v1552
    %v1554 = vmul.f32 1.0, %v1553
    %v1555 = vmul.f32 %v1554, 2.0
    %v1556 = vsub.f32 %v1555, 1.0
    %v1557 = vmul.f32 %v1554, %v1466
    %1559 = vrot.lane.b32.xlu0 %v1556, 64
    %v1560 = vpop.permute.xlu0 %1559
    %v1562 = vmul.f32 %v1554, %v1560
    %1564 = vrot.lane.b32.xlu0 %v1562, 32
    %v1565 = vpop.permute.xlu0 %1564
    %v1567 = vadd.f32 %v1557, %v1565
    %v1568 = vtanh.pop %v1567
    %1570 = vrot.lane.b32.xlu0 %v1568, 64
    %v1571 = vpop.permute.xlu0 %1570
    %v1573 = vmul.f32 %v1554, %v1571
    %1575 = vrot.lane.b32.xlu0 %v1573, 32
    %v1576 = vpop.permute.xlu0 %1575
    %v1577 = vsel %vm399, %v1576, 0
    %1579 = vmatprep.subr.mxu0 0.0
    %1580 = vmatpush1.msra.mxu0 %v1373
    %1581 = vmatprep.subr.mxu0 0.0
    %1582 = vmatpush1.msra.mxu0 %v1374
    %1583 = vmatprep.subr.mxu0 0.0
    %1584 = vmatpush1.msra.mxu0 %v1375
    %1585 = vmatprep.subr.mxu0 0.0
    %1586 = vmatpush1.msra.mxu0 %v1376
    %1587 = vmatprep.subr.mxu0 0.0
    %1588 = vmatpush1.msra.mxu0 0.0
    %1589 = vmatprep.subr.mxu0 0.0
    %1590 = vmatpush1.msra.mxu0 0.0
    %1591 = vmatprep.subr.mxu0 0.0
    %1592 = vmatpush1.msra.mxu0 0.0
    %1593 = vmatprep.subr.mxu0 0.0
    %1594 = vmatpush1.msra.mxu0 0.0
    %1595 = vmatprep.subr.mxu0 0.0
    %1596 = vmatpush1.msra.mxu0 0.0
    %1597 = vmatprep.subr.mxu0 0.0
    %1598 = vmatpush1.msra.mxu0 0.0
    %1599 = vmatprep.subr.mxu0 0.0
    %1600 = vmatpush1.msra.mxu0 0.0
    %1601 = vmatprep.subr.mxu0 0.0
    %1602 = vmatpush1.msra.mxu0 0.0
    %1603 = vmatprep.subr.mxu0 0.0
    %1604 = vmatpush1.msra.mxu0 0.0
    %1605 = vmatprep.subr.mxu0 0.0
    %1606 = vmatpush1.msra.mxu0 0.0
    %1607 = vmatprep.subr.mxu0 0.0
    %1608 = vmatpush1.msra.mxu0 0.0
    %1609 = vmatprep.subr.mxu0 0.0
    %1610 = vmatpush1.msra.mxu0 0.0
    %1611 = vmatprep.subr.mxu0 0.0
    %1612 = vmatpush1.msra.mxu0 0.0
    %1613 = vmatprep.subr.mxu0 0.0
    %1614 = vmatpush1.msra.mxu0 0.0
    %1615 = vmatprep.subr.mxu0 0.0
    %1616 = vmatpush1.msra.mxu0 0.0
    %1617 = vmatprep.subr.mxu0 0.0
    %1618 = vmatpush1.msra.mxu0 0.0
    %1619 = vmatprep.subr.mxu0 0.0
    %1620 = vmatpush1.msra.mxu0 0.0
    %1621 = vmatprep.subr.mxu0 0.0
    %1622 = vmatpush1.msra.mxu0 0.0
    %1623 = vmatprep.subr.mxu0 0.0
    %1624 = vmatpush1.msra.mxu0 0.0
    %1625 = vmatprep.subr.mxu0 0.0
    %1626 = vmatpush1.msra.mxu0 0.0
    %1627 = vmatprep.subr.mxu0 0.0
    %1628 = vmatpush1.msra.mxu0 0.0
    %1629 = vmatprep.subr.mxu0 0.0
    %1630 = vmatpush1.msra.mxu0 0.0
    %1631 = vmatprep.subr.mxu0 0.0
    %1632 = vmatpush1.msra.mxu0 0.0
    %1633 = vmatprep.subr.mxu0 0.0
    %1634 = vmatpush1.msra.mxu0 0.0
    %1635 = vmatprep.subr.mxu0 0.0
    %1636 = vmatpush1.msra.mxu0 0.0
    %1637 = vmatprep.subr.mxu0 0.0
    %1638 = vmatpush1.msra.mxu0 0.0
    %1639 = vmatprep.subr.mxu0 0.0
    %1640 = vmatpush1.msra.mxu0 0.0
    %1641 = vmatprep.subr.mxu0 0.0
    %1642 = vmatpush1.msra.mxu0 0.0
    %1643 = vmatprep.mubr.f32.mxu0 0.0
    %1644 = vmatmul.mubr.f32.gmra.mrb[0].mxu0 %v1577
    %v1645 = vpop.f32.mrb[0].mxu0
    %v1646 = vadd.f32 0.0, %v1645
    %v1647 = vpop.f32.mrb[0].mxu0
    %1648 = vdwg.mxu0
    %v1649 = vadd.f32 %v1345, %v1646
    %v1650 = vxor.u32 %v1649, 2147483648
    %v1651 = vmul.f32 %v1650, 1.442695
    %v1652 = vpow.pop %v1651
    %v1653 = vadd.f32 %v1652, 1.0
    %v1654 = vrcp.pop %v1653
    %v1655 = vmul.f32 1.0, %v1654
    %v1656 = vmul.f32 %v1655, 2.0
    %v1657 = vsub.f32 %v1656, 1.0
    %v1658 = vmul.f32 %v1655, %v1567
    %1660 = vrot.lane.b32.xlu0 %v1657, 64
    %v1661 = vpop.permute.xlu0 %1660
    %v1663 = vmul.f32 %v1655, %v1661
    %1665 = vrot.lane.b32.xlu0 %v1663, 32
    %v1666 = vpop.permute.xlu0 %1665
    %v1668 = vadd.f32 %v1658, %v1666
    %v1669 = vtanh.pop %v1668
    %1671 = vrot.lane.b32.xlu0 %v1669, 64
    %v1672 = vpop.permute.xlu0 %1671
    %v1674 = vmul.f32 %v1655, %v1672
    %1676 = vrot.lane.b32.xlu0 %v1674, 32
    %v1677 = vpop.permute.xlu0 %1676
    %v1678 = vsel %vm399, %v1677, 0
    %1680 = vmatprep.subr.mxu0 0.0
    %1681 = vmatpush1.msra.mxu0 %v1373
    %1682 = vmatprep.subr.mxu0 0.0
    %1683 = vmatpush1.msra.mxu0 %v1374
    %1684 = vmatprep.subr.mxu0 0.0
    %1685 = vmatpush1.msra.mxu0 %v1375
    %1686 = vmatprep.subr.mxu0 0.0
    %1687 = vmatpush1.msra.mxu0 %v1376
    %1688 = vmatprep.subr.mxu0 0.0
    %1689 = vmatpush1.msra.mxu0 0.0
    %1690 = vmatprep.subr.mxu0 0.0
    %1691 = vmatpush1.msra.mxu0 0.0
    %1692 = vmatprep.subr.mxu0 0.0
    %1693 = vmatpush1.msra.mxu0 0.0
    %1694 = vmatprep.subr.mxu0 0.0
    %1695 = vmatpush1.msra.mxu0 0.0
    %1696 = vmatprep.subr.mxu0 0.0
    %1697 = vmatpush1.msra.mxu0 0.0
    %1698 = vmatprep.subr.mxu0 0.0
    %1699 = vmatpush1.msra.mxu0 0.0
    %1700 = vmatprep.subr.mxu0 0.0
    %1701 = vmatpush1.msra.mxu0 0.0
    %1702 = vmatprep.subr.mxu0 0.0
    %1703 = vmatpush1.msra.mxu0 0.0
    %1704 = vmatprep.subr.mxu0 0.0
    %1705 = vmatpush1.msra.mxu0 0.0
    %1706 = vmatprep.subr.mxu0 0.0
    %1707 = vmatpush1.msra.mxu0 0.0
    %1708 = vmatprep.subr.mxu0 0.0
    %1709 = vmatpush1.msra.mxu0 0.0
    %1710 = vmatprep.subr.mxu0 0.0
    %1711 = vmatpush1.msra.mxu0 0.0
    %1712 = vmatprep.subr.mxu0 0.0
    %1713 = vmatpush1.msra.mxu0 0.0
    %1714 = vmatprep.subr.mxu0 0.0
    %1715 = vmatpush1.msra.mxu0 0.0
    %1716 = vmatprep.subr.mxu0 0.0
    %1717 = vmatpush1.msra.mxu0 0.0
    %1718 = vmatprep.subr.mxu0 0.0
    %1719 = vmatpush1.msra.mxu0 0.0
    %1720 = vmatprep.subr.mxu0 0.0
    %1721 = vmatpush1.msra.mxu0 0.0
    %1722 = vmatprep.subr.mxu0 0.0
    %1723 = vmatpush1.msra.mxu0 0.0
    %1724 = vmatprep.subr.mxu0 0.0
    %1725 = vmatpush1.msra.mxu0 0.0
    %1726 = vmatprep.subr.mxu0 0.0
    %1727 = vmatpush1.msra.mxu0 0.0
    %1728 = vmatprep.subr.mxu0 0.0
    %1729 = vmatpush1.msra.mxu0 0.0
    %1730 = vmatprep.subr.mxu0 0.0
    %1731 = vmatpush1.msra.mxu0 0.0
    %1732 = vmatprep.subr.mxu0 0.0
    %1733 = vmatpush1.msra.mxu0 0.0
    %1734 = vmatprep.subr.mxu0 0.0
    %1735 = vmatpush1.msra.mxu0 0.0
    %1736 = vmatprep.subr.mxu0 0.0
    %1737 = vmatpush1.msra.mxu0 0.0
    %1738 = vmatprep.subr.mxu0 0.0
    %1739 = vmatpush1.msra.mxu0 0.0
    %1740 = vmatprep.subr.mxu0 0.0
    %1741 = vmatpush1.msra.mxu0 0.0
    %1742 = vmatprep.subr.mxu0 0.0
    %1743 = vmatpush1.msra.mxu0 0.0
    %1744 = vmatprep.mubr.f32.mxu0 0.0
    %1745 = vmatmul.mubr.f32.gmra.mrb[0].mxu0 %v1678
    %v1746 = vpop.f32.mrb[0].mxu0
    %v1747 = vadd.f32 0.0, %v1746
    %v1748 = vpop.f32.mrb[0].mxu0
    %1749 = vdwg.mxu0
    %v1750 = vadd.f32 %v1350, %v1747
    %v1751 = vxor.u32 %v1750, 2147483648
    %v1752 = vmul.f32 %v1751, 1.442695
    %v1753 = vpow.pop %v1752
    %v1754 = vadd.f32 %v1753, 1.0
    %v1755 = vrcp.pop %v1754
    %v1756 = vmul.f32 1.0, %v1755
    %v1757 = vmul.f32 %v1756, 2.0
    %v1758 = vsub.f32 %v1757, 1.0
    %v1759 = vmul.f32 %v1756, %v1668
    %1761 = vrot.lane.b32.xlu0 %v1758, 64
    %v1762 = vpop.permute.xlu0 %1761
    %v1764 = vmul.f32 %v1756, %v1762
    %1766 = vrot.lane.b32.xlu0 %v1764, 32
    %v1767 = vpop.permute.xlu0 %1766
    %v1769 = vadd.f32 %v1759, %v1767
    %v1770 = vtanh.pop %v1769
    %1772 = vrot.lane.b32.xlu0 %v1770, 64
    %v1773 = vpop.permute.xlu0 %1772
    %v1775 = vmul.f32 %v1756, %v1773
    %1777 = vrot.lane.b32.xlu0 %v1775, 32
    %v1778 = vpop.permute.xlu0 %1777
    %v1779 = vsel %vm399, %v1778, 0
    %1781 = vmatprep.subr.mxu0 0.0
    %1782 = vmatpush1.msra.mxu0 %v1373
    %1783 = vmatprep.subr.mxu0 0.0
    %1784 = vmatpush1.msra.mxu0 %v1374
    %1785 = vmatprep.subr.mxu0 0.0
    %1786 = vmatpush1.msra.mxu0 %v1375
    %1787 = vmatprep.subr.mxu0 0.0
    %1788 = vmatpush1.msra.mxu0 %v1376
    %1789 = vmatprep.subr.mxu0 0.0
    %1790 = vmatpush1.msra.mxu0 0.0
    %1791 = vmatprep.subr.mxu0 0.0
    %1792 = vmatpush1.msra.mxu0 0.0
    %1793 = vmatprep.subr.mxu0 0.0
    %1794 = vmatpush1.msra.mxu0 0.0
    %1795 = vmatprep.subr.mxu0 0.0
    %1796 = vmatpush1.msra.mxu0 0.0
    %1797 = vmatprep.subr.mxu0 0.0
    %1798 = vmatpush1.msra.mxu0 0.0
    %1799 = vmatprep.subr.mxu0 0.0
    %1800 = vmatpush1.msra.mxu0 0.0
    %1801 = vmatprep.subr.mxu0 0.0
    %1802 = vmatpush1.msra.mxu0 0.0
    %1803 = vmatprep.subr.mxu0 0.0
    %1804 = vmatpush1.msra.mxu0 0.0
    %1805 = vmatprep.subr.mxu0 0.0
    %1806 = vmatpush1.msra.mxu0 0.0
    %1807 = vmatprep.subr.mxu0 0.0
    %1808 = vmatpush1.msra.mxu0 0.0
    %1809 = vmatprep.subr.mxu0 0.0
    %1810 = vmatpush1.msra.mxu0 0.0
    %1811 = vmatprep.subr.mxu0 0.0
    %1812 = vmatpush1.msra.mxu0 0.0
    %1813 = vmatprep.subr.mxu0 0.0
    %1814 = vmatpush1.msra.mxu0 0.0
    %1815 = vmatprep.subr.mxu0 0.0
    %1816 = vmatpush1.msra.mxu0 0.0
    %1817 = vmatprep.subr.mxu0 0.0
    %1818 = vmatpush1.msra.mxu0 0.0
    %1819 = vmatprep.subr.mxu0 0.0
    %1820 = vmatpush1.msra.mxu0 0.0
    %1821 = vmatprep.subr.mxu0 0.0
    %1822 = vmatpush1.msra.mxu0 0.0
    %1823 = vmatprep.subr.mxu0 0.0
    %1824 = vmatpush1.msra.mxu0 0.0
    %1825 = vmatprep.subr.mxu0 0.0
    %1826 = vmatpush1.msra.mxu0 0.0
    %1827 = vmatprep.subr.mxu0 0.0
    %1828 = vmatpush1.msra.mxu0 0.0
    %1829 = vmatprep.subr.mxu0 0.0
    %1830 = vmatpush1.msra.mxu0 0.0
    %1831 = vmatprep.subr.mxu0 0.0
    %1832 = vmatpush1.msra.mxu0 0.0
    %1833 = vmatprep.subr.mxu0 0.0
    %1834 = vmatpush1.msra.mxu0 0.0
    %1835 = vmatprep.subr.mxu0 0.0
    %1836 = vmatpush1.msra.mxu0 0.0
    %1837 = vmatprep.subr.mxu0 0.0
    %1838 = vmatpush1.msra.mxu0 0.0
    %1839 = vmatprep.subr.mxu0 0.0
    %1840 = vmatpush1.msra.mxu0 0.0
    %1841 = vmatprep.subr.mxu0 0.0
    %1842 = vmatpush1.msra.mxu0 0.0
    %1843 = vmatprep.subr.mxu0 0.0
    %1844 = vmatpush1.msra.mxu0 0.0
    %1845 = vmatprep.mubr.f32.mxu0 0.0
    %1846 = vmatmul.mubr.f32.gmra.mrb[0].mxu0 %v1779
    %v1847 = vpop.f32.mrb[0].mxu0
    %v1848 = vadd.f32 0.0, %v1847
    %v1849 = vpop.f32.mrb[0].mxu0
    %1850 = vdwg.mxu0
    %v1851 = vadd.f32 %v1355, %v1848
    %v1852 = vxor.u32 %v1851, 2147483648
    %v1853 = vmul.f32 %v1852, 1.442695
    %v1854 = vpow.pop %v1853
    %v1855 = vadd.f32 %v1854, 1.0
    %v1856 = vrcp.pop %v1855
    %v1857 = vmul.f32 1.0, %v1856
    %v1858 = vmul.f32 %v1857, 2.0
    %v1859 = vsub.f32 %v1858, 1.0
    %v1860 = vmul.f32 %v1857, %v1769
    %1862 = vrot.lane.b32.xlu0 %v1859, 64
    %v1863 = vpop.permute.xlu0 %1862
    %v1865 = vmul.f32 %v1857, %v1863
    %1867 = vrot.lane.b32.xlu0 %v1865, 32
    %v1868 = vpop.permute.xlu0 %1867
    %v1870 = vadd.f32 %v1860, %v1868
    %v1871 = vtanh.pop %v1870
    %1873 = vrot.lane.b32.xlu0 %v1871, 64
    %v1874 = vpop.permute.xlu0 %1873
    %v1876 = vmul.f32 %v1857, %v1874
    %1878 = vrot.lane.b32.xlu0 %v1876, 32
    %v1879 = vpop.permute.xlu0 %1878
    %v1880 = vsel %vm399, %v1879, 0
    %1882 = vmatprep.subr.mxu0 0.0
    %1883 = vmatpush1.msra.mxu0 %v1373
    %1884 = vmatprep.subr.mxu0 0.0
    %1885 = vmatpush1.msra.mxu0 %v1374
    %1886 = vmatprep.subr.mxu0 0.0
    %1887 = vmatpush1.msra.mxu0 %v1375
    %1888 = vmatprep.subr.mxu0 0.0
    %1889 = vmatpush1.msra.mxu0 %v1376
    %1890 = vmatprep.subr.mxu0 0.0
    %1891 = vmatpush1.msra.mxu0 0.0
    %1892 = vmatprep.subr.mxu0 0.0
    %1893 = vmatpush1.msra.mxu0 0.0
    %1894 = vmatprep.subr.mxu0 0.0
    %1895 = vmatpush1.msra.mxu0 0.0
    %1896 = vmatprep.subr.mxu0 0.0
    %1897 = vmatpush1.msra.mxu0 0.0
    %1898 = vmatprep.subr.mxu0 0.0
    %1899 = vmatpush1.msra.mxu0 0.0
    %1900 = vmatprep.subr.mxu0 0.0
    %1901 = vmatpush1.msra.mxu0 0.0
    %1902 = vmatprep.subr.mxu0 0.0
    %1903 = vmatpush1.msra.mxu0 0.0
    %1904 = vmatprep.subr.mxu0 0.0
    %1905 = vmatpush1.msra.mxu0 0.0
    %1906 = vmatprep.subr.mxu0 0.0
    %1907 = vmatpush1.msra.mxu0 0.0
    %1908 = vmatprep.subr.mxu0 0.0
    %1909 = vmatpush1.msra.mxu0 0.0
    %1910 = vmatprep.subr.mxu0 0.0
    %1911 = vmatpush1.msra.mxu0 0.0
    %1912 = vmatprep.subr.mxu0 0.0
    %1913 = vmatpush1.msra.mxu0 0.0
    %1914 = vmatprep.subr.mxu0 0.0
    %1915 = vmatpush1.msra.mxu0 0.0
    %1916 = vmatprep.subr.mxu0 0.0
    %1917 = vmatpush1.msra.mxu0 0.0
    %1918 = vmatprep.subr.mxu0 0.0
    %1919 = vmatpush1.msra.mxu0 0.0
    %1920 = vmatprep.subr.mxu0 0.0
    %1921 = vmatpush1.msra.mxu0 0.0
    %1922 = vmatprep.subr.mxu0 0.0
    %1923 = vmatpush1.msra.mxu0 0.0
    %1924 = vmatprep.subr.mxu0 0.0
    %1925 = vmatpush1.msra.mxu0 0.0
    %1926 = vmatprep.subr.mxu0 0.0
    %1927 = vmatpush1.msra.mxu0 0.0
    %1928 = vmatprep.subr.mxu0 0.0
    %1929 = vmatpush1.msra.mxu0 0.0
    %1930 = vmatprep.subr.mxu0 0.0
    %1931 = vmatpush1.msra.mxu0 0.0
    %1932 = vmatprep.subr.mxu0 0.0
    %1933 = vmatpush1.msra.mxu0 0.0
    %1934 = vmatprep.subr.mxu0 0.0
    %1935 = vmatpush1.msra.mxu0 0.0
    %1936 = vmatprep.subr.mxu0 0.0
    %1937 = vmatpush1.msra.mxu0 0.0
    %1938 = vmatprep.subr.mxu0 0.0
    %1939 = vmatpush1.msra.mxu0 0.0
    %1940 = vmatprep.subr.mxu0 0.0
    %1941 = vmatpush1.msra.mxu0 0.0
    %1942 = vmatprep.subr.mxu0 0.0
    %1943 = vmatpush1.msra.mxu0 0.0
    %1944 = vmatprep.subr.mxu0 0.0
    %1945 = vmatpush1.msra.mxu0 0.0
    %1946 = vmatprep.mubr.f32.mxu0 0.0
    %1947 = vmatmul.mubr.f32.gmra.mrb[0].mxu0 %v1880
    %v1948 = vpop.f32.mrb[0].mxu0
    %v1949 = vadd.f32 0.0, %v1948
    %v1950 = vpop.f32.mrb[0].mxu0
    %1951 = vdwg.mxu0
    %v1952 = vadd.f32 %v1360, %v1949
    %v1953 = vxor.u32 %v1952, 2147483648
    %v1954 = vmul.f32 %v1953, 1.442695
    %v1955 = vpow.pop %v1954
    %v1956 = vadd.f32 %v1955, 1.0
    %v1957 = vrcp.pop %v1956
    %v1958 = vmul.f32 1.0, %v1957
    %v1959 = vmul.f32 %v1958, 2.0
    %v1960 = vsub.f32 %v1959, 1.0
    %v1961 = vmul.f32 %v1958, %v1870
    %1963 = vrot.lane.b32.xlu0 %v1960, 64
    %v1964 = vpop.permute.xlu0 %1963
    %v1966 = vmul.f32 %v1958, %v1964
    %1968 = vrot.lane.b32.xlu0 %v1966, 32
    %v1969 = vpop.permute.xlu0 %1968
    %v1971 = vadd.f32 %v1961, %v1969
    %v1972 = vtanh.pop %v1971
    %1974 = vrot.lane.b32.xlu0 %v1972, 64
    %v1975 = vpop.permute.xlu0 %1974
    %v1977 = vmul.f32 %v1958, %v1975
    %1979 = vrot.lane.b32.xlu0 %v1977, 32
    %v1980 = vpop.permute.xlu0 %1979
    %v1981 = vsel %vm399, %v1980, 0
    %1983 = vmatprep.subr.mxu0 0.0
    %1984 = vmatpush1.msra.mxu0 %v1373
    %1985 = vmatprep.subr.mxu0 0.0
    %1986 = vmatpush1.msra.mxu0 %v1374
    %1987 = vmatprep.subr.mxu0 0.0
    %1988 = vmatpush1.msra.mxu0 %v1375
    %1989 = vmatprep.subr.mxu0 0.0
    %1990 = vmatpush1.msra.mxu0 %v1376
    %1991 = vmatprep.subr.mxu0 0.0
    %1992 = vmatpush1.msra.mxu0 0.0
    %1993 = vmatprep.subr.mxu0 0.0
    %1994 = vmatpush1.msra.mxu0 0.0
    %1995 = vmatprep.subr.mxu0 0.0
    %1996 = vmatpush1.msra.mxu0 0.0
    %1997 = vmatprep.subr.mxu0 0.0
    %1998 = vmatpush1.msra.mxu0 0.0
    %1999 = vmatprep.subr.mxu0 0.0
    %2000 = vmatpush1.msra.mxu0 0.0
    %2001 = vmatprep.subr.mxu0 0.0
    %2002 = vmatpush1.msra.mxu0 0.0
    %2003 = vmatprep.subr.mxu0 0.0
    %2004 = vmatpush1.msra.mxu0 0.0
    %2005 = vmatprep.subr.mxu0 0.0
    %2006 = vmatpush1.msra.mxu0 0.0
    %2007 = vmatprep.subr.mxu0 0.0
    %2008 = vmatpush1.msra.mxu0 0.0
    %2009 = vmatprep.subr.mxu0 0.0
    %2010 = vmatpush1.msra.mxu0 0.0
    %2011 = vmatprep.subr.mxu0 0.0
    %2012 = vmatpush1.msra.mxu0 0.0
    %2013 = vmatprep.subr.mxu0 0.0
    %2014 = vmatpush1.msra.mxu0 0.0
    %2015 = vmatprep.subr.mxu0 0.0
    %2016 = vmatpush1.msra.mxu0 0.0
    %2017 = vmatprep.subr.mxu0 0.0
    %2018 = vmatpush1.msra.mxu0 0.0
    %2019 = vmatprep.subr.mxu0 0.0
    %2020 = vmatpush1.msra.mxu0 0.0
    %2021 = vmatprep.subr.mxu0 0.0
    %2022 = vmatpush1.msra.mxu0 0.0
    %2023 = vmatprep.subr.mxu0 0.0
    %2024 = vmatpush1.msra.mxu0 0.0
    %2025 = vmatprep.subr.mxu0 0.0
    %2026 = vmatpush1.msra.mxu0 0.0
    %2027 = vmatprep.subr.mxu0 0.0
    %2028 = vmatpush1.msra.mxu0 0.0
    %2029 = vmatprep.subr.mxu0 0.0
    %2030 = vmatpush1.msra.mxu0 0.0
    %2031 = vmatprep.subr.mxu0 0.0
    %2032 = vmatpush1.msra.mxu0 0.0
    %2033 = vmatprep.subr.mxu0 0.0
    %2034 = vmatpush1.msra.mxu0 0.0
    %2035 = vmatprep.subr.mxu0 0.0
    %2036 = vmatpush1.msra.mxu0 0.0
    %2037 = vmatprep.subr.mxu0 0.0
    %2038 = vmatpush1.msra.mxu0 0.0
    %2039 = vmatprep.subr.mxu0 0.0
    %2040 = vmatpush1.msra.mxu0 0.0
    %2041 = vmatprep.subr.mxu0 0.0
    %2042 = vmatpush1.msra.mxu0 0.0
    %2043 = vmatprep.subr.mxu0 0.0
    %2044 = vmatpush1.msra.mxu0 0.0
    %2045 = vmatprep.subr.mxu0 0.0
    %2046 = vmatpush1.msra.mxu0 0.0
    %2047 = vmatprep.mubr.f32.mxu0 0.0
    %2048 = vmatmul.mubr.f32.gmra.mrb[0].mxu0 %v1981
    %v2049 = vpop.f32.mrb[0].mxu0
    %v2050 = vadd.f32 0.0, %v2049
    %v2051 = vpop.f32.mrb[0].mxu0
    %2052 = vdwg.mxu0
    %v2053 = vadd.f32 %v1365, %v2050
    %v2054 = vxor.u32 %v2053, 2147483648
    %v2055 = vmul.f32 %v2054, 1.442695
    %v2056 = vpow.pop %v2055
    %v2057 = vadd.f32 %v2056, 1.0
    %v2058 = vrcp.pop %v2057
    %v2059 = vmul.f32 1.0, %v2058
    %v2060 = vmul.f32 %v2059, 2.0
    %v2061 = vsub.f32 %v2060, 1.0
    %v2062 = vmul.f32 %v2059, %v1971
    %2064 = vrot.lane.b32.xlu0 %v2061, 64
    %v2065 = vpop.permute.xlu0 %2064
    %v2067 = vmul.f32 %v2059, %v2065
    %2069 = vrot.lane.b32.xlu0 %v2067, 32
    %v2070 = vpop.permute.xlu0 %2069
    %v2072 = vadd.f32 %v2062, %v2070
    %v2073 = vtanh.pop %v2072
    %2075 = vrot.lane.b32.xlu0 %v2073, 64
    %v2076 = vpop.permute.xlu0 %2075
    %v2078 = vmul.f32 %v2059, %v2076
    %2080 = vrot.lane.b32.xlu0 %v2078, 32
    %v2081 = vpop.permute.xlu0 %2080
    %v2082 = vsel %vm399, %v2081, 0
    %2084 = vmatprep.subr.mxu0 0.0
    %2085 = vmatpush1.msra.mxu0 %v1373
    %2086 = vmatprep.subr.mxu0 0.0
    %2087 = vmatpush1.msra.mxu0 %v1374
    %2088 = vmatprep.subr.mxu0 0.0
    %2089 = vmatpush1.msra.mxu0 %v1375
    %2090 = vmatprep.subr.mxu0 0.0
    %2091 = vmatpush1.msra.mxu0 %v1376
    %2092 = vmatprep.subr.mxu0 0.0
    %2093 = vmatpush1.msra.mxu0 0.0
    %2094 = vmatprep.subr.mxu0 0.0
    %2095 = vmatpush1.msra.mxu0 0.0
    %2096 = vmatprep.subr.mxu0 0.0
    %2097 = vmatpush1.msra.mxu0 0.0
    %2098 = vmatprep.subr.mxu0 0.0
    %2099 = vmatpush1.msra.mxu0 0.0
    %2100 = vmatprep.subr.mxu0 0.0
    %2101 = vmatpush1.msra.mxu0 0.0
    %2102 = vmatprep.subr.mxu0 0.0
    %2103 = vmatpush1.msra.mxu0 0.0
    %2104 = vmatprep.subr.mxu0 0.0
    %2105 = vmatpush1.msra.mxu0 0.0
    %2106 = vmatprep.subr.mxu0 0.0
    %2107 = vmatpush1.msra.mxu0 0.0
    %2108 = vmatprep.subr.mxu0 0.0
    %2109 = vmatpush1.msra.mxu0 0.0
    %2110 = vmatprep.subr.mxu0 0.0
    %2111 = vmatpush1.msra.mxu0 0.0
    %2112 = vmatprep.subr.mxu0 0.0
    %2113 = vmatpush1.msra.mxu0 0.0
    %2114 = vmatprep.subr.mxu0 0.0
    %2115 = vmatpush1.msra.mxu0 0.0
    %2116 = vmatprep.subr.mxu0 0.0
    %2117 = vmatpush1.msra.mxu0 0.0
    %2118 = vmatprep.subr.mxu0 0.0
    %2119 = vmatpush1.msra.mxu0 0.0
    %2120 = vmatprep.subr.mxu0 0.0
    %2121 = vmatpush1.msra.mxu0 0.0
    %2122 = vmatprep.subr.mxu0 0.0
    %2123 = vmatpush1.msra.mxu0 0.0
    %2124 = vmatprep.subr.mxu0 0.0
    %2125 = vmatpush1.msra.mxu0 0.0
    %2126 = vmatprep.subr.mxu0 0.0
    %2127 = vmatpush1.msra.mxu0 0.0
    %2128 = vmatprep.subr.mxu0 0.0
    %2129 = vmatpush1.msra.mxu0 0.0
    %2130 = vmatprep.subr.mxu0 0.0
    %2131 = vmatpush1.msra.mxu0 0.0
    %2132 = vmatprep.subr.mxu0 0.0
    %2133 = vmatpush1.msra.mxu0 0.0
    %2134 = vmatprep.subr.mxu0 0.0
    %2135 = vmatpush1.msra.mxu0 0.0
    %2136 = vmatprep.subr.mxu0 0.0
    %2137 = vmatpush1.msra.mxu0 0.0
    %2138 = vmatprep.subr.mxu0 0.0
    %2139 = vmatpush1.msra.mxu0 0.0
    %2140 = vmatprep.subr.mxu0 0.0
    %2141 = vmatpush1.msra.mxu0 0.0
    %2142 = vmatprep.subr.mxu0 0.0
    %2143 = vmatpush1.msra.mxu0 0.0
    %2144 = vmatprep.subr.mxu0 0.0
    %2145 = vmatpush1.msra.mxu0 0.0
    %2146 = vmatprep.subr.mxu0 0.0
    %2147 = vmatpush1.msra.mxu0 0.0
    %2148 = vmatprep.mubr.f32.mxu0 0.0
    %2149 = vmatmul.mubr.f32.gmra.mrb[0].mxu0 %v2082
    %v2150 = vpop.f32.mrb[0].mxu0
    %v2151 = vadd.f32 0.0, %v2150
    %v2152 = vpop.f32.mrb[0].mxu0
    %2153 = vdwg.mxu0
    %v2154 = vadd.f32 %v1370, %v2151
    %v2155 = vxor.u32 %v2154, 2147483648
    %v2156 = vmul.f32 %v2155, 1.442695
    %v2157 = vpow.pop %v2156
    %v2158 = vadd.f32 %v2157, 1.0
    %v2159 = vrcp.pop %v2158
    %v2160 = vmul.f32 1.0, %v2159
    %v2161 = vmul.f32 %v2160, 2.0
    %v2162 = vsub.f32 %v2161, 1.0
    %v2163 = vmul.f32 %v2160, %v2072
    %2165 = vrot.lane.b32.xlu0 %v2162, 64
    %v2166 = vpop.permute.xlu0 %2165
    %v2168 = vmul.f32 %v2160, %v2166
    %2170 = vrot.lane.b32.xlu0 %v2168, 32
    %v2171 = vpop.permute.xlu0 %2170
    %v2173 = vadd.f32 %v2163, %v2171
    %v2174 = vtanh.pop %v2173
    %2176 = vrot.lane.b32.xlu0 %v2174, 64
    %v2177 = vpop.permute.xlu0 %2176
    %v2179 = vmul.f32 %v2160, %v2177
    %v2180 = vld [vmem:[%s17] sm:$0xff]
    %v2181 = vld [vmem:[%s17 + $0x8] sm:$0xff]
    %v2182 = vld [vmem:[%s17 + $0x10] sm:$0xff]
    %v2183 = vld [vmem:[%s17 + $0x18] sm:$0xff]
    %v2184 = vld [vmem:[%s19] sm:$0x1]
    %v2186 = vlaneseq
    %v2187 = vshrl.u32 %v2186, 7
    %v2188 = vsub.s32 0, %v2187
    %v2189 = vrot.slane %v2184, %v2188
    %2192 = vrot.lane.b32.xlu0 %v2179, 32
    %v2193 = vpop.permute.xlu0 %2192
    %v2194 = vsel %vm399, %v2193, 0
    %2196 = vmatprep.subr.mxu0 0.0
    %2197 = vmatpush1.msra.mxu0 %v2180
    %2198 = vmatprep.subr.mxu0 0.0
    %2199 = vmatpush1.msra.mxu0 %v2181
    %2200 = vmatprep.subr.mxu0 0.0
    %2201 = vmatpush1.msra.mxu0 %v2182
    %2202 = vmatprep.subr.mxu0 0.0
    %2203 = vmatpush1.msra.mxu0 %v2183
    %2204 = vmatprep.subr.mxu0 0.0
    %2205 = vmatpush1.msra.mxu0 0.0
    %2206 = vmatprep.subr.mxu0 0.0
    %2207 = vmatpush1.msra.mxu0 0.0
    %2208 = vmatprep.subr.mxu0 0.0
    %2209 = vmatpush1.msra.mxu0 0.0
    %2210 = vmatprep.subr.mxu0 0.0
    %2211 = vmatpush1.msra.mxu0 0.0
    %2212 = vmatprep.subr.mxu0 0.0
    %2213 = vmatpush1.msra.mxu0 0.0
    %2214 = vmatprep.subr.mxu0 0.0
    %2215 = vmatpush1.msra.mxu0 0.0
    %2216 = vmatprep.subr.mxu0 0.0
    %2217 = vmatpush1.msra.mxu0 0.0
    %2218 = vmatprep.subr.mxu0 0.0
    %2219 = vmatpush1.msra.mxu0 0.0
    %2220 = vmatprep.subr.mxu0 0.0
    %2221 = vmatpush1.msra.mxu0 0.0
    %2222 = vmatprep.subr.mxu0 0.0
    %2223 = vmatpush1.msra.mxu0 0.0
    %2224 = vmatprep.subr.mxu0 0.0
    %2225 = vmatpush1.msra.mxu0 0.0
    %2226 = vmatprep.subr.mxu0 0.0
    %2227 = vmatpush1.msra.mxu0 0.0
    %2228 = vmatprep.subr.mxu0 0.0
    %2229 = vmatpush1.msra.mxu0 0.0
    %2230 = vmatprep.subr.mxu0 0.0
    %2231 = vmatpush1.msra.mxu0 0.0
    %2232 = vmatprep.subr.mxu0 0.0
    %2233 = vmatpush1.msra.mxu0 0.0
    %2234 = vmatprep.subr.mxu0 0.0
    %2235 = vmatpush1.msra.mxu0 0.0
    %2236 = vmatprep.subr.mxu0 0.0
    %2237 = vmatpush1.msra.mxu0 0.0
    %2238 = vmatprep.subr.mxu0 0.0
    %2239 = vmatpush1.msra.mxu0 0.0
    %2240 = vmatprep.subr.mxu0 0.0
    %2241 = vmatpush1.msra.mxu0 0.0
    %2242 = vmatprep.subr.mxu0 0.0
    %2243 = vmatpush1.msra.mxu0 0.0
    %2244 = vmatprep.subr.mxu0 0.0
    %2245 = vmatpush1.msra.mxu0 0.0
    %2246 = vmatprep.subr.mxu0 0.0
    %2247 = vmatpush1.msra.mxu0 0.0
    %2248 = vmatprep.subr.mxu0 0.0
    %2249 = vmatpush1.msra.mxu0 0.0
    %2250 = vmatprep.subr.mxu0 0.0
    %2251 = vmatpush1.msra.mxu0 0.0
    %2252 = vmatprep.subr.mxu0 0.0
    %2253 = vmatpush1.msra.mxu0 0.0
    %2254 = vmatprep.subr.mxu0 0.0
    %2255 = vmatpush1.msra.mxu0 0.0
    %2256 = vmatprep.subr.mxu0 0.0
    %2257 = vmatpush1.msra.mxu0 0.0
    %2258 = vmatprep.subr.mxu0 0.0
    %2259 = vmatpush1.msra.mxu0 0.0
    %2260 = vmatprep.mubr.f32.mxu0 0.0
    %2261 = vmatmul.mubr.f32.gmra.mrb[0].mxu0 %v2194
    %v2262 = vpop.f32.mrb[0].mxu0
    %v2263 = vadd.f32 %v2189, %v2262
    %v2264 = vpop.f32.mrb[0].mxu0
    %2265 = vdwg.mxu0
    %v2266 = vld [vmem:[%s3] sm:$0xff]
    %v2267 = vmul.f32 %v2263, 0.5
    %v2268 = vmul.f32 %v2267, 1.442695
    %v2269 = vpow.pop %v2268
    %2271 = vrot.lane.b32.xlu0 %v2269, 112
    %v2272 = vpop.permute.xlu0 %2271
    %v2274 = vmul.f32 %v2266, %v2272
    %v2275 = vadd.f32 %v2263, %v2274
    %2276 = vst.msk [vmem:[%s57] sm:$0xff] %vm399, %v2263
    %v2277 = vld [vmem:[#allocation4] sm:$0xff]
    %v2278 = vld [vmem:[#allocation4 + $0x8] sm:$0xff]
    %v2279 = vld [vmem:[#allocation6] sm:$0x1]
    %v2281 = vlaneseq
    %v2282 = vshrl.u32 %v2281, 7
    %v2283 = vsub.s32 0, %v2282
    %v2284 = vrot.slane %v2279, %v2283
    %vm2286 = vcmask 130048
    %v2288 = vsel %vm2286, %v2275, 0
    %2290 = vmatprep.subr.mxu0 0.0
    %2291 = vmatpush1.msra.mxu0 %v2277
    %2292 = vmatprep.subr.mxu0 0.0
    %2293 = vmatpush1.msra.mxu0 %v2278
    %2294 = vmatprep.subr.mxu0 0.0
    %2295 = vmatpush1.msra.mxu0 0.0
    %2296 = vmatprep.subr.mxu0 0.0
    %2297 = vmatpush1.msra.mxu0 0.0
    %2298 = vmatprep.subr.mxu0 0.0
    %2299 = vmatpush1.msra.mxu0 0.0
    %2300 = vmatprep.subr.mxu0 0.0
    %2301 = vmatpush1.msra.mxu0 0.0
    %2302 = vmatprep.subr.mxu0 0.0
    %2303 = vmatpush1.msra.mxu0 0.0
    %2304 = vmatprep.subr.mxu0 0.0
    %2305 = vmatpush1.msra.mxu0 0.0
    %2306 = vmatprep.subr.mxu0 0.0
    %2307 = vmatpush1.msra.mxu0 0.0
    %2308 = vmatprep.subr.mxu0 0.0
    %2309 = vmatpush1.msra.mxu0 0.0
    %2310 = vmatprep.subr.mxu0 0.0
    %2311 = vmatpush1.msra.mxu0 0.0
    %2312 = vmatprep.subr.mxu0 0.0
    %2313 = vmatpush1.msra.mxu0 0.0
    %2314 = vmatprep.subr.mxu0 0.0
    %2315 = vmatpush1.msra.mxu0 0.0
    %2316 = vmatprep.subr.mxu0 0.0
    %2317 = vmatpush1.msra.mxu0 0.0
    %2318 = vmatprep.subr.mxu0 0.0
    %2319 = vmatpush1.msra.mxu0 0.0
    %2320 = vmatprep.subr.mxu0 0.0
    %2321 = vmatpush1.msra.mxu0 0.0
    %2322 = vmatprep.subr.mxu0 0.0
    %2323 = vmatpush1.msra.mxu0 0.0
    %2324 = vmatprep.subr.mxu0 0.0
    %2325 = vmatpush1.msra.mxu0 0.0
    %2326 = vmatprep.subr.mxu0 0.0
    %2327 = vmatpush1.msra.mxu0 0.0
    %2328 = vmatprep.subr.mxu0 0.0
    %2329 = vmatpush1.msra.mxu0 0.0
    %2330 = vmatprep.subr.mxu0 0.0
    %2331 = vmatpush1.msra.mxu0 0.0
    %2332 = vmatprep.subr.mxu0 0.0
    %2333 = vmatpush1.msra.mxu0 0.0
    %2334 = vmatprep.subr.mxu0 0.0
    %2335 = vmatpush1.msra.mxu0 0.0
    %2336 = vmatprep.subr.mxu0 0.0
    %2337 = vmatpush1.msra.mxu0 0.0
    %2338 = vmatprep.subr.mxu0 0.0
    %2339 = vmatpush1.msra.mxu0 0.0
    %2340 = vmatprep.subr.mxu0 0.0
    %2341 = vmatpush1.msra.mxu0 0.0
    %2342 = vmatprep.subr.mxu0 0.0
    %2343 = vmatpush1.msra.mxu0 0.0
    %2344 = vmatprep.subr.mxu0 0.0
    %2345 = vmatpush1.msra.mxu0 0.0
    %2346 = vmatprep.subr.mxu0 0.0
    %2347 = vmatpush1.msra.mxu0 0.0
    %2348 = vmatprep.subr.mxu0 0.0
    %2349 = vmatpush1.msra.mxu0 0.0
    %2350 = vmatprep.subr.mxu0 0.0
    %2351 = vmatpush1.msra.mxu0 0.0
    %2352 = vmatprep.subr.mxu0 0.0
    %2353 = vmatpush1.msra.mxu0 0.0
    %2354 = vmatprep.mubr.f32.mxu0 0.0
    %2355 = vmatmul.mubr.f32.gmra.mrb[0].mxu0 %v2288
    %v2356 = vpop.f32.mrb[0].mxu0
    %v2357 = vadd.f32 %v2284, %v2356
    %v2358 = vpop.f32.mrb[0].mxu0
    %2359 = vdwg.mxu0
    %v2360 = vld [vmem:[%s25] sm:$0xff]
    %v2361 = vld [vmem:[%s25 + $0x8] sm:$0xff]
    %v2362 = vld [vmem:[%s25 + $0x10] sm:$0xff]
    %v2363 = vld [vmem:[%s25 + $0x18] sm:$0xff]
    %v2364 = vld [vmem:[#allocation8] sm:$0x1]
    %v2366 = vsel %vm399, %v2357, 0
    %2368 = vmatprep.subr.mxu0 0.0
    %2369 = vmatpush1.msra.mxu0 %v2360
    %2370 = vmatprep.subr.mxu0 0.0
    %2371 = vmatpush1.msra.mxu0 %v2361
    %2372 = vmatprep.subr.mxu0 0.0
    %2373 = vmatpush1.msra.mxu0 %v2362
    %2374 = vmatprep.subr.mxu0 0.0
    %2375 = vmatpush1.msra.mxu0 %v2363
    %2376 = vmatprep.subr.mxu0 0.0
    %2377 = vmatpush1.msra.mxu0 0.0
    %2378 = vmatprep.subr.mxu0 0.0
    %2379 = vmatpush1.msra.mxu0 0.0
    %2380 = vmatprep.subr.mxu0 0.0
    %2381 = vmatpush1.msra.mxu0 0.0
    %2382 = vmatprep.subr.mxu0 0.0
    %2383 = vmatpush1.msra.mxu0 0.0
    %2384 = vmatprep.subr.mxu0 0.0
    %2385 = vmatpush1.msra.mxu0 0.0
    %2386 = vmatprep.subr.mxu0 0.0
    %2387 = vmatpush1.msra.mxu0 0.0
    %2388 = vmatprep.subr.mxu0 0.0
    %2389 = vmatpush1.msra.mxu0 0.0
    %2390 = vmatprep.subr.mxu0 0.0
    %2391 = vmatpush1.msra.mxu0 0.0
    %2392 = vmatprep.subr.mxu0 0.0
    %2393 = vmatpush1.msra.mxu0 0.0
    %2394 = vmatprep.subr.mxu0 0.0
    %2395 = vmatpush1.msra.mxu0 0.0
    %2396 = vmatprep.subr.mxu0 0.0
    %2397 = vmatpush1.msra.mxu0 0.0
    %2398 = vmatprep.subr.mxu0 0.0
    %2399 = vmatpush1.msra.mxu0 0.0
    %2400 = vmatprep.subr.mxu0 0.0
    %2401 = vmatpush1.msra.mxu0 0.0
    %2402 = vmatprep.subr.mxu0 0.0
    %2403 = vmatpush1.msra.mxu0 0.0
    %2404 = vmatprep.subr.mxu0 0.0
    %2405 = vmatpush1.msra.mxu0 0.0
    %2406 = vmatprep.subr.mxu0 0.0
    %2407 = vmatpush1.msra.mxu0 0.0
    %2408 = vmatprep.subr.mxu0 0.0
    %2409 = vmatpush1.msra.mxu0 0.0
    %2410 = vmatprep.subr.mxu0 0.0
    %2411 = vmatpush1.msra.mxu0 0.0
    %2412 = vmatprep.subr.mxu0 0.0
    %2413 = vmatpush1.msra.mxu0 0.0
    %2414 = vmatprep.subr.mxu0 0.0
    %2415 = vmatpush1.msra.mxu0 0.0
    %2416 = vmatprep.subr.mxu0 0.0
    %2417 = vmatpush1.msra.mxu0 0.0
    %2418 = vmatprep.subr.mxu0 0.0
    %2419 = vmatpush1.msra.mxu0 0.0
    %2420 = vmatprep.subr.mxu0 0.0
    %2421 = vmatpush1.msra.mxu0 0.0
    %2422 = vmatprep.subr.mxu0 0.0
    %2423 = vmatpush1.msra.mxu0 0.0
    %2424 = vmatprep.subr.mxu0 0.0
    %2425 = vmatpush1.msra.mxu0 0.0
    %2426 = vmatprep.subr.mxu0 0.0
    %2427 = vmatpush1.msra.mxu0 0.0
    %2428 = vmatprep.subr.mxu0 0.0
    %2429 = vmatpush1.msra.mxu0 0.0
    %2430 = vmatprep.subr.mxu0 0.0
    %2431 = vmatpush1.msra.mxu0 0.0
    %2432 = vmatprep.mubr.f32.mxu0 0.0
    %2433 = vmatmul.mubr.f32.gmra.mrb[0].mxu0 %v2366
    %v2434 = vpop.f32.mrb[0].mxu0
    %v2435 = vadd.f32 0.0, %v2434
    %v2436 = vpop.f32.mrb[0].mxu0
    %2437 = vdwg.mxu0
    %v2439 = vlaneseq
    %v2440 = vshrl.u32 %v2439, 7
    %v2441 = vsub.s32 0, %v2440
    %v2442 = vrot.slane %v2364, %v2441
    %v2444 = vadd.f32 %v2442, %v2435
    %v2445 = vxor.u32 %v2444, 2147483648
    %v2446 = vmul.f32 %v2445, 1.442695
    %v2447 = vpow.pop %v2446
    %v2448 = vadd.f32 %v2447, 1.0
    %v2449 = vrcp.pop %v2448
    %v2450 = vmul.f32 1.0, %v2449
    %v2451 = vmul.f32 %v2450, 2.0
    %v2452 = vsub.f32 %v2451, 1.0
    %v2453 = vmul.f32 %v2450, 0.0
    %2455 = vrot.lane.b32.xlu0 %v2452, 64
    %v2456 = vpop.permute.xlu0 %2455
    %v2458 = vmul.f32 %v2450, %v2456
    %2460 = vrot.lane.b32.xlu0 %v2458, 32
    %v2461 = vpop.permute.xlu0 %2460
    %v2463 = vadd.f32 %v2453, %v2461
    %v2464 = vtanh.pop %v2463
    %2466 = vrot.lane.b32.xlu0 %v2464, 64
    %v2467 = vpop.permute.xlu0 %2466
    %v2469 = vmul.f32 %v2450, %v2467
    %2471 = vrot.lane.b32.xlu0 %v2469, 32
    %v2472 = vpop.permute.xlu0 %2471
    %2474 = vst.msk [vmem:[#allocation2] sm:$0xff] %vm399, %v2472
    %v2475 = vsel %vm399, %v2472, 0
    %2477 = vmatprep.subr.mxu0 0.0
    %2478 = vmatpush1.msra.mxu0 %v2360
    %2479 = vmatprep.subr.mxu0 0.0
    %2480 = vmatpush1.msra.mxu0 %v2361
    %2481 = vmatprep.subr.mxu0 0.0
    %2482 = vmatpush1.msra.mxu0 %v2362
    %2483 = vmatprep.subr.mxu0 0.0
    %2484 = vmatpush1.msra.mxu0 %v2363
    %2485 = vmatprep.subr.mxu0 0.0
    %2486 = vmatpush1.msra.mxu0 0.0
    %2487 = vmatprep.subr.mxu0 0.0
    %2488 = vmatpush1.msra.mxu0 0.0
    %2489 = vmatprep.subr.mxu0 0.0
    %2490 = vmatpush1.msra.mxu0 0.0
    %2491 = vmatprep.subr.mxu0 0.0
    %2492 = vmatpush1.msra.mxu0 0.0
    %2493 = vmatprep.subr.mxu0 0.0
    %2494 = vmatpush1.msra.mxu0 0.0
    %2495 = vmatprep.subr.mxu0 0.0
    %2496 = vmatpush1.msra.mxu0 0.0
    %2497 = vmatprep.subr.mxu0 0.0
    %2498 = vmatpush1.msra.mxu0 0.0
    %2499 = vmatprep.subr.mxu0 0.0
    %2500 = vmatpush1.msra.mxu0 0.0
    %2501 = vmatprep.subr.mxu0 0.0
    %2502 = vmatpush1.msra.mxu0 0.0
    %2503 = vmatprep.subr.mxu0 0.0
    %2504 = vmatpush1.msra.mxu0 0.0
    %2505 = vmatprep.subr.mxu0 0.0
    %2506 = vmatpush1.msra.mxu0 0.0
    %2507 = vmatprep.subr.mxu0 0.0
    %2508 = vmatpush1.msra.mxu0 0.0
    %2509 = vmatprep.subr.mxu0 0.0
    %2510 = vmatpush1.msra.mxu0 0.0
    %2511 = vmatprep.subr.mxu0 0.0
    %2512 = vmatpush1.msra.mxu0 0.0
    %2513 = vmatprep.subr.mxu0 0.0
    %2514 = vmatpush1.msra.mxu0 0.0
    %2515 = vmatprep.subr.mxu0 0.0
    %2516 = vmatpush1.msra.mxu0 0.0
    %2517 = vmatprep.subr.mxu0 0.0
    %2518 = vmatpush1.msra.mxu0 0.0
    %2519 = vmatprep.subr.mxu0 0.0
    %2520 = vmatpush1.msra.mxu0 0.0
    %2521 = vmatprep.subr.mxu0 0.0
    %2522 = vmatpush1.msra.mxu0 0.0
    %2523 = vmatprep.subr.mxu0 0.0
    %2524 = vmatpush1.msra.mxu0 0.0
    %2525 = vmatprep.subr.mxu0 0.0
    %2526 = vmatpush1.msra.mxu0 0.0
    %2527 = vmatprep.subr.mxu0 0.0
    %2528 = vmatpush1.msra.mxu0 0.0
    %2529 = vmatprep.subr.mxu0 0.0
    %2530 = vmatpush1.msra.mxu0 0.0
    %2531 = vmatprep.subr.mxu0 0.0
    %2532 = vmatpush1.msra.mxu0 0.0
    %2533 = vmatprep.subr.mxu0 0.0
    %2534 = vmatpush1.msra.mxu0 0.0
    %2535 = vmatprep.subr.mxu0 0.0
    %2536 = vmatpush1.msra.mxu0 0.0
    %2537 = vmatprep.subr.mxu0 0.0
    %2538 = vmatpush1.msra.mxu0 0.0
    %2539 = vmatprep.subr.mxu0 0.0
    %2540 = vmatpush1.msra.mxu0 0.0
    %2541 = vmatprep.mubr.f32.mxu0 0.0
    %2542 = vmatmul.mubr.f32.gmra.mrb[0].mxu0 %v2475
    %v2543 = vpop.f32.mrb[0].mxu0
    %v2544 = vadd.f32 0.0, %v2543
    %v2545 = vpop.f32.mrb[0].mxu0
    %2546 = vdwg.mxu0
    %v2547 = vadd.f32 %v2442, %v2544
    %v2548 = vxor.u32 %v2547, 2147483648
    %v2549 = vmul.f32 %v2548, 1.442695
    %v2550 = vpow.pop %v2549
    %v2551 = vadd.f32 %v2550, 1.0
    %v2552 = vrcp.pop %v2551
    %v2553 = vmul.f32 1.0, %v2552
    %v2554 = vmul.f32 %v2553, 2.0
    %v2555 = vsub.f32 %v2554, 1.0
    %v2556 = vmul.f32 %v2553, %v2463
    %2558 = vrot.lane.b32.xlu0 %v2555, 64
    %v2559 = vpop.permute.xlu0 %2558
    %v2561 = vmul.f32 %v2553, %v2559
    %2563 = vrot.lane.b32.xlu0 %v2561, 32
    %v2564 = vpop.permute.xlu0 %2563
    %v2566 = vadd.f32 %v2556, %v2564
    %v2567 = vtanh.pop %v2566
    %2569 = vrot.lane.b32.xlu0 %v2567, 64
    %v2570 = vpop.permute.xlu0 %2569
    %v2572 = vmul.f32 %v2553, %v2570
    %2574 = vrot.lane.b32.xlu0 %v2572, 32
    %v2575 = vpop.permute.xlu0 %2574
    %2577 = vst.msk [vmem:[#allocation2 + $0x8] sm:$0xff] %vm399, %v2575
    %v2578 = vsel %vm399, %v2575, 0
    %2580 = vmatprep.subr.mxu0 0.0
    %2581 = vmatpush1.msra.mxu0 %v2360
    %2582 = vmatprep.subr.mxu0 0.0
    %2583 = vmatpush1.msra.mxu0 %v2361
    %2584 = vmatprep.subr.mxu0 0.0
    %2585 = vmatpush1.msra.mxu0 %v2362
    %2586 = vmatprep.subr.mxu0 0.0
    %2587 = vmatpush1.msra.mxu0 %v2363
    %2588 = vmatprep.subr.mxu0 0.0
    %2589 = vmatpush1.msra.mxu0 0.0
    %2590 = vmatprep.subr.mxu0 0.0
    %2591 = vmatpush1.msra.mxu0 0.0
    %2592 = vmatprep.subr.mxu0 0.0
    %2593 = vmatpush1.msra.mxu0 0.0
    %2594 = vmatprep.subr.mxu0 0.0
    %2595 = vmatpush1.msra.mxu0 0.0
    %2596 = vmatprep.subr.mxu0 0.0
    %2597 = vmatpush1.msra.mxu0 0.0
    %2598 = vmatprep.subr.mxu0 0.0
    %2599 = vmatpush1.msra.mxu0 0.0
    %2600 = vmatprep.subr.mxu0 0.0
    %2601 = vmatpush1.msra.mxu0 0.0
    %2602 = vmatprep.subr.mxu0 0.0
    %2603 = vmatpush1.msra.mxu0 0.0
    %2604 = vmatprep.subr.mxu0 0.0
    %2605 = vmatpush1.msra.mxu0 0.0
    %2606 = vmatprep.subr.mxu0 0.0
    %2607 = vmatpush1.msra.mxu0 0.0
    %2608 = vmatprep.subr.mxu0 0.0
    %2609 = vmatpush1.msra.mxu0 0.0
    %2610 = vmatprep.subr.mxu0 0.0
    %2611 = vmatpush1.msra.mxu0 0.0
    %2612 = vmatprep.subr.mxu0 0.0
    %2613 = vmatpush1.msra.mxu0 0.0
    %2614 = vmatprep.subr.mxu0 0.0
    %2615 = vmatpush1.msra.mxu0 0.0
    %2616 = vmatprep.subr.mxu0 0.0
    %2617 = vmatpush1.msra.mxu0 0.0
    %2618 = vmatprep.subr.mxu0 0.0
    %2619 = vmatpush1.msra.mxu0 0.0
    %2620 = vmatprep.subr.mxu0 0.0
    %2621 = vmatpush1.msra.mxu0 0.0
    %2622 = vmatprep.subr.mxu0 0.0
    %2623 = vmatpush1.msra.mxu0 0.0
    %2624 = vmatprep.subr.mxu0 0.0
    %2625 = vmatpush1.msra.mxu0 0.0
    %2626 = vmatprep.subr.mxu0 0.0
    %2627 = vmatpush1.msra.mxu0 0.0
    %2628 = vmatprep.subr.mxu0 0.0
    %2629 = vmatpush1.msra.mxu0 0.0
    %2630 = vmatprep.subr.mxu0 0.0
    %2631 = vmatpush1.msra.mxu0 0.0
    %2632 = vmatprep.subr.mxu0 0.0
    %2633 = vmatpush1.msra.mxu0 0.0
    %2634 = vmatprep.subr.mxu0 0.0
    %2635 = vmatpush1.msra.mxu0 0.0
    %2636 = vmatprep.subr.mxu0 0.0
    %2637 = vmatpush1.msra.mxu0 0.0
    %2638 = vmatprep.subr.mxu0 0.0
    %2639 = vmatpush1.msra.mxu0 0.0
    %2640 = vmatprep.subr.mxu0 0.0
    %2641 = vmatpush1.msra.mxu0 0.0
    %2642 = vmatprep.subr.mxu0 0.0
    %2643 = vmatpush1.msra.mxu0 0.0
    %2644 = vmatprep.mubr.f32.mxu0 0.0
    %2645 = vmatmul.mubr.f32.gmra.mrb[0].mxu0 %v2578
    %v2646 = vpop.f32.mrb[0].mxu0
    %v2647 = vadd.f32 0.0, %v2646
    %v2648 = vpop.f32.mrb[0].mxu0
    %2649 = vdwg.mxu0
    %v2650 = vadd.f32 %v2442, %v2647
    %v2651 = vxor.u32 %v2650, 2147483648
    %v2652 = vmul.f32 %v2651, 1.442695
    %v2653 = vpow.pop %v2652
    %v2654 = vadd.f32 %v2653, 1.0
    %v2655 = vrcp.pop %v2654
    %v2656 = vmul.f32 1.0, %v2655
    %v2657 = vmul.f32 %v2656, 2.0
    %v2658 = vsub.f32 %v2657, 1.0
    %v2659 = vmul.f32 %v2656, %v2566
    %2661 = vrot.lane.b32.xlu0 %v2658, 64
    %v2662 = vpop.permute.xlu0 %2661
    %v2664 = vmul.f32 %v2656, %v2662
    %2666 = vrot.lane.b32.xlu0 %v2664, 32
    %v2667 = vpop.permute.xlu0 %2666
    %v2669 = vadd.f32 %v2659, %v2667
    %v2670 = vtanh.pop %v2669
    %2672 = vrot.lane.b32.xlu0 %v2670, 64
    %v2673 = vpop.permute.xlu0 %2672
    %v2675 = vmul.f32 %v2656, %v2673
    %2677 = vrot.lane.b32.xlu0 %v2675, 32
    %v2678 = vpop.permute.xlu0 %2677
    %2680 = vst.msk [vmem:[#allocation2 + $0x10] sm:$0xff] %vm399, %v2678
    %v2681 = vsel %vm399, %v2678, 0
    %2683 = vmatprep.subr.mxu0 0.0
    %2684 = vmatpush1.msra.mxu0 %v2360
    %2685 = vmatprep.subr.mxu0 0.0
    %2686 = vmatpush1.msra.mxu0 %v2361
    %2687 = vmatprep.subr.mxu0 0.0
    %2688 = vmatpush1.msra.mxu0 %v2362
    %2689 = vmatprep.subr.mxu0 0.0
    %2690 = vmatpush1.msra.mxu0 %v2363
    %2691 = vmatprep.subr.mxu0 0.0
    %2692 = vmatpush1.msra.mxu0 0.0
    %2693 = vmatprep.subr.mxu0 0.0
    %2694 = vmatpush1.msra.mxu0 0.0
    %2695 = vmatprep.subr.mxu0 0.0
    %2696 = vmatpush1.msra.mxu0 0.0
    %2697 = vmatprep.subr.mxu0 0.0
    %2698 = vmatpush1.msra.mxu0 0.0
    %2699 = vmatprep.subr.mxu0 0.0
    %2700 = vmatpush1.msra.mxu0 0.0
    %2701 = vmatprep.subr.mxu0 0.0
    %2702 = vmatpush1.msra.mxu0 0.0
    %2703 = vmatprep.subr.mxu0 0.0
    %2704 = vmatpush1.msra.mxu0 0.0
    %2705 = vmatprep.subr.mxu0 0.0
    %2706 = vmatpush1.msra.mxu0 0.0
    %2707 = vmatprep.subr.mxu0 0.0
    %2708 = vmatpush1.msra.mxu0 0.0
    %2709 = vmatprep.subr.mxu0 0.0
    %2710 = vmatpush1.msra.mxu0 0.0
    %2711 = vmatprep.subr.mxu0 0.0
    %2712 = vmatpush1.msra.mxu0 0.0
    %2713 = vmatprep.subr.mxu0 0.0
    %2714 = vmatpush1.msra.mxu0 0.0
    %2715 = vmatprep.subr.mxu0 0.0
    %2716 = vmatpush1.msra.mxu0 0.0
    %2717 = vmatprep.subr.mxu0 0.0
    %2718 = vmatpush1.msra.mxu0 0.0
    %2719 = vmatprep.subr.mxu0 0.0
    %2720 = vmatpush1.msra.mxu0 0.0
    %2721 = vmatprep.subr.mxu0 0.0
    %2722 = vmatpush1.msra.mxu0 0.0
    %2723 = vmatprep.subr.mxu0 0.0
    %2724 = vmatpush1.msra.mxu0 0.0
    %2725 = vmatprep.subr.mxu0 0.0
    %2726 = vmatpush1.msra.mxu0 0.0
    %2727 = vmatprep.subr.mxu0 0.0
    %2728 = vmatpush1.msra.mxu0 0.0
    %2729 = vmatprep.subr.mxu0 0.0
    %2730 = vmatpush1.msra.mxu0 0.0
    %2731 = vmatprep.subr.mxu0 0.0
    %2732 = vmatpush1.msra.mxu0 0.0
    %2733 = vmatprep.subr.mxu0 0.0
    %2734 = vmatpush1.msra.mxu0 0.0
    %2735 = vmatprep.subr.mxu0 0.0
    %2736 = vmatpush1.msra.mxu0 0.0
    %2737 = vmatprep.subr.mxu0 0.0
    %2738 = vmatpush1.msra.mxu0 0.0
    %2739 = vmatprep.subr.mxu0 0.0
    %2740 = vmatpush1.msra.mxu0 0.0
    %2741 = vmatprep.subr.mxu0 0.0
    %2742 = vmatpush1.msra.mxu0 0.0
    %2743 = vmatprep.subr.mxu0 0.0
    %2744 = vmatpush1.msra.mxu0 0.0
    %2745 = vmatprep.subr.mxu0 0.0
    %2746 = vmatpush1.msra.mxu0 0.0
    %2747 = vmatprep.mubr.f32.mxu0 0.0
    %2748 = vmatmul.mubr.f32.gmra.mrb[0].mxu0 %v2681
    %v2749 = vpop.f32.mrb[0].mxu0
    %v2750 = vadd.f32 0.0, %v2749
    %v2751 = vpop.f32.mrb[0].mxu0
    %2752 = vdwg.mxu0
    %v2753 = vadd.f32 %v2442, %v2750
    %v2754 = vxor.u32 %v2753, 2147483648
    %v2755 = vmul.f32 %v2754, 1.442695
    %v2756 = vpow.pop %v2755
    %v2757 = vadd.f32 %v2756, 1.0
    %v2758 = vrcp.pop %v2757
    %v2759 = vmul.f32 1.0, %v2758
    %v2760 = vmul.f32 %v2759, 2.0
    %v2761 = vsub.f32 %v2760, 1.0
    %v2762 = vmul.f32 %v2759, %v2669
    %2764 = vrot.lane.b32.xlu0 %v2761, 64
    %v2765 = vpop.permute.xlu0 %2764
    %v2767 = vmul.f32 %v2759, %v2765
    %2769 = vrot.lane.b32.xlu0 %v2767, 32
    %v2770 = vpop.permute.xlu0 %2769
    %v2772 = vadd.f32 %v2762, %v2770
    %v2773 = vtanh.pop %v2772
    %2775 = vrot.lane.b32.xlu0 %v2773, 64
    %v2776 = vpop.permute.xlu0 %2775
    %v2778 = vmul.f32 %v2759, %v2776
    %2780 = vrot.lane.b32.xlu0 %v2778, 32
    %v2781 = vpop.permute.xlu0 %2780
    %2783 = vst.msk [vmem:[#allocation2 + $0x18] sm:$0xff] %vm399, %v2781
    %v2784 = vsel %vm399, %v2781, 0
    %2786 = vmatprep.subr.mxu0 0.0
    %2787 = vmatpush1.msra.mxu0 %v2360
    %2788 = vmatprep.subr.mxu0 0.0
    %2789 = vmatpush1.msra.mxu0 %v2361
    %2790 = vmatprep.subr.mxu0 0.0
    %2791 = vmatpush1.msra.mxu0 %v2362
    %2792 = vmatprep.subr.mxu0 0.0
    %2793 = vmatpush1.msra.mxu0 %v2363
    %2794 = vmatprep.subr.mxu0 0.0
    %2795 = vmatpush1.msra.mxu0 0.0
    %2796 = vmatprep.subr.mxu0 0.0
    %2797 = vmatpush1.msra.mxu0 0.0
    %2798 = vmatprep.subr.mxu0 0.0
    %2799 = vmatpush1.msra.mxu0 0.0
    %2800 = vmatprep.subr.mxu0 0.0
    %2801 = vmatpush1.msra.mxu0 0.0
    %2802 = vmatprep.subr.mxu0 0.0
    %2803 = vmatpush1.msra.mxu0 0.0
    %2804 = vmatprep.subr.mxu0 0.0
    %2805 = vmatpush1.msra.mxu0 0.0
    %2806 = vmatprep.subr.mxu0 0.0
    %2807 = vmatpush1.msra.mxu0 0.0
    %2808 = vmatprep.subr.mxu0 0.0
    %2809 = vmatpush1.msra.mxu0 0.0
    %2810 = vmatprep.subr.mxu0 0.0
    %2811 = vmatpush1.msra.mxu0 0.0
    %2812 = vmatprep.subr.mxu0 0.0
    %2813 = vmatpush1.msra.mxu0 0.0
    %2814 = vmatprep.subr.mxu0 0.0
    %2815 = vmatpush1.msra.mxu0 0.0
    %2816 = vmatprep.subr.mxu0 0.0
    %2817 = vmatpush1.msra.mxu0 0.0
    %2818 = vmatprep.subr.mxu0 0.0
    %2819 = vmatpush1.msra.mxu0 0.0
    %2820 = vmatprep.subr.mxu0 0.0
    %2821 = vmatpush1.msra.mxu0 0.0
    %2822 = vmatprep.subr.mxu0 0.0
    %2823 = vmatpush1.msra.mxu0 0.0
    %2824 = vmatprep.subr.mxu0 0.0
    %2825 = vmatpush1.msra.mxu0 0.0
    %2826 = vmatprep.subr.mxu0 0.0
    %2827 = vmatpush1.msra.mxu0 0.0
    %2828 = vmatprep.subr.mxu0 0.0
    %2829 = vmatpush1.msra.mxu0 0.0
    %2830 = vmatprep.subr.mxu0 0.0
    %2831 = vmatpush1.msra.mxu0 0.0
    %2832 = vmatprep.subr.mxu0 0.0
    %2833 = vmatpush1.msra.mxu0 0.0
    %2834 = vmatprep.subr.mxu0 0.0
    %2835 = vmatpush1.msra.mxu0 0.0
    %2836 = vmatprep.subr.mxu0 0.0
    %2837 = vmatpush1.msra.mxu0 0.0
    %2838 = vmatprep.subr.mxu0 0.0
    %2839 = vmatpush1.msra.mxu0 0.0
    %2840 = vmatprep.subr.mxu0 0.0
    %2841 = vmatpush1.msra.mxu0 0.0
    %2842 = vmatprep.subr.mxu0 0.0
    %2843 = vmatpush1.msra.mxu0 0.0
    %2844 = vmatprep.subr.mxu0 0.0
    %2845 = vmatpush1.msra.mxu0 0.0
    %2846 = vmatprep.subr.mxu0 0.0
    %2847 = vmatpush1.msra.mxu0 0.0
    %2848 = vmatprep.subr.mxu0 0.0
    %2849 = vmatpush1.msra.mxu0 0.0
    %2850 = vmatprep.mubr.f32.mxu0 0.0
    %2851 = vmatmul.mubr.f32.gmra.mrb[0].mxu0 %v2784
    %v2852 = vpop.f32.mrb[0].mxu0
    %v2853 = vadd.f32 0.0, %v2852
    %v2854 = vpop.f32.mrb[0].mxu0
    %2855 = vdwg.mxu0
    %v2856 = vadd.f32 %v2442, %v2853
    %v2857 = vxor.u32 %v2856, 2147483648
    %v2858 = vmul.f32 %v2857, 1.442695
    %v2859 = vpow.pop %v2858
    %v2860 = vadd.f32 %v2859, 1.0
    %v2861 = vrcp.pop %v2860
    %v2862 = vmul.f32 1.0, %v2861
    %v2863 = vmul.f32 %v2862, 2.0
    %v2864 = vsub.f32 %v2863, 1.0
    %v2865 = vmul.f32 %v2862, %v2772
    %2867 = vrot.lane.b32.xlu0 %v2864, 64
    %v2868 = vpop.permute.xlu0 %2867
    %v2870 = vmul.f32 %v2862, %v2868
    %2872 = vrot.lane.b32.xlu0 %v2870, 32
    %v2873 = vpop.permute.xlu0 %2872
    %v2875 = vadd.f32 %v2865, %v2873
    %v2876 = vtanh.pop %v2875
    %2878 = vrot.lane.b32.xlu0 %v2876, 64
    %v2879 = vpop.permute.xlu0 %2878
    %v2881 = vmul.f32 %v2862, %v2879
    %2883 = vrot.lane.b32.xlu0 %v2881, 32
    %v2884 = vpop.permute.xlu0 %2883
    %2886 = vst.msk [vmem:[#allocation2 + $0x20] sm:$0xff] %vm399, %v2884
    %v2887 = vsel %vm399, %v2884, 0
    %2889 = vmatprep.subr.mxu0 0.0
    %2890 = vmatpush1.msra.mxu0 %v2360
    %2891 = vmatprep.subr.mxu0 0.0
    %2892 = vmatpush1.msra.mxu0 %v2361
    %2893 = vmatprep.subr.mxu0 0.0
    %2894 = vmatpush1.msra.mxu0 %v2362
    %2895 = vmatprep.subr.mxu0 0.0
    %2896 = vmatpush1.msra.mxu0 %v2363
    %2897 = vmatprep.subr.mxu0 0.0
    %2898 = vmatpush1.msra.mxu0 0.0
    %2899 = vmatprep.subr.mxu0 0.0
    %2900 = vmatpush1.msra.mxu0 0.0
    %2901 = vmatprep.subr.mxu0 0.0
    %2902 = vmatpush1.msra.mxu0 0.0
    %2903 = vmatprep.subr.mxu0 0.0
    %2904 = vmatpush1.msra.mxu0 0.0
    %2905 = vmatprep.subr.mxu0 0.0
    %2906 = vmatpush1.msra.mxu0 0.0
    %2907 = vmatprep.subr.mxu0 0.0
    %2908 = vmatpush1.msra.mxu0 0.0
    %2909 = vmatprep.subr.mxu0 0.0
    %2910 = vmatpush1.msra.mxu0 0.0
    %2911 = vmatprep.subr.mxu0 0.0
    %2912 = vmatpush1.msra.mxu0 0.0
    %2913 = vmatprep.subr.mxu0 0.0
    %2914 = vmatpush1.msra.mxu0 0.0
    %2915 = vmatprep.subr.mxu0 0.0
    %2916 = vmatpush1.msra.mxu0 0.0
    %2917 = vmatprep.subr.mxu0 0.0
    %2918 = vmatpush1.msra.mxu0 0.0
    %2919 = vmatprep.subr.mxu0 0.0
    %2920 = vmatpush1.msra.mxu0 0.0
    %2921 = vmatprep.subr.mxu0 0.0
    %2922 = vmatpush1.msra.mxu0 0.0
    %2923 = vmatprep.subr.mxu0 0.0
    %2924 = vmatpush1.msra.mxu0 0.0
    %2925 = vmatprep.subr.mxu0 0.0
    %2926 = vmatpush1.msra.mxu0 0.0
    %2927 = vmatprep.subr.mxu0 0.0
    %2928 = vmatpush1.msra.mxu0 0.0
    %2929 = vmatprep.subr.mxu0 0.0
    %2930 = vmatpush1.msra.mxu0 0.0
    %2931 = vmatprep.subr.mxu0 0.0
    %2932 = vmatpush1.msra.mxu0 0.0
    %2933 = vmatprep.subr.mxu0 0.0
    %2934 = vmatpush1.msra.mxu0 0.0
    %2935 = vmatprep.subr.mxu0 0.0
    %2936 = vmatpush1.msra.mxu0 0.0
    %2937 = vmatprep.subr.mxu0 0.0
    %2938 = vmatpush1.msra.mxu0 0.0
    %2939 = vmatprep.subr.mxu0 0.0
    %2940 = vmatpush1.msra.mxu0 0.0
    %2941 = vmatprep.subr.mxu0 0.0
    %2942 = vmatpush1.msra.mxu0 0.0
    %2943 = vmatprep.subr.mxu0 0.0
    %2944 = vmatpush1.msra.mxu0 0.0
    %2945 = vmatprep.subr.mxu0 0.0
    %2946 = vmatpush1.msra.mxu0 0.0
    %2947 = vmatprep.subr.mxu0 0.0
    %2948 = vmatpush1.msra.mxu0 0.0
    %2949 = vmatprep.subr.mxu0 0.0
    %2950 = vmatpush1.msra.mxu0 0.0
    %2951 = vmatprep.subr.mxu0 0.0
    %2952 = vmatpush1.msra.mxu0 0.0
    %2953 = vmatprep.mubr.f32.mxu0 0.0
    %2954 = vmatmul.mubr.f32.gmra.mrb[0].mxu0 %v2887
    %v2955 = vpop.f32.mrb[0].mxu0
    %v2956 = vadd.f32 0.0, %v2955
    %v2957 = vpop.f32.mrb[0].mxu0
    %2958 = vdwg.mxu0
    %v2959 = vadd.f32 %v2442, %v2956
    %v2960 = vxor.u32 %v2959, 2147483648
    %v2961 = vmul.f32 %v2960, 1.442695
    %v2962 = vpow.pop %v2961
    %v2963 = vadd.f32 %v2962, 1.0
    %v2964 = vrcp.pop %v2963
    %v2965 = vmul.f32 1.0, %v2964
    %v2966 = vmul.f32 %v2965, 2.0
    %v2967 = vsub.f32 %v2966, 1.0
    %v2968 = vmul.f32 %v2965, %v2875
    %2970 = vrot.lane.b32.xlu0 %v2967, 64
    %v2971 = vpop.permute.xlu0 %2970
    %v2973 = vmul.f32 %v2965, %v2971
    %2975 = vrot.lane.b32.xlu0 %v2973, 32
    %v2976 = vpop.permute.xlu0 %2975
    %v2978 = vadd.f32 %v2968, %v2976
    %v2979 = vtanh.pop %v2978
    %2981 = vrot.lane.b32.xlu0 %v2979, 64
    %v2982 = vpop.permute.xlu0 %2981
    %v2984 = vmul.f32 %v2965, %v2982
    %2986 = vrot.lane.b32.xlu0 %v2984, 32
    %v2987 = vpop.permute.xlu0 %2986
    %2989 = vst.msk [vmem:[#allocation2 + $0x28] sm:$0xff] %vm399, %v2987
    %v2990 = vsel %vm399, %v2987, 0
    %2992 = vmatprep.subr.mxu0 0.0
    %2993 = vmatpush1.msra.mxu0 %v2360
    %2994 = vmatprep.subr.mxu0 0.0
    %2995 = vmatpush1.msra.mxu0 %v2361
    %2996 = vmatprep.subr.mxu0 0.0
    %2997 = vmatpush1.msra.mxu0 %v2362
    %2998 = vmatprep.subr.mxu0 0.0
    %2999 = vmatpush1.msra.mxu0 %v2363
    %3000 = vmatprep.subr.mxu0 0.0
    %3001 = vmatpush1.msra.mxu0 0.0
    %3002 = vmatprep.subr.mxu0 0.0
    %3003 = vmatpush1.msra.mxu0 0.0
    %3004 = vmatprep.subr.mxu0 0.0
    %3005 = vmatpush1.msra.mxu0 0.0
    %3006 = vmatprep.subr.mxu0 0.0
    %3007 = vmatpush1.msra.mxu0 0.0
    %3008 = vmatprep.subr.mxu0 0.0
    %3009 = vmatpush1.msra.mxu0 0.0
    %3010 = vmatprep.subr.mxu0 0.0
    %3011 = vmatpush1.msra.mxu0 0.0
    %3012 = vmatprep.subr.mxu0 0.0
    %3013 = vmatpush1.msra.mxu0 0.0
    %3014 = vmatprep.subr.mxu0 0.0
    %3015 = vmatpush1.msra.mxu0 0.0
    %3016 = vmatprep.subr.mxu0 0.0
    %3017 = vmatpush1.msra.mxu0 0.0
    %3018 = vmatprep.subr.mxu0 0.0
    %3019 = vmatpush1.msra.mxu0 0.0
    %3020 = vmatprep.subr.mxu0 0.0
    %3021 = vmatpush1.msra.mxu0 0.0
    %3022 = vmatprep.subr.mxu0 0.0
    %3023 = vmatpush1.msra.mxu0 0.0
    %3024 = vmatprep.subr.mxu0 0.0
    %3025 = vmatpush1.msra.mxu0 0.0
    %3026 = vmatprep.subr.mxu0 0.0
    %3027 = vmatpush1.msra.mxu0 0.0
    %3028 = vmatprep.subr.mxu0 0.0
    %3029 = vmatpush1.msra.mxu0 0.0
    %3030 = vmatprep.subr.mxu0 0.0
    %3031 = vmatpush1.msra.mxu0 0.0
    %3032 = vmatprep.subr.mxu0 0.0
    %3033 = vmatpush1.msra.mxu0 0.0
    %3034 = vmatprep.subr.mxu0 0.0
    %3035 = vmatpush1.msra.mxu0 0.0
    %3036 = vmatprep.subr.mxu0 0.0
    %3037 = vmatpush1.msra.mxu0 0.0
    %3038 = vmatprep.subr.mxu0 0.0
    %3039 = vmatpush1.msra.mxu0 0.0
    %3040 = vmatprep.subr.mxu0 0.0
    %3041 = vmatpush1.msra.mxu0 0.0
    %3042 = vmatprep.subr.mxu0 0.0
    %3043 = vmatpush1.msra.mxu0 0.0
    %3044 = vmatprep.subr.mxu0 0.0
    %3045 = vmatpush1.msra.mxu0 0.0
    %3046 = vmatprep.subr.mxu0 0.0
    %3047 = vmatpush1.msra.mxu0 0.0
    %3048 = vmatprep.subr.mxu0 0.0
    %3049 = vmatpush1.msra.mxu0 0.0
    %3050 = vmatprep.subr.mxu0 0.0
    %3051 = vmatpush1.msra.mxu0 0.0
    %3052 = vmatprep.subr.mxu0 0.0
    %3053 = vmatpush1.msra.mxu0 0.0
    %3054 = vmatprep.subr.mxu0 0.0
    %3055 = vmatpush1.msra.mxu0 0.0
    %3056 = vmatprep.mubr.f32.mxu0 0.0
    %3057 = vmatmul.mubr.f32.gmra.mrb[0].mxu0 %v2990
    %v3058 = vpop.f32.mrb[0].mxu0
    %v3059 = vadd.f32 0.0, %v3058
    %v3060 = vpop.f32.mrb[0].mxu0
    %3061 = vdwg.mxu0
    %v3062 = vadd.f32 %v2442, %v3059
    %v3063 = vxor.u32 %v3062, 2147483648
    %v3064 = vmul.f32 %v3063, 1.442695
    %v3065 = vpow.pop %v3064
    %v3066 = vadd.f32 %v3065, 1.0
    %v3067 = vrcp.pop %v3066
    %v3068 = vmul.f32 1.0, %v3067
    %v3069 = vmul.f32 %v3068, 2.0
    %v3070 = vsub.f32 %v3069, 1.0
    %v3071 = vmul.f32 %v3068, %v2978
    %3073 = vrot.lane.b32.xlu0 %v3070, 64
    %v3074 = vpop.permute.xlu0 %3073
    %v3076 = vmul.f32 %v3068, %v3074
    %3078 = vrot.lane.b32.xlu0 %v3076, 32
    %v3079 = vpop.permute.xlu0 %3078
    %v3081 = vadd.f32 %v3071, %v3079
    %v3082 = vtanh.pop %v3081
    %3084 = vrot.lane.b32.xlu0 %v3082, 64
    %v3085 = vpop.permute.xlu0 %3084
    %v3087 = vmul.f32 %v3068, %v3085
    %3089 = vrot.lane.b32.xlu0 %v3087, 32
    %v3090 = vpop.permute.xlu0 %3089
    %3092 = vst.msk [vmem:[#allocation2 + $0x30] sm:$0xff] %vm399, %v3090
    %v3093 = vsel %vm399, %v3090, 0
    %3095 = vmatprep.subr.mxu0 0.0
    %3096 = vmatpush1.msra.mxu0 %v2360
    %3097 = vmatprep.subr.mxu0 0.0
    %3098 = vmatpush1.msra.mxu0 %v2361
    %3099 = vmatprep.subr.mxu0 0.0
    %3100 = vmatpush1.msra.mxu0 %v2362
    %3101 = vmatprep.subr.mxu0 0.0
    %3102 = vmatpush1.msra.mxu0 %v2363
    %3103 = vmatprep.subr.mxu0 0.0
    %3104 = vmatpush1.msra.mxu0 0.0
    %3105 = vmatprep.subr.mxu0 0.0
    %3106 = vmatpush1.msra.mxu0 0.0
    %3107 = vmatprep.subr.mxu0 0.0
    %3108 = vmatpush1.msra.mxu0 0.0
    %3109 = vmatprep.subr.mxu0 0.0
    %3110 = vmatpush1.msra.mxu0 0.0
    %3111 = vmatprep.subr.mxu0 0.0
    %3112 = vmatpush1.msra.mxu0 0.0
    %3113 = vmatprep.subr.mxu0 0.0
    %3114 = vmatpush1.msra.mxu0 0.0
    %3115 = vmatprep.subr.mxu0 0.0
    %3116 = vmatpush1.msra.mxu0 0.0
    %3117 = vmatprep.subr.mxu0 0.0
    %3118 = vmatpush1.msra.mxu0 0.0
    %3119 = vmatprep.subr.mxu0 0.0
    %3120 = vmatpush1.msra.mxu0 0.0
    %3121 = vmatprep.subr.mxu0 0.0
    %3122 = vmatpush1.msra.mxu0 0.0
    %3123 = vmatprep.subr.mxu0 0.0
    %3124 = vmatpush1.msra.mxu0 0.0
    %3125 = vmatprep.subr.mxu0 0.0
    %3126 = vmatpush1.msra.mxu0 0.0
    %3127 = vmatprep.subr.mxu0 0.0
    %3128 = vmatpush1.msra.mxu0 0.0
    %3129 = vmatprep.subr.mxu0 0.0
    %3130 = vmatpush1.msra.mxu0 0.0
    %3131 = vmatprep.subr.mxu0 0.0
    %3132 = vmatpush1.msra.mxu0 0.0
    %3133 = vmatprep.subr.mxu0 0.0
    %3134 = vmatpush1.msra.mxu0 0.0
    %3135 = vmatprep.subr.mxu0 0.0
    %3136 = vmatpush1.msra.mxu0 0.0
    %3137 = vmatprep.subr.mxu0 0.0
    %3138 = vmatpush1.msra.mxu0 0.0
    %3139 = vmatprep.subr.mxu0 0.0
    %3140 = vmatpush1.msra.mxu0 0.0
    %3141 = vmatprep.subr.mxu0 0.0
    %3142 = vmatpush1.msra.mxu0 0.0
    %3143 = vmatprep.subr.mxu0 0.0
    %3144 = vmatpush1.msra.mxu0 0.0
    %3145 = vmatprep.subr.mxu0 0.0
    %3146 = vmatpush1.msra.mxu0 0.0
    %3147 = vmatprep.subr.mxu0 0.0
    %3148 = vmatpush1.msra.mxu0 0.0
    %3149 = vmatprep.subr.mxu0 0.0
    %3150 = vmatpush1.msra.mxu0 0.0
    %3151 = vmatprep.subr.mxu0 0.0
    %3152 = vmatpush1.msra.mxu0 0.0
    %3153 = vmatprep.subr.mxu0 0.0
    %3154 = vmatpush1.msra.mxu0 0.0
    %3155 = vmatprep.subr.mxu0 0.0
    %3156 = vmatpush1.msra.mxu0 0.0
    %3157 = vmatprep.subr.mxu0 0.0
    %3158 = vmatpush1.msra.mxu0 0.0
    %3159 = vmatprep.mubr.f32.mxu0 0.0
    %3160 = vmatmul.mubr.f32.gmra.mrb[0].mxu0 %v3093
    %v3161 = vpop.f32.mrb[0].mxu0
    %v3162 = vadd.f32 0.0, %v3161
    %v3163 = vpop.f32.mrb[0].mxu0
    %3164 = vdwg.mxu0
    %v3165 = vadd.f32 %v2442, %v3162
    %v3166 = vxor.u32 %v3165, 2147483648
    %v3167 = vmul.f32 %v3166, 1.442695
    %v3168 = vpow.pop %v3167
    %v3169 = vadd.f32 %v3168, 1.0
    %v3170 = vrcp.pop %v3169
    %v3171 = vmul.f32 1.0, %v3170
    %v3172 = vmul.f32 %v3171, 2.0
    %v3173 = vsub.f32 %v3172, 1.0
    %v3174 = vmul.f32 %v3171, %v3081
    %3176 = vrot.lane.b32.xlu0 %v3173, 64
    %v3177 = vpop.permute.xlu0 %3176
    %v3179 = vmul.f32 %v3171, %v3177
    %3181 = vrot.lane.b32.xlu0 %v3179, 32
    %v3182 = vpop.permute.xlu0 %3181
    %v3184 = vadd.f32 %v3174, %v3182
    %v3185 = vtanh.pop %v3184
    %3187 = vrot.lane.b32.xlu0 %v3185, 64
    %v3188 = vpop.permute.xlu0 %3187
    %v3190 = vmul.f32 %v3171, %v3188
    %3192 = vrot.lane.b32.xlu0 %v3190, 32
    %v3193 = vpop.permute.xlu0 %3192
    %3195 = vst.msk [vmem:[#allocation2 + $0x38] sm:$0xff] %vm399, %v3193
    %v3196 = vld [vmem:[#allocation2] sm:$0xff]
    %v3197 = vld [vmem:[#allocation2 + $0x8] sm:$0xff]
    %v3198 = vld [vmem:[#allocation2 + $0x10] sm:$0xff]
    %v3199 = vld [vmem:[#allocation2 + $0x18] sm:$0xff]
    %v3200 = vld [vmem:[#allocation2 + $0x20] sm:$0xff]
    %v3201 = vld [vmem:[#allocation2 + $0x28] sm:$0xff]
    %v3202 = vld [vmem:[#allocation2 + $0x30] sm:$0xff]
    %v3203 = vld [vmem:[#allocation2 + $0x38] sm:$0xff]
    %v3204 = vld [vmem:[%s29] sm:$0xff]
    %v3205 = vld [vmem:[%s29 + $0x8] sm:$0xff]
    %v3206 = vld [vmem:[%s29 + $0x10] sm:$0xff]
    %v3207 = vld [vmem:[%s29 + $0x18] sm:$0xff]
    %v3208 = vld [vmem:[#allocation11] sm:$0x1]
    %v3210 = vlaneseq
    %v3211 = vshrl.u32 %v3210, 7
    %v3212 = vsub.s32 0, %v3211
    %v3213 = vrot.slane %v3208, %v3212
    %v3216 = vsel %vm399, %v3196, 0
    %v3219 = vsel %vm399, %v3197, 0
    %v3222 = vsel %vm399, %v3198, 0
    %v3225 = vsel %vm399, %v3199, 0
    %v3228 = vsel %vm399, %v3200, 0
    %v3231 = vsel %vm399, %v3201, 0
    %v3234 = vsel %vm399, %v3202, 0
    %v3237 = vsel %vm399, %v3203, 0
    %3239 = vmatprep.subr.mxu0 0.0
    %3240 = vmatpush1.msra.mxu0 %v3204
    %3241 = vmatprep.subr.mxu0 0.0
    %3242 = vmatpush1.msra.mxu0 %v3205
    %3243 = vmatprep.subr.mxu0 0.0
    %3244 = vmatpush1.msra.mxu0 %v3206
    %3245 = vmatprep.subr.mxu0 0.0
    %3246 = vmatpush1.msra.mxu0 %v3207
    %3247 = vmatprep.subr.mxu0 0.0
    %3248 = vmatpush1.msra.mxu0 0.0
    %3249 = vmatprep.subr.mxu0 0.0
    %3250 = vmatpush1.msra.mxu0 0.0
    %3251 = vmatprep.subr.mxu0 0.0
    %3252 = vmatpush1.msra.mxu0 0.0
    %3253 = vmatprep.subr.mxu0 0.0
    %3254 = vmatpush1.msra.mxu0 0.0
    %3255 = vmatprep.subr.mxu0 0.0
    %3256 = vmatpush1.msra.mxu0 0.0
    %3257 = vmatprep.subr.mxu0 0.0
    %3258 = vmatpush1.msra.mxu0 0.0
    %3259 = vmatprep.subr.mxu0 0.0
    %3260 = vmatpush1.msra.mxu0 0.0
    %3261 = vmatprep.subr.mxu0 0.0
    %3262 = vmatpush1.msra.mxu0 0.0
    %3263 = vmatprep.subr.mxu0 0.0
    %3264 = vmatpush1.msra.mxu0 0.0
    %3265 = vmatprep.subr.mxu0 0.0
    %3266 = vmatpush1.msra.mxu0 0.0
    %3267 = vmatprep.subr.mxu0 0.0
    %3268 = vmatpush1.msra.mxu0 0.0
    %3269 = vmatprep.subr.mxu0 0.0
    %3270 = vmatpush1.msra.mxu0 0.0
    %3271 = vmatprep.subr.mxu0 0.0
    %3272 = vmatpush1.msra.mxu0 0.0
    %3273 = vmatprep.subr.mxu0 0.0
    %3274 = vmatpush1.msra.mxu0 0.0
    %3275 = vmatprep.subr.mxu0 0.0
    %3276 = vmatpush1.msra.mxu0 0.0
    %3277 = vmatprep.subr.mxu0 0.0
    %3278 = vmatpush1.msra.mxu0 0.0
    %3279 = vmatprep.subr.mxu0 0.0
    %3280 = vmatpush1.msra.mxu0 0.0
    %3281 = vmatprep.subr.mxu0 0.0
    %3282 = vmatpush1.msra.mxu0 0.0
    %3283 = vmatprep.subr.mxu0 0.0
    %3284 = vmatpush1.msra.mxu0 0.0
    %3285 = vmatprep.subr.mxu0 0.0
    %3286 = vmatpush1.msra.mxu0 0.0
    %3287 = vmatprep.subr.mxu0 0.0
    %3288 = vmatpush1.msra.mxu0 0.0
    %3289 = vmatprep.subr.mxu0 0.0
    %3290 = vmatpush1.msra.mxu0 0.0
    %3291 = vmatprep.subr.mxu0 0.0
    %3292 = vmatpush1.msra.mxu0 0.0
    %3293 = vmatprep.subr.mxu0 0.0
    %3294 = vmatpush1.msra.mxu0 0.0
    %3295 = vmatprep.subr.mxu0 0.0
    %3296 = vmatpush1.msra.mxu0 0.0
    %3297 = vmatprep.subr.mxu0 0.0
    %3298 = vmatpush1.msra.mxu0 0.0
    %3299 = vmatprep.subr.mxu0 0.0
    %3300 = vmatpush1.msra.mxu0 0.0
    %3301 = vmatprep.subr.mxu0 0.0
    %3302 = vmatpush1.msra.mxu0 0.0
    %3303 = vmatprep.mubr.f32.mxu0 0.0
    %3304 = vmatmul.mubr.f32.gmra.mrb[0].mxu0 %v3216
    %v3305 = vpop.f32.mrb[0].mxu0
    %v3306 = vadd.f32 %v3213, %v3305
    %v3307 = vpop.f32.mrb[0].mxu0
    %3308 = vmatprep.mubr.f32.mxu0 0.0
    %3309 = vmatmul.mubr.f32.gmra.mrb[0].mxu0 %v3219
    %v3310 = vpop.f32.mrb[0].mxu0
    %v3311 = vadd.f32 %v3213, %v3310
    %v3312 = vpop.f32.mrb[0].mxu0
    %3313 = vmatprep.mubr.f32.mxu0 0.0
    %3314 = vmatmul.mubr.f32.gmra.mrb[0].mxu0 %v3222
    %v3315 = vpop.f32.mrb[0].mxu0
    %v3316 = vadd.f32 %v3213, %v3315
    %v3317 = vpop.f32.mrb[0].mxu0
    %3318 = vmatprep.mubr.f32.mxu0 0.0
    %3319 = vmatmul.mubr.f32.gmra.mrb[0].mxu0 %v3225
    %v3320 = vpop.f32.mrb[0].mxu0
    %v3321 = vadd.f32 %v3213, %v3320
    %v3322 = vpop.f32.mrb[0].mxu0
    %3323 = vmatprep.mubr.f32.mxu0 0.0
    %3324 = vmatmul.mubr.f32.gmra.mrb[0].mxu0 %v3228
    %v3325 = vpop.f32.mrb[0].mxu0
    %v3326 = vadd.f32 %v3213, %v3325
    %v3327 = vpop.f32.mrb[0].mxu0
    %3328 = vmatprep.mubr.f32.mxu0 0.0
    %3329 = vmatmul.mubr.f32.gmra.mrb[0].mxu0 %v3231
    %v3330 = vpop.f32.mrb[0].mxu0
    %v3331 = vadd.f32 %v3213, %v3330
    %v3332 = vpop.f32.mrb[0].mxu0
    %3333 = vmatprep.mubr.f32.mxu0 0.0
    %3334 = vmatmul.mubr.f32.gmra.mrb[0].mxu0 %v3234
    %v3335 = vpop.f32.mrb[0].mxu0
    %v3336 = vadd.f32 %v3213, %v3335
    %v3337 = vpop.f32.mrb[0].mxu0
    %3338 = vmatprep.mubr.f32.mxu0 0.0
    %3339 = vmatmul.mubr.f32.gmra.mrb[0].mxu0 %v3237
    %v3340 = vpop.f32.mrb[0].mxu0
    %v3341 = vadd.f32 %v3213, %v3340
    %v3342 = vpop.f32.mrb[0].mxu0
    %3343 = vdwg.mxu0
    %v3344 = vld [vmem:[#allocation9] sm:$0xff]
    %v3345 = vld [vmem:[#allocation9 + $0x8] sm:$0xff]
    %v3346 = vld [vmem:[#allocation9 + $0x10] sm:$0xff]
    %v3347 = vld [vmem:[#allocation9 + $0x18] sm:$0xff]
    %3348 = vmatprep.subr.mxu0 0.0
    %3349 = vmatpush1.msra.mxu0 %v3344
    %3350 = vmatprep.subr.mxu0 0.0
    %3351 = vmatpush1.msra.mxu0 %v3345
    %3352 = vmatprep.subr.mxu0 0.0
    %3353 = vmatpush1.msra.mxu0 %v3346
    %3354 = vmatprep.subr.mxu0 0.0
    %3355 = vmatpush1.msra.mxu0 %v3347
    %3356 = vmatprep.subr.mxu0 0.0
    %3357 = vmatpush1.msra.mxu0 0.0
    %3358 = vmatprep.subr.mxu0 0.0
    %3359 = vmatpush1.msra.mxu0 0.0
    %3360 = vmatprep.subr.mxu0 0.0
    %3361 = vmatpush1.msra.mxu0 0.0
    %3362 = vmatprep.subr.mxu0 0.0
    %3363 = vmatpush1.msra.mxu0 0.0
    %3364 = vmatprep.subr.mxu0 0.0
    %3365 = vmatpush1.msra.mxu0 0.0
    %3366 = vmatprep.subr.mxu0 0.0
    %3367 = vmatpush1.msra.mxu0 0.0
    %3368 = vmatprep.subr.mxu0 0.0
    %3369 = vmatpush1.msra.mxu0 0.0
    %3370 = vmatprep.subr.mxu0 0.0
    %3371 = vmatpush1.msra.mxu0 0.0
    %3372 = vmatprep.subr.mxu0 0.0
    %3373 = vmatpush1.msra.mxu0 0.0
    %3374 = vmatprep.subr.mxu0 0.0
    %3375 = vmatpush1.msra.mxu0 0.0
    %3376 = vmatprep.subr.mxu0 0.0
    %3377 = vmatpush1.msra.mxu0 0.0
    %3378 = vmatprep.subr.mxu0 0.0
    %3379 = vmatpush1.msra.mxu0 0.0
    %3380 = vmatprep.subr.mxu0 0.0
    %3381 = vmatpush1.msra.mxu0 0.0
    %3382 = vmatprep.subr.mxu0 0.0
    %3383 = vmatpush1.msra.mxu0 0.0
    %3384 = vmatprep.subr.mxu0 0.0
    %3385 = vmatpush1.msra.mxu0 0.0
    %3386 = vmatprep.subr.mxu0 0.0
    %3387 = vmatpush1.msra.mxu0 0.0
    %3388 = vmatprep.subr.mxu0 0.0
    %3389 = vmatpush1.msra.mxu0 0.0
    %3390 = vmatprep.subr.mxu0 0.0
    %3391 = vmatpush1.msra.mxu0 0.0
    %3392 = vmatprep.subr.mxu0 0.0
    %3393 = vmatpush1.msra.mxu0 0.0
    %3394 = vmatprep.subr.mxu0 0.0
    %3395 = vmatpush1.msra.mxu0 0.0
    %3396 = vmatprep.subr.mxu0 0.0
    %3397 = vmatpush1.msra.mxu0 0.0
    %3398 = vmatprep.subr.mxu0 0.0
    %3399 = vmatpush1.msra.mxu0 0.0
    %3400 = vmatprep.subr.mxu0 0.0
    %3401 = vmatpush1.msra.mxu0 0.0
    %3402 = vmatprep.subr.mxu0 0.0
    %3403 = vmatpush1.msra.mxu0 0.0
    %3404 = vmatprep.subr.mxu0 0.0
    %3405 = vmatpush1.msra.mxu0 0.0
    %3406 = vmatprep.subr.mxu0 0.0
    %3407 = vmatpush1.msra.mxu0 0.0
    %3408 = vmatprep.subr.mxu0 0.0
    %3409 = vmatpush1.msra.mxu0 0.0
    %3410 = vmatprep.subr.mxu0 0.0
    %3411 = vmatpush1.msra.mxu0 0.0
    %3412 = vmatprep.mubr.f32.mxu0 0.0
    %3413 = vmatmul.mubr.f32.gmra.mrb[0].mxu0 %v2366
    %v3414 = vpop.f32.mrb[0].mxu0
    %v3415 = vadd.f32 0.0, %v3414
    %v3416 = vpop.f32.mrb[0].mxu0
    %3417 = vdwg.mxu0
    %v3418 = vadd.f32 %v3306, %v3415
    %v3419 = vxor.u32 %v3418, 2147483648
    %v3420 = vmul.f32 %v3419, 1.442695
    %v3421 = vpow.pop %v3420
    %v3422 = vadd.f32 %v3421, 1.0
    %v3423 = vrcp.pop %v3422
    %v3424 = vmul.f32 1.0, %v3423
    %v3425 = vmul.f32 %v3424, 2.0
    %v3426 = vsub.f32 %v3425, 1.0
    %v3427 = vmul.f32 %v3424, 0.0
    %3429 = vrot.lane.b32.xlu0 %v3426, 64
    %v3430 = vpop.permute.xlu0 %3429
    %v3432 = vmul.f32 %v3424, %v3430
    %3434 = vrot.lane.b32.xlu0 %v3432, 32
    %v3435 = vpop.permute.xlu0 %3434
    %v3437 = vadd.f32 %v3427, %v3435
    %v3438 = vtanh.pop %v3437
    %3440 = vrot.lane.b32.xlu0 %v3438, 64
    %v3441 = vpop.permute.xlu0 %3440
    %v3443 = vmul.f32 %v3424, %v3441
    %3445 = vrot.lane.b32.xlu0 %v3443, 32
    %v3446 = vpop.permute.xlu0 %3445
    %3448 = vst.msk [vmem:[#allocation2] sm:$0xff] %vm399, %v3446
    %v3449 = vsel %vm399, %v3446, 0
    %3451 = vmatprep.subr.mxu0 0.0
    %3452 = vmatpush1.msra.mxu0 %v3344
    %3453 = vmatprep.subr.mxu0 0.0
    %3454 = vmatpush1.msra.mxu0 %v3345
    %3455 = vmatprep.subr.mxu0 0.0
    %3456 = vmatpush1.msra.mxu0 %v3346
    %3457 = vmatprep.subr.mxu0 0.0
    %3458 = vmatpush1.msra.mxu0 %v3347
    %3459 = vmatprep.subr.mxu0 0.0
    %3460 = vmatpush1.msra.mxu0 0.0
    %3461 = vmatprep.subr.mxu0 0.0
    %3462 = vmatpush1.msra.mxu0 0.0
    %3463 = vmatprep.subr.mxu0 0.0
    %3464 = vmatpush1.msra.mxu0 0.0
    %3465 = vmatprep.subr.mxu0 0.0
    %3466 = vmatpush1.msra.mxu0 0.0
    %3467 = vmatprep.subr.mxu0 0.0
    %3468 = vmatpush1.msra.mxu0 0.0
    %3469 = vmatprep.subr.mxu0 0.0
    %3470 = vmatpush1.msra.mxu0 0.0
    %3471 = vmatprep.subr.mxu0 0.0
    %3472 = vmatpush1.msra.mxu0 0.0
    %3473 = vmatprep.subr.mxu0 0.0
    %3474 = vmatpush1.msra.mxu0 0.0
    %3475 = vmatprep.subr.mxu0 0.0
    %3476 = vmatpush1.msra.mxu0 0.0
    %3477 = vmatprep.subr.mxu0 0.0
    %3478 = vmatpush1.msra.mxu0 0.0
    %3479 = vmatprep.subr.mxu0 0.0
    %3480 = vmatpush1.msra.mxu0 0.0
    %3481 = vmatprep.subr.mxu0 0.0
    %3482 = vmatpush1.msra.mxu0 0.0
    %3483 = vmatprep.subr.mxu0 0.0
    %3484 = vmatpush1.msra.mxu0 0.0
    %3485 = vmatprep.subr.mxu0 0.0
    %3486 = vmatpush1.msra.mxu0 0.0
    %3487 = vmatprep.subr.mxu0 0.0
    %3488 = vmatpush1.msra.mxu0 0.0
    %3489 = vmatprep.subr.mxu0 0.0
    %3490 = vmatpush1.msra.mxu0 0.0
    %3491 = vmatprep.subr.mxu0 0.0
    %3492 = vmatpush1.msra.mxu0 0.0
    %3493 = vmatprep.subr.mxu0 0.0
    %3494 = vmatpush1.msra.mxu0 0.0
    %3495 = vmatprep.subr.mxu0 0.0
    %3496 = vmatpush1.msra.mxu0 0.0
    %3497 = vmatprep.subr.mxu0 0.0
    %3498 = vmatpush1.msra.mxu0 0.0
    %3499 = vmatprep.subr.mxu0 0.0
    %3500 = vmatpush1.msra.mxu0 0.0
    %3501 = vmatprep.subr.mxu0 0.0
    %3502 = vmatpush1.msra.mxu0 0.0
    %3503 = vmatprep.subr.mxu0 0.0
    %3504 = vmatpush1.msra.mxu0 0.0
    %3505 = vmatprep.subr.mxu0 0.0
    %3506 = vmatpush1.msra.mxu0 0.0
    %3507 = vmatprep.subr.mxu0 0.0
    %3508 = vmatpush1.msra.mxu0 0.0
    %3509 = vmatprep.subr.mxu0 0.0
    %3510 = vmatpush1.msra.mxu0 0.0
    %3511 = vmatprep.subr.mxu0 0.0
    %3512 = vmatpush1.msra.mxu0 0.0
    %3513 = vmatprep.subr.mxu0 0.0
    %3514 = vmatpush1.msra.mxu0 0.0
    %3515 = vmatprep.mubr.f32.mxu0 0.0
    %3516 = vmatmul.mubr.f32.gmra.mrb[0].mxu0 %v3449
    %v3517 = vpop.f32.mrb[0].mxu0
    %v3518 = vadd.f32 0.0, %v3517
    %v3519 = vpop.f32.mrb[0].mxu0
    %3520 = vdwg.mxu0
    %v3521 = vadd.f32 %v3311, %v3518
    %v3522 = vxor.u32 %v3521, 2147483648
    %v3523 = vmul.f32 %v3522, 1.442695
    %v3524 = vpow.pop %v3523
    %v3525 = vadd.f32 %v3524, 1.0
    %v3526 = vrcp.pop %v3525
    %v3527 = vmul.f32 1.0, %v3526
    %v3528 = vmul.f32 %v3527, 2.0
    %v3529 = vsub.f32 %v3528, 1.0
    %v3530 = vmul.f32 %v3527, %v3437
    %3532 = vrot.lane.b32.xlu0 %v3529, 64
    %v3533 = vpop.permute.xlu0 %3532
    %v3535 = vmul.f32 %v3527, %v3533
    %3537 = vrot.lane.b32.xlu0 %v3535, 32
    %v3538 = vpop.permute.xlu0 %3537
    %v3540 = vadd.f32 %v3530, %v3538
    %v3541 = vtanh.pop %v3540
    %3543 = vrot.lane.b32.xlu0 %v3541, 64
    %v3544 = vpop.permute.xlu0 %3543
    %v3546 = vmul.f32 %v3527, %v3544
    %3548 = vrot.lane.b32.xlu0 %v3546, 32
    %v3549 = vpop.permute.xlu0 %3548
    %3551 = vst.msk [vmem:[#allocation2 + $0x8] sm:$0xff] %vm399, %v3549
    %v3552 = vsel %vm399, %v3549, 0
    %3554 = vmatprep.subr.mxu0 0.0
    %3555 = vmatpush1.msra.mxu0 %v3344
    %3556 = vmatprep.subr.mxu0 0.0
    %3557 = vmatpush1.msra.mxu0 %v3345
    %3558 = vmatprep.subr.mxu0 0.0
    %3559 = vmatpush1.msra.mxu0 %v3346
    %3560 = vmatprep.subr.mxu0 0.0
    %3561 = vmatpush1.msra.mxu0 %v3347
    %3562 = vmatprep.subr.mxu0 0.0
    %3563 = vmatpush1.msra.mxu0 0.0
    %3564 = vmatprep.subr.mxu0 0.0
    %3565 = vmatpush1.msra.mxu0 0.0
    %3566 = vmatprep.subr.mxu0 0.0
    %3567 = vmatpush1.msra.mxu0 0.0
    %3568 = vmatprep.subr.mxu0 0.0
    %3569 = vmatpush1.msra.mxu0 0.0
    %3570 = vmatprep.subr.mxu0 0.0
    %3571 = vmatpush1.msra.mxu0 0.0
    %3572 = vmatprep.subr.mxu0 0.0
    %3573 = vmatpush1.msra.mxu0 0.0
    %3574 = vmatprep.subr.mxu0 0.0
    %3575 = vmatpush1.msra.mxu0 0.0
    %3576 = vmatprep.subr.mxu0 0.0
    %3577 = vmatpush1.msra.mxu0 0.0
    %3578 = vmatprep.subr.mxu0 0.0
    %3579 = vmatpush1.msra.mxu0 0.0
    %3580 = vmatprep.subr.mxu0 0.0
    %3581 = vmatpush1.msra.mxu0 0.0
    %3582 = vmatprep.subr.mxu0 0.0
    %3583 = vmatpush1.msra.mxu0 0.0
    %3584 = vmatprep.subr.mxu0 0.0
    %3585 = vmatpush1.msra.mxu0 0.0
    %3586 = vmatprep.subr.mxu0 0.0
    %3587 = vmatpush1.msra.mxu0 0.0
    %3588 = vmatprep.subr.mxu0 0.0
    %3589 = vmatpush1.msra.mxu0 0.0
    %3590 = vmatprep.subr.mxu0 0.0
    %3591 = vmatpush1.msra.mxu0 0.0
    %3592 = vmatprep.subr.mxu0 0.0
    %3593 = vmatpush1.msra.mxu0 0.0
    %3594 = vmatprep.subr.mxu0 0.0
    %3595 = vmatpush1.msra.mxu0 0.0
    %3596 = vmatprep.subr.mxu0 0.0
    %3597 = vmatpush1.msra.mxu0 0.0
    %3598 = vmatprep.subr.mxu0 0.0
    %3599 = vmatpush1.msra.mxu0 0.0
    %3600 = vmatprep.subr.mxu0 0.0
    %3601 = vmatpush1.msra.mxu0 0.0
    %3602 = vmatprep.subr.mxu0 0.0
    %3603 = vmatpush1.msra.mxu0 0.0
    %3604 = vmatprep.subr.mxu0 0.0
    %3605 = vmatpush1.msra.mxu0 0.0
    %3606 = vmatprep.subr.mxu0 0.0
    %3607 = vmatpush1.msra.mxu0 0.0
    %3608 = vmatprep.subr.mxu0 0.0
    %3609 = vmatpush1.msra.mxu0 0.0
    %3610 = vmatprep.subr.mxu0 0.0
    %3611 = vmatpush1.msra.mxu0 0.0
    %3612 = vmatprep.subr.mxu0 0.0
    %3613 = vmatpush1.msra.mxu0 0.0
    %3614 = vmatprep.subr.mxu0 0.0
    %3615 = vmatpush1.msra.mxu0 0.0
    %3616 = vmatprep.subr.mxu0 0.0
    %3617 = vmatpush1.msra.mxu0 0.0
    %3618 = vmatprep.mubr.f32.mxu0 0.0
    %3619 = vmatmul.mubr.f32.gmra.mrb[0].mxu0 %v3552
    %v3620 = vpop.f32.mrb[0].mxu0
    %v3621 = vadd.f32 0.0, %v3620
    %v3622 = vpop.f32.mrb[0].mxu0
    %3623 = vdwg.mxu0
    %v3624 = vadd.f32 %v3316, %v3621
    %v3625 = vxor.u32 %v3624, 2147483648
    %v3626 = vmul.f32 %v3625, 1.442695
    %v3627 = vpow.pop %v3626
    %v3628 = vadd.f32 %v3627, 1.0
    %v3629 = vrcp.pop %v3628
    %v3630 = vmul.f32 1.0, %v3629
    %v3631 = vmul.f32 %v3630, 2.0
    %v3632 = vsub.f32 %v3631, 1.0
    %v3633 = vmul.f32 %v3630, %v3540
    %3635 = vrot.lane.b32.xlu0 %v3632, 64
    %v3636 = vpop.permute.xlu0 %3635
    %v3638 = vmul.f32 %v3630, %v3636
    %3640 = vrot.lane.b32.xlu0 %v3638, 32
    %v3641 = vpop.permute.xlu0 %3640
    %v3643 = vadd.f32 %v3633, %v3641
    %v3644 = vtanh.pop %v3643
    %3646 = vrot.lane.b32.xlu0 %v3644, 64
    %v3647 = vpop.permute.xlu0 %3646
    %v3649 = vmul.f32 %v3630, %v3647
    %3651 = vrot.lane.b32.xlu0 %v3649, 32
    %v3652 = vpop.permute.xlu0 %3651
    %3654 = vst.msk [vmem:[#allocation2 + $0x10] sm:$0xff] %vm399, %v3652
    %v3655 = vsel %vm399, %v3652, 0
    %3657 = vmatprep.subr.mxu0 0.0
    %3658 = vmatpush1.msra.mxu0 %v3344
    %3659 = vmatprep.subr.mxu0 0.0
    %3660 = vmatpush1.msra.mxu0 %v3345
    %3661 = vmatprep.subr.mxu0 0.0
    %3662 = vmatpush1.msra.mxu0 %v3346
    %3663 = vmatprep.subr.mxu0 0.0
    %3664 = vmatpush1.msra.mxu0 %v3347
    %3665 = vmatprep.subr.mxu0 0.0
    %3666 = vmatpush1.msra.mxu0 0.0
    %3667 = vmatprep.subr.mxu0 0.0
    %3668 = vmatpush1.msra.mxu0 0.0
    %3669 = vmatprep.subr.mxu0 0.0
    %3670 = vmatpush1.msra.mxu0 0.0
    %3671 = vmatprep.subr.mxu0 0.0
    %3672 = vmatpush1.msra.mxu0 0.0
    %3673 = vmatprep.subr.mxu0 0.0
    %3674 = vmatpush1.msra.mxu0 0.0
    %3675 = vmatprep.subr.mxu0 0.0
    %3676 = vmatpush1.msra.mxu0 0.0
    %3677 = vmatprep.subr.mxu0 0.0
    %3678 = vmatpush1.msra.mxu0 0.0
    %3679 = vmatprep.subr.mxu0 0.0
    %3680 = vmatpush1.msra.mxu0 0.0
    %3681 = vmatprep.subr.mxu0 0.0
    %3682 = vmatpush1.msra.mxu0 0.0
    %3683 = vmatprep.subr.mxu0 0.0
    %3684 = vmatpush1.msra.mxu0 0.0
    %3685 = vmatprep.subr.mxu0 0.0
    %3686 = vmatpush1.msra.mxu0 0.0
    %3687 = vmatprep.subr.mxu0 0.0
    %3688 = vmatpush1.msra.mxu0 0.0
    %3689 = vmatprep.subr.mxu0 0.0
    %3690 = vmatpush1.msra.mxu0 0.0
    %3691 = vmatprep.subr.mxu0 0.0
    %3692 = vmatpush1.msra.mxu0 0.0
    %3693 = vmatprep.subr.mxu0 0.0
    %3694 = vmatpush1.msra.mxu0 0.0
    %3695 = vmatprep.subr.mxu0 0.0
    %3696 = vmatpush1.msra.mxu0 0.0
    %3697 = vmatprep.subr.mxu0 0.0
    %3698 = vmatpush1.msra.mxu0 0.0
    %3699 = vmatprep.subr.mxu0 0.0
    %3700 = vmatpush1.msra.mxu0 0.0
    %3701 = vmatprep.subr.mxu0 0.0
    %3702 = vmatpush1.msra.mxu0 0.0
    %3703 = vmatprep.subr.mxu0 0.0
    %3704 = vmatpush1.msra.mxu0 0.0
    %3705 = vmatprep.subr.mxu0 0.0
    %3706 = vmatpush1.msra.mxu0 0.0
    %3707 = vmatprep.subr.mxu0 0.0
    %3708 = vmatpush1.msra.mxu0 0.0
    %3709 = vmatprep.subr.mxu0 0.0
    %3710 = vmatpush1.msra.mxu0 0.0
    %3711 = vmatprep.subr.mxu0 0.0
    %3712 = vmatpush1.msra.mxu0 0.0
    %3713 = vmatprep.subr.mxu0 0.0
    %3714 = vmatpush1.msra.mxu0 0.0
    %3715 = vmatprep.subr.mxu0 0.0
    %3716 = vmatpush1.msra.mxu0 0.0
    %3717 = vmatprep.subr.mxu0 0.0
    %3718 = vmatpush1.msra.mxu0 0.0
    %3719 = vmatprep.subr.mxu0 0.0
    %3720 = vmatpush1.msra.mxu0 0.0
    %3721 = vmatprep.mubr.f32.mxu0 0.0
    %3722 = vmatmul.mubr.f32.gmra.mrb[0].mxu0 %v3655
    %v3723 = vpop.f32.mrb[0].mxu0
    %v3724 = vadd.f32 0.0, %v3723
    %v3725 = vpop.f32.mrb[0].mxu0
    %3726 = vdwg.mxu0
    %v3727 = vadd.f32 %v3321, %v3724
    %v3728 = vxor.u32 %v3727, 2147483648
    %v3729 = vmul.f32 %v3728, 1.442695
    %v3730 = vpow.pop %v3729
    %v3731 = vadd.f32 %v3730, 1.0
    %v3732 = vrcp.pop %v3731
    %v3733 = vmul.f32 1.0, %v3732
    %v3734 = vmul.f32 %v3733, 2.0
    %v3735 = vsub.f32 %v3734, 1.0
    %v3736 = vmul.f32 %v3733, %v3643
    %3738 = vrot.lane.b32.xlu0 %v3735, 64
    %v3739 = vpop.permute.xlu0 %3738
    %v3741 = vmul.f32 %v3733, %v3739
    %3743 = vrot.lane.b32.xlu0 %v3741, 32
    %v3744 = vpop.permute.xlu0 %3743
    %v3746 = vadd.f32 %v3736, %v3744
    %v3747 = vtanh.pop %v3746
    %3749 = vrot.lane.b32.xlu0 %v3747, 64
    %v3750 = vpop.permute.xlu0 %3749
    %v3752 = vmul.f32 %v3733, %v3750
    %3754 = vrot.lane.b32.xlu0 %v3752, 32
    %v3755 = vpop.permute.xlu0 %3754
    %3757 = vst.msk [vmem:[#allocation2 + $0x18] sm:$0xff] %vm399, %v3755
    %v3758 = vsel %vm399, %v3755, 0
    %3760 = vmatprep.subr.mxu0 0.0
    %3761 = vmatpush1.msra.mxu0 %v3344
    %3762 = vmatprep.subr.mxu0 0.0
    %3763 = vmatpush1.msra.mxu0 %v3345
    %3764 = vmatprep.subr.mxu0 0.0
    %3765 = vmatpush1.msra.mxu0 %v3346
    %3766 = vmatprep.subr.mxu0 0.0
    %3767 = vmatpush1.msra.mxu0 %v3347
    %3768 = vmatprep.subr.mxu0 0.0
    %3769 = vmatpush1.msra.mxu0 0.0
    %3770 = vmatprep.subr.mxu0 0.0
    %3771 = vmatpush1.msra.mxu0 0.0
    %3772 = vmatprep.subr.mxu0 0.0
    %3773 = vmatpush1.msra.mxu0 0.0
    %3774 = vmatprep.subr.mxu0 0.0
    %3775 = vmatpush1.msra.mxu0 0.0
    %3776 = vmatprep.subr.mxu0 0.0
    %3777 = vmatpush1.msra.mxu0 0.0
    %3778 = vmatprep.subr.mxu0 0.0
    %3779 = vmatpush1.msra.mxu0 0.0
    %3780 = vmatprep.subr.mxu0 0.0
    %3781 = vmatpush1.msra.mxu0 0.0
    %3782 = vmatprep.subr.mxu0 0.0
    %3783 = vmatpush1.msra.mxu0 0.0
    %3784 = vmatprep.subr.mxu0 0.0
    %3785 = vmatpush1.msra.mxu0 0.0
    %3786 = vmatprep.subr.mxu0 0.0
    %3787 = vmatpush1.msra.mxu0 0.0
    %3788 = vmatprep.subr.mxu0 0.0
    %3789 = vmatpush1.msra.mxu0 0.0
    %3790 = vmatprep.subr.mxu0 0.0
    %3791 = vmatpush1.msra.mxu0 0.0
    %3792 = vmatprep.subr.mxu0 0.0
    %3793 = vmatpush1.msra.mxu0 0.0
    %3794 = vmatprep.subr.mxu0 0.0
    %3795 = vmatpush1.msra.mxu0 0.0
    %3796 = vmatprep.subr.mxu0 0.0
    %3797 = vmatpush1.msra.mxu0 0.0
    %3798 = vmatprep.subr.mxu0 0.0
    %3799 = vmatpush1.msra.mxu0 0.0
    %3800 = vmatprep.subr.mxu0 0.0
    %3801 = vmatpush1.msra.mxu0 0.0
    %3802 = vmatprep.subr.mxu0 0.0
    %3803 = vmatpush1.msra.mxu0 0.0
    %3804 = vmatprep.subr.mxu0 0.0
    %3805 = vmatpush1.msra.mxu0 0.0
    %3806 = vmatprep.subr.mxu0 0.0
    %3807 = vmatpush1.msra.mxu0 0.0
    %3808 = vmatprep.subr.mxu0 0.0
    %3809 = vmatpush1.msra.mxu0 0.0
    %3810 = vmatprep.subr.mxu0 0.0
    %3811 = vmatpush1.msra.mxu0 0.0
    %3812 = vmatprep.subr.mxu0 0.0
    %3813 = vmatpush1.msra.mxu0 0.0
    %3814 = vmatprep.subr.mxu0 0.0
    %3815 = vmatpush1.msra.mxu0 0.0
    %3816 = vmatprep.subr.mxu0 0.0
    %3817 = vmatpush1.msra.mxu0 0.0
    %3818 = vmatprep.subr.mxu0 0.0
    %3819 = vmatpush1.msra.mxu0 0.0
    %3820 = vmatprep.subr.mxu0 0.0
    %3821 = vmatpush1.msra.mxu0 0.0
    %3822 = vmatprep.subr.mxu0 0.0
    %3823 = vmatpush1.msra.mxu0 0.0
    %3824 = vmatprep.mubr.f32.mxu0 0.0
    %3825 = vmatmul.mubr.f32.gmra.mrb[0].mxu0 %v3758
    %v3826 = vpop.f32.mrb[0].mxu0
    %v3827 = vadd.f32 0.0, %v3826
    %v3828 = vpop.f32.mrb[0].mxu0
    %3829 = vdwg.mxu0
    %v3830 = vadd.f32 %v3326, %v3827
    %v3831 = vxor.u32 %v3830, 2147483648
    %v3832 = vmul.f32 %v3831, 1.442695
    %v3833 = vpow.pop %v3832
    %v3834 = vadd.f32 %v3833, 1.0
    %v3835 = vrcp.pop %v3834
    %v3836 = vmul.f32 1.0, %v3835
    %v3837 = vmul.f32 %v3836, 2.0
    %v3838 = vsub.f32 %v3837, 1.0
    %v3839 = vmul.f32 %v3836, %v3746
    %3841 = vrot.lane.b32.xlu0 %v3838, 64
    %v3842 = vpop.permute.xlu0 %3841
    %v3844 = vmul.f32 %v3836, %v3842
    %3846 = vrot.lane.b32.xlu0 %v3844, 32
    %v3847 = vpop.permute.xlu0 %3846
    %v3849 = vadd.f32 %v3839, %v3847
    %v3850 = vtanh.pop %v3849
    %3852 = vrot.lane.b32.xlu0 %v3850, 64
    %v3853 = vpop.permute.xlu0 %3852
    %v3855 = vmul.f32 %v3836, %v3853
    %3857 = vrot.lane.b32.xlu0 %v3855, 32
    %v3858 = vpop.permute.xlu0 %3857
    %3860 = vst.msk [vmem:[#allocation2 + $0x20] sm:$0xff] %vm399, %v3858
    %v3861 = vsel %vm399, %v3858, 0
    %3863 = vmatprep.subr.mxu0 0.0
    %3864 = vmatpush1.msra.mxu0 %v3344
    %3865 = vmatprep.subr.mxu0 0.0
    %3866 = vmatpush1.msra.mxu0 %v3345
    %3867 = vmatprep.subr.mxu0 0.0
    %3868 = vmatpush1.msra.mxu0 %v3346
    %3869 = vmatprep.subr.mxu0 0.0
    %3870 = vmatpush1.msra.mxu0 %v3347
    %3871 = vmatprep.subr.mxu0 0.0
    %3872 = vmatpush1.msra.mxu0 0.0
    %3873 = vmatprep.subr.mxu0 0.0
    %3874 = vmatpush1.msra.mxu0 0.0
    %3875 = vmatprep.subr.mxu0 0.0
    %3876 = vmatpush1.msra.mxu0 0.0
    %3877 = vmatprep.subr.mxu0 0.0
    %3878 = vmatpush1.msra.mxu0 0.0
    %3879 = vmatprep.subr.mxu0 0.0
    %3880 = vmatpush1.msra.mxu0 0.0
    %3881 = vmatprep.subr.mxu0 0.0
    %3882 = vmatpush1.msra.mxu0 0.0
    %3883 = vmatprep.subr.mxu0 0.0
    %3884 = vmatpush1.msra.mxu0 0.0
    %3885 = vmatprep.subr.mxu0 0.0
    %3886 = vmatpush1.msra.mxu0 0.0
    %3887 = vmatprep.subr.mxu0 0.0
    %3888 = vmatpush1.msra.mxu0 0.0
    %3889 = vmatprep.subr.mxu0 0.0
    %3890 = vmatpush1.msra.mxu0 0.0
    %3891 = vmatprep.subr.mxu0 0.0
    %3892 = vmatpush1.msra.mxu0 0.0
    %3893 = vmatprep.subr.mxu0 0.0
    %3894 = vmatpush1.msra.mxu0 0.0
    %3895 = vmatprep.subr.mxu0 0.0
    %3896 = vmatpush1.msra.mxu0 0.0
    %3897 = vmatprep.subr.mxu0 0.0
    %3898 = vmatpush1.msra.mxu0 0.0
    %3899 = vmatprep.subr.mxu0 0.0
    %3900 = vmatpush1.msra.mxu0 0.0
    %3901 = vmatprep.subr.mxu0 0.0
    %3902 = vmatpush1.msra.mxu0 0.0
    %3903 = vmatprep.subr.mxu0 0.0
    %3904 = vmatpush1.msra.mxu0 0.0
    %3905 = vmatprep.subr.mxu0 0.0
    %3906 = vmatpush1.msra.mxu0 0.0
    %3907 = vmatprep.subr.mxu0 0.0
    %3908 = vmatpush1.msra.mxu0 0.0
    %3909 = vmatprep.subr.mxu0 0.0
    %3910 = vmatpush1.msra.mxu0 0.0
    %3911 = vmatprep.subr.mxu0 0.0
    %3912 = vmatpush1.msra.mxu0 0.0
    %3913 = vmatprep.subr.mxu0 0.0
    %3914 = vmatpush1.msra.mxu0 0.0
    %3915 = vmatprep.subr.mxu0 0.0
    %3916 = vmatpush1.msra.mxu0 0.0
    %3917 = vmatprep.subr.mxu0 0.0
    %3918 = vmatpush1.msra.mxu0 0.0
    %3919 = vmatprep.subr.mxu0 0.0
    %3920 = vmatpush1.msra.mxu0 0.0
    %3921 = vmatprep.subr.mxu0 0.0
    %3922 = vmatpush1.msra.mxu0 0.0
    %3923 = vmatprep.subr.mxu0 0.0
    %3924 = vmatpush1.msra.mxu0 0.0
    %3925 = vmatprep.subr.mxu0 0.0
    %3926 = vmatpush1.msra.mxu0 0.0
    %3927 = vmatprep.mubr.f32.mxu0 0.0
    %3928 = vmatmul.mubr.f32.gmra.mrb[0].mxu0 %v3861
    %v3929 = vpop.f32.mrb[0].mxu0
    %v3930 = vadd.f32 0.0, %v3929
    %v3931 = vpop.f32.mrb[0].mxu0
    %3932 = vdwg.mxu0
    %v3933 = vadd.f32 %v3331, %v3930
    %v3934 = vxor.u32 %v3933, 2147483648
    %v3935 = vmul.f32 %v3934, 1.442695
    %v3936 = vpow.pop %v3935
    %v3937 = vadd.f32 %v3936, 1.0
    %v3938 = vrcp.pop %v3937
    %v3939 = vmul.f32 1.0, %v3938
    %v3940 = vmul.f32 %v3939, 2.0
    %v3941 = vsub.f32 %v3940, 1.0
    %v3942 = vmul.f32 %v3939, %v3849
    %3944 = vrot.lane.b32.xlu0 %v3941, 64
    %v3945 = vpop.permute.xlu0 %3944
    %v3947 = vmul.f32 %v3939, %v3945
    %3949 = vrot.lane.b32.xlu0 %v3947, 32
    %v3950 = vpop.permute.xlu0 %3949
    %v3952 = vadd.f32 %v3942, %v3950
    %v3953 = vtanh.pop %v3952
    %3955 = vrot.lane.b32.xlu0 %v3953, 64
    %v3956 = vpop.permute.xlu0 %3955
    %v3958 = vmul.f32 %v3939, %v3956
    %3960 = vrot.lane.b32.xlu0 %v3958, 32
    %v3961 = vpop.permute.xlu0 %3960
    %3963 = vst.msk [vmem:[#allocation2 + $0x28] sm:$0xff] %vm399, %v3961
    %v3964 = vsel %vm399, %v3961, 0
    %3966 = vmatprep.subr.mxu0 0.0
    %3967 = vmatpush1.msra.mxu0 %v3344
    %3968 = vmatprep.subr.mxu0 0.0
    %3969 = vmatpush1.msra.mxu0 %v3345
    %3970 = vmatprep.subr.mxu0 0.0
    %3971 = vmatpush1.msra.mxu0 %v3346
    %3972 = vmatprep.subr.mxu0 0.0
    %3973 = vmatpush1.msra.mxu0 %v3347
    %3974 = vmatprep.subr.mxu0 0.0
    %3975 = vmatpush1.msra.mxu0 0.0
    %3976 = vmatprep.subr.mxu0 0.0
    %3977 = vmatpush1.msra.mxu0 0.0
    %3978 = vmatprep.subr.mxu0 0.0
    %3979 = vmatpush1.msra.mxu0 0.0
    %3980 = vmatprep.subr.mxu0 0.0
    %3981 = vmatpush1.msra.mxu0 0.0
    %3982 = vmatprep.subr.mxu0 0.0
    %3983 = vmatpush1.msra.mxu0 0.0
    %3984 = vmatprep.subr.mxu0 0.0
    %3985 = vmatpush1.msra.mxu0 0.0
    %3986 = vmatprep.subr.mxu0 0.0
    %3987 = vmatpush1.msra.mxu0 0.0
    %3988 = vmatprep.subr.mxu0 0.0
    %3989 = vmatpush1.msra.mxu0 0.0
    %3990 = vmatprep.subr.mxu0 0.0
    %3991 = vmatpush1.msra.mxu0 0.0
    %3992 = vmatprep.subr.mxu0 0.0
    %3993 = vmatpush1.msra.mxu0 0.0
    %3994 = vmatprep.subr.mxu0 0.0
    %3995 = vmatpush1.msra.mxu0 0.0
    %3996 = vmatprep.subr.mxu0 0.0
    %3997 = vmatpush1.msra.mxu0 0.0
    %3998 = vmatprep.subr.mxu0 0.0
    %3999 = vmatpush1.msra.mxu0 0.0
    %4000 = vmatprep.subr.mxu0 0.0
    %4001 = vmatpush1.msra.mxu0 0.0
    %4002 = vmatprep.subr.mxu0 0.0
    %4003 = vmatpush1.msra.mxu0 0.0
    %4004 = vmatprep.subr.mxu0 0.0
    %4005 = vmatpush1.msra.mxu0 0.0
    %4006 = vmatprep.subr.mxu0 0.0
    %4007 = vmatpush1.msra.mxu0 0.0
    %4008 = vmatprep.subr.mxu0 0.0
    %4009 = vmatpush1.msra.mxu0 0.0
    %4010 = vmatprep.subr.mxu0 0.0
    %4011 = vmatpush1.msra.mxu0 0.0
    %4012 = vmatprep.subr.mxu0 0.0
    %4013 = vmatpush1.msra.mxu0 0.0
    %4014 = vmatprep.subr.mxu0 0.0
    %4015 = vmatpush1.msra.mxu0 0.0
    %4016 = vmatprep.subr.mxu0 0.0
    %4017 = vmatpush1.msra.mxu0 0.0
    %4018 = vmatprep.subr.mxu0 0.0
    %4019 = vmatpush1.msra.mxu0 0.0
    %4020 = vmatprep.subr.mxu0 0.0
    %4021 = vmatpush1.msra.mxu0 0.0
    %4022 = vmatprep.subr.mxu0 0.0
    %4023 = vmatpush1.msra.mxu0 0.0
    %4024 = vmatprep.subr.mxu0 0.0
    %4025 = vmatpush1.msra.mxu0 0.0
    %4026 = vmatprep.subr.mxu0 0.0
    %4027 = vmatpush1.msra.mxu0 0.0
    %4028 = vmatprep.subr.mxu0 0.0
    %4029 = vmatpush1.msra.mxu0 0.0
    %4030 = vmatprep.mubr.f32.mxu0 0.0
    %4031 = vmatmul.mubr.f32.gmra.mrb[0].mxu0 %v3964
    %v4032 = vpop.f32.mrb[0].mxu0
    %v4033 = vadd.f32 0.0, %v4032
    %v4034 = vpop.f32.mrb[0].mxu0
    %4035 = vdwg.mxu0
    %v4036 = vadd.f32 %v3336, %v4033
    %v4037 = vxor.u32 %v4036, 2147483648
    %v4038 = vmul.f32 %v4037, 1.442695
    %v4039 = vpow.pop %v4038
    %v4040 = vadd.f32 %v4039, 1.0
    %v4041 = vrcp.pop %v4040
    %v4042 = vmul.f32 1.0, %v4041
    %v4043 = vmul.f32 %v4042, 2.0
    %v4044 = vsub.f32 %v4043, 1.0
    %v4045 = vmul.f32 %v4042, %v3952
    %4047 = vrot.lane.b32.xlu0 %v4044, 64
    %v4048 = vpop.permute.xlu0 %4047
    %v4050 = vmul.f32 %v4042, %v4048
    %4052 = vrot.lane.b32.xlu0 %v4050, 32
    %v4053 = vpop.permute.xlu0 %4052
    %v4055 = vadd.f32 %v4045, %v4053
    %v4056 = vtanh.pop %v4055
    %4058 = vrot.lane.b32.xlu0 %v4056, 64
    %v4059 = vpop.permute.xlu0 %4058
    %v4061 = vmul.f32 %v4042, %v4059
    %4063 = vrot.lane.b32.xlu0 %v4061, 32
    %v4064 = vpop.permute.xlu0 %4063
    %4066 = vst.msk [vmem:[#allocation2 + $0x30] sm:$0xff] %vm399, %v4064
    %v4067 = vsel %vm399, %v4064, 0
    %4069 = vmatprep.subr.mxu0 0.0
    %4070 = vmatpush1.msra.mxu0 %v3344
    %4071 = vmatprep.subr.mxu0 0.0
    %4072 = vmatpush1.msra.mxu0 %v3345
    %4073 = vmatprep.subr.mxu0 0.0
    %4074 = vmatpush1.msra.mxu0 %v3346
    %4075 = vmatprep.subr.mxu0 0.0
    %4076 = vmatpush1.msra.mxu0 %v3347
    %4077 = vmatprep.subr.mxu0 0.0
    %4078 = vmatpush1.msra.mxu0 0.0
    %4079 = vmatprep.subr.mxu0 0.0
    %4080 = vmatpush1.msra.mxu0 0.0
    %4081 = vmatprep.subr.mxu0 0.0
    %4082 = vmatpush1.msra.mxu0 0.0
    %4083 = vmatprep.subr.mxu0 0.0
    %4084 = vmatpush1.msra.mxu0 0.0
    %4085 = vmatprep.subr.mxu0 0.0
    %4086 = vmatpush1.msra.mxu0 0.0
    %4087 = vmatprep.subr.mxu0 0.0
    %4088 = vmatpush1.msra.mxu0 0.0
    %4089 = vmatprep.subr.mxu0 0.0
    %4090 = vmatpush1.msra.mxu0 0.0
    %4091 = vmatprep.subr.mxu0 0.0
    %4092 = vmatpush1.msra.mxu0 0.0
    %4093 = vmatprep.subr.mxu0 0.0
    %4094 = vmatpush1.msra.mxu0 0.0
    %4095 = vmatprep.subr.mxu0 0.0
    %4096 = vmatpush1.msra.mxu0 0.0
    %4097 = vmatprep.subr.mxu0 0.0
    %4098 = vmatpush1.msra.mxu0 0.0
    %4099 = vmatprep.subr.mxu0 0.0
    %4100 = vmatpush1.msra.mxu0 0.0
    %4101 = vmatprep.subr.mxu0 0.0
    %4102 = vmatpush1.msra.mxu0 0.0
    %4103 = vmatprep.subr.mxu0 0.0
    %4104 = vmatpush1.msra.mxu0 0.0
    %4105 = vmatprep.subr.mxu0 0.0
    %4106 = vmatpush1.msra.mxu0 0.0
    %4107 = vmatprep.subr.mxu0 0.0
    %4108 = vmatpush1.msra.mxu0 0.0
    %4109 = vmatprep.subr.mxu0 0.0
    %4110 = vmatpush1.msra.mxu0 0.0
    %4111 = vmatprep.subr.mxu0 0.0
    %4112 = vmatpush1.msra.mxu0 0.0
    %4113 = vmatprep.subr.mxu0 0.0
    %4114 = vmatpush1.msra.mxu0 0.0
    %4115 = vmatprep.subr.mxu0 0.0
    %4116 = vmatpush1.msra.mxu0 0.0
    %4117 = vmatprep.subr.mxu0 0.0
    %4118 = vmatpush1.msra.mxu0 0.0
    %4119 = vmatprep.subr.mxu0 0.0
    %4120 = vmatpush1.msra.mxu0 0.0
    %4121 = vmatprep.subr.mxu0 0.0
    %4122 = vmatpush1.msra.mxu0 0.0
    %4123 = vmatprep.subr.mxu0 0.0
    %4124 = vmatpush1.msra.mxu0 0.0
    %4125 = vmatprep.subr.mxu0 0.0
    %4126 = vmatpush1.msra.mxu0 0.0
    %4127 = vmatprep.subr.mxu0 0.0
    %4128 = vmatpush1.msra.mxu0 0.0
    %4129 = vmatprep.subr.mxu0 0.0
    %4130 = vmatpush1.msra.mxu0 0.0
    %4131 = vmatprep.subr.mxu0 0.0
    %4132 = vmatpush1.msra.mxu0 0.0
    %4133 = vmatprep.mubr.f32.mxu0 0.0
    %4134 = vmatmul.mubr.f32.gmra.mrb[0].mxu0 %v4067
    %v4135 = vpop.f32.mrb[0].mxu0
    %v4136 = vadd.f32 0.0, %v4135
    %v4137 = vpop.f32.mrb[0].mxu0
    %4138 = vdwg.mxu0
    %v4139 = vadd.f32 %v3341, %v4136
    %v4140 = vxor.u32 %v4139, 2147483648
    %v4141 = vmul.f32 %v4140, 1.442695
    %v4142 = vpow.pop %v4141
    %v4143 = vadd.f32 %v4142, 1.0
    %v4144 = vrcp.pop %v4143
    %v4145 = vmul.f32 1.0, %v4144
    %v4146 = vmul.f32 %v4145, 2.0
    %v4147 = vsub.f32 %v4146, 1.0
    %v4148 = vmul.f32 %v4145, %v4055
    %4150 = vrot.lane.b32.xlu0 %v4147, 64
    %v4151 = vpop.permute.xlu0 %4150
    %v4153 = vmul.f32 %v4145, %v4151
    %4155 = vrot.lane.b32.xlu0 %v4153, 32
    %v4156 = vpop.permute.xlu0 %4155
    %v4158 = vadd.f32 %v4148, %v4156
    %v4159 = vtanh.pop %v4158
    %4161 = vrot.lane.b32.xlu0 %v4159, 64
    %v4162 = vpop.permute.xlu0 %4161
    %v4164 = vmul.f32 %v4145, %v4162
    %4166 = vrot.lane.b32.xlu0 %v4164, 32
    %v4167 = vpop.permute.xlu0 %4166
    %4169 = vst.msk [vmem:[#allocation2 + $0x38] sm:$0xff] %vm399, %v4167
    %v4170 = vld [vmem:[#allocation2] sm:$0xff]
    %v4171 = vld [vmem:[#allocation2 + $0x8] sm:$0xff]
    %v4172 = vld [vmem:[#allocation2 + $0x10] sm:$0xff]
    %v4173 = vld [vmem:[#allocation2 + $0x18] sm:$0xff]
    %v4174 = vld [vmem:[#allocation2 + $0x20] sm:$0xff]
    %v4175 = vld [vmem:[#allocation2 + $0x28] sm:$0xff]
    %v4176 = vld [vmem:[#allocation2 + $0x30] sm:$0xff]
    %v4177 = vld [vmem:[#allocation2 + $0x38] sm:$0xff]
    %v4178 = vld [vmem:[%s35] sm:$0xff]
    %v4179 = vld [vmem:[%s35 + $0x8] sm:$0xff]
    %v4180 = vld [vmem:[%s35 + $0x10] sm:$0xff]
    %v4181 = vld [vmem:[%s35 + $0x18] sm:$0xff]
    %v4182 = vld [vmem:[%s37] sm:$0x1]
    %v4184 = vlaneseq
    %v4185 = vshrl.u32 %v4184, 7
    %v4186 = vsub.s32 0, %v4185
    %v4187 = vrot.slane %v4182, %v4186
    %v4190 = vsel %vm399, %v4170, 0
    %v4193 = vsel %vm399, %v4171, 0
    %v4196 = vsel %vm399, %v4172, 0
    %v4199 = vsel %vm399, %v4173, 0
    %v4202 = vsel %vm399, %v4174, 0
    %v4205 = vsel %vm399, %v4175, 0
    %v4208 = vsel %vm399, %v4176, 0
    %v4211 = vsel %vm399, %v4177, 0
    %4213 = vmatprep.subr.mxu0 0.0
    %4214 = vmatpush1.msra.mxu0 %v4178
    %4215 = vmatprep.subr.mxu0 0.0
    %4216 = vmatpush1.msra.mxu0 %v4179
    %4217 = vmatprep.subr.mxu0 0.0
    %4218 = vmatpush1.msra.mxu0 %v4180
    %4219 = vmatprep.subr.mxu0 0.0
    %4220 = vmatpush1.msra.mxu0 %v4181
    %4221 = vmatprep.subr.mxu0 0.0
    %4222 = vmatpush1.msra.mxu0 0.0
    %4223 = vmatprep.subr.mxu0 0.0
    %4224 = vmatpush1.msra.mxu0 0.0
    %4225 = vmatprep.subr.mxu0 0.0
    %4226 = vmatpush1.msra.mxu0 0.0
    %4227 = vmatprep.subr.mxu0 0.0
    %4228 = vmatpush1.msra.mxu0 0.0
    %4229 = vmatprep.subr.mxu0 0.0
    %4230 = vmatpush1.msra.mxu0 0.0
    %4231 = vmatprep.subr.mxu0 0.0
    %4232 = vmatpush1.msra.mxu0 0.0
    %4233 = vmatprep.subr.mxu0 0.0
    %4234 = vmatpush1.msra.mxu0 0.0
    %4235 = vmatprep.subr.mxu0 0.0
    %4236 = vmatpush1.msra.mxu0 0.0
    %4237 = vmatprep.subr.mxu0 0.0
    %4238 = vmatpush1.msra.mxu0 0.0
    %4239 = vmatprep.subr.mxu0 0.0
    %4240 = vmatpush1.msra.mxu0 0.0
    %4241 = vmatprep.subr.mxu0 0.0
    %4242 = vmatpush1.msra.mxu0 0.0
    %4243 = vmatprep.subr.mxu0 0.0
    %4244 = vmatpush1.msra.mxu0 0.0
    %4245 = vmatprep.subr.mxu0 0.0
    %4246 = vmatpush1.msra.mxu0 0.0
    %4247 = vmatprep.subr.mxu0 0.0
    %4248 = vmatpush1.msra.mxu0 0.0
    %4249 = vmatprep.subr.mxu0 0.0
    %4250 = vmatpush1.msra.mxu0 0.0
    %4251 = vmatprep.subr.mxu0 0.0
    %4252 = vmatpush1.msra.mxu0 0.0
    %4253 = vmatprep.subr.mxu0 0.0
    %4254 = vmatpush1.msra.mxu0 0.0
    %4255 = vmatprep.subr.mxu0 0.0
    %4256 = vmatpush1.msra.mxu0 0.0
    %4257 = vmatprep.subr.mxu0 0.0
    %4258 = vmatpush1.msra.mxu0 0.0
    %4259 = vmatprep.subr.mxu0 0.0
    %4260 = vmatpush1.msra.mxu0 0.0
    %4261 = vmatprep.subr.mxu0 0.0
    %4262 = vmatpush1.msra.mxu0 0.0
    %4263 = vmatprep.subr.mxu0 0.0
    %4264 = vmatpush1.msra.mxu0 0.0
    %4265 = vmatprep.subr.mxu0 0.0
    %4266 = vmatpush1.msra.mxu0 0.0
    %4267 = vmatprep.subr.mxu0 0.0
    %4268 = vmatpush1.msra.mxu0 0.0
    %4269 = vmatprep.subr.mxu0 0.0
    %4270 = vmatpush1.msra.mxu0 0.0
    %4271 = vmatprep.subr.mxu0 0.0
    %4272 = vmatpush1.msra.mxu0 0.0
    %4273 = vmatprep.subr.mxu0 0.0
    %4274 = vmatpush1.msra.mxu0 0.0
    %4275 = vmatprep.subr.mxu0 0.0
    %4276 = vmatpush1.msra.mxu0 0.0
    %4277 = vmatprep.mubr.f32.mxu0 0.0
    %4278 = vmatmul.mubr.f32.gmra.mrb[0].mxu0 %v4190
    %v4279 = vpop.f32.mrb[0].mxu0
    %v4280 = vadd.f32 %v4187, %v4279
    %v4281 = vpop.f32.mrb[0].mxu0
    %4282 = vmatprep.mubr.f32.mxu0 0.0
    %4283 = vmatmul.mubr.f32.gmra.mrb[0].mxu0 %v4193
    %v4284 = vpop.f32.mrb[0].mxu0
    %v4285 = vadd.f32 %v4187, %v4284
    %v4286 = vpop.f32.mrb[0].mxu0
    %4287 = vmatprep.mubr.f32.mxu0 0.0
    %4288 = vmatmul.mubr.f32.gmra.mrb[0].mxu0 %v4196
    %v4289 = vpop.f32.mrb[0].mxu0
    %v4290 = vadd.f32 %v4187, %v4289
    %v4291 = vpop.f32.mrb[0].mxu0
    %4292 = vmatprep.mubr.f32.mxu0 0.0
    %4293 = vmatmul.mubr.f32.gmra.mrb[0].mxu0 %v4199
    %v4294 = vpop.f32.mrb[0].mxu0
    %v4295 = vadd.f32 %v4187, %v4294
    %v4296 = vpop.f32.mrb[0].mxu0
    %4297 = vmatprep.mubr.f32.mxu0 0.0
    %4298 = vmatmul.mubr.f32.gmra.mrb[0].mxu0 %v4202
    %v4299 = vpop.f32.mrb[0].mxu0
    %v4300 = vadd.f32 %v4187, %v4299
    %v4301 = vpop.f32.mrb[0].mxu0
    %4302 = vmatprep.mubr.f32.mxu0 0.0
    %4303 = vmatmul.mubr.f32.gmra.mrb[0].mxu0 %v4205
    %v4304 = vpop.f32.mrb[0].mxu0
    %v4305 = vadd.f32 %v4187, %v4304
    %v4306 = vpop.f32.mrb[0].mxu0
    %4307 = vmatprep.mubr.f32.mxu0 0.0
    %4308 = vmatmul.mubr.f32.gmra.mrb[0].mxu0 %v4208
    %v4309 = vpop.f32.mrb[0].mxu0
    %v4310 = vadd.f32 %v4187, %v4309
    %v4311 = vpop.f32.mrb[0].mxu0
    %4312 = vmatprep.mubr.f32.mxu0 0.0
    %4313 = vmatmul.mubr.f32.gmra.mrb[0].mxu0 %v4211
    %v4314 = vpop.f32.mrb[0].mxu0
    %v4315 = vadd.f32 %v4187, %v4314
    %v4316 = vpop.f32.mrb[0].mxu0
    %4317 = vdwg.mxu0
    %v4318 = vtanh.pop %v4280
    %v4319 = vtanh.pop %v4285
    %v4320 = vtanh.pop %v4290
    %v4321 = vtanh.pop %v4295
    %v4322 = vtanh.pop %v4300
    %v4323 = vtanh.pop %v4305
    %v4324 = vtanh.pop %v4310
    %v4325 = vtanh.pop %v4315
    %4326 = vst.msk [vmem:[%s55] sm:$0xff] %vm261, %v4325
    %v4327 = vld [vmem:[#allocation12] sm:$0xf]
    %v4328 = vld [vmem:[#allocation14] sm:$0x1]
    %v4330 = vlaneseq
    %v4331 = vshrl.u32 %v4330, 7
    %v4332 = vsub.s32 0, %v4331
    %v4333 = vrot.slane %v4328, %v4332
    %v4336 = vsel %vm261, %v4318, 0
    %v4339 = vsel %vm261, %v4319, 0
    %v4342 = vsel %vm261, %v4320, 0
    %v4345 = vsel %vm261, %v4321, 0
    %v4348 = vsel %vm261, %v4322, 0
    %v4351 = vsel %vm261, %v4323, 0
    %v4354 = vsel %vm261, %v4324, 0
    %v4357 = vsel %vm261, %v4325, 0
    %v4360 = vsel %vm286, %v4327, 0
    %4362 = vmatprep.subr.mxu0 0.0
    %4363 = vmatpush1.msra.mxu0 %v4360
    %4364 = vmatprep.subr.mxu0 0.0
    %4365 = vmatpush1.msra.mxu0 0.0
    %4366 = vmatprep.subr.mxu0 0.0
    %4367 = vmatpush1.msra.mxu0 0.0
    %4368 = vmatprep.subr.mxu0 0.0
    %4369 = vmatpush1.msra.mxu0 0.0
    %4370 = vmatprep.subr.mxu0 0.0
    %4371 = vmatpush1.msra.mxu0 0.0
    %4372 = vmatprep.subr.mxu0 0.0
    %4373 = vmatpush1.msra.mxu0 0.0
    %4374 = vmatprep.subr.mxu0 0.0
    %4375 = vmatpush1.msra.mxu0 0.0
    %4376 = vmatprep.subr.mxu0 0.0
    %4377 = vmatpush1.msra.mxu0 0.0
    %4378 = vmatprep.subr.mxu0 0.0
    %4379 = vmatpush1.msra.mxu0 0.0
    %4380 = vmatprep.subr.mxu0 0.0
    %4381 = vmatpush1.msra.mxu0 0.0
    %4382 = vmatprep.subr.mxu0 0.0
    %4383 = vmatpush1.msra.mxu0 0.0
    %4384 = vmatprep.subr.mxu0 0.0
    %4385 = vmatpush1.msra.mxu0 0.0
    %4386 = vmatprep.subr.mxu0 0.0
    %4387 = vmatpush1.msra.mxu0 0.0
    %4388 = vmatprep.subr.mxu0 0.0
    %4389 = vmatpush1.msra.mxu0 0.0
    %4390 = vmatprep.subr.mxu0 0.0
    %4391 = vmatpush1.msra.mxu0 0.0
    %4392 = vmatprep.subr.mxu0 0.0
    %4393 = vmatpush1.msra.mxu0 0.0
    %4394 = vmatprep.subr.mxu0 0.0
    %4395 = vmatpush1.msra.mxu0 0.0
    %4396 = vmatprep.subr.mxu0 0.0
    %4397 = vmatpush1.msra.mxu0 0.0
    %4398 = vmatprep.subr.mxu0 0.0
    %4399 = vmatpush1.msra.mxu0 0.0
    %4400 = vmatprep.subr.mxu0 0.0
    %4401 = vmatpush1.msra.mxu0 0.0
    %4402 = vmatprep.subr.mxu0 0.0
    %4403 = vmatpush1.msra.mxu0 0.0
    %4404 = vmatprep.subr.mxu0 0.0
    %4405 = vmatpush1.msra.mxu0 0.0
    %4406 = vmatprep.subr.mxu0 0.0
    %4407 = vmatpush1.msra.mxu0 0.0
    %4408 = vmatprep.subr.mxu0 0.0
    %4409 = vmatpush1.msra.mxu0 0.0
    %4410 = vmatprep.subr.mxu0 0.0
    %4411 = vmatpush1.msra.mxu0 0.0
    %4412 = vmatprep.subr.mxu0 0.0
    %4413 = vmatpush1.msra.mxu0 0.0
    %4414 = vmatprep.subr.mxu0 0.0
    %4415 = vmatpush1.msra.mxu0 0.0
    %4416 = vmatprep.subr.mxu0 0.0
    %4417 = vmatpush1.msra.mxu0 0.0
    %4418 = vmatprep.subr.mxu0 0.0
    %4419 = vmatpush1.msra.mxu0 0.0
    %4420 = vmatprep.subr.mxu0 0.0
    %4421 = vmatpush1.msra.mxu0 0.0
    %4422 = vmatprep.subr.mxu0 0.0
    %4423 = vmatpush1.msra.mxu0 0.0
    %4424 = vmatprep.subr.mxu0 0.0
    %4425 = vmatpush1.msra.mxu0 0.0
    %4426 = vmatprep.mubr.f32.mxu0 0.0
    %4427 = vmatmul.mubr.f32.gmra.mrb[0].mxu0 %v4336
    %v4428 = vpop.f32.mrb[0].mxu0
    %v4429 = vadd.f32 %v4333, %v4428
    %v4430 = vpop.f32.mrb[0].mxu0
    %4431 = vmatprep.mubr.f32.mxu0 0.0
    %4432 = vmatmul.mubr.f32.gmra.mrb[0].mxu0 %v4339
    %v4433 = vpop.f32.mrb[0].mxu0
    %v4434 = vadd.f32 %v4333, %v4433
    %v4435 = vpop.f32.mrb[0].mxu0
    %4436 = vmatprep.mubr.f32.mxu0 0.0
    %4437 = vmatmul.mubr.f32.gmra.mrb[0].mxu0 %v4342
    %v4438 = vpop.f32.mrb[0].mxu0
    %v4439 = vadd.f32 %v4333, %v4438
    %v4440 = vpop.f32.mrb[0].mxu0
    %4441 = vmatprep.mubr.f32.mxu0 0.0
    %4442 = vmatmul.mubr.f32.gmra.mrb[0].mxu0 %v4345
    %v4443 = vpop.f32.mrb[0].mxu0
    %v4444 = vadd.f32 %v4333, %v4443
    %v4445 = vpop.f32.mrb[0].mxu0
    %4446 = vmatprep.mubr.f32.mxu0 0.0
    %4447 = vmatmul.mubr.f32.gmra.mrb[0].mxu0 %v4348
    %v4448 = vpop.f32.mrb[0].mxu0
    %v4449 = vadd.f32 %v4333, %v4448
    %v4450 = vpop.f32.mrb[0].mxu0
    %4451 = vmatprep.mubr.f32.mxu0 0.0
    %4452 = vmatmul.mubr.f32.gmra.mrb[0].mxu0 %v4351
    %v4453 = vpop.f32.mrb[0].mxu0
    %v4454 = vadd.f32 %v4333, %v4453
    %v4455 = vpop.f32.mrb[0].mxu0
    %4456 = vmatprep.mubr.f32.mxu0 0.0
    %4457 = vmatmul.mubr.f32.gmra.mrb[0].mxu0 %v4354
    %v4458 = vpop.f32.mrb[0].mxu0
    %v4459 = vadd.f32 %v4333, %v4458
    %v4460 = vpop.f32.mrb[0].mxu0
    %4461 = vmatprep.mubr.f32.mxu0 0.0
    %4462 = vmatmul.mubr.f32.gmra.mrb[0].mxu0 %v4357
    %v4463 = vpop.f32.mrb[0].mxu0
    %v4464 = vadd.f32 %v4333, %v4463
    %v4465 = vpop.f32.mrb[0].mxu0
    %4466 = vdwg.mxu0
    %v4467 = vld [vmem:[%s41] sm:$0xff]
    %v4468 = vld [vmem:[%s41 + $0x8] sm:$0xff]
    %v4469 = vld [vmem:[%s41 + $0x10] sm:$0xff]
    %v4470 = vld [vmem:[%s41 + $0x18] sm:$0xff]
    %4471 = vmatprep.subr.mxu0 0.0
    %4472 = vmatpush1.msra.mxu0 %v4467
    %4473 = vmatprep.subr.mxu0 0.0
    %4474 = vmatpush1.msra.mxu0 %v4468
    %4475 = vmatprep.subr.mxu0 0.0
    %4476 = vmatpush1.msra.mxu0 %v4469
    %4477 = vmatprep.subr.mxu0 0.0
    %4478 = vmatpush1.msra.mxu0 %v4470
    %4479 = vmatprep.subr.mxu0 0.0
    %4480 = vmatpush1.msra.mxu0 0.0
    %4481 = vmatprep.subr.mxu0 0.0
    %4482 = vmatpush1.msra.mxu0 0.0
    %4483 = vmatprep.subr.mxu0 0.0
    %4484 = vmatpush1.msra.mxu0 0.0
    %4485 = vmatprep.subr.mxu0 0.0
    %4486 = vmatpush1.msra.mxu0 0.0
    %4487 = vmatprep.subr.mxu0 0.0
    %4488 = vmatpush1.msra.mxu0 0.0
    %4489 = vmatprep.subr.mxu0 0.0
    %4490 = vmatpush1.msra.mxu0 0.0
    %4491 = vmatprep.subr.mxu0 0.0
    %4492 = vmatpush1.msra.mxu0 0.0
    %4493 = vmatprep.subr.mxu0 0.0
    %4494 = vmatpush1.msra.mxu0 0.0
    %4495 = vmatprep.subr.mxu0 0.0
    %4496 = vmatpush1.msra.mxu0 0.0
    %4497 = vmatprep.subr.mxu0 0.0
    %4498 = vmatpush1.msra.mxu0 0.0
    %4499 = vmatprep.subr.mxu0 0.0
    %4500 = vmatpush1.msra.mxu0 0.0
    %4501 = vmatprep.subr.mxu0 0.0
    %4502 = vmatpush1.msra.mxu0 0.0
    %4503 = vmatprep.subr.mxu0 0.0
    %4504 = vmatpush1.msra.mxu0 0.0
    %4505 = vmatprep.subr.mxu0 0.0
    %4506 = vmatpush1.msra.mxu0 0.0
    %4507 = vmatprep.subr.mxu0 0.0
    %4508 = vmatpush1.msra.mxu0 0.0
    %4509 = vmatprep.subr.mxu0 0.0
    %4510 = vmatpush1.msra.mxu0 0.0
    %4511 = vmatprep.subr.mxu0 0.0
    %4512 = vmatpush1.msra.mxu0 0.0
    %4513 = vmatprep.subr.mxu0 0.0
    %4514 = vmatpush1.msra.mxu0 0.0
    %4515 = vmatprep.subr.mxu0 0.0
    %4516 = vmatpush1.msra.mxu0 0.0
    %4517 = vmatprep.subr.mxu0 0.0
    %4518 = vmatpush1.msra.mxu0 0.0
    %4519 = vmatprep.subr.mxu0 0.0
    %4520 = vmatpush1.msra.mxu0 0.0
    %4521 = vmatprep.subr.mxu0 0.0
    %4522 = vmatpush1.msra.mxu0 0.0
    %4523 = vmatprep.subr.mxu0 0.0
    %4524 = vmatpush1.msra.mxu0 0.0
    %4525 = vmatprep.subr.mxu0 0.0
    %4526 = vmatpush1.msra.mxu0 0.0
    %4527 = vmatprep.subr.mxu0 0.0
    %4528 = vmatpush1.msra.mxu0 0.0
    %4529 = vmatprep.subr.mxu0 0.0
    %4530 = vmatpush1.msra.mxu0 0.0
    %4531 = vmatprep.subr.mxu0 0.0
    %4532 = vmatpush1.msra.mxu0 0.0
    %4533 = vmatprep.subr.mxu0 0.0
    %4534 = vmatpush1.msra.mxu0 0.0
    %4535 = vmatprep.mubr.f32.mxu0 0.0
    %4536 = vmatmul.mubr.f32.gmra.mrb[0].mxu0 %v401
    %v4537 = vpop.f32.mrb[0].mxu0
    %v4538 = vadd.f32 0.0, %v4537
    %v4539 = vpop.f32.mrb[0].mxu0
    %4540 = vdwg.mxu0
    %v4541 = vadd.f32 %v4429, %v4538
    %v4542 = vxor.u32 %v4541, 2147483648
    %v4543 = vmul.f32 %v4542, 1.442695
    %v4544 = vpow.pop %v4543
    %v4545 = vadd.f32 %v4544, 1.0
    %v4546 = vrcp.pop %v4545
    %v4547 = vmul.f32 1.0, %v4546
    %v4548 = vmul.f32 %v4547, 2.0
    %v4549 = vsub.f32 %v4548, 1.0
    %v4550 = vmul.f32 %v4547, 0.0
    %4552 = vrot.lane.b32.xlu0 %v4549, 64
    %v4553 = vpop.permute.xlu0 %4552
    %v4555 = vmul.f32 %v4547, %v4553
    %4557 = vrot.lane.b32.xlu0 %v4555, 32
    %v4558 = vpop.permute.xlu0 %4557
    %v4560 = vadd.f32 %v4550, %v4558
    %v4561 = vtanh.pop %v4560
    %4563 = vrot.lane.b32.xlu0 %v4561, 64
    %v4564 = vpop.permute.xlu0 %4563
    %v4566 = vmul.f32 %v4547, %v4564
    %4568 = vrot.lane.b32.xlu0 %v4566, 32
    %v4569 = vpop.permute.xlu0 %4568
    %4571 = vst.msk [vmem:[#allocation2] sm:$0xff] %vm399, %v4569
    %v4572 = vsel %vm399, %v4569, 0
    %4574 = vmatprep.subr.mxu0 0.0
    %4575 = vmatpush1.msra.mxu0 %v4467
    %4576 = vmatprep.subr.mxu0 0.0
    %4577 = vmatpush1.msra.mxu0 %v4468
    %4578 = vmatprep.subr.mxu0 0.0
    %4579 = vmatpush1.msra.mxu0 %v4469
    %4580 = vmatprep.subr.mxu0 0.0
    %4581 = vmatpush1.msra.mxu0 %v4470
    %4582 = vmatprep.subr.mxu0 0.0
    %4583 = vmatpush1.msra.mxu0 0.0
    %4584 = vmatprep.subr.mxu0 0.0
    %4585 = vmatpush1.msra.mxu0 0.0
    %4586 = vmatprep.subr.mxu0 0.0
    %4587 = vmatpush1.msra.mxu0 0.0
    %4588 = vmatprep.subr.mxu0 0.0
    %4589 = vmatpush1.msra.mxu0 0.0
    %4590 = vmatprep.subr.mxu0 0.0
    %4591 = vmatpush1.msra.mxu0 0.0
    %4592 = vmatprep.subr.mxu0 0.0
    %4593 = vmatpush1.msra.mxu0 0.0
    %4594 = vmatprep.subr.mxu0 0.0
    %4595 = vmatpush1.msra.mxu0 0.0
    %4596 = vmatprep.subr.mxu0 0.0
    %4597 = vmatpush1.msra.mxu0 0.0
    %4598 = vmatprep.subr.mxu0 0.0
    %4599 = vmatpush1.msra.mxu0 0.0
    %4600 = vmatprep.subr.mxu0 0.0
    %4601 = vmatpush1.msra.mxu0 0.0
    %4602 = vmatprep.subr.mxu0 0.0
    %4603 = vmatpush1.msra.mxu0 0.0
    %4604 = vmatprep.subr.mxu0 0.0
    %4605 = vmatpush1.msra.mxu0 0.0
    %4606 = vmatprep.subr.mxu0 0.0
    %4607 = vmatpush1.msra.mxu0 0.0
    %4608 = vmatprep.subr.mxu0 0.0
    %4609 = vmatpush1.msra.mxu0 0.0
    %4610 = vmatprep.subr.mxu0 0.0
    %4611 = vmatpush1.msra.mxu0 0.0
    %4612 = vmatprep.subr.mxu0 0.0
    %4613 = vmatpush1.msra.mxu0 0.0
    %4614 = vmatprep.subr.mxu0 0.0
    %4615 = vmatpush1.msra.mxu0 0.0
    %4616 = vmatprep.subr.mxu0 0.0
    %4617 = vmatpush1.msra.mxu0 0.0
    %4618 = vmatprep.subr.mxu0 0.0
    %4619 = vmatpush1.msra.mxu0 0.0
    %4620 = vmatprep.subr.mxu0 0.0
    %4621 = vmatpush1.msra.mxu0 0.0
    %4622 = vmatprep.subr.mxu0 0.0
    %4623 = vmatpush1.msra.mxu0 0.0
    %4624 = vmatprep.subr.mxu0 0.0
    %4625 = vmatpush1.msra.mxu0 0.0
    %4626 = vmatprep.subr.mxu0 0.0
    %4627 = vmatpush1.msra.mxu0 0.0
    %4628 = vmatprep.subr.mxu0 0.0
    %4629 = vmatpush1.msra.mxu0 0.0
    %4630 = vmatprep.subr.mxu0 0.0
    %4631 = vmatpush1.msra.mxu0 0.0
    %4632 = vmatprep.subr.mxu0 0.0
    %4633 = vmatpush1.msra.mxu0 0.0
    %4634 = vmatprep.subr.mxu0 0.0
    %4635 = vmatpush1.msra.mxu0 0.0
    %4636 = vmatprep.subr.mxu0 0.0
    %4637 = vmatpush1.msra.mxu0 0.0
    %4638 = vmatprep.mubr.f32.mxu0 0.0
    %4639 = vmatmul.mubr.f32.gmra.mrb[0].mxu0 %v4572
    %v4640 = vpop.f32.mrb[0].mxu0
    %v4641 = vadd.f32 0.0, %v4640
    %v4642 = vpop.f32.mrb[0].mxu0
    %4643 = vdwg.mxu0
    %v4644 = vadd.f32 %v4434, %v4641
    %v4645 = vxor.u32 %v4644, 2147483648
    %v4646 = vmul.f32 %v4645, 1.442695
    %v4647 = vpow.pop %v4646
    %v4648 = vadd.f32 %v4647, 1.0
    %v4649 = vrcp.pop %v4648
    %v4650 = vmul.f32 1.0, %v4649
    %v4651 = vmul.f32 %v4650, 2.0
    %v4652 = vsub.f32 %v4651, 1.0
    %v4653 = vmul.f32 %v4650, %v4560
    %4655 = vrot.lane.b32.xlu0 %v4652, 64
    %v4656 = vpop.permute.xlu0 %4655
    %v4658 = vmul.f32 %v4650, %v4656
    %4660 = vrot.lane.b32.xlu0 %v4658, 32
    %v4661 = vpop.permute.xlu0 %4660
    %v4663 = vadd.f32 %v4653, %v4661
    %v4664 = vtanh.pop %v4663
    %4666 = vrot.lane.b32.xlu0 %v4664, 64
    %v4667 = vpop.permute.xlu0 %4666
    %v4669 = vmul.f32 %v4650, %v4667
    %4671 = vrot.lane.b32.xlu0 %v4669, 32
    %v4672 = vpop.permute.xlu0 %4671
    %4674 = vst.msk [vmem:[#allocation2 + $0x8] sm:$0xff] %vm399, %v4672
    %v4675 = vsel %vm399, %v4672, 0
    %4677 = vmatprep.subr.mxu0 0.0
    %4678 = vmatpush1.msra.mxu0 %v4467
    %4679 = vmatprep.subr.mxu0 0.0
    %4680 = vmatpush1.msra.mxu0 %v4468
    %4681 = vmatprep.subr.mxu0 0.0
    %4682 = vmatpush1.msra.mxu0 %v4469
    %4683 = vmatprep.subr.mxu0 0.0
    %4684 = vmatpush1.msra.mxu0 %v4470
    %4685 = vmatprep.subr.mxu0 0.0
    %4686 = vmatpush1.msra.mxu0 0.0
    %4687 = vmatprep.subr.mxu0 0.0
    %4688 = vmatpush1.msra.mxu0 0.0
    %4689 = vmatprep.subr.mxu0 0.0
    %4690 = vmatpush1.msra.mxu0 0.0
    %4691 = vmatprep.subr.mxu0 0.0
    %4692 = vmatpush1.msra.mxu0 0.0
    %4693 = vmatprep.subr.mxu0 0.0
    %4694 = vmatpush1.msra.mxu0 0.0
    %4695 = vmatprep.subr.mxu0 0.0
    %4696 = vmatpush1.msra.mxu0 0.0
    %4697 = vmatprep.subr.mxu0 0.0
    %4698 = vmatpush1.msra.mxu0 0.0
    %4699 = vmatprep.subr.mxu0 0.0
    %4700 = vmatpush1.msra.mxu0 0.0
    %4701 = vmatprep.subr.mxu0 0.0
    %4702 = vmatpush1.msra.mxu0 0.0
    %4703 = vmatprep.subr.mxu0 0.0
    %4704 = vmatpush1.msra.mxu0 0.0
    %4705 = vmatprep.subr.mxu0 0.0
    %4706 = vmatpush1.msra.mxu0 0.0
    %4707 = vmatprep.subr.mxu0 0.0
    %4708 = vmatpush1.msra.mxu0 0.0
    %4709 = vmatprep.subr.mxu0 0.0
    %4710 = vmatpush1.msra.mxu0 0.0
    %4711 = vmatprep.subr.mxu0 0.0
    %4712 = vmatpush1.msra.mxu0 0.0
    %4713 = vmatprep.subr.mxu0 0.0
    %4714 = vmatpush1.msra.mxu0 0.0
    %4715 = vmatprep.subr.mxu0 0.0
    %4716 = vmatpush1.msra.mxu0 0.0
    %4717 = vmatprep.subr.mxu0 0.0
    %4718 = vmatpush1.msra.mxu0 0.0
    %4719 = vmatprep.subr.mxu0 0.0
    %4720 = vmatpush1.msra.mxu0 0.0
    %4721 = vmatprep.subr.mxu0 0.0
    %4722 = vmatpush1.msra.mxu0 0.0
    %4723 = vmatprep.subr.mxu0 0.0
    %4724 = vmatpush1.msra.mxu0 0.0
    %4725 = vmatprep.subr.mxu0 0.0
    %4726 = vmatpush1.msra.mxu0 0.0
    %4727 = vmatprep.subr.mxu0 0.0
    %4728 = vmatpush1.msra.mxu0 0.0
    %4729 = vmatprep.subr.mxu0 0.0
    %4730 = vmatpush1.msra.mxu0 0.0
    %4731 = vmatprep.subr.mxu0 0.0
    %4732 = vmatpush1.msra.mxu0 0.0
    %4733 = vmatprep.subr.mxu0 0.0
    %4734 = vmatpush1.msra.mxu0 0.0
    %4735 = vmatprep.subr.mxu0 0.0
    %4736 = vmatpush1.msra.mxu0 0.0
    %4737 = vmatprep.subr.mxu0 0.0
    %4738 = vmatpush1.msra.mxu0 0.0
    %4739 = vmatprep.subr.mxu0 0.0
    %4740 = vmatpush1.msra.mxu0 0.0
    %4741 = vmatprep.mubr.f32.mxu0 0.0
    %4742 = vmatmul.mubr.f32.gmra.mrb[0].mxu0 %v4675
    %v4743 = vpop.f32.mrb[0].mxu0
    %v4744 = vadd.f32 0.0, %v4743
    %v4745 = vpop.f32.mrb[0].mxu0
    %4746 = vdwg.mxu0
    %v4747 = vadd.f32 %v4439, %v4744
    %v4748 = vxor.u32 %v4747, 2147483648
    %v4749 = vmul.f32 %v4748, 1.442695
    %v4750 = vpow.pop %v4749
    %v4751 = vadd.f32 %v4750, 1.0
    %v4752 = vrcp.pop %v4751
    %v4753 = vmul.f32 1.0, %v4752
    %v4754 = vmul.f32 %v4753, 2.0
    %v4755 = vsub.f32 %v4754, 1.0
    %v4756 = vmul.f32 %v4753, %v4663
    %4758 = vrot.lane.b32.xlu0 %v4755, 64
    %v4759 = vpop.permute.xlu0 %4758
    %v4761 = vmul.f32 %v4753, %v4759
    %4763 = vrot.lane.b32.xlu0 %v4761, 32
    %v4764 = vpop.permute.xlu0 %4763
    %v4766 = vadd.f32 %v4756, %v4764
    %v4767 = vtanh.pop %v4766
    %4769 = vrot.lane.b32.xlu0 %v4767, 64
    %v4770 = vpop.permute.xlu0 %4769
    %v4772 = vmul.f32 %v4753, %v4770
    %4774 = vrot.lane.b32.xlu0 %v4772, 32
    %v4775 = vpop.permute.xlu0 %4774
    %4777 = vst.msk [vmem:[#allocation2 + $0x10] sm:$0xff] %vm399, %v4775
    %v4778 = vsel %vm399, %v4775, 0
    %4780 = vmatprep.subr.mxu0 0.0
    %4781 = vmatpush1.msra.mxu0 %v4467
    %4782 = vmatprep.subr.mxu0 0.0
    %4783 = vmatpush1.msra.mxu0 %v4468
    %4784 = vmatprep.subr.mxu0 0.0
    %4785 = vmatpush1.msra.mxu0 %v4469
    %4786 = vmatprep.subr.mxu0 0.0
    %4787 = vmatpush1.msra.mxu0 %v4470
    %4788 = vmatprep.subr.mxu0 0.0
    %4789 = vmatpush1.msra.mxu0 0.0
    %4790 = vmatprep.subr.mxu0 0.0
    %4791 = vmatpush1.msra.mxu0 0.0
    %4792 = vmatprep.subr.mxu0 0.0
    %4793 = vmatpush1.msra.mxu0 0.0
    %4794 = vmatprep.subr.mxu0 0.0
    %4795 = vmatpush1.msra.mxu0 0.0
    %4796 = vmatprep.subr.mxu0 0.0
    %4797 = vmatpush1.msra.mxu0 0.0
    %4798 = vmatprep.subr.mxu0 0.0
    %4799 = vmatpush1.msra.mxu0 0.0
    %4800 = vmatprep.subr.mxu0 0.0
    %4801 = vmatpush1.msra.mxu0 0.0
    %4802 = vmatprep.subr.mxu0 0.0
    %4803 = vmatpush1.msra.mxu0 0.0
    %4804 = vmatprep.subr.mxu0 0.0
    %4805 = vmatpush1.msra.mxu0 0.0
    %4806 = vmatprep.subr.mxu0 0.0
    %4807 = vmatpush1.msra.mxu0 0.0
    %4808 = vmatprep.subr.mxu0 0.0
    %4809 = vmatpush1.msra.mxu0 0.0
    %4810 = vmatprep.subr.mxu0 0.0
    %4811 = vmatpush1.msra.mxu0 0.0
    %4812 = vmatprep.subr.mxu0 0.0
    %4813 = vmatpush1.msra.mxu0 0.0
    %4814 = vmatprep.subr.mxu0 0.0
    %4815 = vmatpush1.msra.mxu0 0.0
    %4816 = vmatprep.subr.mxu0 0.0
    %4817 = vmatpush1.msra.mxu0 0.0
    %4818 = vmatprep.subr.mxu0 0.0
    %4819 = vmatpush1.msra.mxu0 0.0
    %4820 = vmatprep.subr.mxu0 0.0
    %4821 = vmatpush1.msra.mxu0 0.0
    %4822 = vmatprep.subr.mxu0 0.0
    %4823 = vmatpush1.msra.mxu0 0.0
    %4824 = vmatprep.subr.mxu0 0.0
    %4825 = vmatpush1.msra.mxu0 0.0
    %4826 = vmatprep.subr.mxu0 0.0
    %4827 = vmatpush1.msra.mxu0 0.0
    %4828 = vmatprep.subr.mxu0 0.0
    %4829 = vmatpush1.msra.mxu0 0.0
    %4830 = vmatprep.subr.mxu0 0.0
    %4831 = vmatpush1.msra.mxu0 0.0
    %4832 = vmatprep.subr.mxu0 0.0
    %4833 = vmatpush1.msra.mxu0 0.0
    %4834 = vmatprep.subr.mxu0 0.0
    %4835 = vmatpush1.msra.mxu0 0.0
    %4836 = vmatprep.subr.mxu0 0.0
    %4837 = vmatpush1.msra.mxu0 0.0
    %4838 = vmatprep.subr.mxu0 0.0
    %4839 = vmatpush1.msra.mxu0 0.0
    %4840 = vmatprep.subr.mxu0 0.0
    %4841 = vmatpush1.msra.mxu0 0.0
    %4842 = vmatprep.subr.mxu0 0.0
    %4843 = vmatpush1.msra.mxu0 0.0
    %4844 = vmatprep.mubr.f32.mxu0 0.0
    %4845 = vmatmul.mubr.f32.gmra.mrb[0].mxu0 %v4778
    %v4846 = vpop.f32.mrb[0].mxu0
    %v4847 = vadd.f32 0.0, %v4846
    %v4848 = vpop.f32.mrb[0].mxu0
    %4849 = vdwg.mxu0
    %v4850 = vadd.f32 %v4444, %v4847
    %v4851 = vxor.u32 %v4850, 2147483648
    %v4852 = vmul.f32 %v4851, 1.442695
    %v4853 = vpow.pop %v4852
    %v4854 = vadd.f32 %v4853, 1.0
    %v4855 = vrcp.pop %v4854
    %v4856 = vmul.f32 1.0, %v4855
    %v4857 = vmul.f32 %v4856, 2.0
    %v4858 = vsub.f32 %v4857, 1.0
    %v4859 = vmul.f32 %v4856, %v4766
    %4861 = vrot.lane.b32.xlu0 %v4858, 64
    %v4862 = vpop.permute.xlu0 %4861
    %v4864 = vmul.f32 %v4856, %v4862
    %4866 = vrot.lane.b32.xlu0 %v4864, 32
    %v4867 = vpop.permute.xlu0 %4866
    %v4869 = vadd.f32 %v4859, %v4867
    %v4870 = vtanh.pop %v4869
    %4872 = vrot.lane.b32.xlu0 %v4870, 64
    %v4873 = vpop.permute.xlu0 %4872
    %v4875 = vmul.f32 %v4856, %v4873
    %4877 = vrot.lane.b32.xlu0 %v4875, 32
    %v4878 = vpop.permute.xlu0 %4877
    %4880 = vst.msk [vmem:[#allocation2 + $0x18] sm:$0xff] %vm399, %v4878
    %v4881 = vsel %vm399, %v4878, 0
    %4883 = vmatprep.subr.mxu0 0.0
    %4884 = vmatpush1.msra.mxu0 %v4467
    %4885 = vmatprep.subr.mxu0 0.0
    %4886 = vmatpush1.msra.mxu0 %v4468
    %4887 = vmatprep.subr.mxu0 0.0
    %4888 = vmatpush1.msra.mxu0 %v4469
    %4889 = vmatprep.subr.mxu0 0.0
    %4890 = vmatpush1.msra.mxu0 %v4470
    %4891 = vmatprep.subr.mxu0 0.0
    %4892 = vmatpush1.msra.mxu0 0.0
    %4893 = vmatprep.subr.mxu0 0.0
    %4894 = vmatpush1.msra.mxu0 0.0
    %4895 = vmatprep.subr.mxu0 0.0
    %4896 = vmatpush1.msra.mxu0 0.0
    %4897 = vmatprep.subr.mxu0 0.0
    %4898 = vmatpush1.msra.mxu0 0.0
    %4899 = vmatprep.subr.mxu0 0.0
    %4900 = vmatpush1.msra.mxu0 0.0
    %4901 = vmatprep.subr.mxu0 0.0
    %4902 = vmatpush1.msra.mxu0 0.0
    %4903 = vmatprep.subr.mxu0 0.0
    %4904 = vmatpush1.msra.mxu0 0.0
    %4905 = vmatprep.subr.mxu0 0.0
    %4906 = vmatpush1.msra.mxu0 0.0
    %4907 = vmatprep.subr.mxu0 0.0
    %4908 = vmatpush1.msra.mxu0 0.0
    %4909 = vmatprep.subr.mxu0 0.0
    %4910 = vmatpush1.msra.mxu0 0.0
    %4911 = vmatprep.subr.mxu0 0.0
    %4912 = vmatpush1.msra.mxu0 0.0
    %4913 = vmatprep.subr.mxu0 0.0
    %4914 = vmatpush1.msra.mxu0 0.0
    %4915 = vmatprep.subr.mxu0 0.0
    %4916 = vmatpush1.msra.mxu0 0.0
    %4917 = vmatprep.subr.mxu0 0.0
    %4918 = vmatpush1.msra.mxu0 0.0
    %4919 = vmatprep.subr.mxu0 0.0
    %4920 = vmatpush1.msra.mxu0 0.0
    %4921 = vmatprep.subr.mxu0 0.0
    %4922 = vmatpush1.msra.mxu0 0.0
    %4923 = vmatprep.subr.mxu0 0.0
    %4924 = vmatpush1.msra.mxu0 0.0
    %4925 = vmatprep.subr.mxu0 0.0
    %4926 = vmatpush1.msra.mxu0 0.0
    %4927 = vmatprep.subr.mxu0 0.0
    %4928 = vmatpush1.msra.mxu0 0.0
    %4929 = vmatprep.subr.mxu0 0.0
    %4930 = vmatpush1.msra.mxu0 0.0
    %4931 = vmatprep.subr.mxu0 0.0
    %4932 = vmatpush1.msra.mxu0 0.0
    %4933 = vmatprep.subr.mxu0 0.0
    %4934 = vmatpush1.msra.mxu0 0.0
    %4935 = vmatprep.subr.mxu0 0.0
    %4936 = vmatpush1.msra.mxu0 0.0
    %4937 = vmatprep.subr.mxu0 0.0
    %4938 = vmatpush1.msra.mxu0 0.0
    %4939 = vmatprep.subr.mxu0 0.0
    %4940 = vmatpush1.msra.mxu0 0.0
    %4941 = vmatprep.subr.mxu0 0.0
    %4942 = vmatpush1.msra.mxu0 0.0
    %4943 = vmatprep.subr.mxu0 0.0
    %4944 = vmatpush1.msra.mxu0 0.0
    %4945 = vmatprep.subr.mxu0 0.0
    %4946 = vmatpush1.msra.mxu0 0.0
    %4947 = vmatprep.mubr.f32.mxu0 0.0
    %4948 = vmatmul.mubr.f32.gmra.mrb[0].mxu0 %v4881
    %v4949 = vpop.f32.mrb[0].mxu0
    %v4950 = vadd.f32 0.0, %v4949
    %v4951 = vpop.f32.mrb[0].mxu0
    %4952 = vdwg.mxu0
    %v4953 = vadd.f32 %v4449, %v4950
    %v4954 = vxor.u32 %v4953, 2147483648
    %v4955 = vmul.f32 %v4954, 1.442695
    %v4956 = vpow.pop %v4955
    %v4957 = vadd.f32 %v4956, 1.0
    %v4958 = vrcp.pop %v4957
    %v4959 = vmul.f32 1.0, %v4958
    %v4960 = vmul.f32 %v4959, 2.0
    %v4961 = vsub.f32 %v4960, 1.0
    %v4962 = vmul.f32 %v4959, %v4869
    %4964 = vrot.lane.b32.xlu0 %v4961, 64
    %v4965 = vpop.permute.xlu0 %4964
    %v4967 = vmul.f32 %v4959, %v4965
    %4969 = vrot.lane.b32.xlu0 %v4967, 32
    %v4970 = vpop.permute.xlu0 %4969
    %v4972 = vadd.f32 %v4962, %v4970
    %v4973 = vtanh.pop %v4972
    %4975 = vrot.lane.b32.xlu0 %v4973, 64
    %v4976 = vpop.permute.xlu0 %4975
    %v4978 = vmul.f32 %v4959, %v4976
    %4980 = vrot.lane.b32.xlu0 %v4978, 32
    %v4981 = vpop.permute.xlu0 %4980
    %4983 = vst.msk [vmem:[#allocation2 + $0x20] sm:$0xff] %vm399, %v4981
    %v4984 = vsel %vm399, %v4981, 0
    %4986 = vmatprep.subr.mxu0 0.0
    %4987 = vmatpush1.msra.mxu0 %v4467
    %4988 = vmatprep.subr.mxu0 0.0
    %4989 = vmatpush1.msra.mxu0 %v4468
    %4990 = vmatprep.subr.mxu0 0.0
    %4991 = vmatpush1.msra.mxu0 %v4469
    %4992 = vmatprep.subr.mxu0 0.0
    %4993 = vmatpush1.msra.mxu0 %v4470
    %4994 = vmatprep.subr.mxu0 0.0
    %4995 = vmatpush1.msra.mxu0 0.0
    %4996 = vmatprep.subr.mxu0 0.0
    %4997 = vmatpush1.msra.mxu0 0.0
    %4998 = vmatprep.subr.mxu0 0.0
    %4999 = vmatpush1.msra.mxu0 0.0
    %5000 = vmatprep.subr.mxu0 0.0
    %5001 = vmatpush1.msra.mxu0 0.0
    %5002 = vmatprep.subr.mxu0 0.0
    %5003 = vmatpush1.msra.mxu0 0.0
    %5004 = vmatprep.subr.mxu0 0.0
    %5005 = vmatpush1.msra.mxu0 0.0
    %5006 = vmatprep.subr.mxu0 0.0
    %5007 = vmatpush1.msra.mxu0 0.0
    %5008 = vmatprep.subr.mxu0 0.0
    %5009 = vmatpush1.msra.mxu0 0.0
    %5010 = vmatprep.subr.mxu0 0.0
    %5011 = vmatpush1.msra.mxu0 0.0
    %5012 = vmatprep.subr.mxu0 0.0
    %5013 = vmatpush1.msra.mxu0 0.0
    %5014 = vmatprep.subr.mxu0 0.0
    %5015 = vmatpush1.msra.mxu0 0.0
    %5016 = vmatprep.subr.mxu0 0.0
    %5017 = vmatpush1.msra.mxu0 0.0
    %5018 = vmatprep.subr.mxu0 0.0
    %5019 = vmatpush1.msra.mxu0 0.0
    %5020 = vmatprep.subr.mxu0 0.0
    %5021 = vmatpush1.msra.mxu0 0.0
    %5022 = vmatprep.subr.mxu0 0.0
    %5023 = vmatpush1.msra.mxu0 0.0
    %5024 = vmatprep.subr.mxu0 0.0
    %5025 = vmatpush1.msra.mxu0 0.0
    %5026 = vmatprep.subr.mxu0 0.0
    %5027 = vmatpush1.msra.mxu0 0.0
    %5028 = vmatprep.subr.mxu0 0.0
    %5029 = vmatpush1.msra.mxu0 0.0
    %5030 = vmatprep.subr.mxu0 0.0
    %5031 = vmatpush1.msra.mxu0 0.0
    %5032 = vmatprep.subr.mxu0 0.0
    %5033 = vmatpush1.msra.mxu0 0.0
    %5034 = vmatprep.subr.mxu0 0.0
    %5035 = vmatpush1.msra.mxu0 0.0
    %5036 = vmatprep.subr.mxu0 0.0
    %5037 = vmatpush1.msra.mxu0 0.0
    %5038 = vmatprep.subr.mxu0 0.0
    %5039 = vmatpush1.msra.mxu0 0.0
    %5040 = vmatprep.subr.mxu0 0.0
    %5041 = vmatpush1.msra.mxu0 0.0
    %5042 = vmatprep.subr.mxu0 0.0
    %5043 = vmatpush1.msra.mxu0 0.0
    %5044 = vmatprep.subr.mxu0 0.0
    %5045 = vmatpush1.msra.mxu0 0.0
    %5046 = vmatprep.subr.mxu0 0.0
    %5047 = vmatpush1.msra.mxu0 0.0
    %5048 = vmatprep.subr.mxu0 0.0
    %5049 = vmatpush1.msra.mxu0 0.0
    %5050 = vmatprep.mubr.f32.mxu0 0.0
    %5051 = vmatmul.mubr.f32.gmra.mrb[0].mxu0 %v4984
    %v5052 = vpop.f32.mrb[0].mxu0
    %v5053 = vadd.f32 0.0, %v5052
    %v5054 = vpop.f32.mrb[0].mxu0
    %5055 = vdwg.mxu0
    %v5056 = vadd.f32 %v4454, %v5053
    %v5057 = vxor.u32 %v5056, 2147483648
    %v5058 = vmul.f32 %v5057, 1.442695
    %v5059 = vpow.pop %v5058
    %v5060 = vadd.f32 %v5059, 1.0
    %v5061 = vrcp.pop %v5060
    %v5062 = vmul.f32 1.0, %v5061
    %v5063 = vmul.f32 %v5062, 2.0
    %v5064 = vsub.f32 %v5063, 1.0
    %v5065 = vmul.f32 %v5062, %v4972
    %5067 = vrot.lane.b32.xlu0 %v5064, 64
    %v5068 = vpop.permute.xlu0 %5067
    %v5070 = vmul.f32 %v5062, %v5068
    %5072 = vrot.lane.b32.xlu0 %v5070, 32
    %v5073 = vpop.permute.xlu0 %5072
    %v5075 = vadd.f32 %v5065, %v5073
    %v5076 = vtanh.pop %v5075
    %5078 = vrot.lane.b32.xlu0 %v5076, 64
    %v5079 = vpop.permute.xlu0 %5078
    %v5081 = vmul.f32 %v5062, %v5079
    %5083 = vrot.lane.b32.xlu0 %v5081, 32
    %v5084 = vpop.permute.xlu0 %5083
    %5086 = vst.msk [vmem:[#allocation2 + $0x28] sm:$0xff] %vm399, %v5084
    %v5087 = vsel %vm399, %v5084, 0
    %5089 = vmatprep.subr.mxu0 0.0
    %5090 = vmatpush1.msra.mxu0 %v4467
    %5091 = vmatprep.subr.mxu0 0.0
    %5092 = vmatpush1.msra.mxu0 %v4468
    %5093 = vmatprep.subr.mxu0 0.0
    %5094 = vmatpush1.msra.mxu0 %v4469
    %5095 = vmatprep.subr.mxu0 0.0
    %5096 = vmatpush1.msra.mxu0 %v4470
    %5097 = vmatprep.subr.mxu0 0.0
    %5098 = vmatpush1.msra.mxu0 0.0
    %5099 = vmatprep.subr.mxu0 0.0
    %5100 = vmatpush1.msra.mxu0 0.0
    %5101 = vmatprep.subr.mxu0 0.0
    %5102 = vmatpush1.msra.mxu0 0.0
    %5103 = vmatprep.subr.mxu0 0.0
    %5104 = vmatpush1.msra.mxu0 0.0
    %5105 = vmatprep.subr.mxu0 0.0
    %5106 = vmatpush1.msra.mxu0 0.0
    %5107 = vmatprep.subr.mxu0 0.0
    %5108 = vmatpush1.msra.mxu0 0.0
    %5109 = vmatprep.subr.mxu0 0.0
    %5110 = vmatpush1.msra.mxu0 0.0
    %5111 = vmatprep.subr.mxu0 0.0
    %5112 = vmatpush1.msra.mxu0 0.0
    %5113 = vmatprep.subr.mxu0 0.0
    %5114 = vmatpush1.msra.mxu0 0.0
    %5115 = vmatprep.subr.mxu0 0.0
    %5116 = vmatpush1.msra.mxu0 0.0
    %5117 = vmatprep.subr.mxu0 0.0
    %5118 = vmatpush1.msra.mxu0 0.0
    %5119 = vmatprep.subr.mxu0 0.0
    %5120 = vmatpush1.msra.mxu0 0.0
    %5121 = vmatprep.subr.mxu0 0.0
    %5122 = vmatpush1.msra.mxu0 0.0
    %5123 = vmatprep.subr.mxu0 0.0
    %5124 = vmatpush1.msra.mxu0 0.0
    %5125 = vmatprep.subr.mxu0 0.0
    %5126 = vmatpush1.msra.mxu0 0.0
    %5127 = vmatprep.subr.mxu0 0.0
    %5128 = vmatpush1.msra.mxu0 0.0
    %5129 = vmatprep.subr.mxu0 0.0
    %5130 = vmatpush1.msra.mxu0 0.0
    %5131 = vmatprep.subr.mxu0 0.0
    %5132 = vmatpush1.msra.mxu0 0.0
    %5133 = vmatprep.subr.mxu0 0.0
    %5134 = vmatpush1.msra.mxu0 0.0
    %5135 = vmatprep.subr.mxu0 0.0
    %5136 = vmatpush1.msra.mxu0 0.0
    %5137 = vmatprep.subr.mxu0 0.0
    %5138 = vmatpush1.msra.mxu0 0.0
    %5139 = vmatprep.subr.mxu0 0.0
    %5140 = vmatpush1.msra.mxu0 0.0
    %5141 = vmatprep.subr.mxu0 0.0
    %5142 = vmatpush1.msra.mxu0 0.0
    %5143 = vmatprep.subr.mxu0 0.0
    %5144 = vmatpush1.msra.mxu0 0.0
    %5145 = vmatprep.subr.mxu0 0.0
    %5146 = vmatpush1.msra.mxu0 0.0
    %5147 = vmatprep.subr.mxu0 0.0
    %5148 = vmatpush1.msra.mxu0 0.0
    %5149 = vmatprep.subr.mxu0 0.0
    %5150 = vmatpush1.msra.mxu0 0.0
    %5151 = vmatprep.subr.mxu0 0.0
    %5152 = vmatpush1.msra.mxu0 0.0
    %5153 = vmatprep.mubr.f32.mxu0 0.0
    %5154 = vmatmul.mubr.f32.gmra.mrb[0].mxu0 %v5087
    %v5155 = vpop.f32.mrb[0].mxu0
    %v5156 = vadd.f32 0.0, %v5155
    %v5157 = vpop.f32.mrb[0].mxu0
    %5158 = vdwg.mxu0
    %v5159 = vadd.f32 %v4459, %v5156
    %v5160 = vxor.u32 %v5159, 2147483648
    %v5161 = vmul.f32 %v5160, 1.442695
    %v5162 = vpow.pop %v5161
    %v5163 = vadd.f32 %v5162, 1.0
    %v5164 = vrcp.pop %v5163
    %v5165 = vmul.f32 1.0, %v5164
    %v5166 = vmul.f32 %v5165, 2.0
    %v5167 = vsub.f32 %v5166, 1.0
    %v5168 = vmul.f32 %v5165, %v5075
    %5170 = vrot.lane.b32.xlu0 %v5167, 64
    %v5171 = vpop.permute.xlu0 %5170
    %v5173 = vmul.f32 %v5165, %v5171
    %5175 = vrot.lane.b32.xlu0 %v5173, 32
    %v5176 = vpop.permute.xlu0 %5175
    %v5178 = vadd.f32 %v5168, %v5176
    %v5179 = vtanh.pop %v5178
    %5181 = vrot.lane.b32.xlu0 %v5179, 64
    %v5182 = vpop.permute.xlu0 %5181
    %v5184 = vmul.f32 %v5165, %v5182
    %5186 = vrot.lane.b32.xlu0 %v5184, 32
    %v5187 = vpop.permute.xlu0 %5186
    %5189 = vst.msk [vmem:[#allocation2 + $0x30] sm:$0xff] %vm399, %v5187
    %v5190 = vsel %vm399, %v5187, 0
    %5192 = vmatprep.subr.mxu0 0.0
    %5193 = vmatpush1.msra.mxu0 %v4467
    %5194 = vmatprep.subr.mxu0 0.0
    %5195 = vmatpush1.msra.mxu0 %v4468
    %5196 = vmatprep.subr.mxu0 0.0
    %5197 = vmatpush1.msra.mxu0 %v4469
    %5198 = vmatprep.subr.mxu0 0.0
    %5199 = vmatpush1.msra.mxu0 %v4470
    %5200 = vmatprep.subr.mxu0 0.0
    %5201 = vmatpush1.msra.mxu0 0.0
    %5202 = vmatprep.subr.mxu0 0.0
    %5203 = vmatpush1.msra.mxu0 0.0
    %5204 = vmatprep.subr.mxu0 0.0
    %5205 = vmatpush1.msra.mxu0 0.0
    %5206 = vmatprep.subr.mxu0 0.0
    %5207 = vmatpush1.msra.mxu0 0.0
    %5208 = vmatprep.subr.mxu0 0.0
    %5209 = vmatpush1.msra.mxu0 0.0
    %5210 = vmatprep.subr.mxu0 0.0
    %5211 = vmatpush1.msra.mxu0 0.0
    %5212 = vmatprep.subr.mxu0 0.0
    %5213 = vmatpush1.msra.mxu0 0.0
    %5214 = vmatprep.subr.mxu0 0.0
    %5215 = vmatpush1.msra.mxu0 0.0
    %5216 = vmatprep.subr.mxu0 0.0
    %5217 = vmatpush1.msra.mxu0 0.0
    %5218 = vmatprep.subr.mxu0 0.0
    %5219 = vmatpush1.msra.mxu0 0.0
    %5220 = vmatprep.subr.mxu0 0.0
    %5221 = vmatpush1.msra.mxu0 0.0
    %5222 = vmatprep.subr.mxu0 0.0
    %5223 = vmatpush1.msra.mxu0 0.0
    %5224 = vmatprep.subr.mxu0 0.0
    %5225 = vmatpush1.msra.mxu0 0.0
    %5226 = vmatprep.subr.mxu0 0.0
    %5227 = vmatpush1.msra.mxu0 0.0
    %5228 = vmatprep.subr.mxu0 0.0
    %5229 = vmatpush1.msra.mxu0 0.0
    %5230 = vmatprep.subr.mxu0 0.0
    %5231 = vmatpush1.msra.mxu0 0.0
    %5232 = vmatprep.subr.mxu0 0.0
    %5233 = vmatpush1.msra.mxu0 0.0
    %5234 = vmatprep.subr.mxu0 0.0
    %5235 = vmatpush1.msra.mxu0 0.0
    %5236 = vmatprep.subr.mxu0 0.0
    %5237 = vmatpush1.msra.mxu0 0.0
    %5238 = vmatprep.subr.mxu0 0.0
    %5239 = vmatpush1.msra.mxu0 0.0
    %5240 = vmatprep.subr.mxu0 0.0
    %5241 = vmatpush1.msra.mxu0 0.0
    %5242 = vmatprep.subr.mxu0 0.0
    %5243 = vmatpush1.msra.mxu0 0.0
    %5244 = vmatprep.subr.mxu0 0.0
    %5245 = vmatpush1.msra.mxu0 0.0
    %5246 = vmatprep.subr.mxu0 0.0
    %5247 = vmatpush1.msra.mxu0 0.0
    %5248 = vmatprep.subr.mxu0 0.0
    %5249 = vmatpush1.msra.mxu0 0.0
    %5250 = vmatprep.subr.mxu0 0.0
    %5251 = vmatpush1.msra.mxu0 0.0
    %5252 = vmatprep.subr.mxu0 0.0
    %5253 = vmatpush1.msra.mxu0 0.0
    %5254 = vmatprep.subr.mxu0 0.0
    %5255 = vmatpush1.msra.mxu0 0.0
    %5256 = vmatprep.mubr.f32.mxu0 0.0
    %5257 = vmatmul.mubr.f32.gmra.mrb[0].mxu0 %v5190
    %v5258 = vpop.f32.mrb[0].mxu0
    %v5259 = vadd.f32 0.0, %v5258
    %v5260 = vpop.f32.mrb[0].mxu0
    %5261 = vdwg.mxu0
    %v5262 = vadd.f32 %v4464, %v5259
    %v5263 = vxor.u32 %v5262, 2147483648
    %v5264 = vmul.f32 %v5263, 1.442695
    %v5265 = vpow.pop %v5264
    %v5266 = vadd.f32 %v5265, 1.0
    %v5267 = vrcp.pop %v5266
    %v5268 = vmul.f32 1.0, %v5267
    %v5269 = vmul.f32 %v5268, 2.0
    %v5270 = vsub.f32 %v5269, 1.0
    %v5271 = vmul.f32 %v5268, %v5178
    %5273 = vrot.lane.b32.xlu0 %v5270, 64
    %v5274 = vpop.permute.xlu0 %5273
    %v5276 = vmul.f32 %v5268, %v5274
    %5278 = vrot.lane.b32.xlu0 %v5276, 32
    %v5279 = vpop.permute.xlu0 %5278
    %v5281 = vadd.f32 %v5271, %v5279
    %v5282 = vtanh.pop %v5281
    %5284 = vrot.lane.b32.xlu0 %v5282, 64
    %v5285 = vpop.permute.xlu0 %5284
    %v5287 = vmul.f32 %v5268, %v5285
    %5289 = vrot.lane.b32.xlu0 %v5287, 32
    %v5290 = vpop.permute.xlu0 %5289
    %5292 = vst.msk [vmem:[#allocation2 + $0x38] sm:$0xff] %vm399, %v5290
    %v5293 = vld [vmem:[#allocation2] sm:$0xff]
    %v5294 = vld [vmem:[#allocation2 + $0x8] sm:$0xff]
    %v5295 = vld [vmem:[#allocation2 + $0x10] sm:$0xff]
    %v5296 = vld [vmem:[#allocation2 + $0x18] sm:$0xff]
    %v5297 = vld [vmem:[#allocation2 + $0x20] sm:$0xff]
    %v5298 = vld [vmem:[#allocation2 + $0x28] sm:$0xff]
    %v5299 = vld [vmem:[#allocation2 + $0x30] sm:$0xff]
    %v5300 = vld [vmem:[#allocation2 + $0x38] sm:$0xff]
    %v5301 = vld [vmem:[#allocation15] sm:$0xff]
    %v5302 = vld [vmem:[#allocation15 + $0x8] sm:$0xff]
    %v5303 = vld [vmem:[#allocation15 + $0x10] sm:$0xff]
    %v5304 = vld [vmem:[#allocation15 + $0x18] sm:$0xff]
    %v5305 = vld [vmem:[#allocation18] sm:$0x1]
    %v5307 = vlaneseq
    %v5308 = vshrl.u32 %v5307, 7
    %v5309 = vsub.s32 0, %v5308
    %v5310 = vrot.slane %v5305, %v5309
    %v5313 = vsel %vm399, %v5293, 0
    %v5316 = vsel %vm399, %v5294, 0
    %v5319 = vsel %vm399, %v5295, 0
    %v5322 = vsel %vm399, %v5296, 0
    %v5325 = vsel %vm399, %v5297, 0
    %v5328 = vsel %vm399, %v5298, 0
    %v5331 = vsel %vm399, %v5299, 0
    %v5334 = vsel %vm399, %v5300, 0
    %5336 = vmatprep.subr.mxu0 0.0
    %5337 = vmatpush1.msra.mxu0 %v5301
    %5338 = vmatprep.subr.mxu0 0.0
    %5339 = vmatpush1.msra.mxu0 %v5302
    %5340 = vmatprep.subr.mxu0 0.0
    %5341 = vmatpush1.msra.mxu0 %v5303
    %5342 = vmatprep.subr.mxu0 0.0
    %5343 = vmatpush1.msra.mxu0 %v5304
    %5344 = vmatprep.subr.mxu0 0.0
    %5345 = vmatpush1.msra.mxu0 0.0
    %5346 = vmatprep.subr.mxu0 0.0
    %5347 = vmatpush1.msra.mxu0 0.0
    %5348 = vmatprep.subr.mxu0 0.0
    %5349 = vmatpush1.msra.mxu0 0.0
    %5350 = vmatprep.subr.mxu0 0.0
    %5351 = vmatpush1.msra.mxu0 0.0
    %5352 = vmatprep.subr.mxu0 0.0
    %5353 = vmatpush1.msra.mxu0 0.0
    %5354 = vmatprep.subr.mxu0 0.0
    %5355 = vmatpush1.msra.mxu0 0.0
    %5356 = vmatprep.subr.mxu0 0.0
    %5357 = vmatpush1.msra.mxu0 0.0
    %5358 = vmatprep.subr.mxu0 0.0
    %5359 = vmatpush1.msra.mxu0 0.0
    %5360 = vmatprep.subr.mxu0 0.0
    %5361 = vmatpush1.msra.mxu0 0.0
    %5362 = vmatprep.subr.mxu0 0.0
    %5363 = vmatpush1.msra.mxu0 0.0
    %5364 = vmatprep.subr.mxu0 0.0
    %5365 = vmatpush1.msra.mxu0 0.0
    %5366 = vmatprep.subr.mxu0 0.0
    %5367 = vmatpush1.msra.mxu0 0.0
    %5368 = vmatprep.subr.mxu0 0.0
    %5369 = vmatpush1.msra.mxu0 0.0
    %5370 = vmatprep.subr.mxu0 0.0
    %5371 = vmatpush1.msra.mxu0 0.0
    %5372 = vmatprep.subr.mxu0 0.0
    %5373 = vmatpush1.msra.mxu0 0.0
    %5374 = vmatprep.subr.mxu0 0.0
    %5375 = vmatpush1.msra.mxu0 0.0
    %5376 = vmatprep.subr.mxu0 0.0
    %5377 = vmatpush1.msra.mxu0 0.0
    %5378 = vmatprep.subr.mxu0 0.0
    %5379 = vmatpush1.msra.mxu0 0.0
    %5380 = vmatprep.subr.mxu0 0.0
    %5381 = vmatpush1.msra.mxu0 0.0
    %5382 = vmatprep.subr.mxu0 0.0
    %5383 = vmatpush1.msra.mxu0 0.0
    %5384 = vmatprep.subr.mxu0 0.0
    %5385 = vmatpush1.msra.mxu0 0.0
    %5386 = vmatprep.subr.mxu0 0.0
    %5387 = vmatpush1.msra.mxu0 0.0
    %5388 = vmatprep.subr.mxu0 0.0
    %5389 = vmatpush1.msra.mxu0 0.0
    %5390 = vmatprep.subr.mxu0 0.0
    %5391 = vmatpush1.msra.mxu0 0.0
    %5392 = vmatprep.subr.mxu0 0.0
    %5393 = vmatpush1.msra.mxu0 0.0
    %5394 = vmatprep.subr.mxu0 0.0
    %5395 = vmatpush1.msra.mxu0 0.0
    %5396 = vmatprep.subr.mxu0 0.0
    %5397 = vmatpush1.msra.mxu0 0.0
    %5398 = vmatprep.subr.mxu0 0.0
    %5399 = vmatpush1.msra.mxu0 0.0
    %5400 = vmatprep.mubr.f32.mxu0 0.0
    %5401 = vmatmul.mubr.f32.gmra.mrb[0].mxu0 %v5313
    %v5402 = vpop.f32.mrb[0].mxu0
    %v5403 = vadd.f32 %v5310, %v5402
    %v5404 = vpop.f32.mrb[0].mxu0
    %5405 = vmatprep.mubr.f32.mxu0 0.0
    %5406 = vmatmul.mubr.f32.gmra.mrb[0].mxu0 %v5316
    %v5407 = vpop.f32.mrb[0].mxu0
    %v5408 = vadd.f32 %v5310, %v5407
    %v5409 = vpop.f32.mrb[0].mxu0
    %5410 = vmatprep.mubr.f32.mxu0 0.0
    %5411 = vmatmul.mubr.f32.gmra.mrb[0].mxu0 %v5319
    %v5412 = vpop.f32.mrb[0].mxu0
    %v5413 = vadd.f32 %v5310, %v5412
    %v5414 = vpop.f32.mrb[0].mxu0
    %5415 = vmatprep.mubr.f32.mxu0 0.0
    %5416 = vmatmul.mubr.f32.gmra.mrb[0].mxu0 %v5322
    %v5417 = vpop.f32.mrb[0].mxu0
    %v5418 = vadd.f32 %v5310, %v5417
    %v5419 = vpop.f32.mrb[0].mxu0
    %5420 = vmatprep.mubr.f32.mxu0 0.0
    %5421 = vmatmul.mubr.f32.gmra.mrb[0].mxu0 %v5325
    %v5422 = vpop.f32.mrb[0].mxu0
    %v5423 = vadd.f32 %v5310, %v5422
    %v5424 = vpop.f32.mrb[0].mxu0
    %5425 = vmatprep.mubr.f32.mxu0 0.0
    %5426 = vmatmul.mubr.f32.gmra.mrb[0].mxu0 %v5328
    %v5427 = vpop.f32.mrb[0].mxu0
    %v5428 = vadd.f32 %v5310, %v5427
    %v5429 = vpop.f32.mrb[0].mxu0
    %5430 = vmatprep.mubr.f32.mxu0 0.0
    %5431 = vmatmul.mubr.f32.gmra.mrb[0].mxu0 %v5331
    %v5432 = vpop.f32.mrb[0].mxu0
    %v5433 = vadd.f32 %v5310, %v5432
    %v5434 = vpop.f32.mrb[0].mxu0
    %5435 = vmatprep.mubr.f32.mxu0 0.0
    %5436 = vmatmul.mubr.f32.gmra.mrb[0].mxu0 %v5334
    %v5437 = vpop.f32.mrb[0].mxu0
    %v5438 = vadd.f32 %v5310, %v5437
    %v5439 = vpop.f32.mrb[0].mxu0
    %5440 = vdwg.mxu0
    %v5441 = vld [vmem:[#allocation17] sm:$0xff]
    %v5442 = vld [vmem:[#allocation17 + $0x8] sm:$0xff]
    %v5443 = vld [vmem:[#allocation17 + $0x10] sm:$0xff]
    %v5444 = vld [vmem:[#allocation17 + $0x18] sm:$0xff]
    %5445 = vmatprep.subr.mxu0 0.0
    %5446 = vmatpush1.msra.mxu0 %v5441
    %5447 = vmatprep.subr.mxu0 0.0
    %5448 = vmatpush1.msra.mxu0 %v5442
    %5449 = vmatprep.subr.mxu0 0.0
    %5450 = vmatpush1.msra.mxu0 %v5443
    %5451 = vmatprep.subr.mxu0 0.0
    %5452 = vmatpush1.msra.mxu0 %v5444
    %5453 = vmatprep.subr.mxu0 0.0
    %5454 = vmatpush1.msra.mxu0 0.0
    %5455 = vmatprep.subr.mxu0 0.0
    %5456 = vmatpush1.msra.mxu0 0.0
    %5457 = vmatprep.subr.mxu0 0.0
    %5458 = vmatpush1.msra.mxu0 0.0
    %5459 = vmatprep.subr.mxu0 0.0
    %5460 = vmatpush1.msra.mxu0 0.0
    %5461 = vmatprep.subr.mxu0 0.0
    %5462 = vmatpush1.msra.mxu0 0.0
    %5463 = vmatprep.subr.mxu0 0.0
    %5464 = vmatpush1.msra.mxu0 0.0
    %5465 = vmatprep.subr.mxu0 0.0
    %5466 = vmatpush1.msra.mxu0 0.0
    %5467 = vmatprep.subr.mxu0 0.0
    %5468 = vmatpush1.msra.mxu0 0.0
    %5469 = vmatprep.subr.mxu0 0.0
    %5470 = vmatpush1.msra.mxu0 0.0
    %5471 = vmatprep.subr.mxu0 0.0
    %5472 = vmatpush1.msra.mxu0 0.0
    %5473 = vmatprep.subr.mxu0 0.0
    %5474 = vmatpush1.msra.mxu0 0.0
    %5475 = vmatprep.subr.mxu0 0.0
    %5476 = vmatpush1.msra.mxu0 0.0
    %5477 = vmatprep.subr.mxu0 0.0
    %5478 = vmatpush1.msra.mxu0 0.0
    %5479 = vmatprep.subr.mxu0 0.0
    %5480 = vmatpush1.msra.mxu0 0.0
    %5481 = vmatprep.subr.mxu0 0.0
    %5482 = vmatpush1.msra.mxu0 0.0
    %5483 = vmatprep.subr.mxu0 0.0
    %5484 = vmatpush1.msra.mxu0 0.0
    %5485 = vmatprep.subr.mxu0 0.0
    %5486 = vmatpush1.msra.mxu0 0.0
    %5487 = vmatprep.subr.mxu0 0.0
    %5488 = vmatpush1.msra.mxu0 0.0
    %5489 = vmatprep.subr.mxu0 0.0
    %5490 = vmatpush1.msra.mxu0 0.0
    %5491 = vmatprep.subr.mxu0 0.0
    %5492 = vmatpush1.msra.mxu0 0.0
    %5493 = vmatprep.subr.mxu0 0.0
    %5494 = vmatpush1.msra.mxu0 0.0
    %5495 = vmatprep.subr.mxu0 0.0
    %5496 = vmatpush1.msra.mxu0 0.0
    %5497 = vmatprep.subr.mxu0 0.0
    %5498 = vmatpush1.msra.mxu0 0.0
    %5499 = vmatprep.subr.mxu0 0.0
    %5500 = vmatpush1.msra.mxu0 0.0
    %5501 = vmatprep.subr.mxu0 0.0
    %5502 = vmatpush1.msra.mxu0 0.0
    %5503 = vmatprep.subr.mxu0 0.0
    %5504 = vmatpush1.msra.mxu0 0.0
    %5505 = vmatprep.subr.mxu0 0.0
    %5506 = vmatpush1.msra.mxu0 0.0
    %5507 = vmatprep.subr.mxu0 0.0
    %5508 = vmatpush1.msra.mxu0 0.0
    %5509 = vmatprep.mubr.f32.mxu0 0.0
    %5510 = vmatmul.mubr.f32.gmra.mrb[0].mxu0 %v401
    %v5511 = vpop.f32.mrb[0].mxu0
    %v5512 = vadd.f32 0.0, %v5511
    %v5513 = vpop.f32.mrb[0].mxu0
    %5514 = vdwg.mxu0
    %v5515 = vadd.f32 %v5403, %v5512
    %v5516 = vxor.u32 %v5515, 2147483648
    %v5517 = vmul.f32 %v5516, 1.442695
    %v5518 = vpow.pop %v5517
    %v5519 = vadd.f32 %v5518, 1.0
    %v5520 = vrcp.pop %v5519
    %v5521 = vmul.f32 1.0, %v5520
    %v5522 = vmul.f32 %v5521, 2.0
    %v5523 = vsub.f32 %v5522, 1.0
    %v5524 = vmul.f32 %v5521, 0.0
    %5526 = vrot.lane.b32.xlu0 %v5523, 64
    %v5527 = vpop.permute.xlu0 %5526
    %v5529 = vmul.f32 %v5521, %v5527
    %5531 = vrot.lane.b32.xlu0 %v5529, 32
    %v5532 = vpop.permute.xlu0 %5531
    %v5534 = vadd.f32 %v5524, %v5532
    %v5535 = vtanh.pop %v5534
    %5537 = vrot.lane.b32.xlu0 %v5535, 64
    %v5538 = vpop.permute.xlu0 %5537
    %v5540 = vmul.f32 %v5521, %v5538
    %5542 = vrot.lane.b32.xlu0 %v5540, 32
    %v5543 = vpop.permute.xlu0 %5542
    %v5544 = vsel %vm399, %v5543, 0
    %5546 = vmatprep.subr.mxu0 0.0
    %5547 = vmatpush1.msra.mxu0 %v5441
    %5548 = vmatprep.subr.mxu0 0.0
    %5549 = vmatpush1.msra.mxu0 %v5442
    %5550 = vmatprep.subr.mxu0 0.0
    %5551 = vmatpush1.msra.mxu0 %v5443
    %5552 = vmatprep.subr.mxu0 0.0
    %5553 = vmatpush1.msra.mxu0 %v5444
    %5554 = vmatprep.subr.mxu0 0.0
    %5555 = vmatpush1.msra.mxu0 0.0
    %5556 = vmatprep.subr.mxu0 0.0
    %5557 = vmatpush1.msra.mxu0 0.0
    %5558 = vmatprep.subr.mxu0 0.0
    %5559 = vmatpush1.msra.mxu0 0.0
    %5560 = vmatprep.subr.mxu0 0.0
    %5561 = vmatpush1.msra.mxu0 0.0
    %5562 = vmatprep.subr.mxu0 0.0
    %5563 = vmatpush1.msra.mxu0 0.0
    %5564 = vmatprep.subr.mxu0 0.0
    %5565 = vmatpush1.msra.mxu0 0.0
    %5566 = vmatprep.subr.mxu0 0.0
    %5567 = vmatpush1.msra.mxu0 0.0
    %5568 = vmatprep.subr.mxu0 0.0
    %5569 = vmatpush1.msra.mxu0 0.0
    %5570 = vmatprep.subr.mxu0 0.0
    %5571 = vmatpush1.msra.mxu0 0.0
    %5572 = vmatprep.subr.mxu0 0.0
    %5573 = vmatpush1.msra.mxu0 0.0
    %5574 = vmatprep.subr.mxu0 0.0
    %5575 = vmatpush1.msra.mxu0 0.0
    %5576 = vmatprep.subr.mxu0 0.0
    %5577 = vmatpush1.msra.mxu0 0.0
    %5578 = vmatprep.subr.mxu0 0.0
    %5579 = vmatpush1.msra.mxu0 0.0
    %5580 = vmatprep.subr.mxu0 0.0
    %5581 = vmatpush1.msra.mxu0 0.0
    %5582 = vmatprep.subr.mxu0 0.0
    %5583 = vmatpush1.msra.mxu0 0.0
    %5584 = vmatprep.subr.mxu0 0.0
    %5585 = vmatpush1.msra.mxu0 0.0
    %5586 = vmatprep.subr.mxu0 0.0
    %5587 = vmatpush1.msra.mxu0 0.0
    %5588 = vmatprep.subr.mxu0 0.0
    %5589 = vmatpush1.msra.mxu0 0.0
    %5590 = vmatprep.subr.mxu0 0.0
    %5591 = vmatpush1.msra.mxu0 0.0
    %5592 = vmatprep.subr.mxu0 0.0
    %5593 = vmatpush1.msra.mxu0 0.0
    %5594 = vmatprep.subr.mxu0 0.0
    %5595 = vmatpush1.msra.mxu0 0.0
    %5596 = vmatprep.subr.mxu0 0.0
    %5597 = vmatpush1.msra.mxu0 0.0
    %5598 = vmatprep.subr.mxu0 0.0
    %5599 = vmatpush1.msra.mxu0 0.0
    %5600 = vmatprep.subr.mxu0 0.0
    %5601 = vmatpush1.msra.mxu0 0.0
    %5602 = vmatprep.subr.mxu0 0.0
    %5603 = vmatpush1.msra.mxu0 0.0
    %5604 = vmatprep.subr.mxu0 0.0
    %5605 = vmatpush1.msra.mxu0 0.0
    %5606 = vmatprep.subr.mxu0 0.0
    %5607 = vmatpush1.msra.mxu0 0.0
    %5608 = vmatprep.subr.mxu0 0.0
    %5609 = vmatpush1.msra.mxu0 0.0
    %5610 = vmatprep.mubr.f32.mxu0 0.0
    %5611 = vmatmul.mubr.f32.gmra.mrb[0].mxu0 %v5544
    %v5612 = vpop.f32.mrb[0].mxu0
    %v5613 = vadd.f32 0.0, %v5612
    %v5614 = vpop.f32.mrb[0].mxu0
    %5615 = vdwg.mxu0
    %v5616 = vadd.f32 %v5408, %v5613
    %v5617 = vxor.u32 %v5616, 2147483648
    %v5618 = vmul.f32 %v5617, 1.442695
    %v5619 = vpow.pop %v5618
    %v5620 = vadd.f32 %v5619, 1.0
    %v5621 = vrcp.pop %v5620
    %v5622 = vmul.f32 1.0, %v5621
    %v5623 = vmul.f32 %v5622, 2.0
    %v5624 = vsub.f32 %v5623, 1.0
    %v5625 = vmul.f32 %v5622, %v5534
    %5627 = vrot.lane.b32.xlu0 %v5624, 64
    %v5628 = vpop.permute.xlu0 %5627
    %v5630 = vmul.f32 %v5622, %v5628
    %5632 = vrot.lane.b32.xlu0 %v5630, 32
    %v5633 = vpop.permute.xlu0 %5632
    %v5635 = vadd.f32 %v5625, %v5633
    %v5636 = vtanh.pop %v5635
    %5638 = vrot.lane.b32.xlu0 %v5636, 64
    %v5639 = vpop.permute.xlu0 %5638
    %v5641 = vmul.f32 %v5622, %v5639
    %5643 = vrot.lane.b32.xlu0 %v5641, 32
    %v5644 = vpop.permute.xlu0 %5643
    %v5645 = vsel %vm399, %v5644, 0
    %5647 = vmatprep.subr.mxu0 0.0
    %5648 = vmatpush1.msra.mxu0 %v5441
    %5649 = vmatprep.subr.mxu0 0.0
    %5650 = vmatpush1.msra.mxu0 %v5442
    %5651 = vmatprep.subr.mxu0 0.0
    %5652 = vmatpush1.msra.mxu0 %v5443
    %5653 = vmatprep.subr.mxu0 0.0
    %5654 = vmatpush1.msra.mxu0 %v5444
    %5655 = vmatprep.subr.mxu0 0.0
    %5656 = vmatpush1.msra.mxu0 0.0
    %5657 = vmatprep.subr.mxu0 0.0
    %5658 = vmatpush1.msra.mxu0 0.0
    %5659 = vmatprep.subr.mxu0 0.0
    %5660 = vmatpush1.msra.mxu0 0.0
    %5661 = vmatprep.subr.mxu0 0.0
    %5662 = vmatpush1.msra.mxu0 0.0
    %5663 = vmatprep.subr.mxu0 0.0
    %5664 = vmatpush1.msra.mxu0 0.0
    %5665 = vmatprep.subr.mxu0 0.0
    %5666 = vmatpush1.msra.mxu0 0.0
    %5667 = vmatprep.subr.mxu0 0.0
    %5668 = vmatpush1.msra.mxu0 0.0
    %5669 = vmatprep.subr.mxu0 0.0
    %5670 = vmatpush1.msra.mxu0 0.0
    %5671 = vmatprep.subr.mxu0 0.0
    %5672 = vmatpush1.msra.mxu0 0.0
    %5673 = vmatprep.subr.mxu0 0.0
    %5674 = vmatpush1.msra.mxu0 0.0
    %5675 = vmatprep.subr.mxu0 0.0
    %5676 = vmatpush1.msra.mxu0 0.0
    %5677 = vmatprep.subr.mxu0 0.0
    %5678 = vmatpush1.msra.mxu0 0.0
    %5679 = vmatprep.subr.mxu0 0.0
    %5680 = vmatpush1.msra.mxu0 0.0
    %5681 = vmatprep.subr.mxu0 0.0
    %5682 = vmatpush1.msra.mxu0 0.0
    %5683 = vmatprep.subr.mxu0 0.0
    %5684 = vmatpush1.msra.mxu0 0.0
    %5685 = vmatprep.subr.mxu0 0.0
    %5686 = vmatpush1.msra.mxu0 0.0
    %5687 = vmatprep.subr.mxu0 0.0
    %5688 = vmatpush1.msra.mxu0 0.0
    %5689 = vmatprep.subr.mxu0 0.0
    %5690 = vmatpush1.msra.mxu0 0.0
    %5691 = vmatprep.subr.mxu0 0.0
    %5692 = vmatpush1.msra.mxu0 0.0
    %5693 = vmatprep.subr.mxu0 0.0
    %5694 = vmatpush1.msra.mxu0 0.0
    %5695 = vmatprep.subr.mxu0 0.0
    %5696 = vmatpush1.msra.mxu0 0.0
    %5697 = vmatprep.subr.mxu0 0.0
    %5698 = vmatpush1.msra.mxu0 0.0
    %5699 = vmatprep.subr.mxu0 0.0
    %5700 = vmatpush1.msra.mxu0 0.0
    %5701 = vmatprep.subr.mxu0 0.0
    %5702 = vmatpush1.msra.mxu0 0.0
    %5703 = vmatprep.subr.mxu0 0.0
    %5704 = vmatpush1.msra.mxu0 0.0
    %5705 = vmatprep.subr.mxu0 0.0
    %5706 = vmatpush1.msra.mxu0 0.0
    %5707 = vmatprep.subr.mxu0 0.0
    %5708 = vmatpush1.msra.mxu0 0.0
    %5709 = vmatprep.subr.mxu0 0.0
    %5710 = vmatpush1.msra.mxu0 0.0
    %5711 = vmatprep.mubr.f32.mxu0 0.0
    %5712 = vmatmul.mubr.f32.gmra.mrb[0].mxu0 %v5645
    %v5713 = vpop.f32.mrb[0].mxu0
    %v5714 = vadd.f32 0.0, %v5713
    %v5715 = vpop.f32.mrb[0].mxu0
    %5716 = vdwg.mxu0
    %v5717 = vadd.f32 %v5413, %v5714
    %v5718 = vxor.u32 %v5717, 2147483648
    %v5719 = vmul.f32 %v5718, 1.442695
    %v5720 = vpow.pop %v5719
    %v5721 = vadd.f32 %v5720, 1.0
    %v5722 = vrcp.pop %v5721
    %v5723 = vmul.f32 1.0, %v5722
    %v5724 = vmul.f32 %v5723, 2.0
    %v5725 = vsub.f32 %v5724, 1.0
    %v5726 = vmul.f32 %v5723, %v5635
    %5728 = vrot.lane.b32.xlu0 %v5725, 64
    %v5729 = vpop.permute.xlu0 %5728
    %v5731 = vmul.f32 %v5723, %v5729
    %5733 = vrot.lane.b32.xlu0 %v5731, 32
    %v5734 = vpop.permute.xlu0 %5733
    %v5736 = vadd.f32 %v5726, %v5734
    %v5737 = vtanh.pop %v5736
    %5739 = vrot.lane.b32.xlu0 %v5737, 64
    %v5740 = vpop.permute.xlu0 %5739
    %v5742 = vmul.f32 %v5723, %v5740
    %5744 = vrot.lane.b32.xlu0 %v5742, 32
    %v5745 = vpop.permute.xlu0 %5744
    %v5746 = vsel %vm399, %v5745, 0
    %5748 = vmatprep.subr.mxu0 0.0
    %5749 = vmatpush1.msra.mxu0 %v5441
    %5750 = vmatprep.subr.mxu0 0.0
    %5751 = vmatpush1.msra.mxu0 %v5442
    %5752 = vmatprep.subr.mxu0 0.0
    %5753 = vmatpush1.msra.mxu0 %v5443
    %5754 = vmatprep.subr.mxu0 0.0
    %5755 = vmatpush1.msra.mxu0 %v5444
    %5756 = vmatprep.subr.mxu0 0.0
    %5757 = vmatpush1.msra.mxu0 0.0
    %5758 = vmatprep.subr.mxu0 0.0
    %5759 = vmatpush1.msra.mxu0 0.0
    %5760 = vmatprep.subr.mxu0 0.0
    %5761 = vmatpush1.msra.mxu0 0.0
    %5762 = vmatprep.subr.mxu0 0.0
    %5763 = vmatpush1.msra.mxu0 0.0
    %5764 = vmatprep.subr.mxu0 0.0
    %5765 = vmatpush1.msra.mxu0 0.0
    %5766 = vmatprep.subr.mxu0 0.0
    %5767 = vmatpush1.msra.mxu0 0.0
    %5768 = vmatprep.subr.mxu0 0.0
    %5769 = vmatpush1.msra.mxu0 0.0
    %5770 = vmatprep.subr.mxu0 0.0
    %5771 = vmatpush1.msra.mxu0 0.0
    %5772 = vmatprep.subr.mxu0 0.0
    %5773 = vmatpush1.msra.mxu0 0.0
    %5774 = vmatprep.subr.mxu0 0.0
    %5775 = vmatpush1.msra.mxu0 0.0
    %5776 = vmatprep.subr.mxu0 0.0
    %5777 = vmatpush1.msra.mxu0 0.0
    %5778 = vmatprep.subr.mxu0 0.0
    %5779 = vmatpush1.msra.mxu0 0.0
    %5780 = vmatprep.subr.mxu0 0.0
    %5781 = vmatpush1.msra.mxu0 0.0
    %5782 = vmatprep.subr.mxu0 0.0
    %5783 = vmatpush1.msra.mxu0 0.0
    %5784 = vmatprep.subr.mxu0 0.0
    %5785 = vmatpush1.msra.mxu0 0.0
    %5786 = vmatprep.subr.mxu0 0.0
    %5787 = vmatpush1.msra.mxu0 0.0
    %5788 = vmatprep.subr.mxu0 0.0
    %5789 = vmatpush1.msra.mxu0 0.0
    %5790 = vmatprep.subr.mxu0 0.0
    %5791 = vmatpush1.msra.mxu0 0.0
    %5792 = vmatprep.subr.mxu0 0.0
    %5793 = vmatpush1.msra.mxu0 0.0
    %5794 = vmatprep.subr.mxu0 0.0
    %5795 = vmatpush1.msra.mxu0 0.0
    %5796 = vmatprep.subr.mxu0 0.0
    %5797 = vmatpush1.msra.mxu0 0.0
    %5798 = vmatprep.subr.mxu0 0.0
    %5799 = vmatpush1.msra.mxu0 0.0
    %5800 = vmatprep.subr.mxu0 0.0
    %5801 = vmatpush1.msra.mxu0 0.0
    %5802 = vmatprep.subr.mxu0 0.0
    %5803 = vmatpush1.msra.mxu0 0.0
    %5804 = vmatprep.subr.mxu0 0.0
    %5805 = vmatpush1.msra.mxu0 0.0
    %5806 = vmatprep.subr.mxu0 0.0
    %5807 = vmatpush1.msra.mxu0 0.0
    %5808 = vmatprep.subr.mxu0 0.0
    %5809 = vmatpush1.msra.mxu0 0.0
    %5810 = vmatprep.subr.mxu0 0.0
    %5811 = vmatpush1.msra.mxu0 0.0
    %5812 = vmatprep.mubr.f32.mxu0 0.0
    %5813 = vmatmul.mubr.f32.gmra.mrb[0].mxu0 %v5746
    %v5814 = vpop.f32.mrb[0].mxu0
    %v5815 = vadd.f32 0.0, %v5814
    %v5816 = vpop.f32.mrb[0].mxu0
    %5817 = vdwg.mxu0
    %v5818 = vadd.f32 %v5418, %v5815
    %v5819 = vxor.u32 %v5818, 2147483648
    %v5820 = vmul.f32 %v5819, 1.442695
    %v5821 = vpow.pop %v5820
    %v5822 = vadd.f32 %v5821, 1.0
    %v5823 = vrcp.pop %v5822
    %v5824 = vmul.f32 1.0, %v5823
    %v5825 = vmul.f32 %v5824, 2.0
    %v5826 = vsub.f32 %v5825, 1.0
    %v5827 = vmul.f32 %v5824, %v5736
    %5829 = vrot.lane.b32.xlu0 %v5826, 64
    %v5830 = vpop.permute.xlu0 %5829
    %v5832 = vmul.f32 %v5824, %v5830
    %5834 = vrot.lane.b32.xlu0 %v5832, 32
    %v5835 = vpop.permute.xlu0 %5834
    %v5837 = vadd.f32 %v5827, %v5835
    %v5838 = vtanh.pop %v5837
    %5840 = vrot.lane.b32.xlu0 %v5838, 64
    %v5841 = vpop.permute.xlu0 %5840
    %v5843 = vmul.f32 %v5824, %v5841
    %5845 = vrot.lane.b32.xlu0 %v5843, 32
    %v5846 = vpop.permute.xlu0 %5845
    %v5847 = vsel %vm399, %v5846, 0
    %5849 = vmatprep.subr.mxu0 0.0
    %5850 = vmatpush1.msra.mxu0 %v5441
    %5851 = vmatprep.subr.mxu0 0.0
    %5852 = vmatpush1.msra.mxu0 %v5442
    %5853 = vmatprep.subr.mxu0 0.0
    %5854 = vmatpush1.msra.mxu0 %v5443
    %5855 = vmatprep.subr.mxu0 0.0
    %5856 = vmatpush1.msra.mxu0 %v5444
    %5857 = vmatprep.subr.mxu0 0.0
    %5858 = vmatpush1.msra.mxu0 0.0
    %5859 = vmatprep.subr.mxu0 0.0
    %5860 = vmatpush1.msra.mxu0 0.0
    %5861 = vmatprep.subr.mxu0 0.0
    %5862 = vmatpush1.msra.mxu0 0.0
    %5863 = vmatprep.subr.mxu0 0.0
    %5864 = vmatpush1.msra.mxu0 0.0
    %5865 = vmatprep.subr.mxu0 0.0
    %5866 = vmatpush1.msra.mxu0 0.0
    %5867 = vmatprep.subr.mxu0 0.0
    %5868 = vmatpush1.msra.mxu0 0.0
    %5869 = vmatprep.subr.mxu0 0.0
    %5870 = vmatpush1.msra.mxu0 0.0
    %5871 = vmatprep.subr.mxu0 0.0
    %5872 = vmatpush1.msra.mxu0 0.0
    %5873 = vmatprep.subr.mxu0 0.0
    %5874 = vmatpush1.msra.mxu0 0.0
    %5875 = vmatprep.subr.mxu0 0.0
    %5876 = vmatpush1.msra.mxu0 0.0
    %5877 = vmatprep.subr.mxu0 0.0
    %5878 = vmatpush1.msra.mxu0 0.0
    %5879 = vmatprep.subr.mxu0 0.0
    %5880 = vmatpush1.msra.mxu0 0.0
    %5881 = vmatprep.subr.mxu0 0.0
    %5882 = vmatpush1.msra.mxu0 0.0
    %5883 = vmatprep.subr.mxu0 0.0
    %5884 = vmatpush1.msra.mxu0 0.0
    %5885 = vmatprep.subr.mxu0 0.0
    %5886 = vmatpush1.msra.mxu0 0.0
    %5887 = vmatprep.subr.mxu0 0.0
    %5888 = vmatpush1.msra.mxu0 0.0
    %5889 = vmatprep.subr.mxu0 0.0
    %5890 = vmatpush1.msra.mxu0 0.0
    %5891 = vmatprep.subr.mxu0 0.0
    %5892 = vmatpush1.msra.mxu0 0.0
    %5893 = vmatprep.subr.mxu0 0.0
    %5894 = vmatpush1.msra.mxu0 0.0
    %5895 = vmatprep.subr.mxu0 0.0
    %5896 = vmatpush1.msra.mxu0 0.0
    %5897 = vmatprep.subr.mxu0 0.0
    %5898 = vmatpush1.msra.mxu0 0.0
    %5899 = vmatprep.subr.mxu0 0.0
    %5900 = vmatpush1.msra.mxu0 0.0
    %5901 = vmatprep.subr.mxu0 0.0
    %5902 = vmatpush1.msra.mxu0 0.0
    %5903 = vmatprep.subr.mxu0 0.0
    %5904 = vmatpush1.msra.mxu0 0.0
    %5905 = vmatprep.subr.mxu0 0.0
    %5906 = vmatpush1.msra.mxu0 0.0
    %5907 = vmatprep.subr.mxu0 0.0
    %5908 = vmatpush1.msra.mxu0 0.0
    %5909 = vmatprep.subr.mxu0 0.0
    %5910 = vmatpush1.msra.mxu0 0.0
    %5911 = vmatprep.subr.mxu0 0.0
    %5912 = vmatpush1.msra.mxu0 0.0
    %5913 = vmatprep.mubr.f32.mxu0 0.0
    %5914 = vmatmul.mubr.f32.gmra.mrb[0].mxu0 %v5847
    %v5915 = vpop.f32.mrb[0].mxu0
    %v5916 = vadd.f32 0.0, %v5915
    %v5917 = vpop.f32.mrb[0].mxu0
    %5918 = vdwg.mxu0
    %v5919 = vadd.f32 %v5423, %v5916
    %v5920 = vxor.u32 %v5919, 2147483648
    %v5921 = vmul.f32 %v5920, 1.442695
    %v5922 = vpow.pop %v5921
    %v5923 = vadd.f32 %v5922, 1.0
    %v5924 = vrcp.pop %v5923
    %v5925 = vmul.f32 1.0, %v5924
    %v5926 = vmul.f32 %v5925, 2.0
    %v5927 = vsub.f32 %v5926, 1.0
    %v5928 = vmul.f32 %v5925, %v5837
    %5930 = vrot.lane.b32.xlu0 %v5927, 64
    %v5931 = vpop.permute.xlu0 %5930
    %v5933 = vmul.f32 %v5925, %v5931
    %5935 = vrot.lane.b32.xlu0 %v5933, 32
    %v5936 = vpop.permute.xlu0 %5935
    %v5938 = vadd.f32 %v5928, %v5936
    %v5939 = vtanh.pop %v5938
    %5941 = vrot.lane.b32.xlu0 %v5939, 64
    %v5942 = vpop.permute.xlu0 %5941
    %v5944 = vmul.f32 %v5925, %v5942
    %5946 = vrot.lane.b32.xlu0 %v5944, 32
    %v5947 = vpop.permute.xlu0 %5946
    %v5948 = vsel %vm399, %v5947, 0
    %5950 = vmatprep.subr.mxu0 0.0
    %5951 = vmatpush1.msra.mxu0 %v5441
    %5952 = vmatprep.subr.mxu0 0.0
    %5953 = vmatpush1.msra.mxu0 %v5442
    %5954 = vmatprep.subr.mxu0 0.0
    %5955 = vmatpush1.msra.mxu0 %v5443
    %5956 = vmatprep.subr.mxu0 0.0
    %5957 = vmatpush1.msra.mxu0 %v5444
    %5958 = vmatprep.subr.mxu0 0.0
    %5959 = vmatpush1.msra.mxu0 0.0
    %5960 = vmatprep.subr.mxu0 0.0
    %5961 = vmatpush1.msra.mxu0 0.0
    %5962 = vmatprep.subr.mxu0 0.0
    %5963 = vmatpush1.msra.mxu0 0.0
    %5964 = vmatprep.subr.mxu0 0.0
    %5965 = vmatpush1.msra.mxu0 0.0
    %5966 = vmatprep.subr.mxu0 0.0
    %5967 = vmatpush1.msra.mxu0 0.0
    %5968 = vmatprep.subr.mxu0 0.0
    %5969 = vmatpush1.msra.mxu0 0.0
    %5970 = vmatprep.subr.mxu0 0.0
    %5971 = vmatpush1.msra.mxu0 0.0
    %5972 = vmatprep.subr.mxu0 0.0
    %5973 = vmatpush1.msra.mxu0 0.0
    %5974 = vmatprep.subr.mxu0 0.0
    %5975 = vmatpush1.msra.mxu0 0.0
    %5976 = vmatprep.subr.mxu0 0.0
    %5977 = vmatpush1.msra.mxu0 0.0
    %5978 = vmatprep.subr.mxu0 0.0
    %5979 = vmatpush1.msra.mxu0 0.0
    %5980 = vmatprep.subr.mxu0 0.0
    %5981 = vmatpush1.msra.mxu0 0.0
    %5982 = vmatprep.subr.mxu0 0.0
    %5983 = vmatpush1.msra.mxu0 0.0
    %5984 = vmatprep.subr.mxu0 0.0
    %5985 = vmatpush1.msra.mxu0 0.0
    %5986 = vmatprep.subr.mxu0 0.0
    %5987 = vmatpush1.msra.mxu0 0.0
    %5988 = vmatprep.subr.mxu0 0.0
    %5989 = vmatpush1.msra.mxu0 0.0
    %5990 = vmatprep.subr.mxu0 0.0
    %5991 = vmatpush1.msra.mxu0 0.0
    %5992 = vmatprep.subr.mxu0 0.0
    %5993 = vmatpush1.msra.mxu0 0.0
    %5994 = vmatprep.subr.mxu0 0.0
    %5995 = vmatpush1.msra.mxu0 0.0
    %5996 = vmatprep.subr.mxu0 0.0
    %5997 = vmatpush1.msra.mxu0 0.0
    %5998 = vmatprep.subr.mxu0 0.0
    %5999 = vmatpush1.msra.mxu0 0.0
    %6000 = vmatprep.subr.mxu0 0.0
    %6001 = vmatpush1.msra.mxu0 0.0
    %6002 = vmatprep.subr.mxu0 0.0
    %6003 = vmatpush1.msra.mxu0 0.0
    %6004 = vmatprep.subr.mxu0 0.0
    %6005 = vmatpush1.msra.mxu0 0.0
    %6006 = vmatprep.subr.mxu0 0.0
    %6007 = vmatpush1.msra.mxu0 0.0
    %6008 = vmatprep.subr.mxu0 0.0
    %6009 = vmatpush1.msra.mxu0 0.0
    %6010 = vmatprep.subr.mxu0 0.0
    %6011 = vmatpush1.msra.mxu0 0.0
    %6012 = vmatprep.subr.mxu0 0.0
    %6013 = vmatpush1.msra.mxu0 0.0
    %6014 = vmatprep.mubr.f32.mxu0 0.0
    %6015 = vmatmul.mubr.f32.gmra.mrb[0].mxu0 %v5948
    %v6016 = vpop.f32.mrb[0].mxu0
    %v6017 = vadd.f32 0.0, %v6016
    %v6018 = vpop.f32.mrb[0].mxu0
    %6019 = vdwg.mxu0
    %v6020 = vadd.f32 %v5428, %v6017
    %v6021 = vxor.u32 %v6020, 2147483648
    %v6022 = vmul.f32 %v6021, 1.442695
    %v6023 = vpow.pop %v6022
    %v6024 = vadd.f32 %v6023, 1.0
    %v6025 = vrcp.pop %v6024
    %v6026 = vmul.f32 1.0, %v6025
    %v6027 = vmul.f32 %v6026, 2.0
    %v6028 = vsub.f32 %v6027, 1.0
    %v6029 = vmul.f32 %v6026, %v5938
    %6031 = vrot.lane.b32.xlu0 %v6028, 64
    %v6032 = vpop.permute.xlu0 %6031
    %v6034 = vmul.f32 %v6026, %v6032
    %6036 = vrot.lane.b32.xlu0 %v6034, 32
    %v6037 = vpop.permute.xlu0 %6036
    %v6039 = vadd.f32 %v6029, %v6037
    %v6040 = vtanh.pop %v6039
    %6042 = vrot.lane.b32.xlu0 %v6040, 64
    %v6043 = vpop.permute.xlu0 %6042
    %v6045 = vmul.f32 %v6026, %v6043
    %6047 = vrot.lane.b32.xlu0 %v6045, 32
    %v6048 = vpop.permute.xlu0 %6047
    %v6049 = vsel %vm399, %v6048, 0
    %6051 = vmatprep.subr.mxu0 0.0
    %6052 = vmatpush1.msra.mxu0 %v5441
    %6053 = vmatprep.subr.mxu0 0.0
    %6054 = vmatpush1.msra.mxu0 %v5442
    %6055 = vmatprep.subr.mxu0 0.0
    %6056 = vmatpush1.msra.mxu0 %v5443
    %6057 = vmatprep.subr.mxu0 0.0
    %6058 = vmatpush1.msra.mxu0 %v5444
    %6059 = vmatprep.subr.mxu0 0.0
    %6060 = vmatpush1.msra.mxu0 0.0
    %6061 = vmatprep.subr.mxu0 0.0
    %6062 = vmatpush1.msra.mxu0 0.0
    %6063 = vmatprep.subr.mxu0 0.0
    %6064 = vmatpush1.msra.mxu0 0.0
    %6065 = vmatprep.subr.mxu0 0.0
    %6066 = vmatpush1.msra.mxu0 0.0
    %6067 = vmatprep.subr.mxu0 0.0
    %6068 = vmatpush1.msra.mxu0 0.0
    %6069 = vmatprep.subr.mxu0 0.0
    %6070 = vmatpush1.msra.mxu0 0.0
    %6071 = vmatprep.subr.mxu0 0.0
    %6072 = vmatpush1.msra.mxu0 0.0
    %6073 = vmatprep.subr.mxu0 0.0
    %6074 = vmatpush1.msra.mxu0 0.0
    %6075 = vmatprep.subr.mxu0 0.0
    %6076 = vmatpush1.msra.mxu0 0.0
    %6077 = vmatprep.subr.mxu0 0.0
    %6078 = vmatpush1.msra.mxu0 0.0
    %6079 = vmatprep.subr.mxu0 0.0
    %6080 = vmatpush1.msra.mxu0 0.0
    %6081 = vmatprep.subr.mxu0 0.0
    %6082 = vmatpush1.msra.mxu0 0.0
    %6083 = vmatprep.subr.mxu0 0.0
    %6084 = vmatpush1.msra.mxu0 0.0
    %6085 = vmatprep.subr.mxu0 0.0
    %6086 = vmatpush1.msra.mxu0 0.0
    %6087 = vmatprep.subr.mxu0 0.0
    %6088 = vmatpush1.msra.mxu0 0.0
    %6089 = vmatprep.subr.mxu0 0.0
    %6090 = vmatpush1.msra.mxu0 0.0
    %6091 = vmatprep.subr.mxu0 0.0
    %6092 = vmatpush1.msra.mxu0 0.0
    %6093 = vmatprep.subr.mxu0 0.0
    %6094 = vmatpush1.msra.mxu0 0.0
    %6095 = vmatprep.subr.mxu0 0.0
    %6096 = vmatpush1.msra.mxu0 0.0
    %6097 = vmatprep.subr.mxu0 0.0
    %6098 = vmatpush1.msra.mxu0 0.0
    %6099 = vmatprep.subr.mxu0 0.0
    %6100 = vmatpush1.msra.mxu0 0.0
    %6101 = vmatprep.subr.mxu0 0.0
    %6102 = vmatpush1.msra.mxu0 0.0
    %6103 = vmatprep.subr.mxu0 0.0
    %6104 = vmatpush1.msra.mxu0 0.0
    %6105 = vmatprep.subr.mxu0 0.0
    %6106 = vmatpush1.msra.mxu0 0.0
    %6107 = vmatprep.subr.mxu0 0.0
    %6108 = vmatpush1.msra.mxu0 0.0
    %6109 = vmatprep.subr.mxu0 0.0
    %6110 = vmatpush1.msra.mxu0 0.0
    %6111 = vmatprep.subr.mxu0 0.0
    %6112 = vmatpush1.msra.mxu0 0.0
    %6113 = vmatprep.subr.mxu0 0.0
    %6114 = vmatpush1.msra.mxu0 0.0
    %6115 = vmatprep.mubr.f32.mxu0 0.0
    %6116 = vmatmul.mubr.f32.gmra.mrb[0].mxu0 %v6049
    %v6117 = vpop.f32.mrb[0].mxu0
    %v6118 = vadd.f32 0.0, %v6117
    %v6119 = vpop.f32.mrb[0].mxu0
    %6120 = vdwg.mxu0
    %v6121 = vadd.f32 %v5433, %v6118
    %v6122 = vxor.u32 %v6121, 2147483648
    %v6123 = vmul.f32 %v6122, 1.442695
    %v6124 = vpow.pop %v6123
    %v6125 = vadd.f32 %v6124, 1.0
    %v6126 = vrcp.pop %v6125
    %v6127 = vmul.f32 1.0, %v6126
    %v6128 = vmul.f32 %v6127, 2.0
    %v6129 = vsub.f32 %v6128, 1.0
    %v6130 = vmul.f32 %v6127, %v6039
    %6132 = vrot.lane.b32.xlu0 %v6129, 64
    %v6133 = vpop.permute.xlu0 %6132
    %v6135 = vmul.f32 %v6127, %v6133
    %6137 = vrot.lane.b32.xlu0 %v6135, 32
    %v6138 = vpop.permute.xlu0 %6137
    %v6140 = vadd.f32 %v6130, %v6138
    %v6141 = vtanh.pop %v6140
    %6143 = vrot.lane.b32.xlu0 %v6141, 64
    %v6144 = vpop.permute.xlu0 %6143
    %v6146 = vmul.f32 %v6127, %v6144
    %6148 = vrot.lane.b32.xlu0 %v6146, 32
    %v6149 = vpop.permute.xlu0 %6148
    %v6150 = vsel %vm399, %v6149, 0
    %6152 = vmatprep.subr.mxu0 0.0
    %6153 = vmatpush1.msra.mxu0 %v5441
    %6154 = vmatprep.subr.mxu0 0.0
    %6155 = vmatpush1.msra.mxu0 %v5442
    %6156 = vmatprep.subr.mxu0 0.0
    %6157 = vmatpush1.msra.mxu0 %v5443
    %6158 = vmatprep.subr.mxu0 0.0
    %6159 = vmatpush1.msra.mxu0 %v5444
    %6160 = vmatprep.subr.mxu0 0.0
    %6161 = vmatpush1.msra.mxu0 0.0
    %6162 = vmatprep.subr.mxu0 0.0
    %6163 = vmatpush1.msra.mxu0 0.0
    %6164 = vmatprep.subr.mxu0 0.0
    %6165 = vmatpush1.msra.mxu0 0.0
    %6166 = vmatprep.subr.mxu0 0.0
    %6167 = vmatpush1.msra.mxu0 0.0
    %6168 = vmatprep.subr.mxu0 0.0
    %6169 = vmatpush1.msra.mxu0 0.0
    %6170 = vmatprep.subr.mxu0 0.0
    %6171 = vmatpush1.msra.mxu0 0.0
    %6172 = vmatprep.subr.mxu0 0.0
    %6173 = vmatpush1.msra.mxu0 0.0
    %6174 = vmatprep.subr.mxu0 0.0
    %6175 = vmatpush1.msra.mxu0 0.0
    %6176 = vmatprep.subr.mxu0 0.0
    %6177 = vmatpush1.msra.mxu0 0.0
    %6178 = vmatprep.subr.mxu0 0.0
    %6179 = vmatpush1.msra.mxu0 0.0
    %6180 = vmatprep.subr.mxu0 0.0
    %6181 = vmatpush1.msra.mxu0 0.0
    %6182 = vmatprep.subr.mxu0 0.0
    %6183 = vmatpush1.msra.mxu0 0.0
    %6184 = vmatprep.subr.mxu0 0.0
    %6185 = vmatpush1.msra.mxu0 0.0
    %6186 = vmatprep.subr.mxu0 0.0
    %6187 = vmatpush1.msra.mxu0 0.0
    %6188 = vmatprep.subr.mxu0 0.0
    %6189 = vmatpush1.msra.mxu0 0.0
    %6190 = vmatprep.subr.mxu0 0.0
    %6191 = vmatpush1.msra.mxu0 0.0
    %6192 = vmatprep.subr.mxu0 0.0
    %6193 = vmatpush1.msra.mxu0 0.0
    %6194 = vmatprep.subr.mxu0 0.0
    %6195 = vmatpush1.msra.mxu0 0.0
    %6196 = vmatprep.subr.mxu0 0.0
    %6197 = vmatpush1.msra.mxu0 0.0
    %6198 = vmatprep.subr.mxu0 0.0
    %6199 = vmatpush1.msra.mxu0 0.0
    %6200 = vmatprep.subr.mxu0 0.0
    %6201 = vmatpush1.msra.mxu0 0.0
    %6202 = vmatprep.subr.mxu0 0.0
    %6203 = vmatpush1.msra.mxu0 0.0
    %6204 = vmatprep.subr.mxu0 0.0
    %6205 = vmatpush1.msra.mxu0 0.0
    %6206 = vmatprep.subr.mxu0 0.0
    %6207 = vmatpush1.msra.mxu0 0.0
    %6208 = vmatprep.subr.mxu0 0.0
    %6209 = vmatpush1.msra.mxu0 0.0
    %6210 = vmatprep.subr.mxu0 0.0
    %6211 = vmatpush1.msra.mxu0 0.0
    %6212 = vmatprep.subr.mxu0 0.0
    %6213 = vmatpush1.msra.mxu0 0.0
    %6214 = vmatprep.subr.mxu0 0.0
    %6215 = vmatpush1.msra.mxu0 0.0
    %6216 = vmatprep.mubr.f32.mxu0 0.0
    %6217 = vmatmul.mubr.f32.gmra.mrb[0].mxu0 %v6150
    %v6218 = vpop.f32.mrb[0].mxu0
    %v6219 = vadd.f32 0.0, %v6218
    %v6220 = vpop.f32.mrb[0].mxu0
    %6221 = vdwg.mxu0
    %v6222 = vadd.f32 %v5438, %v6219
    %v6223 = vxor.u32 %v6222, 2147483648
    %v6224 = vmul.f32 %v6223, 1.442695
    %v6225 = vpow.pop %v6224
    %v6226 = vadd.f32 %v6225, 1.0
    %v6227 = vrcp.pop %v6226
    %v6228 = vmul.f32 1.0, %v6227
    %v6229 = vmul.f32 %v6228, 2.0
    %v6230 = vsub.f32 %v6229, 1.0
    %v6231 = vmul.f32 %v6228, %v6140
    %6233 = vrot.lane.b32.xlu0 %v6230, 64
    %v6234 = vpop.permute.xlu0 %6233
    %v6236 = vmul.f32 %v6228, %v6234
    %6238 = vrot.lane.b32.xlu0 %v6236, 32
    %v6239 = vpop.permute.xlu0 %6238
    %v6241 = vadd.f32 %v6231, %v6239
    %v6242 = vtanh.pop %v6241
    %6244 = vrot.lane.b32.xlu0 %v6242, 64
    %v6245 = vpop.permute.xlu0 %6244
    %v6247 = vmul.f32 %v6228, %v6245
    %v6248 = vld [vmem:[%s51] sm:$0xff]
    %v6249 = vld [vmem:[%s51 + $0x8] sm:$0xff]
    %v6250 = vld [vmem:[%s51 + $0x10] sm:$0xff]
    %v6251 = vld [vmem:[%s51 + $0x18] sm:$0xff]
    %v6252 = vld [vmem:[#allocation3] sm:$0x1]
    %v6254 = vlaneseq
    %v6255 = vshrl.u32 %v6254, 7
    %v6256 = vsub.s32 0, %v6255
    %v6257 = vrot.slane %v6252, %v6256
    %6260 = vrot.lane.b32.xlu0 %v6247, 32
    %v6261 = vpop.permute.xlu0 %6260
    %v6262 = vsel %vm399, %v6261, 0
    %6264 = vmatprep.subr.mxu0 0.0
    %6265 = vmatpush1.msra.mxu0 %v6248
    %6266 = vmatprep.subr.mxu0 0.0
    %6267 = vmatpush1.msra.mxu0 %v6249
    %6268 = vmatprep.subr.mxu0 0.0
    %6269 = vmatpush1.msra.mxu0 %v6250
    %6270 = vmatprep.subr.mxu0 0.0
    %6271 = vmatpush1.msra.mxu0 %v6251
    %6272 = vmatprep.subr.mxu0 0.0
    %6273 = vmatpush1.msra.mxu0 0.0
    %6274 = vmatprep.subr.mxu0 0.0
    %6275 = vmatpush1.msra.mxu0 0.0
    %6276 = vmatprep.subr.mxu0 0.0
    %6277 = vmatpush1.msra.mxu0 0.0
    %6278 = vmatprep.subr.mxu0 0.0
    %6279 = vmatpush1.msra.mxu0 0.0
    %6280 = vmatprep.subr.mxu0 0.0
    %6281 = vmatpush1.msra.mxu0 0.0
    %6282 = vmatprep.subr.mxu0 0.0
    %6283 = vmatpush1.msra.mxu0 0.0
    %6284 = vmatprep.subr.mxu0 0.0
    %6285 = vmatpush1.msra.mxu0 0.0
    %6286 = vmatprep.subr.mxu0 0.0
    %6287 = vmatpush1.msra.mxu0 0.0
    %6288 = vmatprep.subr.mxu0 0.0
    %6289 = vmatpush1.msra.mxu0 0.0
    %6290 = vmatprep.subr.mxu0 0.0
    %6291 = vmatpush1.msra.mxu0 0.0
    %6292 = vmatprep.subr.mxu0 0.0
    %6293 = vmatpush1.msra.mxu0 0.0
    %6294 = vmatprep.subr.mxu0 0.0
    %6295 = vmatpush1.msra.mxu0 0.0
    %6296 = vmatprep.subr.mxu0 0.0
    %6297 = vmatpush1.msra.mxu0 0.0
    %6298 = vmatprep.subr.mxu0 0.0
    %6299 = vmatpush1.msra.mxu0 0.0
    %6300 = vmatprep.subr.mxu0 0.0
    %6301 = vmatpush1.msra.mxu0 0.0
    %6302 = vmatprep.subr.mxu0 0.0
    %6303 = vmatpush1.msra.mxu0 0.0
    %6304 = vmatprep.subr.mxu0 0.0
    %6305 = vmatpush1.msra.mxu0 0.0
    %6306 = vmatprep.subr.mxu0 0.0
    %6307 = vmatpush1.msra.mxu0 0.0
    %6308 = vmatprep.subr.mxu0 0.0
    %6309 = vmatpush1.msra.mxu0 0.0
    %6310 = vmatprep.subr.mxu0 0.0
    %6311 = vmatpush1.msra.mxu0 0.0
    %6312 = vmatprep.subr.mxu0 0.0
    %6313 = vmatpush1.msra.mxu0 0.0
    %6314 = vmatprep.subr.mxu0 0.0
    %6315 = vmatpush1.msra.mxu0 0.0
    %6316 = vmatprep.subr.mxu0 0.0
    %6317 = vmatpush1.msra.mxu0 0.0
    %6318 = vmatprep.subr.mxu0 0.0
    %6319 = vmatpush1.msra.mxu0 0.0
    %6320 = vmatprep.subr.mxu0 0.0
    %6321 = vmatpush1.msra.mxu0 0.0
    %6322 = vmatprep.subr.mxu0 0.0
    %6323 = vmatpush1.msra.mxu0 0.0
    %6324 = vmatprep.subr.mxu0 0.0
    %6325 = vmatpush1.msra.mxu0 0.0
    %6326 = vmatprep.subr.mxu0 0.0
    %6327 = vmatpush1.msra.mxu0 0.0
    %6328 = vmatprep.mubr.f32.mxu0 0.0
    %6329 = vmatmul.mubr.f32.gmra.mrb[0].mxu0 %v6262
    %v6330 = vpop.f32.mrb[0].mxu0
    %v6331 = vadd.f32 %v6257, %v6330
    %v6332 = vpop.f32.mrb[0].mxu0
    %6333 = vdwg.mxu0
    %v6334 = vxor.u32 %v6331, 2147483648
    %v6335 = vmul.f32 %v6334, 1.442695
    %v6336 = vpow.pop %v6335
    %v6337 = vadd.f32 %v6336, 1.0
    %v6338 = vrcp.pop %v6337
    %v6339 = vmul.f32 1.0, %v6338
    %vm6340 = vcmask 7168
    %6341 = vst.msk [vmem:[%s59] sm:$0xff] %vm6340, %v6339
    // Predicated region
    $region150: #{lvgnet_forward.1} parent=1 // pred_check
      _
    $region151: #{lvgnet_forward.1} parent=1 // pred_check_branch
      %6343 = sbr.rel (0) target = $region153
    $region152: #{lvgnet_forward.1} parent=1 // pred_region
      _
    $region153: #{lvgnet_forward.1} parent=1 // pred_fallthru
      _
    // Predicated region
    $region154: #{lvgnet_forward.1} parent=1 // pred_check
      _
    $region155: #{lvgnet_forward.1} parent=1 // pred_check_branch
      %6345 = sbr.rel (0) target = $region157
    $region156: #{lvgnet_forward.1} parent=1 // pred_region
      _
    $region157: #{lvgnet_forward.1} parent=1 // pred_fallthru
      _
    // Predicated region
    $region158: #{lvgnet_forward.1} parent=1 // pred_check
      _
    $region159: #{lvgnet_forward.1} parent=1 // pred_check_branch
      %6347 = sbr.rel (0) target = $region161
    $region160: #{lvgnet_forward.1} parent=1 // pred_region
      _
    $region161: #{lvgnet_forward.1} parent=1 // pred_fallthru
      _
    // Predicated region
    $region162: #{lvgnet_forward.1} parent=1 // pred_check
      _
    $region163: #{lvgnet_forward.1} parent=1 // pred_check_branch
      %6349 = sbr.rel (0) target = $region165
    $region164: #{lvgnet_forward.1} parent=1 // pred_region
      _
    $region165: #{lvgnet_forward.1} parent=1 // pred_fallthru
      _
    // Predicated region
    $region166: #{lvgnet_forward.1} parent=1 // pred_check
      _
    $region167: #{lvgnet_forward.1} parent=1 // pred_check_branch
      %6351 = sbr.rel (0) target = $region169
    $region168: #{lvgnet_forward.1} parent=1 // pred_region
      _
    $region169: #{lvgnet_forward.1} parent=1 // pred_fallthru
      _
    // Predicated region
    $region170: #{lvgnet_forward.1} parent=1 // pred_check
      _
    $region171: #{lvgnet_forward.1} parent=1 // pred_check_branch
      %6353 = sbr.rel (0) target = $region173
    $region172: #{lvgnet_forward.1} parent=1 // pred_region
      _
    $region173: #{lvgnet_forward.1} parent=1 // pred_fallthru
      _
    %6354 = vsyncpa [#allocation5], 1
    %6355 = vsyncpa [#allocation7], 1
    %6356 = vsyncpa [#allocation10], 1
    %6357 = vsyncpa [#allocation13], 1
    %6358 = vsyncpa [#allocation16], 1
    %6359 = vsyncpa [#allocation19], 1

</llo_original>
